<compile_context>
chip_gen: v7x
topology: tpu7x:2x2x1
jax: 0.10.0
libtpu: 0.0.40
codegen_flags: <defaults>
</compile_context>

<pallas_src>
import math
import numpy as np

import jax
import jax.numpy as jnp
from jax.experimental import pallas as pl
from jax.experimental.pallas import tpu as pltpu

KERNEL_SIZE_LAYER = [7, 7]
_BN_EPS = 1e-5


def calculate_image_size_after_conv_block(input_size, kernel_size=3, stride=1, padding=1):
    conv_size = (input_size - kernel_size + 2 * padding) // stride + 1
    after_pool = math.ceil((conv_size - 2) / 2) + 1
    return after_pool


# --------------------------- build-time folding -----------------------------

class _LayerCfg:
    def __init__(self, H, Ci, Co, K, padding, terms):
        self.H, self.Ci, self.Co, self.K, self.pad = H, Ci, Co, K, padding
        self.Hp = H + 2 * padding                    # padded spatial size
        self.Ho = self.Hp - K + 1                    # conv output size
        self.Hpool = -(-self.Ho // 2)                # maxpool(2,2,ceil) output size
        self.terms = terms                           # tuple of (mask_rows, kh)


def _fold_layer(w, b, wfm, gamma, beta, mean, var, H, padding=1):
    """Fold the VConv2d branches + weightFeatureMap + eval-mode BN into banded
    matmul terms acting on a zero-padded (Hp, Wp*Ci) row slab.

    Branch s with cropped kernel w[:,:,s:K-s,s:K-s]:
      * s <= padding: exactly the full conv restricted to taps KH,KW in [s,K-s).
      * s >  padding: VConv2d crops the input by s and re-pads by 1, which is
        the same restricted-tap conv except that padded rows/cols {s, Hp-1-s}
        are read as zero (row mask applied in-kernel, column mask baked here).
    """
    w = np.asarray(w, np.float64)                    # (Co, Ci, K, K) torch OIHW
    b = np.asarray(b, np.float64)
    wfm = np.asarray(wfm, np.float64)
    Co, Ci, K, _ = w.shape
    s_num = int(math.ceil(K / 2))
    wfm_n = wfm / wfm.sum()
    scale = np.asarray(gamma, np.float64) / np.sqrt(np.asarray(var, np.float64) + _BN_EPS)
    shift = np.asarray(beta, np.float64) - np.asarray(mean, np.float64) * scale

    Hp = H + 2 * padding
    Wp = Hp
    Wo = Hp - K + 1

    mats, order = {}, []
    for s in range(s_num):
        if padding - s >= 0:
            mask_rows = ()
        else:
            assert padding == 1, "VConv2d crop path assumes padding == 1"
            mask_rows = (s, Hp - 1 - s)
        for kh in range(s, K - s):
            key = (mask_rows, kh)
            if key not in mats:
                mats[key] = np.zeros((Wp * Ci, Wo * Co), np.float64)
                order.append(key)
            M = mats[key]
            for j in range(Wo):
                for kw in range(s, K - s):
                    m = j + kw                       # sampled (padded) column
                    if mask_rows and m in (s, Wp - 1 - s):
                        continue                     # column masked for this branch
                    blk = wfm_n[s] * (w[:, :, kh, kw].T * scale[None, :])   # (Ci, Co)
                    M[m * Ci:(m + 1) * Ci, j * Co:(j + 1) * Co] += blk

    B = np.stack([mats[k] for k in order]).astype(np.float32)        # (T, Wp*Ci, Wo*Co)
    bias_row = np.tile(scale * b + shift, Wo).astype(np.float32)[None, :]   # (1, Wo*Co)
    return B, bias_row, tuple(order)


def _group_terms(terms):
    groups, index = [], {}
    for t, (mask_rows, kh) in enumerate(terms):
        if mask_rows not in index:
            index[mask_rows] = len(groups)
            groups.append((mask_rows, []))
        groups[index[mask_rows]][1].append((kh, t))
    return groups


# ------------------------------ fused kernel --------------------------------

def _make_kernel(cfg1, cfg2, num_classes, N):
    C0, C1, C2 = cfg1.Ci, cfg1.Co, cfg2.Co
    H1, Ho1, P1 = cfg1.H, cfg1.Ho, cfg1.Hpool
    Ho2, P2 = cfg2.Ho, cfg2.Hpool
    g1 = _group_terms(cfg1.terms)
    g2 = _group_terms(cfg2.terms)

    def conv_block(xp_n, b_ref, bias_ref, groups, Ho):
        # xp_n: (Hp, Wp*Ci) zero-padded row slab for one image.
        rows2d = jax.lax.broadcasted_iota(jnp.int32, xp_n.shape, 0)
        acc = None
        for mask_rows, khts in groups:
            if mask_rows:
                msk = rows2d == mask_rows[0]
                for r in mask_rows[1:]:
                    msk = msk | (rows2d == r)
                src = jnp.where(msk, 0.0, xp_n)
            else:
                src = xp_n
            for kh, t in khts:
                part = jnp.dot(src[kh:kh + Ho, :], b_ref[t],
                               preferred_element_type=jnp.float32)
                acc = part if acc is None else acc + part
        return jnp.maximum(acc + bias_ref[...], 0.0)     # folded bias+BN, ReLU

    def kernel(x_ref, b1_ref, bias1_ref, b2_ref, bias2_ref, wl_ref, fcb_ref,
               out_ref, pad1_ref, pad2_ref):
        # in-VMEM zero padding of both layer inputs
        pad1_ref[...] = jnp.zeros(pad1_ref.shape, jnp.float32)
        pad2_ref[...] = jnp.zeros(pad2_ref.shape, jnp.float32)
        pad1_ref[:, 1:1 + H1, C0:C0 * (1 + H1)] = x_ref[...]

        for n in range(N):
            # ---- block 1: folded VConv2d + BN + ReLU ----
            a1 = conv_block(pad1_ref[n], b1_ref, bias1_ref, g1, Ho1)   # (Ho1, Ho1*C1)
            # ---- maxpool 2x2 (ceil), written straight into padded layer-2 input ----
            rows = []
            for th in range(P1):
                r0, r1 = 2 * th, min(2 * th + 1, Ho1 - 1)
                rows.append(jnp.maximum(a1[r0:r0 + 1, :], a1[r1:r1 + 1, :]))
            hp = jnp.concatenate(rows, axis=0)                         # (P1, Ho1*C1)
            for tw in range(P1):
                c0, c1 = 2 * tw * C1, min(2 * tw + 1, Ho1 - 1) * C1
                chunk = jnp.maximum(hp[:, c0:c0 + C1], hp[:, c1:c1 + C1])
                pad2_ref[n, 1:1 + P1, C1 * (1 + tw):C1 * (2 + tw)] = chunk

            # ---- block 2 ----
            a2 = conv_block(pad2_ref[n], b2_ref, bias2_ref, g2, Ho2)   # (Ho2, Ho2*C2)
            # ---- maxpool + NCHW-order flatten + Linear (weight pre-permuted) ----
            o = fcb_ref[...]                                           # (1, num_classes)
            for th in range(P2):
                r0, r1 = 2 * th, min(2 * th + 1, Ho2 - 1)
                rowm = jnp.maximum(a2[r0:r0 + 1, :], a2[r1:r1 + 1, :])
                for tw in range(P2):
                    c0, c1 = 2 * tw * C2, min(2 * tw + 1, Ho2 - 1) * C2
                    chunk = jnp.maximum(rowm[:, c0:c0 + C2], rowm[:, c1:c1 + C2])
                    o = o + jnp.dot(chunk, wl_ref[th, tw],
                                    preferred_element_type=jnp.float32)
            out_ref[n:n + 1, :] = o

    return kernel


def build_forward(params, input_image_size, batch_size, num_classes):
    N = batch_size
    feats = params['features']
    assert len(feats) == 2

    cfgs, arrays = [], []
    H = input_image_size
    for layer, K in zip(feats, KERNEL_SIZE_LAYER):
        Co, Ci = layer['conv_w'].shape[0], layer['conv_w'].shape[1]
        B, bias_row, terms = _fold_layer(
            layer['conv_w'], layer['conv_b'], layer['wfm'],
            layer['bn_gamma'], layer['bn_beta'], layer['bn_mean'], layer['bn_var'],
            H, padding=1)
        cfg = _LayerCfg(H, Ci, Co, K, 1, terms)
        cfgs.append(cfg)
        arrays.append((jnp.asarray(B), jnp.asarray(bias_row)))
        H = cfg.Hpool
    cfg1, cfg2 = cfgs
    assert cfg2.Ci == cfg1.Co and cfg2.H == cfg1.Hpool

    Hf = Wf = cfg2.Hpool
    C2 = cfg2.Co
    feat = Hf * Wf * C2
    assert params['fc_w'].shape == (num_classes, feat)
    # classifier weight: NCHW-flatten order (c*Hf*Wf + h*Wf + w) -> (h, w, c, cls)
    wl = jnp.transpose(params['fc_w'].reshape(num_classes, C2, Hf, Wf), (2, 3, 1, 0))
    fcb = params['fc_b'].reshape(1, num_classes)
    (b1, bias1), (b2, bias2) = arrays

    kernel = _make_kernel(cfg1, cfg2, num_classes, N)
    call = pl.pallas_call(
        kernel,
        out_shape=jax.ShapeDtypeStruct((N, num_classes), jnp.float32),
        in_specs=[pl.BlockSpec(memory_space=pltpu.MemorySpace.VMEM)] * 7,
        out_specs=pl.BlockSpec(memory_space=pltpu.MemorySpace.VMEM),
        scratch_shapes=[
            pltpu.VMEM((N, cfg1.Hp, cfg1.Hp * cfg1.Ci), jnp.float32),
            pltpu.VMEM((N, cfg2.Hp, cfg2.Hp * cfg2.Ci), jnp.float32),
        ],
    )

    C0 = cfg1.Ci

    @jax.jit
    def forward(x_nchw):
        # NCHW -> lane-dense (N, H, W*C) row layout expected by the kernel
        x2d = jnp.transpose(x_nchw, (0, 2, 3, 1)).reshape(N, cfg1.H, cfg1.H * C0)
        return call(x2d, b1, bias1, b2, bias2, wl, fcb)

    return forward


# ------------------------- reference (plain XLA) -----------------------------

def reference_forward(params, x_nchw):
    """Pure-JAX re-implementation of Student_net8.forward (for validation)."""
    x = x_nchw
    for layer in params['features']:
        w, b, wfm = layer['conv_w'], layer['conv_b'], layer['wfm']
        K = w.shape[2]
        s_num = int(math.ceil(K / 2))
        pad = 1
        wfm_n = wfm / jnp.sum(wfm)
        H = x.shape[2]
        y = None
        for s in range(s_num):
            w1 = w[:, :, s:K - s, s:K - s]
            if pad - s < 0:
                x1, p1 = x[:, :, s:H - s, s:H - s], 1
            else:
                x1, p1 = x, pad - s
            conv = jax.lax.conv_general_dilated(
                x1, w1, (1, 1), [(p1, p1), (p1, p1)],
                dimension_numbers=('NCHW', 'OIHW', 'NCHW')) + b[None, :, None, None]
            term = wfm_n[s] * conv
            y = term if y is None else y + term
        scale = layer['bn_gamma'] / jnp.sqrt(layer['bn_var'] + _BN_EPS)
        shift = layer['bn_beta'] - layer['bn_mean'] * scale
        y = jnp.maximum(y * scale[None, :, None, None] + shift[None, :, None, None], 0.0)
        if y.shape[2] % 2:
            y = jnp.pad(y, ((0, 0), (0, 0), (0, 1), (0, 1)), constant_values=-jnp.inf)
        y = jax.lax.reduce_window(y, -jnp.inf, jax.lax.max,
                                  (1, 1, 2, 2), (1, 1, 2, 2), 'VALID')
        x = y
    x = x.reshape(x.shape[0], -1)
    return x @ params['fc_w'].T + params['fc_b']


# --------------------------------- params ------------------------------------

def init_params(key, in_channels=3, num_classes=12, input_image_size=24):
    cfg_channels = [6, 6]      # classifier expects featureSize*featureSize*6
    params = {'features': []}
    ci = in_channels
    for co, ks in zip(cfg_channels, KERNEL_SIZE_LAYER):
        key, k1 = jax.random.split(key)
        std = math.sqrt(2.0 / (co * ks * ks))      # kaiming_normal_, fan_out, relu
        s_num = int(math.ceil(ks / 2))
        params['features'].append(dict(
            conv_w=std * jax.random.normal(k1, (co, ci, ks, ks), jnp.float32),
            conv_b=jnp.zeros((co,), jnp.float32),
            wfm=jnp.full((s_num,), 1.0 / s_num, jnp.float32),
            bn_gamma=jnp.ones((co,), jnp.float32),
            bn_beta=jnp.zeros((co,), jnp.float32),
            bn_mean=jnp.zeros((co,), jnp.float32),
            bn_var=jnp.ones((co,), jnp.float32),
        ))
        ci = co
    s = input_image_size
    for ks in KERNEL_SIZE_LAYER:
        s = calculate_image_size_after_conv_block(s, kernel_size=ks)
    feat = s * s * 6
    key, k2 = jax.random.split(key)
    params['fc_w'] = 0.01 * jax.random.normal(k2, (num_classes, feat), jnp.float32)
    params['fc_b'] = jnp.zeros((num_classes,), jnp.float32)
    return params


if __name__ == "__main__":
    key = jax.random.PRNGKey(0)
    pkey, xkey, tkey = jax.random.split(key, 3)
    params = init_params(pkey, in_channels=3, num_classes=12, input_image_size=24)

    # Perturb BN stats / conv bias / classifier so the BN- and bias-folding
    # paths are actually exercised by the self-check (torch init makes BN identity).
    tkeys = jax.random.split(tkey, 16)
    ti = 0
    for layer in params['features']:
        co = layer['conv_b'].shape[0]
        layer['conv_b'] = 0.1 * jax.random.normal(tkeys[ti], (co,), jnp.float32); ti += 1
        layer['bn_gamma'] = 1.0 + 0.2 * jax.random.normal(tkeys[ti], (co,), jnp.float32); ti += 1
        layer['bn_beta'] = 0.2 * jax.random.normal(tkeys[ti], (co,), jnp.float32); ti += 1
        layer['bn_mean'] = 0.2 * jax.random.normal(tkeys[ti], (co,), jnp.float32); ti += 1
        layer['bn_var'] = 0.5 + jax.random.uniform(tkeys[ti], (co,), jnp.float32); ti += 1
    params['fc_w'] = 0.1 * jax.random.normal(tkeys[ti], params['fc_w'].shape, jnp.float32)

    x = jax.random.normal(xkey, (2, 3, 24, 24), jnp.float32)   # NCHW like PyTorch
    forward = build_forward(params, input_image_size=24, batch_size=2, num_classes=12)

    out = jax.block_until_ready(forward(x))
    assert out.shape == (2, 12) and out.dtype == jnp.float32

    ref = jax.block_until_ready(reference_forward(params, x))
    # tolerance covers MXU bf16-pass rounding differences between the fused
    # kernel and the XLA reference (both accumulate in f32)
    if not jnp.allclose(out, ref, atol=5e-2, rtol=5e-2):
        max_err = float(jnp.max(jnp.abs(out - ref)))
        raise AssertionError(f"kernel/reference mismatch, max abs err = {max_err}")

    print("KERNEL_OK")
</pallas_src>

<mosaic_0001>
module attributes {stable_mosaic.version = 11 : i64} {
  func.func @kernel(%arg0: memref<2x24x72xf32, #tpu.memory_space<vmem>>, %arg1: memref<11x78x120xf32, #tpu.memory_space<vmem>>, %arg2: memref<1x120xf32, #tpu.memory_space<vmem>>, %arg3: memref<11x72x36xf32, #tpu.memory_space<vmem>>, %arg4: memref<1x36xf32, #tpu.memory_space<vmem>>, %arg5: memref<3x3x6x12xf32, #tpu.memory_space<vmem>>, %arg6: memref<1x12xf32, #tpu.memory_space<vmem>>, %arg7: memref<2x12xf32, #tpu.memory_space<vmem>>, %arg8: memref<2x26x78xf32, #tpu.memory_space<vmem>>, %arg9: memref<2x12x72xf32, #tpu.memory_space<vmem>>) attributes {dimension_semantics = [], scalar_prefetch = 0 : i64, scratch_operands = 2 : i64, tpu.core_type = #tpu.core_type<tc>} {
    %cst = arith.constant 0.000000e+00 : f32
    %0 = vector.broadcast %cst : f32 to vector<2x26x78xf32>
    %c0 = arith.constant 0 : index
    %c0_0 = arith.constant 0 : index
    %c0_1 = arith.constant 0 : index
    %1 = vector.load %arg8[%c0, %c0_0, %c0_1] : memref<2x26x78xf32, #tpu.memory_space<vmem>>, vector<2x26x78xf32>
    tpu.vector_store %arg8[%c0, %c0_0, %c0_1], %0 {strides = array<i32>} : memref<2x26x78xf32, #tpu.memory_space<vmem>>, vector<2x26x78xf32>,
    %cst_2 = arith.constant 0.000000e+00 : f32
    %2 = vector.broadcast %cst_2 : f32 to vector<2x12x72xf32>
    %c0_3 = arith.constant 0 : index
    %c0_4 = arith.constant 0 : index
    %c0_5 = arith.constant 0 : index
    %3 = vector.load %arg9[%c0_3, %c0_4, %c0_5] : memref<2x12x72xf32, #tpu.memory_space<vmem>>, vector<2x12x72xf32>
    tpu.vector_store %arg9[%c0_3, %c0_4, %c0_5], %2 {strides = array<i32>} : memref<2x12x72xf32, #tpu.memory_space<vmem>>, vector<2x12x72xf32>,
    %c0_6 = arith.constant 0 : index
    %c0_7 = arith.constant 0 : index
    %c0_8 = arith.constant 0 : index
    %4 = vector.load %arg0[%c0_6, %c0_7, %c0_8] : memref<2x24x72xf32, #tpu.memory_space<vmem>>, vector<2x24x72xf32>
    %c0_9 = arith.constant 0 : index
    %c1 = arith.constant 1 : index
    %c3 = arith.constant 3 : index
    %5 = vector.load %arg8[%c0_9, %c1, %c3] : memref<2x26x78xf32, #tpu.memory_space<vmem>>, vector<2x24x72xf32>
    tpu.vector_store %arg8[%c0_9, %c1, %c3], %4 {strides = array<i32>} : memref<2x26x78xf32, #tpu.memory_space<vmem>>, vector<2x24x72xf32>,
    %c0_10 = arith.constant 0 : index
    %c0_11 = arith.constant 0 : index
    %c0_12 = arith.constant 0 : index
    %6 = vector.load %arg8[%c0_10, %c0_11, %c0_12] : memref<2x26x78xf32, #tpu.memory_space<vmem>>, vector<1x26x78xf32>
    %7 = vector.shape_cast %6 : vector<1x26x78xf32> to vector<26x78xf32>
    %8 = tpu.iota {dimensions = array<i32: 0>} : vector<26x78xi32>
    %9 = vector.extract_strided_slice %7 {offsets = [0, 0], sizes = [20, 78], strides = [1, 1]} : vector<26x78xf32> to vector<20x78xf32>
    %c0_13 = arith.constant 0 : index
    %c0_14 = arith.constant 0 : index
    %c0_15 = arith.constant 0 : index
    %10 = vector.load %arg1[%c0_13, %c0_14, %c0_15] : memref<11x78x120xf32, #tpu.memory_space<vmem>>, vector<1x78x120xf32>
    %11 = vector.shape_cast %10 : vector<1x78x120xf32> to vector<78x120xf32>
    %cst_16 = arith.constant dense<0.000000e+00> : vector<20x120xf32>
    %12 = tpu.matmul %9, %11, %cst_16 {dimension_numbers = #tpu.dot_dimension_numbers<[1], [0], [0], [1], [0, 0, 1, 1], [], []>} : vector<20x78xf32>, vector<78x120xf32>, vector<20x120xf32> -> vector<20x120xf32>
    %13 = vector.extract_strided_slice %7 {offsets = [1, 0], sizes = [20, 78], strides = [1, 1]} : vector<26x78xf32> to vector<20x78xf32>
    %c1_17 = arith.constant 1 : index
    %c0_18 = arith.constant 0 : index
    %c0_19 = arith.constant 0 : index
    %14 = vector.load %arg1[%c1_17, %c0_18, %c0_19] : memref<11x78x120xf32, #tpu.memory_space<vmem>>, vector<1x78x120xf32>
    %15 = vector.shape_cast %14 : vector<1x78x120xf32> to vector<78x120xf32>
    %cst_20 = arith.constant dense<0.000000e+00> : vector<20x120xf32>
    %16 = tpu.matmul %13, %15, %cst_20 {dimension_numbers = #tpu.dot_dimension_numbers<[1], [0], [0], [1], [0, 0, 1, 1], [], []>} : vector<20x78xf32>, vector<78x120xf32>, vector<20x120xf32> -> vector<20x120xf32>
    %17 = arith.addf %12, %16 : vector<20x120xf32>
    %18 = vector.extract_strided_slice %7 {offsets = [2, 0], sizes = [20, 78], strides = [1, 1]} : vector<26x78xf32> to vector<20x78xf32>
    %c2 = arith.constant 2 : index
    %c0_21 = arith.constant 0 : index
    %c0_22 = arith.constant 0 : index
    %19 = vector.load %arg1[%c2, %c0_21, %c0_22] : memref<11x78x120xf32, #tpu.memory_space<vmem>>, vector<1x78x120xf32>
    %20 = vector.shape_cast %19 : vector<1x78x120xf32> to vector<78x120xf32>
    %cst_23 = arith.constant dense<0.000000e+00> : vector<20x120xf32>
    %21 = tpu.matmul %18, %20, %cst_23 {dimension_numbers = #tpu.dot_dimension_numbers<[1], [0], [0], [1], [0, 0, 1, 1], [], []>} : vector<20x78xf32>, vector<78x120xf32>, vector<20x120xf32> -> vector<20x120xf32>
    %22 = arith.addf %17, %21 : vector<20x120xf32>
    %23 = vector.extract_strided_slice %7 {offsets = [3, 0], sizes = [20, 78], strides = [1, 1]} : vector<26x78xf32> to vector<20x78xf32>
    %c3_24 = arith.constant 3 : index
    %c0_25 = arith.constant 0 : index
    %c0_26 = arith.constant 0 : index
    %24 = vector.load %arg1[%c3_24, %c0_25, %c0_26] : memref<11x78x120xf32, #tpu.memory_space<vmem>>, vector<1x78x120xf32>
    %25 = vector.shape_cast %24 : vector<1x78x120xf32> to vector<78x120xf32>
    %cst_27 = arith.constant dense<0.000000e+00> : vector<20x120xf32>
    %26 = tpu.matmul %23, %25, %cst_27 {dimension_numbers = #tpu.dot_dimension_numbers<[1], [0], [0], [1], [0, 0, 1, 1], [], []>} : vector<20x78xf32>, vector<78x120xf32>, vector<20x120xf32> -> vector<20x120xf32>
    %27 = arith.addf %22, %26 : vector<20x120xf32>
    %28 = vector.extract_strided_slice %7 {offsets = [4, 0], sizes = [20, 78], strides = [1, 1]} : vector<26x78xf32> to vector<20x78xf32>
    %c4 = arith.constant 4 : index
    %c0_28 = arith.constant 0 : index
    %c0_29 = arith.constant 0 : index
    %29 = vector.load %arg1[%c4, %c0_28, %c0_29] : memref<11x78x120xf32, #tpu.memory_space<vmem>>, vector<1x78x120xf32>
    %30 = vector.shape_cast %29 : vector<1x78x120xf32> to vector<78x120xf32>
    %cst_30 = arith.constant dense<0.000000e+00> : vector<20x120xf32>
    %31 = tpu.matmul %28, %30, %cst_30 {dimension_numbers = #tpu.dot_dimension_numbers<[1], [0], [0], [1], [0, 0, 1, 1], [], []>} : vector<20x78xf32>, vector<78x120xf32>, vector<20x120xf32> -> vector<20x120xf32>
    %32 = arith.addf %27, %31 : vector<20x120xf32>
    %33 = vector.extract_strided_slice %7 {offsets = [5, 0], sizes = [20, 78], strides = [1, 1]} : vector<26x78xf32> to vector<20x78xf32>
    %c5 = arith.constant 5 : index
    %c0_31 = arith.constant 0 : index
    %c0_32 = arith.constant 0 : index
    %34 = vector.load %arg1[%c5, %c0_31, %c0_32] : memref<11x78x120xf32, #tpu.memory_space<vmem>>, vector<1x78x120xf32>
    %35 = vector.shape_cast %34 : vector<1x78x120xf32> to vector<78x120xf32>
    %cst_33 = arith.constant dense<0.000000e+00> : vector<20x120xf32>
    %36 = tpu.matmul %33, %35, %cst_33 {dimension_numbers = #tpu.dot_dimension_numbers<[1], [0], [0], [1], [0, 0, 1, 1], [], []>} : vector<20x78xf32>, vector<78x120xf32>, vector<20x120xf32> -> vector<20x120xf32>
    %37 = arith.addf %32, %36 : vector<20x120xf32>
    %38 = vector.extract_strided_slice %7 {offsets = [6, 0], sizes = [20, 78], strides = [1, 1]} : vector<26x78xf32> to vector<20x78xf32>
    %c6 = arith.constant 6 : index
    %c0_34 = arith.constant 0 : index
    %c0_35 = arith.constant 0 : index
    %39 = vector.load %arg1[%c6, %c0_34, %c0_35] : memref<11x78x120xf32, #tpu.memory_space<vmem>>, vector<1x78x120xf32>
    %40 = vector.shape_cast %39 : vector<1x78x120xf32> to vector<78x120xf32>
    %cst_36 = arith.constant dense<0.000000e+00> : vector<20x120xf32>
    %41 = tpu.matmul %38, %40, %cst_36 {dimension_numbers = #tpu.dot_dimension_numbers<[1], [0], [0], [1], [0, 0, 1, 1], [], []>} : vector<20x78xf32>, vector<78x120xf32>, vector<20x120xf32> -> vector<20x120xf32>
    %42 = arith.addf %37, %41 : vector<20x120xf32>
    %c2_i32 = arith.constant 2 : i32
    %43 = vector.broadcast %c2_i32 : i32 to vector<26x78xi32>
    %44 = arith.cmpi eq, %8, %43 : vector<26x78xi32>
    %c23_i32 = arith.constant 23 : i32
    %45 = vector.broadcast %c23_i32 : i32 to vector<26x78xi32>
    %46 = arith.cmpi eq, %8, %45 : vector<26x78xi32>
    %47 = arith.ori %44, %46 : vector<26x78xi1>
    %cst_37 = arith.constant 0.000000e+00 : f32
    %48 = vector.broadcast %cst_37 : f32 to vector<26x78xf32>
    %49 = arith.select %47, %48, %7 : vector<26x78xi1>, vector<26x78xf32>
    %50 = vector.extract_strided_slice %49 {offsets = [2, 0], sizes = [20, 78], strides = [1, 1]} : vector<26x78xf32> to vector<20x78xf32>
    %c7 = arith.constant 7 : index
    %c0_38 = arith.constant 0 : index
    %c0_39 = arith.constant 0 : index
    %51 = vector.load %arg1[%c7, %c0_38, %c0_39] : memref<11x78x120xf32, #tpu.memory_space<vmem>>, vector<1x78x120xf32>
    %52 = vector.shape_cast %51 : vector<1x78x120xf32> to vector<78x120xf32>
    %cst_40 = arith.constant dense<0.000000e+00> : vector<20x120xf32>
    %53 = tpu.matmul %50, %52, %cst_40 {dimension_numbers = #tpu.dot_dimension_numbers<[1], [0], [0], [1], [0, 0, 1, 1], [], []>} : vector<20x78xf32>, vector<78x120xf32>, vector<20x120xf32> -> vector<20x120xf32>
    %54 = arith.addf %42, %53 : vector<20x120xf32>
    %55 = vector.extract_strided_slice %49 {offsets = [3, 0], sizes = [20, 78], strides = [1, 1]} : vector<26x78xf32> to vector<20x78xf32>
    %c8 = arith.constant 8 : index
    %c0_41 = arith.constant 0 : index
    %c0_42 = arith.constant 0 : index
    %56 = vector.load %arg1[%c8, %c0_41, %c0_42] : memref<11x78x120xf32, #tpu.memory_space<vmem>>, vector<1x78x120xf32>
    %57 = vector.shape_cast %56 : vector<1x78x120xf32> to vector<78x120xf32>
    %cst_43 = arith.constant dense<0.000000e+00> : vector<20x120xf32>
    %58 = tpu.matmul %55, %57, %cst_43 {dimension_numbers = #tpu.dot_dimension_numbers<[1], [0], [0], [1], [0, 0, 1, 1], [], []>} : vector<20x78xf32>, vector<78x120xf32>, vector<20x120xf32> -> vector<20x120xf32>
    %59 = arith.addf %54, %58 : vector<20x120xf32>
    %60 = vector.extract_strided_slice %49 {offsets = [4, 0], sizes = [20, 78], strides = [1, 1]} : vector<26x78xf32> to vector<20x78xf32>
    %c9 = arith.constant 9 : index
    %c0_44 = arith.constant 0 : index
    %c0_45 = arith.constant 0 : index
    %61 = vector.load %arg1[%c9, %c0_44, %c0_45] : memref<11x78x120xf32, #tpu.memory_space<vmem>>, vector<1x78x120xf32>
    %62 = vector.shape_cast %61 : vector<1x78x120xf32> to vector<78x120xf32>
    %cst_46 = arith.constant dense<0.000000e+00> : vector<20x120xf32>
    %63 = tpu.matmul %60, %62, %cst_46 {dimension_numbers = #tpu.dot_dimension_numbers<[1], [0], [0], [1], [0, 0, 1, 1], [], []>} : vector<20x78xf32>, vector<78x120xf32>, vector<20x120xf32> -> vector<20x120xf32>
    %64 = arith.addf %59, %63 : vector<20x120xf32>
    %c3_i32 = arith.constant 3 : i32
    %65 = vector.broadcast %c3_i32 : i32 to vector<26x78xi32>
    %66 = arith.cmpi eq, %8, %65 : vector<26x78xi32>
    %c22_i32 = arith.constant 22 : i32
    %67 = vector.broadcast %c22_i32 : i32 to vector<26x78xi32>
    %68 = arith.cmpi eq, %8, %67 : vector<26x78xi32>
    %69 = arith.ori %66, %68 : vector<26x78xi1>
    %cst_47 = arith.constant 0.000000e+00 : f32
    %70 = vector.broadcast %cst_47 : f32 to vector<26x78xf32>
    %71 = arith.select %69, %70, %7 : vector<26x78xi1>, vector<26x78xf32>
    %72 = vector.extract_strided_slice %71 {offsets = [3, 0], sizes = [20, 78], strides = [1, 1]} : vector<26x78xf32> to vector<20x78xf32>
    %c10 = arith.constant 10 : index
    %c0_48 = arith.constant 0 : index
    %c0_49 = arith.constant 0 : index
    %73 = vector.load %arg1[%c10, %c0_48, %c0_49] : memref<11x78x120xf32, #tpu.memory_space<vmem>>, vector<1x78x120xf32>
    %74 = vector.shape_cast %73 : vector<1x78x120xf32> to vector<78x120xf32>
    %cst_50 = arith.constant dense<0.000000e+00> : vector<20x120xf32>
    %75 = tpu.matmul %72, %74, %cst_50 {dimension_numbers = #tpu.dot_dimension_numbers<[1], [0], [0], [1], [0, 0, 1, 1], [], []>} : vector<20x78xf32>, vector<78x120xf32>, vector<20x120xf32> -> vector<20x120xf32>
    %76 = arith.addf %64, %75 : vector<20x120xf32>
    %c0_51 = arith.constant 0 : index
    %c0_52 = arith.constant 0 : index
    %77 = vector.load %arg2[%c0_51, %c0_52] : memref<1x120xf32, #tpu.memory_space<vmem>>, vector<1x120xf32>
    %78 = vector.broadcast %77 : vector<1x120xf32> to vector<20x120xf32>
    %79 = arith.addf %76, %78 : vector<20x120xf32>
    %cst_53 = arith.constant 0.000000e+00 : f32
    %80 = vector.broadcast %cst_53 : f32 to vector<20x120xf32>
    %81 = arith.maximumf %79, %80 : vector<20x120xf32>
    %82 = vector.extract_strided_slice %81 {offsets = [0, 0], sizes = [1, 120], strides = [1, 1]} : vector<20x120xf32> to vector<1x120xf32>
    %83 = vector.extract_strided_slice %81 {offsets = [1, 0], sizes = [1, 120], strides = [1, 1]} : vector<20x120xf32> to vector<1x120xf32>
    %84 = arith.maximumf %82, %83 : vector<1x120xf32>
    %85 = vector.extract_strided_slice %81 {offsets = [2, 0], sizes = [1, 120], strides = [1, 1]} : vector<20x120xf32> to vector<1x120xf32>
    %86 = vector.extract_strided_slice %81 {offsets = [3, 0], sizes = [1, 120], strides = [1, 1]} : vector<20x120xf32> to vector<1x120xf32>
    %87 = arith.maximumf %85, %86 : vector<1x120xf32>
    %88 = vector.extract_strided_slice %81 {offsets = [4, 0], sizes = [1, 120], strides = [1, 1]} : vector<20x120xf32> to vector<1x120xf32>
    %89 = vector.extract_strided_slice %81 {offsets = [5, 0], sizes = [1, 120], strides = [1, 1]} : vector<20x120xf32> to vector<1x120xf32>
    %90 = arith.maximumf %88, %89 : vector<1x120xf32>
    %91 = vector.extract_strided_slice %81 {offsets = [6, 0], sizes = [1, 120], strides = [1, 1]} : vector<20x120xf32> to vector<1x120xf32>
    %92 = vector.extract_strided_slice %81 {offsets = [7, 0], sizes = [1, 120], strides = [1, 1]} : vector<20x120xf32> to vector<1x120xf32>
    %93 = arith.maximumf %91, %92 : vector<1x120xf32>
    %94 = vector.extract_strided_slice %81 {offsets = [8, 0], sizes = [1, 120], strides = [1, 1]} : vector<20x120xf32> to vector<1x120xf32>
    %95 = vector.extract_strided_slice %81 {offsets = [9, 0], sizes = [1, 120], strides = [1, 1]} : vector<20x120xf32> to vector<1x120xf32>
    %96 = arith.maximumf %94, %95 : vector<1x120xf32>
    %97 = vector.extract_strided_slice %81 {offsets = [10, 0], sizes = [1, 120], strides = [1, 1]} : vector<20x120xf32> to vector<1x120xf32>
    %98 = vector.extract_strided_slice %81 {offsets = [11, 0], sizes = [1, 120], strides = [1, 1]} : vector<20x120xf32> to vector<1x120xf32>
    %99 = arith.maximumf %97, %98 : vector<1x120xf32>
    %100 = vector.extract_strided_slice %81 {offsets = [12, 0], sizes = [1, 120], strides = [1, 1]} : vector<20x120xf32> to vector<1x120xf32>
    %101 = vector.extract_strided_slice %81 {offsets = [13, 0], sizes = [1, 120], strides = [1, 1]} : vector<20x120xf32> to vector<1x120xf32>
    %102 = arith.maximumf %100, %101 : vector<1x120xf32>
    %103 = vector.extract_strided_slice %81 {offsets = [14, 0], sizes = [1, 120], strides = [1, 1]} : vector<20x120xf32> to vector<1x120xf32>
    %104 = vector.extract_strided_slice %81 {offsets = [15, 0], sizes = [1, 120], strides = [1, 1]} : vector<20x120xf32> to vector<1x120xf32>
    %105 = arith.maximumf %103, %104 : vector<1x120xf32>
    %106 = vector.extract_strided_slice %81 {offsets = [16, 0], sizes = [1, 120], strides = [1, 1]} : vector<20x120xf32> to vector<1x120xf32>
    %107 = vector.extract_strided_slice %81 {offsets = [17, 0], sizes = [1, 120], strides = [1, 1]} : vector<20x120xf32> to vector<1x120xf32>
    %108 = arith.maximumf %106, %107 : vector<1x120xf32>
    %109 = vector.extract_strided_slice %81 {offsets = [18, 0], sizes = [1, 120], strides = [1, 1]} : vector<20x120xf32> to vector<1x120xf32>
    %110 = vector.extract_strided_slice %81 {offsets = [19, 0], sizes = [1, 120], strides = [1, 1]} : vector<20x120xf32> to vector<1x120xf32>
    %111 = arith.maximumf %109, %110 : vector<1x120xf32>
    %112 = tpu.concatenate %84, %87, %90, %93, %96, %99, %102, %105, %108, %111 in 0 : vector<1x120xf32>, vector<1x120xf32>, vector<1x120xf32>, vector<1x120xf32>, vector<1x120xf32>, vector<1x120xf32>, vector<1x120xf32>, vector<1x120xf32>, vector<1x120xf32>, vector<1x120xf32> -> vector<10x120xf32>
    %113 = vector.extract_strided_slice %112 {offsets = [0, 0], sizes = [10, 6], strides = [1, 1]} : vector<10x120xf32> to vector<10x6xf32>
    %114 = vector.extract_strided_slice %112 {offsets = [0, 6], sizes = [10, 6], strides = [1, 1]} : vector<10x120xf32> to vector<10x6xf32>
    %115 = arith.maximumf %113, %114 : vector<10x6xf32>
    %c0_54 = arith.constant 0 : index
    %c1_55 = arith.constant 1 : index
    %c6_56 = arith.constant 6 : index
    %116 = vector.load %arg9[%c0_54, %c1_55, %c6_56] : memref<2x12x72xf32, #tpu.memory_space<vmem>>, vector<1x10x6xf32>
    %117 = vector.shape_cast %116 : vector<1x10x6xf32> to vector<10x6xf32>
    %118 = vector.shape_cast %115 : vector<10x6xf32> to vector<1x10x6xf32>
    tpu.vector_store %arg9[%c0_54, %c1_55, %c6_56], %118 {strides = array<i32>} : memref<2x12x72xf32, #tpu.memory_space<vmem>>, vector<1x10x6xf32>,
    %119 = vector.extract_strided_slice %112 {offsets = [0, 12], sizes = [10, 6], strides = [1, 1]} : vector<10x120xf32> to vector<10x6xf32>
    %120 = vector.extract_strided_slice %112 {offsets = [0, 18], sizes = [10, 6], strides = [1, 1]} : vector<10x120xf32> to vector<10x6xf32>
    %121 = arith.maximumf %119, %120 : vector<10x6xf32>
    %c0_57 = arith.constant 0 : index
    %c1_58 = arith.constant 1 : index
    %c12 = arith.constant 12 : index
    %122 = vector.load %arg9[%c0_57, %c1_58, %c12] : memref<2x12x72xf32, #tpu.memory_space<vmem>>, vector<1x10x6xf32>
    %123 = vector.shape_cast %122 : vector<1x10x6xf32> to vector<10x6xf32>
    %124 = vector.shape_cast %121 : vector<10x6xf32> to vector<1x10x6xf32>
    tpu.vector_store %arg9[%c0_57, %c1_58, %c12], %124 {strides = array<i32>} : memref<2x12x72xf32, #tpu.memory_space<vmem>>, vector<1x10x6xf32>,
    %125 = vector.extract_strided_slice %112 {offsets = [0, 24], sizes = [10, 6], strides = [1, 1]} : vector<10x120xf32> to vector<10x6xf32>
    %126 = vector.extract_strided_slice %112 {offsets = [0, 30], sizes = [10, 6], strides = [1, 1]} : vector<10x120xf32> to vector<10x6xf32>
    %127 = arith.maximumf %125, %126 : vector<10x6xf32>
    %c0_59 = arith.constant 0 : index
    %c1_60 = arith.constant 1 : index
    %c18 = arith.constant 18 : index
    %128 = vector.load %arg9[%c0_59, %c1_60, %c18] : memref<2x12x72xf32, #tpu.memory_space<vmem>>, vector<1x10x6xf32>
    %129 = vector.shape_cast %128 : vector<1x10x6xf32> to vector<10x6xf32>
    %130 = vector.shape_cast %127 : vector<10x6xf32> to vector<1x10x6xf32>
    tpu.vector_store %arg9[%c0_59, %c1_60, %c18], %130 {strides = array<i32>} : memref<2x12x72xf32, #tpu.memory_space<vmem>>, vector<1x10x6xf32>,
    %131 = vector.extract_strided_slice %112 {offsets = [0, 36], sizes = [10, 6], strides = [1, 1]} : vector<10x120xf32> to vector<10x6xf32>
    %132 = vector.extract_strided_slice %112 {offsets = [0, 42], sizes = [10, 6], strides = [1, 1]} : vector<10x120xf32> to vector<10x6xf32>
    %133 = arith.maximumf %131, %132 : vector<10x6xf32>
    %c0_61 = arith.constant 0 : index
    %c1_62 = arith.constant 1 : index
    %c24 = arith.constant 24 : index
    %134 = vector.load %arg9[%c0_61, %c1_62, %c24] : memref<2x12x72xf32, #tpu.memory_space<vmem>>, vector<1x10x6xf32>
    %135 = vector.shape_cast %134 : vector<1x10x6xf32> to vector<10x6xf32>
    %136 = vector.shape_cast %133 : vector<10x6xf32> to vector<1x10x6xf32>
    tpu.vector_store %arg9[%c0_61, %c1_62, %c24], %136 {strides = array<i32>} : memref<2x12x72xf32, #tpu.memory_space<vmem>>, vector<1x10x6xf32>,
    %137 = vector.extract_strided_slice %112 {offsets = [0, 48], sizes = [10, 6], strides = [1, 1]} : vector<10x120xf32> to vector<10x6xf32>
    %138 = vector.extract_strided_slice %112 {offsets = [0, 54], sizes = [10, 6], strides = [1, 1]} : vector<10x120xf32> to vector<10x6xf32>
    %139 = arith.maximumf %137, %138 : vector<10x6xf32>
    %c0_63 = arith.constant 0 : index
    %c1_64 = arith.constant 1 : index
    %c30 = arith.constant 30 : index
    %140 = vector.load %arg9[%c0_63, %c1_64, %c30] : memref<2x12x72xf32, #tpu.memory_space<vmem>>, vector<1x10x6xf32>
    %141 = vector.shape_cast %140 : vector<1x10x6xf32> to vector<10x6xf32>
    %142 = vector.shape_cast %139 : vector<10x6xf32> to vector<1x10x6xf32>
    tpu.vector_store %arg9[%c0_63, %c1_64, %c30], %142 {strides = array<i32>} : memref<2x12x72xf32, #tpu.memory_space<vmem>>, vector<1x10x6xf32>,
    %143 = vector.extract_strided_slice %112 {offsets = [0, 60], sizes = [10, 6], strides = [1, 1]} : vector<10x120xf32> to vector<10x6xf32>
    %144 = vector.extract_strided_slice %112 {offsets = [0, 66], sizes = [10, 6], strides = [1, 1]} : vector<10x120xf32> to vector<10x6xf32>
    %145 = arith.maximumf %143, %144 : vector<10x6xf32>
    %c0_65 = arith.constant 0 : index
    %c1_66 = arith.constant 1 : index
    %c36 = arith.constant 36 : index
    %146 = vector.load %arg9[%c0_65, %c1_66, %c36] : memref<2x12x72xf32, #tpu.memory_space<vmem>>, vector<1x10x6xf32>
    %147 = vector.shape_cast %146 : vector<1x10x6xf32> to vector<10x6xf32>
    %148 = vector.shape_cast %145 : vector<10x6xf32> to vector<1x10x6xf32>
    tpu.vector_store %arg9[%c0_65, %c1_66, %c36], %148 {strides = array<i32>} : memref<2x12x72xf32, #tpu.memory_space<vmem>>, vector<1x10x6xf32>,
    %149 = vector.extract_strided_slice %112 {offsets = [0, 72], sizes = [10, 6], strides = [1, 1]} : vector<10x120xf32> to vector<10x6xf32>
    %150 = vector.extract_strided_slice %112 {offsets = [0, 78], sizes = [10, 6], strides = [1, 1]} : vector<10x120xf32> to vector<10x6xf32>
    %151 = arith.maximumf %149, %150 : vector<10x6xf32>
    %c0_67 = arith.constant 0 : index
    %c1_68 = arith.constant 1 : index
    %c42 = arith.constant 42 : index
    %152 = vector.load %arg9[%c0_67, %c1_68, %c42] : memref<2x12x72xf32, #tpu.memory_space<vmem>>, vector<1x10x6xf32>
    %153 = vector.shape_cast %152 : vector<1x10x6xf32> to vector<10x6xf32>
    %154 = vector.shape_cast %151 : vector<10x6xf32> to vector<1x10x6xf32>
    tpu.vector_store %arg9[%c0_67, %c1_68, %c42], %154 {strides = array<i32>} : memref<2x12x72xf32, #tpu.memory_space<vmem>>, vector<1x10x6xf32>,
    %155 = vector.extract_strided_slice %112 {offsets = [0, 84], sizes = [10, 6], strides = [1, 1]} : vector<10x120xf32> to vector<10x6xf32>
    %156 = vector.extract_strided_slice %112 {offsets = [0, 90], sizes = [10, 6], strides = [1, 1]} : vector<10x120xf32> to vector<10x6xf32>
    %157 = arith.maximumf %155, %156 : vector<10x6xf32>
    %c0_69 = arith.constant 0 : index
    %c1_70 = arith.constant 1 : index
    %c48 = arith.constant 48 : index
    %158 = vector.load %arg9[%c0_69, %c1_70, %c48] : memref<2x12x72xf32, #tpu.memory_space<vmem>>, vector<1x10x6xf32>
    %159 = vector.shape_cast %158 : vector<1x10x6xf32> to vector<10x6xf32>
    %160 = vector.shape_cast %157 : vector<10x6xf32> to vector<1x10x6xf32>
    tpu.vector_store %arg9[%c0_69, %c1_70, %c48], %160 {strides = array<i32>} : memref<2x12x72xf32, #tpu.memory_space<vmem>>, vector<1x10x6xf32>,
    %161 = vector.extract_strided_slice %112 {offsets = [0, 96], sizes = [10, 6], strides = [1, 1]} : vector<10x120xf32> to vector<10x6xf32>
    %162 = vector.extract_strided_slice %112 {offsets = [0, 102], sizes = [10, 6], strides = [1, 1]} : vector<10x120xf32> to vector<10x6xf32>
    %163 = arith.maximumf %161, %162 : vector<10x6xf32>
    %c0_71 = arith.constant 0 : index
    %c1_72 = arith.constant 1 : index
    %c54 = arith.constant 54 : index
    %164 = vector.load %arg9[%c0_71, %c1_72, %c54] : memref<2x12x72xf32, #tpu.memory_space<vmem>>, vector<1x10x6xf32>
    %165 = vector.shape_cast %164 : vector<1x10x6xf32> to vector<10x6xf32>
    %166 = vector.shape_cast %163 : vector<10x6xf32> to vector<1x10x6xf32>
    tpu.vector_store %arg9[%c0_71, %c1_72, %c54], %166 {strides = array<i32>} : memref<2x12x72xf32, #tpu.memory_space<vmem>>, vector<1x10x6xf32>,
    %167 = vector.extract_strided_slice %112 {offsets = [0, 108], sizes = [10, 6], strides = [1, 1]} : vector<10x120xf32> to vector<10x6xf32>
    %168 = vector.extract_strided_slice %112 {offsets = [0, 114], sizes = [10, 6], strides = [1, 1]} : vector<10x120xf32> to vector<10x6xf32>
    %169 = arith.maximumf %167, %168 : vector<10x6xf32>
    %c0_73 = arith.constant 0 : index
    %c1_74 = arith.constant 1 : index
    %c60 = arith.constant 60 : index
    %170 = vector.load %arg9[%c0_73, %c1_74, %c60] : memref<2x12x72xf32, #tpu.memory_space<vmem>>, vector<1x10x6xf32>
    %171 = vector.shape_cast %170 : vector<1x10x6xf32> to vector<10x6xf32>
    %172 = vector.shape_cast %169 : vector<10x6xf32> to vector<1x10x6xf32>
    tpu.vector_store %arg9[%c0_73, %c1_74, %c60], %172 {strides = array<i32>} : memref<2x12x72xf32, #tpu.memory_space<vmem>>, vector<1x10x6xf32>,
    %c0_75 = arith.constant 0 : index
    %c0_76 = arith.constant 0 : index
    %c0_77 = arith.constant 0 : index
    %173 = vector.load %arg9[%c0_75, %c0_76, %c0_77] : memref<2x12x72xf32, #tpu.memory_space<vmem>>, vector<1x12x72xf32>
    %174 = vector.shape_cast %173 : vector<1x12x72xf32> to vector<12x72xf32>
    %175 = tpu.iota {dimensions = array<i32: 0>} : vector<12x72xi32>
    %176 = vector.extract_strided_slice %174 {offsets = [0, 0], sizes = [6, 72], strides = [1, 1]} : vector<12x72xf32> to vector<6x72xf32>
    %c0_78 = arith.constant 0 : index
    %c0_79 = arith.constant 0 : index
    %c0_80 = arith.constant 0 : index
    %177 = vector.load %arg3[%c0_78, %c0_79, %c0_80] : memref<11x72x36xf32, #tpu.memory_space<vmem>>, vector<1x72x36xf32>
    %178 = vector.shape_cast %177 : vector<1x72x36xf32> to vector<72x36xf32>
    %cst_81 = arith.constant dense<0.000000e+00> : vector<6x36xf32>
    %179 = tpu.matmul %176, %178, %cst_81 {dimension_numbers = #tpu.dot_dimension_numbers<[1], [0], [0], [1], [0, 0, 1, 1], [], []>} : vector<6x72xf32>, vector<72x36xf32>, vector<6x36xf32> -> vector<6x36xf32>
    %180 = vector.extract_strided_slice %174 {offsets = [1, 0], sizes = [6, 72], strides = [1, 1]} : vector<12x72xf32> to vector<6x72xf32>
    %c1_82 = arith.constant 1 : index
    %c0_83 = arith.constant 0 : index
    %c0_84 = arith.constant 0 : index
    %181 = vector.load %arg3[%c1_82, %c0_83, %c0_84] : memref<11x72x36xf32, #tpu.memory_space<vmem>>, vector<1x72x36xf32>
    %182 = vector.shape_cast %181 : vector<1x72x36xf32> to vector<72x36xf32>
    %cst_85 = arith.constant dense<0.000000e+00> : vector<6x36xf32>
    %183 = tpu.matmul %180, %182, %cst_85 {dimension_numbers = #tpu.dot_dimension_numbers<[1], [0], [0], [1], [0, 0, 1, 1], [], []>} : vector<6x72xf32>, vector<72x36xf32>, vector<6x36xf32> -> vector<6x36xf32>
    %184 = arith.addf %179, %183 : vector<6x36xf32>
    %185 = vector.extract_strided_slice %174 {offsets = [2, 0], sizes = [6, 72], strides = [1, 1]} : vector<12x72xf32> to vector<6x72xf32>
    %c2_86 = arith.constant 2 : index
    %c0_87 = arith.constant 0 : index
    %c0_88 = arith.constant 0 : index
    %186 = vector.load %arg3[%c2_86, %c0_87, %c0_88] : memref<11x72x36xf32, #tpu.memory_space<vmem>>, vector<1x72x36xf32>
    %187 = vector.shape_cast %186 : vector<1x72x36xf32> to vector<72x36xf32>
    %cst_89 = arith.constant dense<0.000000e+00> : vector<6x36xf32>
    %188 = tpu.matmul %185, %187, %cst_89 {dimension_numbers = #tpu.dot_dimension_numbers<[1], [0], [0], [1], [0, 0, 1, 1], [], []>} : vector<6x72xf32>, vector<72x36xf32>, vector<6x36xf32> -> vector<6x36xf32>
    %189 = arith.addf %184, %188 : vector<6x36xf32>
    %190 = vector.extract_strided_slice %174 {offsets = [3, 0], sizes = [6, 72], strides = [1, 1]} : vector<12x72xf32> to vector<6x72xf32>
    %c3_90 = arith.constant 3 : index
    %c0_91 = arith.constant 0 : index
    %c0_92 = arith.constant 0 : index
    %191 = vector.load %arg3[%c3_90, %c0_91, %c0_92] : memref<11x72x36xf32, #tpu.memory_space<vmem>>, vector<1x72x36xf32>
    %192 = vector.shape_cast %191 : vector<1x72x36xf32> to vector<72x36xf32>
    %cst_93 = arith.constant dense<0.000000e+00> : vector<6x36xf32>
    %193 = tpu.matmul %190, %192, %cst_93 {dimension_numbers = #tpu.dot_dimension_numbers<[1], [0], [0], [1], [0, 0, 1, 1], [], []>} : vector<6x72xf32>, vector<72x36xf32>, vector<6x36xf32> -> vector<6x36xf32>
    %194 = arith.addf %189, %193 : vector<6x36xf32>
    %195 = vector.extract_strided_slice %174 {offsets = [4, 0], sizes = [6, 72], strides = [1, 1]} : vector<12x72xf32> to vector<6x72xf32>
    %c4_94 = arith.constant 4 : index
    %c0_95 = arith.constant 0 : index
    %c0_96 = arith.constant 0 : index
    %196 = vector.load %arg3[%c4_94, %c0_95, %c0_96] : memref<11x72x36xf32, #tpu.memory_space<vmem>>, vector<1x72x36xf32>
    %197 = vector.shape_cast %196 : vector<1x72x36xf32> to vector<72x36xf32>
    %cst_97 = arith.constant dense<0.000000e+00> : vector<6x36xf32>
    %198 = tpu.matmul %195, %197, %cst_97 {dimension_numbers = #tpu.dot_dimension_numbers<[1], [0], [0], [1], [0, 0, 1, 1], [], []>} : vector<6x72xf32>, vector<72x36xf32>, vector<6x36xf32> -> vector<6x36xf32>
    %199 = arith.addf %194, %198 : vector<6x36xf32>
    %200 = vector.extract_strided_slice %174 {offsets = [5, 0], sizes = [6, 72], strides = [1, 1]} : vector<12x72xf32> to vector<6x72xf32>
    %c5_98 = arith.constant 5 : index
    %c0_99 = arith.constant 0 : index
    %c0_100 = arith.constant 0 : index
    %201 = vector.load %arg3[%c5_98, %c0_99, %c0_100] : memref<11x72x36xf32, #tpu.memory_space<vmem>>, vector<1x72x36xf32>
    %202 = vector.shape_cast %201 : vector<1x72x36xf32> to vector<72x36xf32>
    %cst_101 = arith.constant dense<0.000000e+00> : vector<6x36xf32>
    %203 = tpu.matmul %200, %202, %cst_101 {dimension_numbers = #tpu.dot_dimension_numbers<[1], [0], [0], [1], [0, 0, 1, 1], [], []>} : vector<6x72xf32>, vector<72x36xf32>, vector<6x36xf32> -> vector<6x36xf32>
    %204 = arith.addf %199, %203 : vector<6x36xf32>
    %205 = vector.extract_strided_slice %174 {offsets = [6, 0], sizes = [6, 72], strides = [1, 1]} : vector<12x72xf32> to vector<6x72xf32>
    %c6_102 = arith.constant 6 : index
    %c0_103 = arith.constant 0 : index
    %c0_104 = arith.constant 0 : index
    %206 = vector.load %arg3[%c6_102, %c0_103, %c0_104] : memref<11x72x36xf32, #tpu.memory_space<vmem>>, vector<1x72x36xf32>
    %207 = vector.shape_cast %206 : vector<1x72x36xf32> to vector<72x36xf32>
    %cst_105 = arith.constant dense<0.000000e+00> : vector<6x36xf32>
    %208 = tpu.matmul %205, %207, %cst_105 {dimension_numbers = #tpu.dot_dimension_numbers<[1], [0], [0], [1], [0, 0, 1, 1], [], []>} : vector<6x72xf32>, vector<72x36xf32>, vector<6x36xf32> -> vector<6x36xf32>
    %209 = arith.addf %204, %208 : vector<6x36xf32>
    %c2_i32_106 = arith.constant 2 : i32
    %210 = vector.broadcast %c2_i32_106 : i32 to vector<12x72xi32>
    %211 = arith.cmpi eq, %175, %210 : vector<12x72xi32>
    %c9_i32 = arith.constant 9 : i32
    %212 = vector.broadcast %c9_i32 : i32 to vector<12x72xi32>
    %213 = arith.cmpi eq, %175, %212 : vector<12x72xi32>
    %214 = arith.ori %211, %213 : vector<12x72xi1>
    %cst_107 = arith.constant 0.000000e+00 : f32
    %215 = vector.broadcast %cst_107 : f32 to vector<12x72xf32>
    %216 = arith.select %214, %215, %174 : vector<12x72xi1>, vector<12x72xf32>
    %217 = vector.extract_strided_slice %216 {offsets = [2, 0], sizes = [6, 72], strides = [1, 1]} : vector<12x72xf32> to vector<6x72xf32>
    %c7_108 = arith.constant 7 : index
    %c0_109 = arith.constant 0 : index
    %c0_110 = arith.constant 0 : index
    %218 = vector.load %arg3[%c7_108, %c0_109, %c0_110] : memref<11x72x36xf32, #tpu.memory_space<vmem>>, vector<1x72x36xf32>
    %219 = vector.shape_cast %218 : vector<1x72x36xf32> to vector<72x36xf32>
    %cst_111 = arith.constant dense<0.000000e+00> : vector<6x36xf32>
    %220 = tpu.matmul %217, %219, %cst_111 {dimension_numbers = #tpu.dot_dimension_numbers<[1], [0], [0], [1], [0, 0, 1, 1], [], []>} : vector<6x72xf32>, vector<72x36xf32>, vector<6x36xf32> -> vector<6x36xf32>
    %221 = arith.addf %209, %220 : vector<6x36xf32>
    %222 = vector.extract_strided_slice %216 {offsets = [3, 0], sizes = [6, 72], strides = [1, 1]} : vector<12x72xf32> to vector<6x72xf32>
    %c8_112 = arith.constant 8 : index
    %c0_113 = arith.constant 0 : index
    %c0_114 = arith.constant 0 : index
    %223 = vector.load %arg3[%c8_112, %c0_113, %c0_114] : memref<11x72x36xf32, #tpu.memory_space<vmem>>, vector<1x72x36xf32>
    %224 = vector.shape_cast %223 : vector<1x72x36xf32> to vector<72x36xf32>
    %cst_115 = arith.constant dense<0.000000e+00> : vector<6x36xf32>
    %225 = tpu.matmul %222, %224, %cst_115 {dimension_numbers = #tpu.dot_dimension_numbers<[1], [0], [0], [1], [0, 0, 1, 1], [], []>} : vector<6x72xf32>, vector<72x36xf32>, vector<6x36xf32> -> vector<6x36xf32>
    %226 = arith.addf %221, %225 : vector<6x36xf32>
    %227 = vector.extract_strided_slice %216 {offsets = [4, 0], sizes = [6, 72], strides = [1, 1]} : vector<12x72xf32> to vector<6x72xf32>
    %c9_116 = arith.constant 9 : index
    %c0_117 = arith.constant 0 : index
    %c0_118 = arith.constant 0 : index
    %228 = vector.load %arg3[%c9_116, %c0_117, %c0_118] : memref<11x72x36xf32, #tpu.memory_space<vmem>>, vector<1x72x36xf32>
    %229 = vector.shape_cast %228 : vector<1x72x36xf32> to vector<72x36xf32>
    %cst_119 = arith.constant dense<0.000000e+00> : vector<6x36xf32>
    %230 = tpu.matmul %227, %229, %cst_119 {dimension_numbers = #tpu.dot_dimension_numbers<[1], [0], [0], [1], [0, 0, 1, 1], [], []>} : vector<6x72xf32>, vector<72x36xf32>, vector<6x36xf32> -> vector<6x36xf32>
    %231 = arith.addf %226, %230 : vector<6x36xf32>
    %c3_i32_120 = arith.constant 3 : i32
    %232 = vector.broadcast %c3_i32_120 : i32 to vector<12x72xi32>
    %233 = arith.cmpi eq, %175, %232 : vector<12x72xi32>
    %c8_i32 = arith.constant 8 : i32
    %234 = vector.broadcast %c8_i32 : i32 to vector<12x72xi32>
    %235 = arith.cmpi eq, %175, %234 : vector<12x72xi32>
    %236 = arith.ori %233, %235 : vector<12x72xi1>
    %cst_121 = arith.constant 0.000000e+00 : f32
    %237 = vector.broadcast %cst_121 : f32 to vector<12x72xf32>
    %238 = arith.select %236, %237, %174 : vector<12x72xi1>, vector<12x72xf32>
    %239 = vector.extract_strided_slice %238 {offsets = [3, 0], sizes = [6, 72], strides = [1, 1]} : vector<12x72xf32> to vector<6x72xf32>
    %c10_122 = arith.constant 10 : index
    %c0_123 = arith.constant 0 : index
    %c0_124 = arith.constant 0 : index
    %240 = vector.load %arg3[%c10_122, %c0_123, %c0_124] : memref<11x72x36xf32, #tpu.memory_space<vmem>>, vector<1x72x36xf32>
    %241 = vector.shape_cast %240 : vector<1x72x36xf32> to vector<72x36xf32>
    %cst_125 = arith.constant dense<0.000000e+00> : vector<6x36xf32>
    %242 = tpu.matmul %239, %241, %cst_125 {dimension_numbers = #tpu.dot_dimension_numbers<[1], [0], [0], [1], [0, 0, 1, 1], [], []>} : vector<6x72xf32>, vector<72x36xf32>, vector<6x36xf32> -> vector<6x36xf32>
    %243 = arith.addf %231, %242 : vector<6x36xf32>
    %c0_126 = arith.constant 0 : index
    %c0_127 = arith.constant 0 : index
    %244 = vector.load %arg4[%c0_126, %c0_127] : memref<1x36xf32, #tpu.memory_space<vmem>>, vector<1x36xf32>
    %245 = vector.broadcast %244 : vector<1x36xf32> to vector<6x36xf32>
    %246 = arith.addf %243, %245 : vector<6x36xf32>
    %cst_128 = arith.constant 0.000000e+00 : f32
    %247 = vector.broadcast %cst_128 : f32 to vector<6x36xf32>
    %248 = arith.maximumf %246, %247 : vector<6x36xf32>
    %c0_129 = arith.constant 0 : index
    %c0_130 = arith.constant 0 : index
    %249 = vector.load %arg6[%c0_129, %c0_130] : memref<1x12xf32, #tpu.memory_space<vmem>>, vector<1x12xf32>
    %250 = vector.extract_strided_slice %248 {offsets = [0, 0], sizes = [1, 36], strides = [1, 1]} : vector<6x36xf32> to vector<1x36xf32>
    %251 = vector.extract_strided_slice %248 {offsets = [1, 0], sizes = [1, 36], strides = [1, 1]} : vector<6x36xf32> to vector<1x36xf32>
    %252 = arith.maximumf %250, %251 : vector<1x36xf32>
    %253 = vector.extract_strided_slice %252 {offsets = [0, 0], sizes = [1, 6], strides = [1, 1]} : vector<1x36xf32> to vector<1x6xf32>
    %254 = vector.extract_strided_slice %252 {offsets = [0, 6], sizes = [1, 6], strides = [1, 1]} : vector<1x36xf32> to vector<1x6xf32>
    %255 = arith.maximumf %253, %254 : vector<1x6xf32>
    %c0_131 = arith.constant 0 : index
    %c0_132 = arith.constant 0 : index
    %c0_133 = arith.constant 0 : index
    %c0_134 = arith.constant 0 : index
    %256 = vector.load %arg5[%c0_131, %c0_132, %c0_133, %c0_134] : memref<3x3x6x12xf32, #tpu.memory_space<vmem>>, vector<1x1x6x12xf32>
    %257 = vector.shape_cast %256 : vector<1x1x6x12xf32> to vector<6x12xf32>
    %cst_135 = arith.constant dense<0.000000e+00> : vector<1x12xf32>
    %258 = tpu.matmul %255, %257, %cst_135 {dimension_numbers = #tpu.dot_dimension_numbers<[1], [0], [0], [1], [0, 0, 1, 1], [], []>} : vector<1x6xf32>, vector<6x12xf32>, vector<1x12xf32> -> vector<1x12xf32>
    %259 = arith.addf %249, %258 : vector<1x12xf32>
    %260 = vector.extract_strided_slice %252 {offsets = [0, 12], sizes = [1, 6], strides = [1, 1]} : vector<1x36xf32> to vector<1x6xf32>
    %261 = vector.extract_strided_slice %252 {offsets = [0, 18], sizes = [1, 6], strides = [1, 1]} : vector<1x36xf32> to vector<1x6xf32>
    %262 = arith.maximumf %260, %261 : vector<1x6xf32>
    %c0_136 = arith.constant 0 : index
    %c1_137 = arith.constant 1 : index
    %c0_138 = arith.constant 0 : index
    %c0_139 = arith.constant 0 : index
    %263 = vector.load %arg5[%c0_136, %c1_137, %c0_138, %c0_139] : memref<3x3x6x12xf32, #tpu.memory_space<vmem>>, vector<1x1x6x12xf32>
    %264 = vector.shape_cast %263 : vector<1x1x6x12xf32> to vector<6x12xf32>
    %cst_140 = arith.constant dense<0.000000e+00> : vector<1x12xf32>
    %265 = tpu.matmul %262, %264, %cst_140 {dimension_numbers = #tpu.dot_dimension_numbers<[1], [0], [0], [1], [0, 0, 1, 1], [], []>} : vector<1x6xf32>, vector<6x12xf32>, vector<1x12xf32> -> vector<1x12xf32>
    %266 = arith.addf %259, %265 : vector<1x12xf32>
    %267 = vector.extract_strided_slice %252 {offsets = [0, 24], sizes = [1, 6], strides = [1, 1]} : vector<1x36xf32> to vector<1x6xf32>
    %268 = vector.extract_strided_slice %252 {offsets = [0, 30], sizes = [1, 6], strides = [1, 1]} : vector<1x36xf32> to vector<1x6xf32>
    %269 = arith.maximumf %267, %268 : vector<1x6xf32>
    %c0_141 = arith.constant 0 : index
    %c2_142 = arith.constant 2 : index
    %c0_143 = arith.constant 0 : index
    %c0_144 = arith.constant 0 : index
    %270 = vector.load %arg5[%c0_141, %c2_142, %c0_143, %c0_144] : memref<3x3x6x12xf32, #tpu.memory_space<vmem>>, vector<1x1x6x12xf32>
    %271 = vector.shape_cast %270 : vector<1x1x6x12xf32> to vector<6x12xf32>
    %cst_145 = arith.constant dense<0.000000e+00> : vector<1x12xf32>
    %272 = tpu.matmul %269, %271, %cst_145 {dimension_numbers = #tpu.dot_dimension_numbers<[1], [0], [0], [1], [0, 0, 1, 1], [], []>} : vector<1x6xf32>, vector<6x12xf32>, vector<1x12xf32> -> vector<1x12xf32>
    %273 = arith.addf %266, %272 : vector<1x12xf32>
    %274 = vector.extract_strided_slice %248 {offsets = [2, 0], sizes = [1, 36], strides = [1, 1]} : vector<6x36xf32> to vector<1x36xf32>
    %275 = vector.extract_strided_slice %248 {offsets = [3, 0], sizes = [1, 36], strides = [1, 1]} : vector<6x36xf32> to vector<1x36xf32>
    %276 = arith.maximumf %274, %275 : vector<1x36xf32>
    %277 = vector.extract_strided_slice %276 {offsets = [0, 0], sizes = [1, 6], strides = [1, 1]} : vector<1x36xf32> to vector<1x6xf32>
    %278 = vector.extract_strided_slice %276 {offsets = [0, 6], sizes = [1, 6], strides = [1, 1]} : vector<1x36xf32> to vector<1x6xf32>
    %279 = arith.maximumf %277, %278 : vector<1x6xf32>
    %c1_146 = arith.constant 1 : index
    %c0_147 = arith.constant 0 : index
    %c0_148 = arith.constant 0 : index
    %c0_149 = arith.constant 0 : index
    %280 = vector.load %arg5[%c1_146, %c0_147, %c0_148, %c0_149] : memref<3x3x6x12xf32, #tpu.memory_space<vmem>>, vector<1x1x6x12xf32>
    %281 = vector.shape_cast %280 : vector<1x1x6x12xf32> to vector<6x12xf32>
    %cst_150 = arith.constant dense<0.000000e+00> : vector<1x12xf32>
    %282 = tpu.matmul %279, %281, %cst_150 {dimension_numbers = #tpu.dot_dimension_numbers<[1], [0], [0], [1], [0, 0, 1, 1], [], []>} : vector<1x6xf32>, vector<6x12xf32>, vector<1x12xf32> -> vector<1x12xf32>
    %283 = arith.addf %273, %282 : vector<1x12xf32>
    %284 = vector.extract_strided_slice %276 {offsets = [0, 12], sizes = [1, 6], strides = [1, 1]} : vector<1x36xf32> to vector<1x6xf32>
    %285 = vector.extract_strided_slice %276 {offsets = [0, 18], sizes = [1, 6], strides = [1, 1]} : vector<1x36xf32> to vector<1x6xf32>
    %286 = arith.maximumf %284, %285 : vector<1x6xf32>
    %c1_151 = arith.constant 1 : index
    %c1_152 = arith.constant 1 : index
    %c0_153 = arith.constant 0 : index
    %c0_154 = arith.constant 0 : index
    %287 = vector.load %arg5[%c1_151, %c1_152, %c0_153, %c0_154] : memref<3x3x6x12xf32, #tpu.memory_space<vmem>>, vector<1x1x6x12xf32>
    %288 = vector.shape_cast %287 : vector<1x1x6x12xf32> to vector<6x12xf32>
    %cst_155 = arith.constant dense<0.000000e+00> : vector<1x12xf32>
    %289 = tpu.matmul %286, %288, %cst_155 {dimension_numbers = #tpu.dot_dimension_numbers<[1], [0], [0], [1], [0, 0, 1, 1], [], []>} : vector<1x6xf32>, vector<6x12xf32>, vector<1x12xf32> -> vector<1x12xf32>
    %290 = arith.addf %283, %289 : vector<1x12xf32>
    %291 = vector.extract_strided_slice %276 {offsets = [0, 24], sizes = [1, 6], strides = [1, 1]} : vector<1x36xf32> to vector<1x6xf32>
    %292 = vector.extract_strided_slice %276 {offsets = [0, 30], sizes = [1, 6], strides = [1, 1]} : vector<1x36xf32> to vector<1x6xf32>
    %293 = arith.maximumf %291, %292 : vector<1x6xf32>
    %c1_156 = arith.constant 1 : index
    %c2_157 = arith.constant 2 : index
    %c0_158 = arith.constant 0 : index
    %c0_159 = arith.constant 0 : index
    %294 = vector.load %arg5[%c1_156, %c2_157, %c0_158, %c0_159] : memref<3x3x6x12xf32, #tpu.memory_space<vmem>>, vector<1x1x6x12xf32>
    %295 = vector.shape_cast %294 : vector<1x1x6x12xf32> to vector<6x12xf32>
    %cst_160 = arith.constant dense<0.000000e+00> : vector<1x12xf32>
    %296 = tpu.matmul %293, %295, %cst_160 {dimension_numbers = #tpu.dot_dimension_numbers<[1], [0], [0], [1], [0, 0, 1, 1], [], []>} : vector<1x6xf32>, vector<6x12xf32>, vector<1x12xf32> -> vector<1x12xf32>
    %297 = arith.addf %290, %296 : vector<1x12xf32>
    %298 = vector.extract_strided_slice %248 {offsets = [4, 0], sizes = [1, 36], strides = [1, 1]} : vector<6x36xf32> to vector<1x36xf32>
    %299 = vector.extract_strided_slice %248 {offsets = [5, 0], sizes = [1, 36], strides = [1, 1]} : vector<6x36xf32> to vector<1x36xf32>
    %300 = arith.maximumf %298, %299 : vector<1x36xf32>
    %301 = vector.extract_strided_slice %300 {offsets = [0, 0], sizes = [1, 6], strides = [1, 1]} : vector<1x36xf32> to vector<1x6xf32>
    %302 = vector.extract_strided_slice %300 {offsets = [0, 6], sizes = [1, 6], strides = [1, 1]} : vector<1x36xf32> to vector<1x6xf32>
    %303 = arith.maximumf %301, %302 : vector<1x6xf32>
    %c2_161 = arith.constant 2 : index
    %c0_162 = arith.constant 0 : index
    %c0_163 = arith.constant 0 : index
    %c0_164 = arith.constant 0 : index
    %304 = vector.load %arg5[%c2_161, %c0_162, %c0_163, %c0_164] : memref<3x3x6x12xf32, #tpu.memory_space<vmem>>, vector<1x1x6x12xf32>
    %305 = vector.shape_cast %304 : vector<1x1x6x12xf32> to vector<6x12xf32>
    %cst_165 = arith.constant dense<0.000000e+00> : vector<1x12xf32>
    %306 = tpu.matmul %303, %305, %cst_165 {dimension_numbers = #tpu.dot_dimension_numbers<[1], [0], [0], [1], [0, 0, 1, 1], [], []>} : vector<1x6xf32>, vector<6x12xf32>, vector<1x12xf32> -> vector<1x12xf32>
    %307 = arith.addf %297, %306 : vector<1x12xf32>
    %308 = vector.extract_strided_slice %300 {offsets = [0, 12], sizes = [1, 6], strides = [1, 1]} : vector<1x36xf32> to vector<1x6xf32>
    %309 = vector.extract_strided_slice %300 {offsets = [0, 18], sizes = [1, 6], strides = [1, 1]} : vector<1x36xf32> to vector<1x6xf32>
    %310 = arith.maximumf %308, %309 : vector<1x6xf32>
    %c2_166 = arith.constant 2 : index
    %c1_167 = arith.constant 1 : index
    %c0_168 = arith.constant 0 : index
    %c0_169 = arith.constant 0 : index
    %311 = vector.load %arg5[%c2_166, %c1_167, %c0_168, %c0_169] : memref<3x3x6x12xf32, #tpu.memory_space<vmem>>, vector<1x1x6x12xf32>
    %312 = vector.shape_cast %311 : vector<1x1x6x12xf32> to vector<6x12xf32>
    %cst_170 = arith.constant dense<0.000000e+00> : vector<1x12xf32>
    %313 = tpu.matmul %310, %312, %cst_170 {dimension_numbers = #tpu.dot_dimension_numbers<[1], [0], [0], [1], [0, 0, 1, 1], [], []>} : vector<1x6xf32>, vector<6x12xf32>, vector<1x12xf32> -> vector<1x12xf32>
    %314 = arith.addf %307, %313 : vector<1x12xf32>
    %315 = vector.extract_strided_slice %300 {offsets = [0, 24], sizes = [1, 6], strides = [1, 1]} : vector<1x36xf32> to vector<1x6xf32>
    %316 = vector.extract_strided_slice %300 {offsets = [0, 30], sizes = [1, 6], strides = [1, 1]} : vector<1x36xf32> to vector<1x6xf32>
    %317 = arith.maximumf %315, %316 : vector<1x6xf32>
    %c2_171 = arith.constant 2 : index
    %c2_172 = arith.constant 2 : index
    %c0_173 = arith.constant 0 : index
    %c0_174 = arith.constant 0 : index
    %318 = vector.load %arg5[%c2_171, %c2_172, %c0_173, %c0_174] : memref<3x3x6x12xf32, #tpu.memory_space<vmem>>, vector<1x1x6x12xf32>
    %319 = vector.shape_cast %318 : vector<1x1x6x12xf32> to vector<6x12xf32>
    %cst_175 = arith.constant dense<0.000000e+00> : vector<1x12xf32>
    %320 = tpu.matmul %317, %319, %cst_175 {dimension_numbers = #tpu.dot_dimension_numbers<[1], [0], [0], [1], [0, 0, 1, 1], [], []>} : vector<1x6xf32>, vector<6x12xf32>, vector<1x12xf32> -> vector<1x12xf32>
    %321 = arith.addf %314, %320 : vector<1x12xf32>
    %c0_176 = arith.constant 0 : index
    %c0_177 = arith.constant 0 : index
    %322 = vector.load %arg7[%c0_176, %c0_177] : memref<2x12xf32, #tpu.memory_space<vmem>>, vector<1x12xf32>
    tpu.vector_store %arg7[%c0_176, %c0_177], %321 {strides = array<i32>} : memref<2x12xf32, #tpu.memory_space<vmem>>, vector<1x12xf32>,
    %c1_178 = arith.constant 1 : index
    %c0_179 = arith.constant 0 : index
    %c0_180 = arith.constant 0 : index
    %323 = vector.load %arg8[%c1_178, %c0_179, %c0_180] : memref<2x26x78xf32, #tpu.memory_space<vmem>>, vector<1x26x78xf32>
    %324 = vector.shape_cast %323 : vector<1x26x78xf32> to vector<26x78xf32>
    %325 = tpu.iota {dimensions = array<i32: 0>} : vector<26x78xi32>
    %326 = vector.extract_strided_slice %324 {offsets = [0, 0], sizes = [20, 78], strides = [1, 1]} : vector<26x78xf32> to vector<20x78xf32>
    %c0_181 = arith.constant 0 : index
    %c0_182 = arith.constant 0 : index
    %c0_183 = arith.constant 0 : index
    %327 = vector.load %arg1[%c0_181, %c0_182, %c0_183] : memref<11x78x120xf32, #tpu.memory_space<vmem>>, vector<1x78x120xf32>
    %328 = vector.shape_cast %327 : vector<1x78x120xf32> to vector<78x120xf32>
    %cst_184 = arith.constant dense<0.000000e+00> : vector<20x120xf32>
    %329 = tpu.matmul %326, %328, %cst_184 {dimension_numbers = #tpu.dot_dimension_numbers<[1], [0], [0], [1], [0, 0, 1, 1], [], []>} : vector<20x78xf32>, vector<78x120xf32>, vector<20x120xf32> -> vector<20x120xf32>
    %330 = vector.extract_strided_slice %324 {offsets = [1, 0], sizes = [20, 78], strides = [1, 1]} : vector<26x78xf32> to vector<20x78xf32>
    %c1_185 = arith.constant 1 : index
    %c0_186 = arith.constant 0 : index
    %c0_187 = arith.constant 0 : index
    %331 = vector.load %arg1[%c1_185, %c0_186, %c0_187] : memref<11x78x120xf32, #tpu.memory_space<vmem>>, vector<1x78x120xf32>
    %332 = vector.shape_cast %331 : vector<1x78x120xf32> to vector<78x120xf32>
    %cst_188 = arith.constant dense<0.000000e+00> : vector<20x120xf32>
    %333 = tpu.matmul %330, %332, %cst_188 {dimension_numbers = #tpu.dot_dimension_numbers<[1], [0], [0], [1], [0, 0, 1, 1], [], []>} : vector<20x78xf32>, vector<78x120xf32>, vector<20x120xf32> -> vector<20x120xf32>
    %334 = arith.addf %329, %333 : vector<20x120xf32>
    %335 = vector.extract_strided_slice %324 {offsets = [2, 0], sizes = [20, 78], strides = [1, 1]} : vector<26x78xf32> to vector<20x78xf32>
    %c2_189 = arith.constant 2 : index
    %c0_190 = arith.constant 0 : index
    %c0_191 = arith.constant 0 : index
    %336 = vector.load %arg1[%c2_189, %c0_190, %c0_191] : memref<11x78x120xf32, #tpu.memory_space<vmem>>, vector<1x78x120xf32>
    %337 = vector.shape_cast %336 : vector<1x78x120xf32> to vector<78x120xf32>
    %cst_192 = arith.constant dense<0.000000e+00> : vector<20x120xf32>
    %338 = tpu.matmul %335, %337, %cst_192 {dimension_numbers = #tpu.dot_dimension_numbers<[1], [0], [0], [1], [0, 0, 1, 1], [], []>} : vector<20x78xf32>, vector<78x120xf32>, vector<20x120xf32> -> vector<20x120xf32>
    %339 = arith.addf %334, %338 : vector<20x120xf32>
    %340 = vector.extract_strided_slice %324 {offsets = [3, 0], sizes = [20, 78], strides = [1, 1]} : vector<26x78xf32> to vector<20x78xf32>
    %c3_193 = arith.constant 3 : index
    %c0_194 = arith.constant 0 : index
    %c0_195 = arith.constant 0 : index
    %341 = vector.load %arg1[%c3_193, %c0_194, %c0_195] : memref<11x78x120xf32, #tpu.memory_space<vmem>>, vector<1x78x120xf32>
    %342 = vector.shape_cast %341 : vector<1x78x120xf32> to vector<78x120xf32>
    %cst_196 = arith.constant dense<0.000000e+00> : vector<20x120xf32>
    %343 = tpu.matmul %340, %342, %cst_196 {dimension_numbers = #tpu.dot_dimension_numbers<[1], [0], [0], [1], [0, 0, 1, 1], [], []>} : vector<20x78xf32>, vector<78x120xf32>, vector<20x120xf32> -> vector<20x120xf32>
    %344 = arith.addf %339, %343 : vector<20x120xf32>
    %345 = vector.extract_strided_slice %324 {offsets = [4, 0], sizes = [20, 78], strides = [1, 1]} : vector<26x78xf32> to vector<20x78xf32>
    %c4_197 = arith.constant 4 : index
    %c0_198 = arith.constant 0 : index
    %c0_199 = arith.constant 0 : index
    %346 = vector.load %arg1[%c4_197, %c0_198, %c0_199] : memref<11x78x120xf32, #tpu.memory_space<vmem>>, vector<1x78x120xf32>
    %347 = vector.shape_cast %346 : vector<1x78x120xf32> to vector<78x120xf32>
    %cst_200 = arith.constant dense<0.000000e+00> : vector<20x120xf32>
    %348 = tpu.matmul %345, %347, %cst_200 {dimension_numbers = #tpu.dot_dimension_numbers<[1], [0], [0], [1], [0, 0, 1, 1], [], []>} : vector<20x78xf32>, vector<78x120xf32>, vector<20x120xf32> -> vector<20x120xf32>
    %349 = arith.addf %344, %348 : vector<20x120xf32>
    %350 = vector.extract_strided_slice %324 {offsets = [5, 0], sizes = [20, 78], strides = [1, 1]} : vector<26x78xf32> to vector<20x78xf32>
    %c5_201 = arith.constant 5 : index
    %c0_202 = arith.constant 0 : index
    %c0_203 = arith.constant 0 : index
    %351 = vector.load %arg1[%c5_201, %c0_202, %c0_203] : memref<11x78x120xf32, #tpu.memory_space<vmem>>, vector<1x78x120xf32>
    %352 = vector.shape_cast %351 : vector<1x78x120xf32> to vector<78x120xf32>
    %cst_204 = arith.constant dense<0.000000e+00> : vector<20x120xf32>
    %353 = tpu.matmul %350, %352, %cst_204 {dimension_numbers = #tpu.dot_dimension_numbers<[1], [0], [0], [1], [0, 0, 1, 1], [], []>} : vector<20x78xf32>, vector<78x120xf32>, vector<20x120xf32> -> vector<20x120xf32>
    %354 = arith.addf %349, %353 : vector<20x120xf32>
    %355 = vector.extract_strided_slice %324 {offsets = [6, 0], sizes = [20, 78], strides = [1, 1]} : vector<26x78xf32> to vector<20x78xf32>
    %c6_205 = arith.constant 6 : index
    %c0_206 = arith.constant 0 : index
    %c0_207 = arith.constant 0 : index
    %356 = vector.load %arg1[%c6_205, %c0_206, %c0_207] : memref<11x78x120xf32, #tpu.memory_space<vmem>>, vector<1x78x120xf32>
    %357 = vector.shape_cast %356 : vector<1x78x120xf32> to vector<78x120xf32>
    %cst_208 = arith.constant dense<0.000000e+00> : vector<20x120xf32>
    %358 = tpu.matmul %355, %357, %cst_208 {dimension_numbers = #tpu.dot_dimension_numbers<[1], [0], [0], [1], [0, 0, 1, 1], [], []>} : vector<20x78xf32>, vector<78x120xf32>, vector<20x120xf32> -> vector<20x120xf32>
    %359 = arith.addf %354, %358 : vector<20x120xf32>
    %c2_i32_209 = arith.constant 2 : i32
    %360 = vector.broadcast %c2_i32_209 : i32 to vector<26x78xi32>
    %361 = arith.cmpi eq, %325, %360 : vector<26x78xi32>
    %c23_i32_210 = arith.constant 23 : i32
    %362 = vector.broadcast %c23_i32_210 : i32 to vector<26x78xi32>
    %363 = arith.cmpi eq, %325, %362 : vector<26x78xi32>
    %364 = arith.ori %361, %363 : vector<26x78xi1>
    %cst_211 = arith.constant 0.000000e+00 : f32
    %365 = vector.broadcast %cst_211 : f32 to vector<26x78xf32>
    %366 = arith.select %364, %365, %324 : vector<26x78xi1>, vector<26x78xf32>
    %367 = vector.extract_strided_slice %366 {offsets = [2, 0], sizes = [20, 78], strides = [1, 1]} : vector<26x78xf32> to vector<20x78xf32>
    %c7_212 = arith.constant 7 : index
    %c0_213 = arith.constant 0 : index
    %c0_214 = arith.constant 0 : index
    %368 = vector.load %arg1[%c7_212, %c0_213, %c0_214] : memref<11x78x120xf32, #tpu.memory_space<vmem>>, vector<1x78x120xf32>
    %369 = vector.shape_cast %368 : vector<1x78x120xf32> to vector<78x120xf32>
    %cst_215 = arith.constant dense<0.000000e+00> : vector<20x120xf32>
    %370 = tpu.matmul %367, %369, %cst_215 {dimension_numbers = #tpu.dot_dimension_numbers<[1], [0], [0], [1], [0, 0, 1, 1], [], []>} : vector<20x78xf32>, vector<78x120xf32>, vector<20x120xf32> -> vector<20x120xf32>
    %371 = arith.addf %359, %370 : vector<20x120xf32>
    %372 = vector.extract_strided_slice %366 {offsets = [3, 0], sizes = [20, 78], strides = [1, 1]} : vector<26x78xf32> to vector<20x78xf32>
    %c8_216 = arith.constant 8 : index
    %c0_217 = arith.constant 0 : index
    %c0_218 = arith.constant 0 : index
    %373 = vector.load %arg1[%c8_216, %c0_217, %c0_218] : memref<11x78x120xf32, #tpu.memory_space<vmem>>, vector<1x78x120xf32>
    %374 = vector.shape_cast %373 : vector<1x78x120xf32> to vector<78x120xf32>
    %cst_219 = arith.constant dense<0.000000e+00> : vector<20x120xf32>
    %375 = tpu.matmul %372, %374, %cst_219 {dimension_numbers = #tpu.dot_dimension_numbers<[1], [0], [0], [1], [0, 0, 1, 1], [], []>} : vector<20x78xf32>, vector<78x120xf32>, vector<20x120xf32> -> vector<20x120xf32>
    %376 = arith.addf %371, %375 : vector<20x120xf32>
    %377 = vector.extract_strided_slice %366 {offsets = [4, 0], sizes = [20, 78], strides = [1, 1]} : vector<26x78xf32> to vector<20x78xf32>
    %c9_220 = arith.constant 9 : index
    %c0_221 = arith.constant 0 : index
    %c0_222 = arith.constant 0 : index
    %378 = vector.load %arg1[%c9_220, %c0_221, %c0_222] : memref<11x78x120xf32, #tpu.memory_space<vmem>>, vector<1x78x120xf32>
    %379 = vector.shape_cast %378 : vector<1x78x120xf32> to vector<78x120xf32>
    %cst_223 = arith.constant dense<0.000000e+00> : vector<20x120xf32>
    %380 = tpu.matmul %377, %379, %cst_223 {dimension_numbers = #tpu.dot_dimension_numbers<[1], [0], [0], [1], [0, 0, 1, 1], [], []>} : vector<20x78xf32>, vector<78x120xf32>, vector<20x120xf32> -> vector<20x120xf32>
    %381 = arith.addf %376, %380 : vector<20x120xf32>
    %c3_i32_224 = arith.constant 3 : i32
    %382 = vector.broadcast %c3_i32_224 : i32 to vector<26x78xi32>
    %383 = arith.cmpi eq, %325, %382 : vector<26x78xi32>
    %c22_i32_225 = arith.constant 22 : i32
    %384 = vector.broadcast %c22_i32_225 : i32 to vector<26x78xi32>
    %385 = arith.cmpi eq, %325, %384 : vector<26x78xi32>
    %386 = arith.ori %383, %385 : vector<26x78xi1>
    %cst_226 = arith.constant 0.000000e+00 : f32
    %387 = vector.broadcast %cst_226 : f32 to vector<26x78xf32>
    %388 = arith.select %386, %387, %324 : vector<26x78xi1>, vector<26x78xf32>
    %389 = vector.extract_strided_slice %388 {offsets = [3, 0], sizes = [20, 78], strides = [1, 1]} : vector<26x78xf32> to vector<20x78xf32>
    %c10_227 = arith.constant 10 : index
    %c0_228 = arith.constant 0 : index
    %c0_229 = arith.constant 0 : index
    %390 = vector.load %arg1[%c10_227, %c0_228, %c0_229] : memref<11x78x120xf32, #tpu.memory_space<vmem>>, vector<1x78x120xf32>
    %391 = vector.shape_cast %390 : vector<1x78x120xf32> to vector<78x120xf32>
    %cst_230 = arith.constant dense<0.000000e+00> : vector<20x120xf32>
    %392 = tpu.matmul %389, %391, %cst_230 {dimension_numbers = #tpu.dot_dimension_numbers<[1], [0], [0], [1], [0, 0, 1, 1], [], []>} : vector<20x78xf32>, vector<78x120xf32>, vector<20x120xf32> -> vector<20x120xf32>
    %393 = arith.addf %381, %392 : vector<20x120xf32>
    %c0_231 = arith.constant 0 : index
    %c0_232 = arith.constant 0 : index
    %394 = vector.load %arg2[%c0_231, %c0_232] : memref<1x120xf32, #tpu.memory_space<vmem>>, vector<1x120xf32>
    %395 = vector.broadcast %394 : vector<1x120xf32> to vector<20x120xf32>
    %396 = arith.addf %393, %395 : vector<20x120xf32>
    %cst_233 = arith.constant 0.000000e+00 : f32
    %397 = vector.broadcast %cst_233 : f32 to vector<20x120xf32>
    %398 = arith.maximumf %396, %397 : vector<20x120xf32>
    %399 = vector.extract_strided_slice %398 {offsets = [0, 0], sizes = [1, 120], strides = [1, 1]} : vector<20x120xf32> to vector<1x120xf32>
    %400 = vector.extract_strided_slice %398 {offsets = [1, 0], sizes = [1, 120], strides = [1, 1]} : vector<20x120xf32> to vector<1x120xf32>
    %401 = arith.maximumf %399, %400 : vector<1x120xf32>
    %402 = vector.extract_strided_slice %398 {offsets = [2, 0], sizes = [1, 120], strides = [1, 1]} : vector<20x120xf32> to vector<1x120xf32>
    %403 = vector.extract_strided_slice %398 {offsets = [3, 0], sizes = [1, 120], strides = [1, 1]} : vector<20x120xf32> to vector<1x120xf32>
    %404 = arith.maximumf %402, %403 : vector<1x120xf32>
    %405 = vector.extract_strided_slice %398 {offsets = [4, 0], sizes = [1, 120], strides = [1, 1]} : vector<20x120xf32> to vector<1x120xf32>
    %406 = vector.extract_strided_slice %398 {offsets = [5, 0], sizes = [1, 120], strides = [1, 1]} : vector<20x120xf32> to vector<1x120xf32>
    %407 = arith.maximumf %405, %406 : vector<1x120xf32>
    %408 = vector.extract_strided_slice %398 {offsets = [6, 0], sizes = [1, 120], strides = [1, 1]} : vector<20x120xf32> to vector<1x120xf32>
    %409 = vector.extract_strided_slice %398 {offsets = [7, 0], sizes = [1, 120], strides = [1, 1]} : vector<20x120xf32> to vector<1x120xf32>
    %410 = arith.maximumf %408, %409 : vector<1x120xf32>
    %411 = vector.extract_strided_slice %398 {offsets = [8, 0], sizes = [1, 120], strides = [1, 1]} : vector<20x120xf32> to vector<1x120xf32>
    %412 = vector.extract_strided_slice %398 {offsets = [9, 0], sizes = [1, 120], strides = [1, 1]} : vector<20x120xf32> to vector<1x120xf32>
    %413 = arith.maximumf %411, %412 : vector<1x120xf32>
    %414 = vector.extract_strided_slice %398 {offsets = [10, 0], sizes = [1, 120], strides = [1, 1]} : vector<20x120xf32> to vector<1x120xf32>
    %415 = vector.extract_strided_slice %398 {offsets = [11, 0], sizes = [1, 120], strides = [1, 1]} : vector<20x120xf32> to vector<1x120xf32>
    %416 = arith.maximumf %414, %415 : vector<1x120xf32>
    %417 = vector.extract_strided_slice %398 {offsets = [12, 0], sizes = [1, 120], strides = [1, 1]} : vector<20x120xf32> to vector<1x120xf32>
    %418 = vector.extract_strided_slice %398 {offsets = [13, 0], sizes = [1, 120], strides = [1, 1]} : vector<20x120xf32> to vector<1x120xf32>
    %419 = arith.maximumf %417, %418 : vector<1x120xf32>
    %420 = vector.extract_strided_slice %398 {offsets = [14, 0], sizes = [1, 120], strides = [1, 1]} : vector<20x120xf32> to vector<1x120xf32>
    %421 = vector.extract_strided_slice %398 {offsets = [15, 0], sizes = [1, 120], strides = [1, 1]} : vector<20x120xf32> to vector<1x120xf32>
    %422 = arith.maximumf %420, %421 : vector<1x120xf32>
    %423 = vector.extract_strided_slice %398 {offsets = [16, 0], sizes = [1, 120], strides = [1, 1]} : vector<20x120xf32> to vector<1x120xf32>
    %424 = vector.extract_strided_slice %398 {offsets = [17, 0], sizes = [1, 120], strides = [1, 1]} : vector<20x120xf32> to vector<1x120xf32>
    %425 = arith.maximumf %423, %424 : vector<1x120xf32>
    %426 = vector.extract_strided_slice %398 {offsets = [18, 0], sizes = [1, 120], strides = [1, 1]} : vector<20x120xf32> to vector<1x120xf32>
    %427 = vector.extract_strided_slice %398 {offsets = [19, 0], sizes = [1, 120], strides = [1, 1]} : vector<20x120xf32> to vector<1x120xf32>
    %428 = arith.maximumf %426, %427 : vector<1x120xf32>
    %429 = tpu.concatenate %401, %404, %407, %410, %413, %416, %419, %422, %425, %428 in 0 : vector<1x120xf32>, vector<1x120xf32>, vector<1x120xf32>, vector<1x120xf32>, vector<1x120xf32>, vector<1x120xf32>, vector<1x120xf32>, vector<1x120xf32>, vector<1x120xf32>, vector<1x120xf32> -> vector<10x120xf32>
    %430 = vector.extract_strided_slice %429 {offsets = [0, 0], sizes = [10, 6], strides = [1, 1]} : vector<10x120xf32> to vector<10x6xf32>
    %431 = vector.extract_strided_slice %429 {offsets = [0, 6], sizes = [10, 6], strides = [1, 1]} : vector<10x120xf32> to vector<10x6xf32>
    %432 = arith.maximumf %430, %431 : vector<10x6xf32>
    %c1_234 = arith.constant 1 : index
    %c1_235 = arith.constant 1 : index
    %c6_236 = arith.constant 6 : index
    %433 = vector.load %arg9[%c1_234, %c1_235, %c6_236] : memref<2x12x72xf32, #tpu.memory_space<vmem>>, vector<1x10x6xf32>
    %434 = vector.shape_cast %433 : vector<1x10x6xf32> to vector<10x6xf32>
    %435 = vector.shape_cast %432 : vector<10x6xf32> to vector<1x10x6xf32>
    tpu.vector_store %arg9[%c1_234, %c1_235, %c6_236], %435 {strides = array<i32>} : memref<2x12x72xf32, #tpu.memory_space<vmem>>, vector<1x10x6xf32>,
    %436 = vector.extract_strided_slice %429 {offsets = [0, 12], sizes = [10, 6], strides = [1, 1]} : vector<10x120xf32> to vector<10x6xf32>
    %437 = vector.extract_strided_slice %429 {offsets = [0, 18], sizes = [10, 6], strides = [1, 1]} : vector<10x120xf32> to vector<10x6xf32>
    %438 = arith.maximumf %436, %437 : vector<10x6xf32>
    %c1_237 = arith.constant 1 : index
    %c1_238 = arith.constant 1 : index
    %c12_239 = arith.constant 12 : index
    %439 = vector.load %arg9[%c1_237, %c1_238, %c12_239] : memref<2x12x72xf32, #tpu.memory_space<vmem>>, vector<1x10x6xf32>
    %440 = vector.shape_cast %439 : vector<1x10x6xf32> to vector<10x6xf32>
    %441 = vector.shape_cast %438 : vector<10x6xf32> to vector<1x10x6xf32>
    tpu.vector_store %arg9[%c1_237, %c1_238, %c12_239], %441 {strides = array<i32>} : memref<2x12x72xf32, #tpu.memory_space<vmem>>, vector<1x10x6xf32>,
    %442 = vector.extract_strided_slice %429 {offsets = [0, 24], sizes = [10, 6], strides = [1, 1]} : vector<10x120xf32> to vector<10x6xf32>
    %443 = vector.extract_strided_slice %429 {offsets = [0, 30], sizes = [10, 6], strides = [1, 1]} : vector<10x120xf32> to vector<10x6xf32>
    %444 = arith.maximumf %442, %443 : vector<10x6xf32>
    %c1_240 = arith.constant 1 : index
    %c1_241 = arith.constant 1 : index
    %c18_242 = arith.constant 18 : index
    %445 = vector.load %arg9[%c1_240, %c1_241, %c18_242] : memref<2x12x72xf32, #tpu.memory_space<vmem>>, vector<1x10x6xf32>
    %446 = vector.shape_cast %445 : vector<1x10x6xf32> to vector<10x6xf32>
    %447 = vector.shape_cast %444 : vector<10x6xf32> to vector<1x10x6xf32>
    tpu.vector_store %arg9[%c1_240, %c1_241, %c18_242], %447 {strides = array<i32>} : memref<2x12x72xf32, #tpu.memory_space<vmem>>, vector<1x10x6xf32>,
    %448 = vector.extract_strided_slice %429 {offsets = [0, 36], sizes = [10, 6], strides = [1, 1]} : vector<10x120xf32> to vector<10x6xf32>
    %449 = vector.extract_strided_slice %429 {offsets = [0, 42], sizes = [10, 6], strides = [1, 1]} : vector<10x120xf32> to vector<10x6xf32>
    %450 = arith.maximumf %448, %449 : vector<10x6xf32>
    %c1_243 = arith.constant 1 : index
    %c1_244 = arith.constant 1 : index
    %c24_245 = arith.constant 24 : index
    %451 = vector.load %arg9[%c1_243, %c1_244, %c24_245] : memref<2x12x72xf32, #tpu.memory_space<vmem>>, vector<1x10x6xf32>
    %452 = vector.shape_cast %451 : vector<1x10x6xf32> to vector<10x6xf32>
    %453 = vector.shape_cast %450 : vector<10x6xf32> to vector<1x10x6xf32>
    tpu.vector_store %arg9[%c1_243, %c1_244, %c24_245], %453 {strides = array<i32>} : memref<2x12x72xf32, #tpu.memory_space<vmem>>, vector<1x10x6xf32>,
    %454 = vector.extract_strided_slice %429 {offsets = [0, 48], sizes = [10, 6], strides = [1, 1]} : vector<10x120xf32> to vector<10x6xf32>
    %455 = vector.extract_strided_slice %429 {offsets = [0, 54], sizes = [10, 6], strides = [1, 1]} : vector<10x120xf32> to vector<10x6xf32>
    %456 = arith.maximumf %454, %455 : vector<10x6xf32>
    %c1_246 = arith.constant 1 : index
    %c1_247 = arith.constant 1 : index
    %c30_248 = arith.constant 30 : index
    %457 = vector.load %arg9[%c1_246, %c1_247, %c30_248] : memref<2x12x72xf32, #tpu.memory_space<vmem>>, vector<1x10x6xf32>
    %458 = vector.shape_cast %457 : vector<1x10x6xf32> to vector<10x6xf32>
    %459 = vector.shape_cast %456 : vector<10x6xf32> to vector<1x10x6xf32>
    tpu.vector_store %arg9[%c1_246, %c1_247, %c30_248], %459 {strides = array<i32>} : memref<2x12x72xf32, #tpu.memory_space<vmem>>, vector<1x10x6xf32>,
    %460 = vector.extract_strided_slice %429 {offsets = [0, 60], sizes = [10, 6], strides = [1, 1]} : vector<10x120xf32> to vector<10x6xf32>
    %461 = vector.extract_strided_slice %429 {offsets = [0, 66], sizes = [10, 6], strides = [1, 1]} : vector<10x120xf32> to vector<10x6xf32>
    %462 = arith.maximumf %460, %461 : vector<10x6xf32>
    %c1_249 = arith.constant 1 : index
    %c1_250 = arith.constant 1 : index
    %c36_251 = arith.constant 36 : index
    %463 = vector.load %arg9[%c1_249, %c1_250, %c36_251] : memref<2x12x72xf32, #tpu.memory_space<vmem>>, vector<1x10x6xf32>
    %464 = vector.shape_cast %463 : vector<1x10x6xf32> to vector<10x6xf32>
    %465 = vector.shape_cast %462 : vector<10x6xf32> to vector<1x10x6xf32>
    tpu.vector_store %arg9[%c1_249, %c1_250, %c36_251], %465 {strides = array<i32>} : memref<2x12x72xf32, #tpu.memory_space<vmem>>, vector<1x10x6xf32>,
    %466 = vector.extract_strided_slice %429 {offsets = [0, 72], sizes = [10, 6], strides = [1, 1]} : vector<10x120xf32> to vector<10x6xf32>
    %467 = vector.extract_strided_slice %429 {offsets = [0, 78], sizes = [10, 6], strides = [1, 1]} : vector<10x120xf32> to vector<10x6xf32>
    %468 = arith.maximumf %466, %467 : vector<10x6xf32>
    %c1_252 = arith.constant 1 : index
    %c1_253 = arith.constant 1 : index
    %c42_254 = arith.constant 42 : index
    %469 = vector.load %arg9[%c1_252, %c1_253, %c42_254] : memref<2x12x72xf32, #tpu.memory_space<vmem>>, vector<1x10x6xf32>
    %470 = vector.shape_cast %469 : vector<1x10x6xf32> to vector<10x6xf32>
    %471 = vector.shape_cast %468 : vector<10x6xf32> to vector<1x10x6xf32>
    tpu.vector_store %arg9[%c1_252, %c1_253, %c42_254], %471 {strides = array<i32>} : memref<2x12x72xf32, #tpu.memory_space<vmem>>, vector<1x10x6xf32>,
    %472 = vector.extract_strided_slice %429 {offsets = [0, 84], sizes = [10, 6], strides = [1, 1]} : vector<10x120xf32> to vector<10x6xf32>
    %473 = vector.extract_strided_slice %429 {offsets = [0, 90], sizes = [10, 6], strides = [1, 1]} : vector<10x120xf32> to vector<10x6xf32>
    %474 = arith.maximumf %472, %473 : vector<10x6xf32>
    %c1_255 = arith.constant 1 : index
    %c1_256 = arith.constant 1 : index
    %c48_257 = arith.constant 48 : index
    %475 = vector.load %arg9[%c1_255, %c1_256, %c48_257] : memref<2x12x72xf32, #tpu.memory_space<vmem>>, vector<1x10x6xf32>
    %476 = vector.shape_cast %475 : vector<1x10x6xf32> to vector<10x6xf32>
    %477 = vector.shape_cast %474 : vector<10x6xf32> to vector<1x10x6xf32>
    tpu.vector_store %arg9[%c1_255, %c1_256, %c48_257], %477 {strides = array<i32>} : memref<2x12x72xf32, #tpu.memory_space<vmem>>, vector<1x10x6xf32>,
    %478 = vector.extract_strided_slice %429 {offsets = [0, 96], sizes = [10, 6], strides = [1, 1]} : vector<10x120xf32> to vector<10x6xf32>
    %479 = vector.extract_strided_slice %429 {offsets = [0, 102], sizes = [10, 6], strides = [1, 1]} : vector<10x120xf32> to vector<10x6xf32>
    %480 = arith.maximumf %478, %479 : vector<10x6xf32>
    %c1_258 = arith.constant 1 : index
    %c1_259 = arith.constant 1 : index
    %c54_260 = arith.constant 54 : index
    %481 = vector.load %arg9[%c1_258, %c1_259, %c54_260] : memref<2x12x72xf32, #tpu.memory_space<vmem>>, vector<1x10x6xf32>
    %482 = vector.shape_cast %481 : vector<1x10x6xf32> to vector<10x6xf32>
    %483 = vector.shape_cast %480 : vector<10x6xf32> to vector<1x10x6xf32>
    tpu.vector_store %arg9[%c1_258, %c1_259, %c54_260], %483 {strides = array<i32>} : memref<2x12x72xf32, #tpu.memory_space<vmem>>, vector<1x10x6xf32>,
    %484 = vector.extract_strided_slice %429 {offsets = [0, 108], sizes = [10, 6], strides = [1, 1]} : vector<10x120xf32> to vector<10x6xf32>
    %485 = vector.extract_strided_slice %429 {offsets = [0, 114], sizes = [10, 6], strides = [1, 1]} : vector<10x120xf32> to vector<10x6xf32>
    %486 = arith.maximumf %484, %485 : vector<10x6xf32>
    %c1_261 = arith.constant 1 : index
    %c1_262 = arith.constant 1 : index
    %c60_263 = arith.constant 60 : index
    %487 = vector.load %arg9[%c1_261, %c1_262, %c60_263] : memref<2x12x72xf32, #tpu.memory_space<vmem>>, vector<1x10x6xf32>
    %488 = vector.shape_cast %487 : vector<1x10x6xf32> to vector<10x6xf32>
    %489 = vector.shape_cast %486 : vector<10x6xf32> to vector<1x10x6xf32>
    tpu.vector_store %arg9[%c1_261, %c1_262, %c60_263], %489 {strides = array<i32>} : memref<2x12x72xf32, #tpu.memory_space<vmem>>, vector<1x10x6xf32>,
    %c1_264 = arith.constant 1 : index
    %c0_265 = arith.constant 0 : index
    %c0_266 = arith.constant 0 : index
    %490 = vector.load %arg9[%c1_264, %c0_265, %c0_266] : memref<2x12x72xf32, #tpu.memory_space<vmem>>, vector<1x12x72xf32>
    %491 = vector.shape_cast %490 : vector<1x12x72xf32> to vector<12x72xf32>
    %492 = tpu.iota {dimensions = array<i32: 0>} : vector<12x72xi32>
    %493 = vector.extract_strided_slice %491 {offsets = [0, 0], sizes = [6, 72], strides = [1, 1]} : vector<12x72xf32> to vector<6x72xf32>
    %c0_267 = arith.constant 0 : index
    %c0_268 = arith.constant 0 : index
    %c0_269 = arith.constant 0 : index
    %494 = vector.load %arg3[%c0_267, %c0_268, %c0_269] : memref<11x72x36xf32, #tpu.memory_space<vmem>>, vector<1x72x36xf32>
    %495 = vector.shape_cast %494 : vector<1x72x36xf32> to vector<72x36xf32>
    %cst_270 = arith.constant dense<0.000000e+00> : vector<6x36xf32>
    %496 = tpu.matmul %493, %495, %cst_270 {dimension_numbers = #tpu.dot_dimension_numbers<[1], [0], [0], [1], [0, 0, 1, 1], [], []>} : vector<6x72xf32>, vector<72x36xf32>, vector<6x36xf32> -> vector<6x36xf32>
    %497 = vector.extract_strided_slice %491 {offsets = [1, 0], sizes = [6, 72], strides = [1, 1]} : vector<12x72xf32> to vector<6x72xf32>
    %c1_271 = arith.constant 1 : index
    %c0_272 = arith.constant 0 : index
    %c0_273 = arith.constant 0 : index
    %498 = vector.load %arg3[%c1_271, %c0_272, %c0_273] : memref<11x72x36xf32, #tpu.memory_space<vmem>>, vector<1x72x36xf32>
    %499 = vector.shape_cast %498 : vector<1x72x36xf32> to vector<72x36xf32>
    %cst_274 = arith.constant dense<0.000000e+00> : vector<6x36xf32>
    %500 = tpu.matmul %497, %499, %cst_274 {dimension_numbers = #tpu.dot_dimension_numbers<[1], [0], [0], [1], [0, 0, 1, 1], [], []>} : vector<6x72xf32>, vector<72x36xf32>, vector<6x36xf32> -> vector<6x36xf32>
    %501 = arith.addf %496, %500 : vector<6x36xf32>
    %502 = vector.extract_strided_slice %491 {offsets = [2, 0], sizes = [6, 72], strides = [1, 1]} : vector<12x72xf32> to vector<6x72xf32>
    %c2_275 = arith.constant 2 : index
    %c0_276 = arith.constant 0 : index
    %c0_277 = arith.constant 0 : index
    %503 = vector.load %arg3[%c2_275, %c0_276, %c0_277] : memref<11x72x36xf32, #tpu.memory_space<vmem>>, vector<1x72x36xf32>
    %504 = vector.shape_cast %503 : vector<1x72x36xf32> to vector<72x36xf32>
    %cst_278 = arith.constant dense<0.000000e+00> : vector<6x36xf32>
    %505 = tpu.matmul %502, %504, %cst_278 {dimension_numbers = #tpu.dot_dimension_numbers<[1], [0], [0], [1], [0, 0, 1, 1], [], []>} : vector<6x72xf32>, vector<72x36xf32>, vector<6x36xf32> -> vector<6x36xf32>
    %506 = arith.addf %501, %505 : vector<6x36xf32>
    %507 = vector.extract_strided_slice %491 {offsets = [3, 0], sizes = [6, 72], strides = [1, 1]} : vector<12x72xf32> to vector<6x72xf32>
    %c3_279 = arith.constant 3 : index
    %c0_280 = arith.constant 0 : index
    %c0_281 = arith.constant 0 : index
    %508 = vector.load %arg3[%c3_279, %c0_280, %c0_281] : memref<11x72x36xf32, #tpu.memory_space<vmem>>, vector<1x72x36xf32>
    %509 = vector.shape_cast %508 : vector<1x72x36xf32> to vector<72x36xf32>
    %cst_282 = arith.constant dense<0.000000e+00> : vector<6x36xf32>
    %510 = tpu.matmul %507, %509, %cst_282 {dimension_numbers = #tpu.dot_dimension_numbers<[1], [0], [0], [1], [0, 0, 1, 1], [], []>} : vector<6x72xf32>, vector<72x36xf32>, vector<6x36xf32> -> vector<6x36xf32>
    %511 = arith.addf %506, %510 : vector<6x36xf32>
    %512 = vector.extract_strided_slice %491 {offsets = [4, 0], sizes = [6, 72], strides = [1, 1]} : vector<12x72xf32> to vector<6x72xf32>
    %c4_283 = arith.constant 4 : index
    %c0_284 = arith.constant 0 : index
    %c0_285 = arith.constant 0 : index
    %513 = vector.load %arg3[%c4_283, %c0_284, %c0_285] : memref<11x72x36xf32, #tpu.memory_space<vmem>>, vector<1x72x36xf32>
    %514 = vector.shape_cast %513 : vector<1x72x36xf32> to vector<72x36xf32>
    %cst_286 = arith.constant dense<0.000000e+00> : vector<6x36xf32>
    %515 = tpu.matmul %512, %514, %cst_286 {dimension_numbers = #tpu.dot_dimension_numbers<[1], [0], [0], [1], [0, 0, 1, 1], [], []>} : vector<6x72xf32>, vector<72x36xf32>, vector<6x36xf32> -> vector<6x36xf32>
    %516 = arith.addf %511, %515 : vector<6x36xf32>
    %517 = vector.extract_strided_slice %491 {offsets = [5, 0], sizes = [6, 72], strides = [1, 1]} : vector<12x72xf32> to vector<6x72xf32>
    %c5_287 = arith.constant 5 : index
    %c0_288 = arith.constant 0 : index
    %c0_289 = arith.constant 0 : index
    %518 = vector.load %arg3[%c5_287, %c0_288, %c0_289] : memref<11x72x36xf32, #tpu.memory_space<vmem>>, vector<1x72x36xf32>
    %519 = vector.shape_cast %518 : vector<1x72x36xf32> to vector<72x36xf32>
    %cst_290 = arith.constant dense<0.000000e+00> : vector<6x36xf32>
    %520 = tpu.matmul %517, %519, %cst_290 {dimension_numbers = #tpu.dot_dimension_numbers<[1], [0], [0], [1], [0, 0, 1, 1], [], []>} : vector<6x72xf32>, vector<72x36xf32>, vector<6x36xf32> -> vector<6x36xf32>
    %521 = arith.addf %516, %520 : vector<6x36xf32>
    %522 = vector.extract_strided_slice %491 {offsets = [6, 0], sizes = [6, 72], strides = [1, 1]} : vector<12x72xf32> to vector<6x72xf32>
    %c6_291 = arith.constant 6 : index
    %c0_292 = arith.constant 0 : index
    %c0_293 = arith.constant 0 : index
    %523 = vector.load %arg3[%c6_291, %c0_292, %c0_293] : memref<11x72x36xf32, #tpu.memory_space<vmem>>, vector<1x72x36xf32>
    %524 = vector.shape_cast %523 : vector<1x72x36xf32> to vector<72x36xf32>
    %cst_294 = arith.constant dense<0.000000e+00> : vector<6x36xf32>
    %525 = tpu.matmul %522, %524, %cst_294 {dimension_numbers = #tpu.dot_dimension_numbers<[1], [0], [0], [1], [0, 0, 1, 1], [], []>} : vector<6x72xf32>, vector<72x36xf32>, vector<6x36xf32> -> vector<6x36xf32>
    %526 = arith.addf %521, %525 : vector<6x36xf32>
    %c2_i32_295 = arith.constant 2 : i32
    %527 = vector.broadcast %c2_i32_295 : i32 to vector<12x72xi32>
    %528 = arith.cmpi eq, %492, %527 : vector<12x72xi32>
    %c9_i32_296 = arith.constant 9 : i32
    %529 = vector.broadcast %c9_i32_296 : i32 to vector<12x72xi32>
    %530 = arith.cmpi eq, %492, %529 : vector<12x72xi32>
    %531 = arith.ori %528, %530 : vector<12x72xi1>
    %cst_297 = arith.constant 0.000000e+00 : f32
    %532 = vector.broadcast %cst_297 : f32 to vector<12x72xf32>
    %533 = arith.select %531, %532, %491 : vector<12x72xi1>, vector<12x72xf32>
    %534 = vector.extract_strided_slice %533 {offsets = [2, 0], sizes = [6, 72], strides = [1, 1]} : vector<12x72xf32> to vector<6x72xf32>
    %c7_298 = arith.constant 7 : index
    %c0_299 = arith.constant 0 : index
    %c0_300 = arith.constant 0 : index
    %535 = vector.load %arg3[%c7_298, %c0_299, %c0_300] : memref<11x72x36xf32, #tpu.memory_space<vmem>>, vector<1x72x36xf32>
    %536 = vector.shape_cast %535 : vector<1x72x36xf32> to vector<72x36xf32>
    %cst_301 = arith.constant dense<0.000000e+00> : vector<6x36xf32>
    %537 = tpu.matmul %534, %536, %cst_301 {dimension_numbers = #tpu.dot_dimension_numbers<[1], [0], [0], [1], [0, 0, 1, 1], [], []>} : vector<6x72xf32>, vector<72x36xf32>, vector<6x36xf32> -> vector<6x36xf32>
    %538 = arith.addf %526, %537 : vector<6x36xf32>
    %539 = vector.extract_strided_slice %533 {offsets = [3, 0], sizes = [6, 72], strides = [1, 1]} : vector<12x72xf32> to vector<6x72xf32>
    %c8_302 = arith.constant 8 : index
    %c0_303 = arith.constant 0 : index
    %c0_304 = arith.constant 0 : index
    %540 = vector.load %arg3[%c8_302, %c0_303, %c0_304] : memref<11x72x36xf32, #tpu.memory_space<vmem>>, vector<1x72x36xf32>
    %541 = vector.shape_cast %540 : vector<1x72x36xf32> to vector<72x36xf32>
    %cst_305 = arith.constant dense<0.000000e+00> : vector<6x36xf32>
    %542 = tpu.matmul %539, %541, %cst_305 {dimension_numbers = #tpu.dot_dimension_numbers<[1], [0], [0], [1], [0, 0, 1, 1], [], []>} : vector<6x72xf32>, vector<72x36xf32>, vector<6x36xf32> -> vector<6x36xf32>
    %543 = arith.addf %538, %542 : vector<6x36xf32>
    %544 = vector.extract_strided_slice %533 {offsets = [4, 0], sizes = [6, 72], strides = [1, 1]} : vector<12x72xf32> to vector<6x72xf32>
    %c9_306 = arith.constant 9 : index
    %c0_307 = arith.constant 0 : index
    %c0_308 = arith.constant 0 : index
    %545 = vector.load %arg3[%c9_306, %c0_307, %c0_308] : memref<11x72x36xf32, #tpu.memory_space<vmem>>, vector<1x72x36xf32>
    %546 = vector.shape_cast %545 : vector<1x72x36xf32> to vector<72x36xf32>
    %cst_309 = arith.constant dense<0.000000e+00> : vector<6x36xf32>
    %547 = tpu.matmul %544, %546, %cst_309 {dimension_numbers = #tpu.dot_dimension_numbers<[1], [0], [0], [1], [0, 0, 1, 1], [], []>} : vector<6x72xf32>, vector<72x36xf32>, vector<6x36xf32> -> vector<6x36xf32>
    %548 = arith.addf %543, %547 : vector<6x36xf32>
    %c3_i32_310 = arith.constant 3 : i32
    %549 = vector.broadcast %c3_i32_310 : i32 to vector<12x72xi32>
    %550 = arith.cmpi eq, %492, %549 : vector<12x72xi32>
    %c8_i32_311 = arith.constant 8 : i32
    %551 = vector.broadcast %c8_i32_311 : i32 to vector<12x72xi32>
    %552 = arith.cmpi eq, %492, %551 : vector<12x72xi32>
    %553 = arith.ori %550, %552 : vector<12x72xi1>
    %cst_312 = arith.constant 0.000000e+00 : f32
    %554 = vector.broadcast %cst_312 : f32 to vector<12x72xf32>
    %555 = arith.select %553, %554, %491 : vector<12x72xi1>, vector<12x72xf32>
    %556 = vector.extract_strided_slice %555 {offsets = [3, 0], sizes = [6, 72], strides = [1, 1]} : vector<12x72xf32> to vector<6x72xf32>
    %c10_313 = arith.constant 10 : index
    %c0_314 = arith.constant 0 : index
    %c0_315 = arith.constant 0 : index
    %557 = vector.load %arg3[%c10_313, %c0_314, %c0_315] : memref<11x72x36xf32, #tpu.memory_space<vmem>>, vector<1x72x36xf32>
    %558 = vector.shape_cast %557 : vector<1x72x36xf32> to vector<72x36xf32>
    %cst_316 = arith.constant dense<0.000000e+00> : vector<6x36xf32>
    %559 = tpu.matmul %556, %558, %cst_316 {dimension_numbers = #tpu.dot_dimension_numbers<[1], [0], [0], [1], [0, 0, 1, 1], [], []>} : vector<6x72xf32>, vector<72x36xf32>, vector<6x36xf32> -> vector<6x36xf32>
    %560 = arith.addf %548, %559 : vector<6x36xf32>
    %c0_317 = arith.constant 0 : index
    %c0_318 = arith.constant 0 : index
    %561 = vector.load %arg4[%c0_317, %c0_318] : memref<1x36xf32, #tpu.memory_space<vmem>>, vector<1x36xf32>
    %562 = vector.broadcast %561 : vector<1x36xf32> to vector<6x36xf32>
    %563 = arith.addf %560, %562 : vector<6x36xf32>
    %cst_319 = arith.constant 0.000000e+00 : f32
    %564 = vector.broadcast %cst_319 : f32 to vector<6x36xf32>
    %565 = arith.maximumf %563, %564 : vector<6x36xf32>
    %c0_320 = arith.constant 0 : index
    %c0_321 = arith.constant 0 : index
    %566 = vector.load %arg6[%c0_320, %c0_321] : memref<1x12xf32, #tpu.memory_space<vmem>>, vector<1x12xf32>
    %567 = vector.extract_strided_slice %565 {offsets = [0, 0], sizes = [1, 36], strides = [1, 1]} : vector<6x36xf32> to vector<1x36xf32>
    %568 = vector.extract_strided_slice %565 {offsets = [1, 0], sizes = [1, 36], strides = [1, 1]} : vector<6x36xf32> to vector<1x36xf32>
    %569 = arith.maximumf %567, %568 : vector<1x36xf32>
    %570 = vector.extract_strided_slice %569 {offsets = [0, 0], sizes = [1, 6], strides = [1, 1]} : vector<1x36xf32> to vector<1x6xf32>
    %571 = vector.extract_strided_slice %569 {offsets = [0, 6], sizes = [1, 6], strides = [1, 1]} : vector<1x36xf32> to vector<1x6xf32>
    %572 = arith.maximumf %570, %571 : vector<1x6xf32>
    %c0_322 = arith.constant 0 : index
    %c0_323 = arith.constant 0 : index
    %c0_324 = arith.constant 0 : index
    %c0_325 = arith.constant 0 : index
    %573 = vector.load %arg5[%c0_322, %c0_323, %c0_324, %c0_325] : memref<3x3x6x12xf32, #tpu.memory_space<vmem>>, vector<1x1x6x12xf32>
    %574 = vector.shape_cast %573 : vector<1x1x6x12xf32> to vector<6x12xf32>
    %cst_326 = arith.constant dense<0.000000e+00> : vector<1x12xf32>
    %575 = tpu.matmul %572, %574, %cst_326 {dimension_numbers = #tpu.dot_dimension_numbers<[1], [0], [0], [1], [0, 0, 1, 1], [], []>} : vector<1x6xf32>, vector<6x12xf32>, vector<1x12xf32> -> vector<1x12xf32>
    %576 = arith.addf %566, %575 : vector<1x12xf32>
    %577 = vector.extract_strided_slice %569 {offsets = [0, 12], sizes = [1, 6], strides = [1, 1]} : vector<1x36xf32> to vector<1x6xf32>
    %578 = vector.extract_strided_slice %569 {offsets = [0, 18], sizes = [1, 6], strides = [1, 1]} : vector<1x36xf32> to vector<1x6xf32>
    %579 = arith.maximumf %577, %578 : vector<1x6xf32>
    %c0_327 = arith.constant 0 : index
    %c1_328 = arith.constant 1 : index
    %c0_329 = arith.constant 0 : index
    %c0_330 = arith.constant 0 : index
    %580 = vector.load %arg5[%c0_327, %c1_328, %c0_329, %c0_330] : memref<3x3x6x12xf32, #tpu.memory_space<vmem>>, vector<1x1x6x12xf32>
    %581 = vector.shape_cast %580 : vector<1x1x6x12xf32> to vector<6x12xf32>
    %cst_331 = arith.constant dense<0.000000e+00> : vector<1x12xf32>
    %582 = tpu.matmul %579, %581, %cst_331 {dimension_numbers = #tpu.dot_dimension_numbers<[1], [0], [0], [1], [0, 0, 1, 1], [], []>} : vector<1x6xf32>, vector<6x12xf32>, vector<1x12xf32> -> vector<1x12xf32>
    %583 = arith.addf %576, %582 : vector<1x12xf32>
    %584 = vector.extract_strided_slice %569 {offsets = [0, 24], sizes = [1, 6], strides = [1, 1]} : vector<1x36xf32> to vector<1x6xf32>
    %585 = vector.extract_strided_slice %569 {offsets = [0, 30], sizes = [1, 6], strides = [1, 1]} : vector<1x36xf32> to vector<1x6xf32>
    %586 = arith.maximumf %584, %585 : vector<1x6xf32>
    %c0_332 = arith.constant 0 : index
    %c2_333 = arith.constant 2 : index
    %c0_334 = arith.constant 0 : index
    %c0_335 = arith.constant 0 : index
    %587 = vector.load %arg5[%c0_332, %c2_333, %c0_334, %c0_335] : memref<3x3x6x12xf32, #tpu.memory_space<vmem>>, vector<1x1x6x12xf32>
    %588 = vector.shape_cast %587 : vector<1x1x6x12xf32> to vector<6x12xf32>
    %cst_336 = arith.constant dense<0.000000e+00> : vector<1x12xf32>
    %589 = tpu.matmul %586, %588, %cst_336 {dimension_numbers = #tpu.dot_dimension_numbers<[1], [0], [0], [1], [0, 0, 1, 1], [], []>} : vector<1x6xf32>, vector<6x12xf32>, vector<1x12xf32> -> vector<1x12xf32>
    %590 = arith.addf %583, %589 : vector<1x12xf32>
    %591 = vector.extract_strided_slice %565 {offsets = [2, 0], sizes = [1, 36], strides = [1, 1]} : vector<6x36xf32> to vector<1x36xf32>
    %592 = vector.extract_strided_slice %565 {offsets = [3, 0], sizes = [1, 36], strides = [1, 1]} : vector<6x36xf32> to vector<1x36xf32>
    %593 = arith.maximumf %591, %592 : vector<1x36xf32>
    %594 = vector.extract_strided_slice %593 {offsets = [0, 0], sizes = [1, 6], strides = [1, 1]} : vector<1x36xf32> to vector<1x6xf32>
    %595 = vector.extract_strided_slice %593 {offsets = [0, 6], sizes = [1, 6], strides = [1, 1]} : vector<1x36xf32> to vector<1x6xf32>
    %596 = arith.maximumf %594, %595 : vector<1x6xf32>
    %c1_337 = arith.constant 1 : index
    %c0_338 = arith.constant 0 : index
    %c0_339 = arith.constant 0 : index
    %c0_340 = arith.constant 0 : index
    %597 = vector.load %arg5[%c1_337, %c0_338, %c0_339, %c0_340] : memref<3x3x6x12xf32, #tpu.memory_space<vmem>>, vector<1x1x6x12xf32>
    %598 = vector.shape_cast %597 : vector<1x1x6x12xf32> to vector<6x12xf32>
    %cst_341 = arith.constant dense<0.000000e+00> : vector<1x12xf32>
    %599 = tpu.matmul %596, %598, %cst_341 {dimension_numbers = #tpu.dot_dimension_numbers<[1], [0], [0], [1], [0, 0, 1, 1], [], []>} : vector<1x6xf32>, vector<6x12xf32>, vector<1x12xf32> -> vector<1x12xf32>
    %600 = arith.addf %590, %599 : vector<1x12xf32>
    %601 = vector.extract_strided_slice %593 {offsets = [0, 12], sizes = [1, 6], strides = [1, 1]} : vector<1x36xf32> to vector<1x6xf32>
    %602 = vector.extract_strided_slice %593 {offsets = [0, 18], sizes = [1, 6], strides = [1, 1]} : vector<1x36xf32> to vector<1x6xf32>
    %603 = arith.maximumf %601, %602 : vector<1x6xf32>
    %c1_342 = arith.constant 1 : index
    %c1_343 = arith.constant 1 : index
    %c0_344 = arith.constant 0 : index
    %c0_345 = arith.constant 0 : index
    %604 = vector.load %arg5[%c1_342, %c1_343, %c0_344, %c0_345] : memref<3x3x6x12xf32, #tpu.memory_space<vmem>>, vector<1x1x6x12xf32>
    %605 = vector.shape_cast %604 : vector<1x1x6x12xf32> to vector<6x12xf32>
    %cst_346 = arith.constant dense<0.000000e+00> : vector<1x12xf32>
    %606 = tpu.matmul %603, %605, %cst_346 {dimension_numbers = #tpu.dot_dimension_numbers<[1], [0], [0], [1], [0, 0, 1, 1], [], []>} : vector<1x6xf32>, vector<6x12xf32>, vector<1x12xf32> -> vector<1x12xf32>
    %607 = arith.addf %600, %606 : vector<1x12xf32>
    %608 = vector.extract_strided_slice %593 {offsets = [0, 24], sizes = [1, 6], strides = [1, 1]} : vector<1x36xf32> to vector<1x6xf32>
    %609 = vector.extract_strided_slice %593 {offsets = [0, 30], sizes = [1, 6], strides = [1, 1]} : vector<1x36xf32> to vector<1x6xf32>
    %610 = arith.maximumf %608, %609 : vector<1x6xf32>
    %c1_347 = arith.constant 1 : index
    %c2_348 = arith.constant 2 : index
    %c0_349 = arith.constant 0 : index
    %c0_350 = arith.constant 0 : index
    %611 = vector.load %arg5[%c1_347, %c2_348, %c0_349, %c0_350] : memref<3x3x6x12xf32, #tpu.memory_space<vmem>>, vector<1x1x6x12xf32>
    %612 = vector.shape_cast %611 : vector<1x1x6x12xf32> to vector<6x12xf32>
    %cst_351 = arith.constant dense<0.000000e+00> : vector<1x12xf32>
    %613 = tpu.matmul %610, %612, %cst_351 {dimension_numbers = #tpu.dot_dimension_numbers<[1], [0], [0], [1], [0, 0, 1, 1], [], []>} : vector<1x6xf32>, vector<6x12xf32>, vector<1x12xf32> -> vector<1x12xf32>
    %614 = arith.addf %607, %613 : vector<1x12xf32>
    %615 = vector.extract_strided_slice %565 {offsets = [4, 0], sizes = [1, 36], strides = [1, 1]} : vector<6x36xf32> to vector<1x36xf32>
    %616 = vector.extract_strided_slice %565 {offsets = [5, 0], sizes = [1, 36], strides = [1, 1]} : vector<6x36xf32> to vector<1x36xf32>
    %617 = arith.maximumf %615, %616 : vector<1x36xf32>
    %618 = vector.extract_strided_slice %617 {offsets = [0, 0], sizes = [1, 6], strides = [1, 1]} : vector<1x36xf32> to vector<1x6xf32>
    %619 = vector.extract_strided_slice %617 {offsets = [0, 6], sizes = [1, 6], strides = [1, 1]} : vector<1x36xf32> to vector<1x6xf32>
    %620 = arith.maximumf %618, %619 : vector<1x6xf32>
    %c2_352 = arith.constant 2 : index
    %c0_353 = arith.constant 0 : index
    %c0_354 = arith.constant 0 : index
    %c0_355 = arith.constant 0 : index
    %621 = vector.load %arg5[%c2_352, %c0_353, %c0_354, %c0_355] : memref<3x3x6x12xf32, #tpu.memory_space<vmem>>, vector<1x1x6x12xf32>
    %622 = vector.shape_cast %621 : vector<1x1x6x12xf32> to vector<6x12xf32>
    %cst_356 = arith.constant dense<0.000000e+00> : vector<1x12xf32>
    %623 = tpu.matmul %620, %622, %cst_356 {dimension_numbers = #tpu.dot_dimension_numbers<[1], [0], [0], [1], [0, 0, 1, 1], [], []>} : vector<1x6xf32>, vector<6x12xf32>, vector<1x12xf32> -> vector<1x12xf32>
    %624 = arith.addf %614, %623 : vector<1x12xf32>
    %625 = vector.extract_strided_slice %617 {offsets = [0, 12], sizes = [1, 6], strides = [1, 1]} : vector<1x36xf32> to vector<1x6xf32>
    %626 = vector.extract_strided_slice %617 {offsets = [0, 18], sizes = [1, 6], strides = [1, 1]} : vector<1x36xf32> to vector<1x6xf32>
    %627 = arith.maximumf %625, %626 : vector<1x6xf32>
    %c2_357 = arith.constant 2 : index
    %c1_358 = arith.constant 1 : index
    %c0_359 = arith.constant 0 : index
    %c0_360 = arith.constant 0 : index
    %628 = vector.load %arg5[%c2_357, %c1_358, %c0_359, %c0_360] : memref<3x3x6x12xf32, #tpu.memory_space<vmem>>, vector<1x1x6x12xf32>
    %629 = vector.shape_cast %628 : vector<1x1x6x12xf32> to vector<6x12xf32>
    %cst_361 = arith.constant dense<0.000000e+00> : vector<1x12xf32>
    %630 = tpu.matmul %627, %629, %cst_361 {dimension_numbers = #tpu.dot_dimension_numbers<[1], [0], [0], [1], [0, 0, 1, 1], [], []>} : vector<1x6xf32>, vector<6x12xf32>, vector<1x12xf32> -> vector<1x12xf32>
    %631 = arith.addf %624, %630 : vector<1x12xf32>
    %632 = vector.extract_strided_slice %617 {offsets = [0, 24], sizes = [1, 6], strides = [1, 1]} : vector<1x36xf32> to vector<1x6xf32>
    %633 = vector.extract_strided_slice %617 {offsets = [0, 30], sizes = [1, 6], strides = [1, 1]} : vector<1x36xf32> to vector<1x6xf32>
    %634 = arith.maximumf %632, %633 : vector<1x6xf32>
    %c2_362 = arith.constant 2 : index
    %c2_363 = arith.constant 2 : index
    %c0_364 = arith.constant 0 : index
    %c0_365 = arith.constant 0 : index
    %635 = vector.load %arg5[%c2_362, %c2_363, %c0_364, %c0_365] : memref<3x3x6x12xf32, #tpu.memory_space<vmem>>, vector<1x1x6x12xf32>
    %636 = vector.shape_cast %635 : vector<1x1x6x12xf32> to vector<6x12xf32>
    %cst_366 = arith.constant dense<0.000000e+00> : vector<1x12xf32>
    %637 = tpu.matmul %634, %636, %cst_366 {dimension_numbers = #tpu.dot_dimension_numbers<[1], [0], [0], [1], [0, 0, 1, 1], [], []>} : vector<1x6xf32>, vector<6x12xf32>, vector<1x12xf32> -> vector<1x12xf32>
    %638 = arith.addf %631, %637 : vector<1x12xf32>
    %c1_367 = arith.constant 1 : index
    %c0_368 = arith.constant 0 : index
    %639 = vector.load %arg7[%c1_367, %c0_368] : memref<2x12xf32, #tpu.memory_space<vmem>>, vector<1x12xf32>
    tpu.vector_store %arg7[%c1_367, %c0_368], %638 {strides = array<i32>} : memref<2x12xf32, #tpu.memory_space<vmem>>, vector<1x12xf32>,
    return
  }
}

</mosaic_0001>

<llo_original>
// kernel: forward.1
$region0: #{forward.1}
  #allocation0 [shape = 'u32[]', space=smem, size = 0x4, offset = 0x4, fixed_abs, tag = 'smem constant byte address 0x4 - core index']
  #allocation1 [shape = 'u32[144,128]{1,0:T(1,128)}', space=vmem, size = 0x12000, scoped, tag = 'internal scratch']
  #allocation2 [shape = 'f32[2,26,78]{2,1,0:T(8,128)}', space=vmem, size = 0x8000, scoped, tag = 'scratch operand']
  #allocation3 [shape = 'f32[2,12,72]{2,1,0:T(8,128)}', space=vmem, size = 0x4000, scoped, tag = 'scratch operand']
  %s0 = inlined_call_operand.vmem [shape: f32[2,24,72], index: 0, kind: input, shape index: {}]
  %s1 = inlined_call_operand.hbm [shape: f32[11,78,120], index: 1, kind: input, shape index: {}]
  %s2 = inlined_call_operand.vmem [shape: f32[1,120], index: 2, kind: input, shape index: {}]
  %s3 = inlined_call_operand.hbm [shape: f32[11,72,36], index: 3, kind: input, shape index: {}]
  %s4 = inlined_call_operand.vmem [shape: f32[1,36], index: 4, kind: input, shape index: {}]
  %s5 = inlined_call_operand.vmem [shape: f32[3,3,6,12], index: 5, kind: input, shape index: {}]
  %s6 = inlined_call_operand.vmem [shape: f32[1,12], index: 6, kind: input, shape index: {}]
  %s7 = inlined_call_operand.hbm [shape: f32[2,12], index: 7, kind: output, shape index: {}]
  %s8 = sld [smem:[#allocation0]]
  $region46: #{forward.1} parent=0
    _
  %s10 = ssub.s32 1, %s8
  %s11 = scalar_select 0, %s10, %s8
  $region1: #{forward.1} parent=0
    #allocation4 [shape = 'u8[450560]{0}', space=vmem, size = 0x6e000, scoped, tag = 'input window, operand 1, single buffered']
    #allocation5 [shape = 's32[1]{0}', space=sflag, size = 0x4, scoped, tag = 'scoped memory for forward.1']
    #allocation6 [shape = 's32[1]{0}', space=sflag, size = 0x4, scoped, tag = 'scoped memory for forward.1']
    #allocation7 [shape = 'u8[405504]{0}', space=vmem, size = 0x63000, scoped, tag = 'input window, operand 3, single buffered']
    #allocation8 [shape = 's32[1]{0}', space=sflag, size = 0x4, scoped, tag = 'scoped memory for forward.1']
    #allocation9 [shape = 'u8[1024]{0}', space=vmem, size = 0x400, scoped, tag = 'output window, operand 0, single buffered']
    %12 = vsyncpa [#allocation5], 0
    %13 = vsyncpa [#allocation8], 0
    %14 = vsyncpa [#allocation6], 0
    // Predicated region
    $region2: #{forward.1} parent=1 // pred_check
      _
    $region3: #{forward.1} parent=1 // pred_check_branch
      %16 = sbr.rel (0) target = $region5
    $region4: #{forward.1} parent=1 // pred_region
      _
    $region5: #{forward.1} parent=1 // pred_fallthru
      _
    // Predicated region
    $region6: #{forward.1} parent=1 // pred_check
      _
    $region7: #{forward.1} parent=1 // pred_check_branch
      %18 = sbr.rel (0) target = $region9
    $region8: #{forward.1} parent=1 // pred_region
      %s20 = ssub.s32 14080, 14080
      %21 = vsyncadd [#allocation5], %s20
      %s22 = sshll.u32 [#allocation4], 4
      %s23 = int_to_ptr.vmem [resolvable:$true] %s22
      %28 = dma.hbm_to_vmem [thread:$0]  %s1, 14080, %s23, [#allocation5], 128, 128, 8
    $region9: #{forward.1} parent=1 // pred_fallthru
      _
    // Predicated region
    $region10: #{forward.1} parent=1 // pred_check
      _
    $region11: #{forward.1} parent=1 // pred_check_branch
      %30 = sbr.rel (0) target = $region13
    $region12: #{forward.1} parent=1 // pred_region
      _
    $region13: #{forward.1} parent=1 // pred_fallthru
      _
    // Predicated region
    $region14: #{forward.1} parent=1 // pred_check
      _
    $region15: #{forward.1} parent=1 // pred_check_branch
      %32 = sbr.rel (0) target = $region17
    $region16: #{forward.1} parent=1 // pred_region
      %s34 = ssub.s32 12672, 12672
      %35 = vsyncadd [#allocation8], %s34
      %s36 = sshll.u32 [#allocation7], 4
      %s37 = int_to_ptr.vmem [resolvable:$true] %s36
      %42 = dma.hbm_to_vmem [thread:$0]  %s3, 12672, %s37, [#allocation8], 128, 128, 8
    $region17: #{forward.1} parent=1 // pred_fallthru
      _
    // Predicated region
    $region18: #{forward.1} parent=1 // pred_check
      _
    $region19: #{forward.1} parent=1 // pred_check_branch
      %44 = sbr.rel (0) target = $region21
    $region20: #{forward.1} parent=1 // pred_region
      _
    $region21: #{forward.1} parent=1 // pred_fallthru
      _
    // Predicated region
    $region22: #{forward.1} parent=1 // pred_check
      _
    $region23: #{forward.1} parent=1 // pred_check_branch
      %46 = sbr.rel (0) target = $region25
    $region24: #{forward.1} parent=1 // pred_region
      _
    $region25: #{forward.1} parent=1 // pred_fallthru
      _
    // Predicated region
    $region26: #{forward.1} parent=1 // pred_check
      _
    $region27: #{forward.1} parent=1 // pred_check_branch
      %48 = sbr.rel (0) target = $region29
    $region28: #{forward.1} parent=1 // pred_region
      _
    $region29: #{forward.1} parent=1 // pred_fallthru
      _
    // Predicated region
    $region30: #{forward.1} parent=1 // pred_check
      _
    $region31: #{forward.1} parent=1 // pred_check_branch
      %50 = sbr.rel (0) target = $region33
    $region32: #{forward.1} parent=1 // pred_region
      %51 = dma.done [#allocation5], 14080
    $region33: #{forward.1} parent=1 // pred_fallthru
      _
    // Predicated region
    $region34: #{forward.1} parent=1 // pred_check
      _
    $region35: #{forward.1} parent=1 // pred_check_branch
      %53 = sbr.rel (0) target = $region37
    $region36: #{forward.1} parent=1 // pred_region
      %54 = dma.done [#allocation8], 12672
    $region37: #{forward.1} parent=1 // pred_fallthru
      _
    %vm55 = vcmask 637952
    %56 = vst.msk [vmem:[#allocation2] sm:$0xff] %vm55, 0.0
    %57 = vst.msk [vmem:[#allocation2 + $0x8] sm:$0xff] %vm55, 0.0
    %58 = vst.msk [vmem:[#allocation2 + $0x10] sm:$0xff] %vm55, 0.0
    %vm59 = vcmask 631808
    %60 = vst.msk [vmem:[#allocation2 + $0x18] sm:$0x3] %vm59, 0.0
    %61 = vst.msk [vmem:[#allocation2 + $0x20] sm:$0xff] %vm55, 0.0
    %62 = vst.msk [vmem:[#allocation2 + $0x28] sm:$0xff] %vm55, 0.0
    %63 = vst.msk [vmem:[#allocation2 + $0x30] sm:$0xff] %vm55, 0.0
    %64 = vst.msk [vmem:[#allocation2 + $0x38] sm:$0x3] %vm59, 0.0
    %vm65 = vcmask 588800
    %66 = vst.msk [vmem:[#allocation3] sm:$0xff] %vm65, 0.0
    %vm67 = vcmask 584704
    %68 = vst.msk [vmem:[#allocation3 + $0x8] sm:$0xf] %vm67, 0.0
    %69 = vst.msk [vmem:[#allocation3 + $0x10] sm:$0xff] %vm65, 0.0
    %70 = vst.msk [vmem:[#allocation3 + $0x18] sm:$0xf] %vm67, 0.0
    %v71 = vld [vmem:[%s0] sm:$0xff]
    %v72 = vld [vmem:[%s0 + $0x8] sm:$0xff]
    %v73 = vld [vmem:[%s0 + $0x10] sm:$0xff]
    %v74 = vld [vmem:[%s0 + $0x18] sm:$0xff]
    %v75 = vld [vmem:[%s0 + $0x20] sm:$0xff]
    %v76 = vld [vmem:[%s0 + $0x28] sm:$0xff]
    %83 = vrot.lane.b32.xlu0 %v71, 3
    %v84 = vpop.permute.xlu0 %83
    %85 = vrot.lane.b32.xlu0 %v72, 3
    %v86 = vpop.permute.xlu0 %85
    %87 = vrot.lane.b32.xlu0 %v73, 3
    %v88 = vpop.permute.xlu0 %87
    %89 = vrot.lane.b32.xlu0 %v74, 3
    %v90 = vpop.permute.xlu0 %89
    %91 = vrot.lane.b32.xlu0 %v75, 3
    %v92 = vpop.permute.xlu0 %91
    %93 = vrot.lane.b32.xlu0 %v76, 3
    %v94 = vpop.permute.xlu0 %93
    %vm101 = vcmask 613400
    %102 = vst.msk [vmem:[#allocation2 + $0x1] sm:$0xff] %vm101, %v84
    %103 = vst.msk [vmem:[#allocation2 + $0x9] sm:$0xff] %vm101, %v86
    %104 = vst.msk [vmem:[#allocation2 + $0x11] sm:$0xff] %vm101, %v88
    %105 = vst.msk [vmem:[#allocation2 + $0x21] sm:$0xff] %vm101, %v90
    %106 = vst.msk [vmem:[#allocation2 + $0x29] sm:$0xff] %vm101, %v92
    %107 = vst.msk [vmem:[#allocation2 + $0x31] sm:$0xff] %vm101, %v94
    %v108 = vld [vmem:[#allocation2] sm:$0xff]
    %v109 = vld [vmem:[#allocation2 + $0x8] sm:$0xff]
    %v110 = vld [vmem:[#allocation2 + $0x10] sm:$0xff]
    %v111 = vld [vmem:[#allocation2 + $0x18] sm:$0x3]
    %v112 = vlaneseq
    %v113 = vshrl.u32 %v112, 7
    %v114 = vadd.s32 %v113, 8
    %v115 = vadd.s32 %v113, 16
    %v116 = vld [vmem:[#allocation4] sm:$0xff]
    %v117 = vld [vmem:[#allocation4 + $0x8] sm:$0xff]
    %v118 = vld [vmem:[#allocation4 + $0x10] sm:$0xff]
    %v119 = vld [vmem:[#allocation4 + $0x18] sm:$0xff]
    %v120 = vld [vmem:[#allocation4 + $0x20] sm:$0xff]
    %v121 = vld [vmem:[#allocation4 + $0x28] sm:$0xff]
    %v122 = vld [vmem:[#allocation4 + $0x30] sm:$0xff]
    %v123 = vld [vmem:[#allocation4 + $0x38] sm:$0xff]
    %v124 = vld [vmem:[#allocation4 + $0x40] sm:$0xff]
    %v125 = vld [vmem:[#allocation4 + $0x48] sm:$0x3f]
    %s126 = scalar_lea.vmem [#allocation4], 80
    %v127 = vld [vmem:[%s126] sm:$0xff]
    %v128 = vld [vmem:[%s126 + $0x8] sm:$0xff]
    %v129 = vld [vmem:[%s126 + $0x10] sm:$0xff]
    %v130 = vld [vmem:[%s126 + $0x18] sm:$0xff]
    %v131 = vld [vmem:[%s126 + $0x20] sm:$0xff]
    %v132 = vld [vmem:[%s126 + $0x28] sm:$0xff]
    %v133 = vld [vmem:[%s126 + $0x30] sm:$0xff]
    %v134 = vld [vmem:[%s126 + $0x38] sm:$0xff]
    %v135 = vld [vmem:[%s126 + $0x40] sm:$0xff]
    %v136 = vld [vmem:[%s126 + $0x48] sm:$0x3f]
    %vm140 = vcmask 1046528
    %v141 = vrot.slane %v108, 1
    %v142 = vrot.slane %v109, 1
    %v143 = vsel %vm140, %v141, %v142
    %v144 = vrot.slane %v110, 1
    %v145 = vsel %vm140, %v142, %v144
    %v146 = vsel %vm55, %v143, 0
    %v148 = vsel %vm55, %v145, 0
    %v150 = vsel %vm55, %v144, 0
    %vm152 = vcmask 1045504
    %v154 = vsel %vm152, %v136, 0
    %156 = vmatprep.subr.mxu0 0.0
    %157 = vmatpush1.msra.mxu0 %v127
    %158 = vmatprep.subr.mxu0 0.0
    %159 = vmatpush1.msra.mxu0 %v128
    %160 = vmatprep.subr.mxu0 0.0
    %161 = vmatpush1.msra.mxu0 %v129
    %162 = vmatprep.subr.mxu0 0.0
    %163 = vmatpush1.msra.mxu0 %v130
    %164 = vmatprep.subr.mxu0 0.0
    %165 = vmatpush1.msra.mxu0 %v131
    %166 = vmatprep.subr.mxu0 0.0
    %167 = vmatpush1.msra.mxu0 %v132
    %168 = vmatprep.subr.mxu0 0.0
    %169 = vmatpush1.msra.mxu0 %v133
    %170 = vmatprep.subr.mxu0 0.0
    %171 = vmatpush1.msra.mxu0 %v134
    %172 = vmatprep.subr.mxu0 0.0
    %173 = vmatpush1.msra.mxu0 %v135
    %174 = vmatprep.subr.mxu0 0.0
    %175 = vmatpush1.msra.mxu0 %v154
    %176 = vmatprep.subr.mxu0 0.0
    %177 = vmatpush1.msra.mxu0 0.0
    %178 = vmatprep.subr.mxu0 0.0
    %179 = vmatpush1.msra.mxu0 0.0
    %180 = vmatprep.subr.mxu0 0.0
    %181 = vmatpush1.msra.mxu0 0.0
    %182 = vmatprep.subr.mxu0 0.0
    %183 = vmatpush1.msra.mxu0 0.0
    %184 = vmatprep.subr.mxu0 0.0
    %185 = vmatpush1.msra.mxu0 0.0
    %186 = vmatprep.subr.mxu0 0.0
    %187 = vmatpush1.msra.mxu0 0.0
    %188 = vmatprep.subr.mxu0 0.0
    %189 = vmatpush1.msra.mxu0 0.0
    %190 = vmatprep.subr.mxu0 0.0
    %191 = vmatpush1.msra.mxu0 0.0
    %192 = vmatprep.subr.mxu0 0.0
    %193 = vmatpush1.msra.mxu0 0.0
    %194 = vmatprep.subr.mxu0 0.0
    %195 = vmatpush1.msra.mxu0 0.0
    %196 = vmatprep.subr.mxu0 0.0
    %197 = vmatpush1.msra.mxu0 0.0
    %198 = vmatprep.subr.mxu0 0.0
    %199 = vmatpush1.msra.mxu0 0.0
    %200 = vmatprep.subr.mxu0 0.0
    %201 = vmatpush1.msra.mxu0 0.0
    %202 = vmatprep.subr.mxu0 0.0
    %203 = vmatpush1.msra.mxu0 0.0
    %204 = vmatprep.subr.mxu0 0.0
    %205 = vmatpush1.msra.mxu0 0.0
    %206 = vmatprep.subr.mxu0 0.0
    %207 = vmatpush1.msra.mxu0 0.0
    %208 = vmatprep.subr.mxu0 0.0
    %209 = vmatpush1.msra.mxu0 0.0
    %210 = vmatprep.subr.mxu0 0.0
    %211 = vmatpush1.msra.mxu0 0.0
    %212 = vmatprep.subr.mxu0 0.0
    %213 = vmatpush1.msra.mxu0 0.0
    %214 = vmatprep.subr.mxu0 0.0
    %215 = vmatpush1.msra.mxu0 0.0
    %216 = vmatprep.subr.mxu0 0.0
    %217 = vmatpush1.msra.mxu0 0.0
    %218 = vmatprep.subr.mxu0 0.0
    %219 = vmatpush1.msra.mxu0 0.0
    %220 = vmatprep.mubr.f32.mxu0 0.0
    %221 = vmatmul.mubr.f32.gmra.mrb[0].mxu0 %v146
    %v222 = vpop.f32.mrb[0].mxu0
    %v223 = vadd.f32 0.0, %v222
    %v224 = vpop.f32.mrb[0].mxu0
    %225 = vmatprep.mubr.f32.mxu0 0.0
    %226 = vmatmul.mubr.f32.gmra.mrb[0].mxu0 %v148
    %v227 = vpop.f32.mrb[0].mxu0
    %v228 = vadd.f32 0.0, %v227
    %v229 = vpop.f32.mrb[0].mxu0
    %230 = vmatprep.mubr.f32.mxu0 0.0
    %231 = vmatmul.mubr.f32.gmra.mrb[0].mxu0 %v150
    %v232 = vpop.f32.mrb[0].mxu0
    %v233 = vadd.f32 0.0, %v232
    %v234 = vpop.f32.mrb[0].mxu0
    %235 = vdwg.mxu0
    %v236 = vsel %vm55, %v108, 0
    %v238 = vsel %vm55, %v109, 0
    %v240 = vsel %vm55, %v110, 0
    %v243 = vsel %vm152, %v125, 0
    %245 = vmatprep.subr.mxu0 0.0
    %246 = vmatpush1.msra.mxu0 %v116
    %247 = vmatprep.subr.mxu0 0.0
    %248 = vmatpush1.msra.mxu0 %v117
    %249 = vmatprep.subr.mxu0 0.0
    %250 = vmatpush1.msra.mxu0 %v118
    %251 = vmatprep.subr.mxu0 0.0
    %252 = vmatpush1.msra.mxu0 %v119
    %253 = vmatprep.subr.mxu0 0.0
    %254 = vmatpush1.msra.mxu0 %v120
    %255 = vmatprep.subr.mxu0 0.0
    %256 = vmatpush1.msra.mxu0 %v121
    %257 = vmatprep.subr.mxu0 0.0
    %258 = vmatpush1.msra.mxu0 %v122
    %259 = vmatprep.subr.mxu0 0.0
    %260 = vmatpush1.msra.mxu0 %v123
    %261 = vmatprep.subr.mxu0 0.0
    %262 = vmatpush1.msra.mxu0 %v124
    %263 = vmatprep.subr.mxu0 0.0
    %264 = vmatpush1.msra.mxu0 %v243
    %265 = vmatprep.subr.mxu0 0.0
    %266 = vmatpush1.msra.mxu0 0.0
    %267 = vmatprep.subr.mxu0 0.0
    %268 = vmatpush1.msra.mxu0 0.0
    %269 = vmatprep.subr.mxu0 0.0
    %270 = vmatpush1.msra.mxu0 0.0
    %271 = vmatprep.subr.mxu0 0.0
    %272 = vmatpush1.msra.mxu0 0.0
    %273 = vmatprep.subr.mxu0 0.0
    %274 = vmatpush1.msra.mxu0 0.0
    %275 = vmatprep.subr.mxu0 0.0
    %276 = vmatpush1.msra.mxu0 0.0
    %277 = vmatprep.subr.mxu0 0.0
    %278 = vmatpush1.msra.mxu0 0.0
    %279 = vmatprep.subr.mxu0 0.0
    %280 = vmatpush1.msra.mxu0 0.0
    %281 = vmatprep.subr.mxu0 0.0
    %282 = vmatpush1.msra.mxu0 0.0
    %283 = vmatprep.subr.mxu0 0.0
    %284 = vmatpush1.msra.mxu0 0.0
    %285 = vmatprep.subr.mxu0 0.0
    %286 = vmatpush1.msra.mxu0 0.0
    %287 = vmatprep.subr.mxu0 0.0
    %288 = vmatpush1.msra.mxu0 0.0
    %289 = vmatprep.subr.mxu0 0.0
    %290 = vmatpush1.msra.mxu0 0.0
    %291 = vmatprep.subr.mxu0 0.0
    %292 = vmatpush1.msra.mxu0 0.0
    %293 = vmatprep.subr.mxu0 0.0
    %294 = vmatpush1.msra.mxu0 0.0
    %295 = vmatprep.subr.mxu0 0.0
    %296 = vmatpush1.msra.mxu0 0.0
    %297 = vmatprep.subr.mxu0 0.0
    %298 = vmatpush1.msra.mxu0 0.0
    %299 = vmatprep.subr.mxu0 0.0
    %300 = vmatpush1.msra.mxu0 0.0
    %301 = vmatprep.subr.mxu0 0.0
    %302 = vmatpush1.msra.mxu0 0.0
    %303 = vmatprep.subr.mxu0 0.0
    %304 = vmatpush1.msra.mxu0 0.0
    %305 = vmatprep.subr.mxu0 0.0
    %306 = vmatpush1.msra.mxu0 0.0
    %307 = vmatprep.subr.mxu0 0.0
    %308 = vmatpush1.msra.mxu0 0.0
    %309 = vmatprep.mubr.f32.mxu0 0.0
    %310 = vmatmul.mubr.f32.gmra.mrb[0].mxu0 %v236
    %v311 = vpop.f32.mrb[0].mxu0
    %v312 = vadd.f32 %v223, %v311
    %v313 = vpop.f32.mrb[0].mxu0
    %314 = vmatprep.mubr.f32.mxu0 0.0
    %315 = vmatmul.mubr.f32.gmra.mrb[0].mxu0 %v238
    %v316 = vpop.f32.mrb[0].mxu0
    %v317 = vadd.f32 %v228, %v316
    %v318 = vpop.f32.mrb[0].mxu0
    %319 = vmatprep.mubr.f32.mxu0 0.0
    %320 = vmatmul.mubr.f32.gmra.mrb[0].mxu0 %v240
    %v321 = vpop.f32.mrb[0].mxu0
    %v322 = vadd.f32 %v233, %v321
    %v323 = vpop.f32.mrb[0].mxu0
    %324 = vdwg.mxu0
    %s325 = scalar_lea.vmem [#allocation4], 160
    %v326 = vld [vmem:[%s325] sm:$0xff]
    %v327 = vld [vmem:[%s325 + $0x8] sm:$0xff]
    %v328 = vld [vmem:[%s325 + $0x10] sm:$0xff]
    %v329 = vld [vmem:[%s325 + $0x18] sm:$0xff]
    %v330 = vld [vmem:[%s325 + $0x20] sm:$0xff]
    %v331 = vld [vmem:[%s325 + $0x28] sm:$0xff]
    %v332 = vld [vmem:[%s325 + $0x30] sm:$0xff]
    %v333 = vld [vmem:[%s325 + $0x38] sm:$0xff]
    %v334 = vld [vmem:[%s325 + $0x40] sm:$0xff]
    %v335 = vld [vmem:[%s325 + $0x48] sm:$0x3f]
    %v336 = vrot.slane %v108, 2
    %v337 = vrot.slane %v109, 2
    %v338 = vsel %vm152, %v336, %v337
    %v339 = vrot.slane %v110, 2
    %v340 = vsel %vm152, %v337, %v339
    %v341 = vsel %vm55, %v338, 0
    %v343 = vsel %vm55, %v340, 0
    %v345 = vsel %vm55, %v339, 0
    %v348 = vsel %vm152, %v335, 0
    %350 = vmatprep.subr.mxu0 0.0
    %351 = vmatpush1.msra.mxu0 %v326
    %352 = vmatprep.subr.mxu0 0.0
    %353 = vmatpush1.msra.mxu0 %v327
    %354 = vmatprep.subr.mxu0 0.0
    %355 = vmatpush1.msra.mxu0 %v328
    %356 = vmatprep.subr.mxu0 0.0
    %357 = vmatpush1.msra.mxu0 %v329
    %358 = vmatprep.subr.mxu0 0.0
    %359 = vmatpush1.msra.mxu0 %v330
    %360 = vmatprep.subr.mxu0 0.0
    %361 = vmatpush1.msra.mxu0 %v331
    %362 = vmatprep.subr.mxu0 0.0
    %363 = vmatpush1.msra.mxu0 %v332
    %364 = vmatprep.subr.mxu0 0.0
    %365 = vmatpush1.msra.mxu0 %v333
    %366 = vmatprep.subr.mxu0 0.0
    %367 = vmatpush1.msra.mxu0 %v334
    %368 = vmatprep.subr.mxu0 0.0
    %369 = vmatpush1.msra.mxu0 %v348
    %370 = vmatprep.subr.mxu0 0.0
    %371 = vmatpush1.msra.mxu0 0.0
    %372 = vmatprep.subr.mxu0 0.0
    %373 = vmatpush1.msra.mxu0 0.0
    %374 = vmatprep.subr.mxu0 0.0
    %375 = vmatpush1.msra.mxu0 0.0
    %376 = vmatprep.subr.mxu0 0.0
    %377 = vmatpush1.msra.mxu0 0.0
    %378 = vmatprep.subr.mxu0 0.0
    %379 = vmatpush1.msra.mxu0 0.0
    %380 = vmatprep.subr.mxu0 0.0
    %381 = vmatpush1.msra.mxu0 0.0
    %382 = vmatprep.subr.mxu0 0.0
    %383 = vmatpush1.msra.mxu0 0.0
    %384 = vmatprep.subr.mxu0 0.0
    %385 = vmatpush1.msra.mxu0 0.0
    %386 = vmatprep.subr.mxu0 0.0
    %387 = vmatpush1.msra.mxu0 0.0
    %388 = vmatprep.subr.mxu0 0.0
    %389 = vmatpush1.msra.mxu0 0.0
    %390 = vmatprep.subr.mxu0 0.0
    %391 = vmatpush1.msra.mxu0 0.0
    %392 = vmatprep.subr.mxu0 0.0
    %393 = vmatpush1.msra.mxu0 0.0
    %394 = vmatprep.subr.mxu0 0.0
    %395 = vmatpush1.msra.mxu0 0.0
    %396 = vmatprep.subr.mxu0 0.0
    %397 = vmatpush1.msra.mxu0 0.0
    %398 = vmatprep.subr.mxu0 0.0
    %399 = vmatpush1.msra.mxu0 0.0
    %400 = vmatprep.subr.mxu0 0.0
    %401 = vmatpush1.msra.mxu0 0.0
    %402 = vmatprep.subr.mxu0 0.0
    %403 = vmatpush1.msra.mxu0 0.0
    %404 = vmatprep.subr.mxu0 0.0
    %405 = vmatpush1.msra.mxu0 0.0
    %406 = vmatprep.subr.mxu0 0.0
    %407 = vmatpush1.msra.mxu0 0.0
    %408 = vmatprep.subr.mxu0 0.0
    %409 = vmatpush1.msra.mxu0 0.0
    %410 = vmatprep.subr.mxu0 0.0
    %411 = vmatpush1.msra.mxu0 0.0
    %412 = vmatprep.subr.mxu0 0.0
    %413 = vmatpush1.msra.mxu0 0.0
    %414 = vmatprep.mubr.f32.mxu0 0.0
    %415 = vmatmul.mubr.f32.gmra.mrb[0].mxu0 %v341
    %v416 = vpop.f32.mrb[0].mxu0
    %v417 = vadd.f32 0.0, %v416
    %v418 = vpop.f32.mrb[0].mxu0
    %419 = vmatprep.mubr.f32.mxu0 0.0
    %420 = vmatmul.mubr.f32.gmra.mrb[0].mxu0 %v343
    %v421 = vpop.f32.mrb[0].mxu0
    %v422 = vadd.f32 0.0, %v421
    %v423 = vpop.f32.mrb[0].mxu0
    %424 = vmatprep.mubr.f32.mxu0 0.0
    %425 = vmatmul.mubr.f32.gmra.mrb[0].mxu0 %v345
    %v426 = vpop.f32.mrb[0].mxu0
    %v427 = vadd.f32 0.0, %v426
    %v428 = vpop.f32.mrb[0].mxu0
    %429 = vdwg.mxu0
    %v430 = vadd.f32 %v312, %v417
    %v431 = vadd.f32 %v317, %v422
    %v432 = vadd.f32 %v322, %v427
    %s433 = scalar_lea.vmem [#allocation4], 240
    %v434 = vld [vmem:[%s433] sm:$0xff]
    %v435 = vld [vmem:[%s433 + $0x8] sm:$0xff]
    %v436 = vld [vmem:[%s433 + $0x10] sm:$0xff]
    %v437 = vld [vmem:[%s433 + $0x18] sm:$0xff]
    %v438 = vld [vmem:[%s433 + $0x20] sm:$0xff]
    %v439 = vld [vmem:[%s433 + $0x28] sm:$0xff]
    %v440 = vld [vmem:[%s433 + $0x30] sm:$0xff]
    %v441 = vld [vmem:[%s433 + $0x38] sm:$0xff]
    %v442 = vld [vmem:[%s433 + $0x40] sm:$0xff]
    %v443 = vld [vmem:[%s433 + $0x48] sm:$0x3f]
    %vm444 = vcmask 1044480
    %v445 = vrot.slane %v108, 3
    %v446 = vrot.slane %v109, 3
    %v447 = vsel %vm444, %v445, %v446
    %v448 = vrot.slane %v110, 3
    %v449 = vsel %vm444, %v446, %v448
    %v450 = vsel %vm55, %v447, 0
    %v452 = vsel %vm55, %v449, 0
    %v454 = vsel %vm55, %v448, 0
    %v457 = vsel %vm152, %v443, 0
    %459 = vmatprep.subr.mxu0 0.0
    %460 = vmatpush1.msra.mxu0 %v434
    %461 = vmatprep.subr.mxu0 0.0
    %462 = vmatpush1.msra.mxu0 %v435
    %463 = vmatprep.subr.mxu0 0.0
    %464 = vmatpush1.msra.mxu0 %v436
    %465 = vmatprep.subr.mxu0 0.0
    %466 = vmatpush1.msra.mxu0 %v437
    %467 = vmatprep.subr.mxu0 0.0
    %468 = vmatpush1.msra.mxu0 %v438
    %469 = vmatprep.subr.mxu0 0.0
    %470 = vmatpush1.msra.mxu0 %v439
    %471 = vmatprep.subr.mxu0 0.0
    %472 = vmatpush1.msra.mxu0 %v440
    %473 = vmatprep.subr.mxu0 0.0
    %474 = vmatpush1.msra.mxu0 %v441
    %475 = vmatprep.subr.mxu0 0.0
    %476 = vmatpush1.msra.mxu0 %v442
    %477 = vmatprep.subr.mxu0 0.0
    %478 = vmatpush1.msra.mxu0 %v457
    %479 = vmatprep.subr.mxu0 0.0
    %480 = vmatpush1.msra.mxu0 0.0
    %481 = vmatprep.subr.mxu0 0.0
    %482 = vmatpush1.msra.mxu0 0.0
    %483 = vmatprep.subr.mxu0 0.0
    %484 = vmatpush1.msra.mxu0 0.0
    %485 = vmatprep.subr.mxu0 0.0
    %486 = vmatpush1.msra.mxu0 0.0
    %487 = vmatprep.subr.mxu0 0.0
    %488 = vmatpush1.msra.mxu0 0.0
    %489 = vmatprep.subr.mxu0 0.0
    %490 = vmatpush1.msra.mxu0 0.0
    %491 = vmatprep.subr.mxu0 0.0
    %492 = vmatpush1.msra.mxu0 0.0
    %493 = vmatprep.subr.mxu0 0.0
    %494 = vmatpush1.msra.mxu0 0.0
    %495 = vmatprep.subr.mxu0 0.0
    %496 = vmatpush1.msra.mxu0 0.0
    %497 = vmatprep.subr.mxu0 0.0
    %498 = vmatpush1.msra.mxu0 0.0
    %499 = vmatprep.subr.mxu0 0.0
    %500 = vmatpush1.msra.mxu0 0.0
    %501 = vmatprep.subr.mxu0 0.0
    %502 = vmatpush1.msra.mxu0 0.0
    %503 = vmatprep.subr.mxu0 0.0
    %504 = vmatpush1.msra.mxu0 0.0
    %505 = vmatprep.subr.mxu0 0.0
    %506 = vmatpush1.msra.mxu0 0.0
    %507 = vmatprep.subr.mxu0 0.0
    %508 = vmatpush1.msra.mxu0 0.0
    %509 = vmatprep.subr.mxu0 0.0
    %510 = vmatpush1.msra.mxu0 0.0
    %511 = vmatprep.subr.mxu0 0.0
    %512 = vmatpush1.msra.mxu0 0.0
    %513 = vmatprep.subr.mxu0 0.0
    %514 = vmatpush1.msra.mxu0 0.0
    %515 = vmatprep.subr.mxu0 0.0
    %516 = vmatpush1.msra.mxu0 0.0
    %517 = vmatprep.subr.mxu0 0.0
    %518 = vmatpush1.msra.mxu0 0.0
    %519 = vmatprep.subr.mxu0 0.0
    %520 = vmatpush1.msra.mxu0 0.0
    %521 = vmatprep.subr.mxu0 0.0
    %522 = vmatpush1.msra.mxu0 0.0
    %523 = vmatprep.mubr.f32.mxu0 0.0
    %524 = vmatmul.mubr.f32.gmra.mrb[0].mxu0 %v450
    %v525 = vpop.f32.mrb[0].mxu0
    %v526 = vadd.f32 0.0, %v525
    %v527 = vpop.f32.mrb[0].mxu0
    %528 = vmatprep.mubr.f32.mxu0 0.0
    %529 = vmatmul.mubr.f32.gmra.mrb[0].mxu0 %v452
    %v530 = vpop.f32.mrb[0].mxu0
    %v531 = vadd.f32 0.0, %v530
    %v532 = vpop.f32.mrb[0].mxu0
    %533 = vmatprep.mubr.f32.mxu0 0.0
    %534 = vmatmul.mubr.f32.gmra.mrb[0].mxu0 %v454
    %v535 = vpop.f32.mrb[0].mxu0
    %v536 = vadd.f32 0.0, %v535
    %v537 = vpop.f32.mrb[0].mxu0
    %538 = vdwg.mxu0
    %v539 = vadd.f32 %v430, %v526
    %v540 = vadd.f32 %v431, %v531
    %v541 = vadd.f32 %v432, %v536
    %s542 = scalar_lea.vmem [#allocation4], 320
    %v543 = vld [vmem:[%s542] sm:$0xff]
    %v544 = vld [vmem:[%s542 + $0x8] sm:$0xff]
    %v545 = vld [vmem:[%s542 + $0x10] sm:$0xff]
    %v546 = vld [vmem:[%s542 + $0x18] sm:$0xff]
    %v547 = vld [vmem:[%s542 + $0x20] sm:$0xff]
    %v548 = vld [vmem:[%s542 + $0x28] sm:$0xff]
    %v549 = vld [vmem:[%s542 + $0x30] sm:$0xff]
    %v550 = vld [vmem:[%s542 + $0x38] sm:$0xff]
    %v551 = vld [vmem:[%s542 + $0x40] sm:$0xff]
    %v552 = vld [vmem:[%s542 + $0x48] sm:$0x3f]
    %vm553 = vcmask 1043456
    %v554 = vrot.slane %v108, 4
    %v555 = vrot.slane %v109, 4
    %v556 = vsel %vm553, %v554, %v555
    %v557 = vrot.slane %v110, 4
    %v558 = vsel %vm553, %v555, %v557
    %v559 = vsel %vm55, %v556, 0
    %v561 = vsel %vm55, %v558, 0
    %v563 = vsel %vm55, %v557, 0
    %v566 = vsel %vm152, %v552, 0
    %568 = vmatprep.subr.mxu0 0.0
    %569 = vmatpush1.msra.mxu0 %v543
    %570 = vmatprep.subr.mxu0 0.0
    %571 = vmatpush1.msra.mxu0 %v544
    %572 = vmatprep.subr.mxu0 0.0
    %573 = vmatpush1.msra.mxu0 %v545
    %574 = vmatprep.subr.mxu0 0.0
    %575 = vmatpush1.msra.mxu0 %v546
    %576 = vmatprep.subr.mxu0 0.0
    %577 = vmatpush1.msra.mxu0 %v547
    %578 = vmatprep.subr.mxu0 0.0
    %579 = vmatpush1.msra.mxu0 %v548
    %580 = vmatprep.subr.mxu0 0.0
    %581 = vmatpush1.msra.mxu0 %v549
    %582 = vmatprep.subr.mxu0 0.0
    %583 = vmatpush1.msra.mxu0 %v550
    %584 = vmatprep.subr.mxu0 0.0
    %585 = vmatpush1.msra.mxu0 %v551
    %586 = vmatprep.subr.mxu0 0.0
    %587 = vmatpush1.msra.mxu0 %v566
    %588 = vmatprep.subr.mxu0 0.0
    %589 = vmatpush1.msra.mxu0 0.0
    %590 = vmatprep.subr.mxu0 0.0
    %591 = vmatpush1.msra.mxu0 0.0
    %592 = vmatprep.subr.mxu0 0.0
    %593 = vmatpush1.msra.mxu0 0.0
    %594 = vmatprep.subr.mxu0 0.0
    %595 = vmatpush1.msra.mxu0 0.0
    %596 = vmatprep.subr.mxu0 0.0
    %597 = vmatpush1.msra.mxu0 0.0
    %598 = vmatprep.subr.mxu0 0.0
    %599 = vmatpush1.msra.mxu0 0.0
    %600 = vmatprep.subr.mxu0 0.0
    %601 = vmatpush1.msra.mxu0 0.0
    %602 = vmatprep.subr.mxu0 0.0
    %603 = vmatpush1.msra.mxu0 0.0
    %604 = vmatprep.subr.mxu0 0.0
    %605 = vmatpush1.msra.mxu0 0.0
    %606 = vmatprep.subr.mxu0 0.0
    %607 = vmatpush1.msra.mxu0 0.0
    %608 = vmatprep.subr.mxu0 0.0
    %609 = vmatpush1.msra.mxu0 0.0
    %610 = vmatprep.subr.mxu0 0.0
    %611 = vmatpush1.msra.mxu0 0.0
    %612 = vmatprep.subr.mxu0 0.0
    %613 = vmatpush1.msra.mxu0 0.0
    %614 = vmatprep.subr.mxu0 0.0
    %615 = vmatpush1.msra.mxu0 0.0
    %616 = vmatprep.subr.mxu0 0.0
    %617 = vmatpush1.msra.mxu0 0.0
    %618 = vmatprep.subr.mxu0 0.0
    %619 = vmatpush1.msra.mxu0 0.0
    %620 = vmatprep.subr.mxu0 0.0
    %621 = vmatpush1.msra.mxu0 0.0
    %622 = vmatprep.subr.mxu0 0.0
    %623 = vmatpush1.msra.mxu0 0.0
    %624 = vmatprep.subr.mxu0 0.0
    %625 = vmatpush1.msra.mxu0 0.0
    %626 = vmatprep.subr.mxu0 0.0
    %627 = vmatpush1.msra.mxu0 0.0
    %628 = vmatprep.subr.mxu0 0.0
    %629 = vmatpush1.msra.mxu0 0.0
    %630 = vmatprep.subr.mxu0 0.0
    %631 = vmatpush1.msra.mxu0 0.0
    %632 = vmatprep.mubr.f32.mxu0 0.0
    %633 = vmatmul.mubr.f32.gmra.mrb[0].mxu0 %v559
    %v634 = vpop.f32.mrb[0].mxu0
    %v635 = vadd.f32 0.0, %v634
    %v636 = vpop.f32.mrb[0].mxu0
    %637 = vmatprep.mubr.f32.mxu0 0.0
    %638 = vmatmul.mubr.f32.gmra.mrb[0].mxu0 %v561
    %v639 = vpop.f32.mrb[0].mxu0
    %v640 = vadd.f32 0.0, %v639
    %v641 = vpop.f32.mrb[0].mxu0
    %642 = vmatprep.mubr.f32.mxu0 0.0
    %643 = vmatmul.mubr.f32.gmra.mrb[0].mxu0 %v563
    %v644 = vpop.f32.mrb[0].mxu0
    %v645 = vadd.f32 0.0, %v644
    %v646 = vpop.f32.mrb[0].mxu0
    %647 = vdwg.mxu0
    %v648 = vadd.f32 %v539, %v635
    %v649 = vadd.f32 %v540, %v640
    %v650 = vadd.f32 %v541, %v645
    %s651 = scalar_lea.vmem [#allocation4], 400
    %v652 = vld [vmem:[%s651] sm:$0xff]
    %v653 = vld [vmem:[%s651 + $0x8] sm:$0xff]
    %v654 = vld [vmem:[%s651 + $0x10] sm:$0xff]
    %v655 = vld [vmem:[%s651 + $0x18] sm:$0xff]
    %v656 = vld [vmem:[%s651 + $0x20] sm:$0xff]
    %v657 = vld [vmem:[%s651 + $0x28] sm:$0xff]
    %v658 = vld [vmem:[%s651 + $0x30] sm:$0xff]
    %v659 = vld [vmem:[%s651 + $0x38] sm:$0xff]
    %v660 = vld [vmem:[%s651 + $0x40] sm:$0xff]
    %v661 = vld [vmem:[%s651 + $0x48] sm:$0x3f]
    %vm663 = vcmask 1042432
    %v664 = vrot.slane %v108, 5
    %v665 = vrot.slane %v109, 5
    %v666 = vsel %vm663, %v664, %v665
    %v667 = vrot.slane %v110, 5
    %v668 = vsel %vm663, %v665, %v667
    %v669 = vrot.slane %v111, 5
    %v670 = vsel %vm663, %v667, %v669
    %v671 = vsel %vm55, %v666, 0
    %v673 = vsel %vm55, %v668, 0
    %v675 = vsel %vm55, %v670, 0
    %v678 = vsel %vm152, %v661, 0
    %680 = vmatprep.subr.mxu0 0.0
    %681 = vmatpush1.msra.mxu0 %v652
    %682 = vmatprep.subr.mxu0 0.0
    %683 = vmatpush1.msra.mxu0 %v653
    %684 = vmatprep.subr.mxu0 0.0
    %685 = vmatpush1.msra.mxu0 %v654
    %686 = vmatprep.subr.mxu0 0.0
    %687 = vmatpush1.msra.mxu0 %v655
    %688 = vmatprep.subr.mxu0 0.0
    %689 = vmatpush1.msra.mxu0 %v656
    %690 = vmatprep.subr.mxu0 0.0
    %691 = vmatpush1.msra.mxu0 %v657
    %692 = vmatprep.subr.mxu0 0.0
    %693 = vmatpush1.msra.mxu0 %v658
    %694 = vmatprep.subr.mxu0 0.0
    %695 = vmatpush1.msra.mxu0 %v659
    %696 = vmatprep.subr.mxu0 0.0
    %697 = vmatpush1.msra.mxu0 %v660
    %698 = vmatprep.subr.mxu0 0.0
    %699 = vmatpush1.msra.mxu0 %v678
    %700 = vmatprep.subr.mxu0 0.0
    %701 = vmatpush1.msra.mxu0 0.0
    %702 = vmatprep.subr.mxu0 0.0
    %703 = vmatpush1.msra.mxu0 0.0
    %704 = vmatprep.subr.mxu0 0.0
    %705 = vmatpush1.msra.mxu0 0.0
    %706 = vmatprep.subr.mxu0 0.0
    %707 = vmatpush1.msra.mxu0 0.0
    %708 = vmatprep.subr.mxu0 0.0
    %709 = vmatpush1.msra.mxu0 0.0
    %710 = vmatprep.subr.mxu0 0.0
    %711 = vmatpush1.msra.mxu0 0.0
    %712 = vmatprep.subr.mxu0 0.0
    %713 = vmatpush1.msra.mxu0 0.0
    %714 = vmatprep.subr.mxu0 0.0
    %715 = vmatpush1.msra.mxu0 0.0
    %716 = vmatprep.subr.mxu0 0.0
    %717 = vmatpush1.msra.mxu0 0.0
    %718 = vmatprep.subr.mxu0 0.0
    %719 = vmatpush1.msra.mxu0 0.0
    %720 = vmatprep.subr.mxu0 0.0
    %721 = vmatpush1.msra.mxu0 0.0
    %722 = vmatprep.subr.mxu0 0.0
    %723 = vmatpush1.msra.mxu0 0.0
    %724 = vmatprep.subr.mxu0 0.0
    %725 = vmatpush1.msra.mxu0 0.0
    %726 = vmatprep.subr.mxu0 0.0
    %727 = vmatpush1.msra.mxu0 0.0
    %728 = vmatprep.subr.mxu0 0.0
    %729 = vmatpush1.msra.mxu0 0.0
    %730 = vmatprep.subr.mxu0 0.0
    %731 = vmatpush1.msra.mxu0 0.0
    %732 = vmatprep.subr.mxu0 0.0
    %733 = vmatpush1.msra.mxu0 0.0
    %734 = vmatprep.subr.mxu0 0.0
    %735 = vmatpush1.msra.mxu0 0.0
    %736 = vmatprep.subr.mxu0 0.0
    %737 = vmatpush1.msra.mxu0 0.0
    %738 = vmatprep.subr.mxu0 0.0
    %739 = vmatpush1.msra.mxu0 0.0
    %740 = vmatprep.subr.mxu0 0.0
    %741 = vmatpush1.msra.mxu0 0.0
    %742 = vmatprep.subr.mxu0 0.0
    %743 = vmatpush1.msra.mxu0 0.0
    %744 = vmatprep.mubr.f32.mxu0 0.0
    %745 = vmatmul.mubr.f32.gmra.mrb[0].mxu0 %v671
    %v746 = vpop.f32.mrb[0].mxu0
    %v747 = vadd.f32 0.0, %v746
    %v748 = vpop.f32.mrb[0].mxu0
    %749 = vmatprep.mubr.f32.mxu0 0.0
    %750 = vmatmul.mubr.f32.gmra.mrb[0].mxu0 %v673
    %v751 = vpop.f32.mrb[0].mxu0
    %v752 = vadd.f32 0.0, %v751
    %v753 = vpop.f32.mrb[0].mxu0
    %754 = vmatprep.mubr.f32.mxu0 0.0
    %755 = vmatmul.mubr.f32.gmra.mrb[0].mxu0 %v675
    %v756 = vpop.f32.mrb[0].mxu0
    %v757 = vadd.f32 0.0, %v756
    %v758 = vpop.f32.mrb[0].mxu0
    %759 = vdwg.mxu0
    %v760 = vadd.f32 %v648, %v747
    %v761 = vadd.f32 %v649, %v752
    %v762 = vadd.f32 %v650, %v757
    %s763 = scalar_lea.vmem [#allocation4], 480
    %v764 = vld [vmem:[%s763] sm:$0xff]
    %v765 = vld [vmem:[%s763 + $0x8] sm:$0xff]
    %v766 = vld [vmem:[%s763 + $0x10] sm:$0xff]
    %v767 = vld [vmem:[%s763 + $0x18] sm:$0xff]
    %v768 = vld [vmem:[%s763 + $0x20] sm:$0xff]
    %v769 = vld [vmem:[%s763 + $0x28] sm:$0xff]
    %v770 = vld [vmem:[%s763 + $0x30] sm:$0xff]
    %v771 = vld [vmem:[%s763 + $0x38] sm:$0xff]
    %v772 = vld [vmem:[%s763 + $0x40] sm:$0xff]
    %v773 = vld [vmem:[%s763 + $0x48] sm:$0x3f]
    %vm774 = vcmask 1041408
    %v775 = vrot.slane %v108, 6
    %v776 = vrot.slane %v109, 6
    %v777 = vsel %vm774, %v775, %v776
    %v778 = vrot.slane %v110, 6
    %v779 = vsel %vm774, %v776, %v778
    %v780 = vrot.slane %v111, 6
    %v781 = vsel %vm774, %v778, %v780
    %v782 = vsel %vm55, %v777, 0
    %v784 = vsel %vm55, %v779, 0
    %v786 = vsel %vm55, %v781, 0
    %v789 = vsel %vm152, %v773, 0
    %791 = vmatprep.subr.mxu0 0.0
    %792 = vmatpush1.msra.mxu0 %v764
    %793 = vmatprep.subr.mxu0 0.0
    %794 = vmatpush1.msra.mxu0 %v765
    %795 = vmatprep.subr.mxu0 0.0
    %796 = vmatpush1.msra.mxu0 %v766
    %797 = vmatprep.subr.mxu0 0.0
    %798 = vmatpush1.msra.mxu0 %v767
    %799 = vmatprep.subr.mxu0 0.0
    %800 = vmatpush1.msra.mxu0 %v768
    %801 = vmatprep.subr.mxu0 0.0
    %802 = vmatpush1.msra.mxu0 %v769
    %803 = vmatprep.subr.mxu0 0.0
    %804 = vmatpush1.msra.mxu0 %v770
    %805 = vmatprep.subr.mxu0 0.0
    %806 = vmatpush1.msra.mxu0 %v771
    %807 = vmatprep.subr.mxu0 0.0
    %808 = vmatpush1.msra.mxu0 %v772
    %809 = vmatprep.subr.mxu0 0.0
    %810 = vmatpush1.msra.mxu0 %v789
    %811 = vmatprep.subr.mxu0 0.0
    %812 = vmatpush1.msra.mxu0 0.0
    %813 = vmatprep.subr.mxu0 0.0
    %814 = vmatpush1.msra.mxu0 0.0
    %815 = vmatprep.subr.mxu0 0.0
    %816 = vmatpush1.msra.mxu0 0.0
    %817 = vmatprep.subr.mxu0 0.0
    %818 = vmatpush1.msra.mxu0 0.0
    %819 = vmatprep.subr.mxu0 0.0
    %820 = vmatpush1.msra.mxu0 0.0
    %821 = vmatprep.subr.mxu0 0.0
    %822 = vmatpush1.msra.mxu0 0.0
    %823 = vmatprep.subr.mxu0 0.0
    %824 = vmatpush1.msra.mxu0 0.0
    %825 = vmatprep.subr.mxu0 0.0
    %826 = vmatpush1.msra.mxu0 0.0
    %827 = vmatprep.subr.mxu0 0.0
    %828 = vmatpush1.msra.mxu0 0.0
    %829 = vmatprep.subr.mxu0 0.0
    %830 = vmatpush1.msra.mxu0 0.0
    %831 = vmatprep.subr.mxu0 0.0
    %832 = vmatpush1.msra.mxu0 0.0
    %833 = vmatprep.subr.mxu0 0.0
    %834 = vmatpush1.msra.mxu0 0.0
    %835 = vmatprep.subr.mxu0 0.0
    %836 = vmatpush1.msra.mxu0 0.0
    %837 = vmatprep.subr.mxu0 0.0
    %838 = vmatpush1.msra.mxu0 0.0
    %839 = vmatprep.subr.mxu0 0.0
    %840 = vmatpush1.msra.mxu0 0.0
    %841 = vmatprep.subr.mxu0 0.0
    %842 = vmatpush1.msra.mxu0 0.0
    %843 = vmatprep.subr.mxu0 0.0
    %844 = vmatpush1.msra.mxu0 0.0
    %845 = vmatprep.subr.mxu0 0.0
    %846 = vmatpush1.msra.mxu0 0.0
    %847 = vmatprep.subr.mxu0 0.0
    %848 = vmatpush1.msra.mxu0 0.0
    %849 = vmatprep.subr.mxu0 0.0
    %850 = vmatpush1.msra.mxu0 0.0
    %851 = vmatprep.subr.mxu0 0.0
    %852 = vmatpush1.msra.mxu0 0.0
    %853 = vmatprep.subr.mxu0 0.0
    %854 = vmatpush1.msra.mxu0 0.0
    %855 = vmatprep.mubr.f32.mxu0 0.0
    %856 = vmatmul.mubr.f32.gmra.mrb[0].mxu0 %v782
    %v857 = vpop.f32.mrb[0].mxu0
    %v858 = vadd.f32 0.0, %v857
    %v859 = vpop.f32.mrb[0].mxu0
    %860 = vmatprep.mubr.f32.mxu0 0.0
    %861 = vmatmul.mubr.f32.gmra.mrb[0].mxu0 %v784
    %v862 = vpop.f32.mrb[0].mxu0
    %v863 = vadd.f32 0.0, %v862
    %v864 = vpop.f32.mrb[0].mxu0
    %865 = vmatprep.mubr.f32.mxu0 0.0
    %866 = vmatmul.mubr.f32.gmra.mrb[0].mxu0 %v786
    %v867 = vpop.f32.mrb[0].mxu0
    %v868 = vadd.f32 0.0, %v867
    %v869 = vpop.f32.mrb[0].mxu0
    %870 = vdwg.mxu0
    %v871 = vadd.f32 %v760, %v858
    %v872 = vadd.f32 %v761, %v863
    %v873 = vadd.f32 %v762, %v868
    %vm874 = vcmp.eq.s32.totalorder %v113, 2
    %vm875 = vcmp.eq.s32.totalorder %v114, 2
    %vm876 = vcmp.eq.s32.totalorder %v115, 2
    %vm877 = vcmp.eq.s32.totalorder %v113, 23
    %vm878 = vcmp.eq.s32.totalorder %v114, 23
    %vm879 = vcmp.eq.s32.totalorder %v115, 23
    %vm880 = vmor %vm874, %vm877
    %vm881 = vmor %vm875, %vm878
    %vm882 = vmor %vm876, %vm879
    %v883 = vsel %vm880, 0.0, %v108
    %v884 = vsel %vm881, 0.0, %v109
    %v885 = vsel %vm882, 0.0, %v110
    %s886 = scalar_lea.vmem [#allocation4], 560
    %v887 = vld [vmem:[%s886] sm:$0xff]
    %v888 = vld [vmem:[%s886 + $0x8] sm:$0xff]
    %v889 = vld [vmem:[%s886 + $0x10] sm:$0xff]
    %v890 = vld [vmem:[%s886 + $0x18] sm:$0xff]
    %v891 = vld [vmem:[%s886 + $0x20] sm:$0xff]
    %v892 = vld [vmem:[%s886 + $0x28] sm:$0xff]
    %v893 = vld [vmem:[%s886 + $0x30] sm:$0xff]
    %v894 = vld [vmem:[%s886 + $0x38] sm:$0xff]
    %v895 = vld [vmem:[%s886 + $0x40] sm:$0xff]
    %v896 = vld [vmem:[%s886 + $0x48] sm:$0x3f]
    %v900 = vrot.slane %v883, 2
    %v901 = vrot.slane %v884, 2
    %v902 = vsel %vm152, %v900, %v901
    %v903 = vrot.slane %v885, 2
    %v904 = vsel %vm152, %v901, %v903
    %v905 = vsel %vm55, %v902, 0
    %v907 = vsel %vm55, %v904, 0
    %v909 = vsel %vm55, %v903, 0
    %v912 = vsel %vm152, %v896, 0
    %914 = vmatprep.subr.mxu0 0.0
    %915 = vmatpush1.msra.mxu0 %v887
    %916 = vmatprep.subr.mxu0 0.0
    %917 = vmatpush1.msra.mxu0 %v888
    %918 = vmatprep.subr.mxu0 0.0
    %919 = vmatpush1.msra.mxu0 %v889
    %920 = vmatprep.subr.mxu0 0.0
    %921 = vmatpush1.msra.mxu0 %v890
    %922 = vmatprep.subr.mxu0 0.0
    %923 = vmatpush1.msra.mxu0 %v891
    %924 = vmatprep.subr.mxu0 0.0
    %925 = vmatpush1.msra.mxu0 %v892
    %926 = vmatprep.subr.mxu0 0.0
    %927 = vmatpush1.msra.mxu0 %v893
    %928 = vmatprep.subr.mxu0 0.0
    %929 = vmatpush1.msra.mxu0 %v894
    %930 = vmatprep.subr.mxu0 0.0
    %931 = vmatpush1.msra.mxu0 %v895
    %932 = vmatprep.subr.mxu0 0.0
    %933 = vmatpush1.msra.mxu0 %v912
    %934 = vmatprep.subr.mxu0 0.0
    %935 = vmatpush1.msra.mxu0 0.0
    %936 = vmatprep.subr.mxu0 0.0
    %937 = vmatpush1.msra.mxu0 0.0
    %938 = vmatprep.subr.mxu0 0.0
    %939 = vmatpush1.msra.mxu0 0.0
    %940 = vmatprep.subr.mxu0 0.0
    %941 = vmatpush1.msra.mxu0 0.0
    %942 = vmatprep.subr.mxu0 0.0
    %943 = vmatpush1.msra.mxu0 0.0
    %944 = vmatprep.subr.mxu0 0.0
    %945 = vmatpush1.msra.mxu0 0.0
    %946 = vmatprep.subr.mxu0 0.0
    %947 = vmatpush1.msra.mxu0 0.0
    %948 = vmatprep.subr.mxu0 0.0
    %949 = vmatpush1.msra.mxu0 0.0
    %950 = vmatprep.subr.mxu0 0.0
    %951 = vmatpush1.msra.mxu0 0.0
    %952 = vmatprep.subr.mxu0 0.0
    %953 = vmatpush1.msra.mxu0 0.0
    %954 = vmatprep.subr.mxu0 0.0
    %955 = vmatpush1.msra.mxu0 0.0
    %956 = vmatprep.subr.mxu0 0.0
    %957 = vmatpush1.msra.mxu0 0.0
    %958 = vmatprep.subr.mxu0 0.0
    %959 = vmatpush1.msra.mxu0 0.0
    %960 = vmatprep.subr.mxu0 0.0
    %961 = vmatpush1.msra.mxu0 0.0
    %962 = vmatprep.subr.mxu0 0.0
    %963 = vmatpush1.msra.mxu0 0.0
    %964 = vmatprep.subr.mxu0 0.0
    %965 = vmatpush1.msra.mxu0 0.0
    %966 = vmatprep.subr.mxu0 0.0
    %967 = vmatpush1.msra.mxu0 0.0
    %968 = vmatprep.subr.mxu0 0.0
    %969 = vmatpush1.msra.mxu0 0.0
    %970 = vmatprep.subr.mxu0 0.0
    %971 = vmatpush1.msra.mxu0 0.0
    %972 = vmatprep.subr.mxu0 0.0
    %973 = vmatpush1.msra.mxu0 0.0
    %974 = vmatprep.subr.mxu0 0.0
    %975 = vmatpush1.msra.mxu0 0.0
    %976 = vmatprep.subr.mxu0 0.0
    %977 = vmatpush1.msra.mxu0 0.0
    %978 = vmatprep.mubr.f32.mxu0 0.0
    %979 = vmatmul.mubr.f32.gmra.mrb[0].mxu0 %v905
    %v980 = vpop.f32.mrb[0].mxu0
    %v981 = vadd.f32 0.0, %v980
    %v982 = vpop.f32.mrb[0].mxu0
    %983 = vmatprep.mubr.f32.mxu0 0.0
    %984 = vmatmul.mubr.f32.gmra.mrb[0].mxu0 %v907
    %v985 = vpop.f32.mrb[0].mxu0
    %v986 = vadd.f32 0.0, %v985
    %v987 = vpop.f32.mrb[0].mxu0
    %988 = vmatprep.mubr.f32.mxu0 0.0
    %989 = vmatmul.mubr.f32.gmra.mrb[0].mxu0 %v909
    %v990 = vpop.f32.mrb[0].mxu0
    %v991 = vadd.f32 0.0, %v990
    %v992 = vpop.f32.mrb[0].mxu0
    %993 = vdwg.mxu0
    %v994 = vadd.f32 %v871, %v981
    %v995 = vadd.f32 %v872, %v986
    %v996 = vadd.f32 %v873, %v991
    %s997 = scalar_lea.vmem [#allocation4], 640
    %v998 = vld [vmem:[%s997] sm:$0xff]
    %v999 = vld [vmem:[%s997 + $0x8] sm:$0xff]
    %v1000 = vld [vmem:[%s997 + $0x10] sm:$0xff]
    %v1001 = vld [vmem:[%s997 + $0x18] sm:$0xff]
    %v1002 = vld [vmem:[%s997 + $0x20] sm:$0xff]
    %v1003 = vld [vmem:[%s997 + $0x28] sm:$0xff]
    %v1004 = vld [vmem:[%s997 + $0x30] sm:$0xff]
    %v1005 = vld [vmem:[%s997 + $0x38] sm:$0xff]
    %v1006 = vld [vmem:[%s997 + $0x40] sm:$0xff]
    %v1007 = vld [vmem:[%s997 + $0x48] sm:$0x3f]
    %v1008 = vrot.slane %v883, 3
    %v1009 = vrot.slane %v884, 3
    %v1010 = vsel %vm444, %v1008, %v1009
    %v1011 = vrot.slane %v885, 3
    %v1012 = vsel %vm444, %v1009, %v1011
    %v1013 = vsel %vm55, %v1010, 0
    %v1015 = vsel %vm55, %v1012, 0
    %v1017 = vsel %vm55, %v1011, 0
    %v1020 = vsel %vm152, %v1007, 0
    %1022 = vmatprep.subr.mxu0 0.0
    %1023 = vmatpush1.msra.mxu0 %v998
    %1024 = vmatprep.subr.mxu0 0.0
    %1025 = vmatpush1.msra.mxu0 %v999
    %1026 = vmatprep.subr.mxu0 0.0
    %1027 = vmatpush1.msra.mxu0 %v1000
    %1028 = vmatprep.subr.mxu0 0.0
    %1029 = vmatpush1.msra.mxu0 %v1001
    %1030 = vmatprep.subr.mxu0 0.0
    %1031 = vmatpush1.msra.mxu0 %v1002
    %1032 = vmatprep.subr.mxu0 0.0
    %1033 = vmatpush1.msra.mxu0 %v1003
    %1034 = vmatprep.subr.mxu0 0.0
    %1035 = vmatpush1.msra.mxu0 %v1004
    %1036 = vmatprep.subr.mxu0 0.0
    %1037 = vmatpush1.msra.mxu0 %v1005
    %1038 = vmatprep.subr.mxu0 0.0
    %1039 = vmatpush1.msra.mxu0 %v1006
    %1040 = vmatprep.subr.mxu0 0.0
    %1041 = vmatpush1.msra.mxu0 %v1020
    %1042 = vmatprep.subr.mxu0 0.0
    %1043 = vmatpush1.msra.mxu0 0.0
    %1044 = vmatprep.subr.mxu0 0.0
    %1045 = vmatpush1.msra.mxu0 0.0
    %1046 = vmatprep.subr.mxu0 0.0
    %1047 = vmatpush1.msra.mxu0 0.0
    %1048 = vmatprep.subr.mxu0 0.0
    %1049 = vmatpush1.msra.mxu0 0.0
    %1050 = vmatprep.subr.mxu0 0.0
    %1051 = vmatpush1.msra.mxu0 0.0
    %1052 = vmatprep.subr.mxu0 0.0
    %1053 = vmatpush1.msra.mxu0 0.0
    %1054 = vmatprep.subr.mxu0 0.0
    %1055 = vmatpush1.msra.mxu0 0.0
    %1056 = vmatprep.subr.mxu0 0.0
    %1057 = vmatpush1.msra.mxu0 0.0
    %1058 = vmatprep.subr.mxu0 0.0
    %1059 = vmatpush1.msra.mxu0 0.0
    %1060 = vmatprep.subr.mxu0 0.0
    %1061 = vmatpush1.msra.mxu0 0.0
    %1062 = vmatprep.subr.mxu0 0.0
    %1063 = vmatpush1.msra.mxu0 0.0
    %1064 = vmatprep.subr.mxu0 0.0
    %1065 = vmatpush1.msra.mxu0 0.0
    %1066 = vmatprep.subr.mxu0 0.0
    %1067 = vmatpush1.msra.mxu0 0.0
    %1068 = vmatprep.subr.mxu0 0.0
    %1069 = vmatpush1.msra.mxu0 0.0
    %1070 = vmatprep.subr.mxu0 0.0
    %1071 = vmatpush1.msra.mxu0 0.0
    %1072 = vmatprep.subr.mxu0 0.0
    %1073 = vmatpush1.msra.mxu0 0.0
    %1074 = vmatprep.subr.mxu0 0.0
    %1075 = vmatpush1.msra.mxu0 0.0
    %1076 = vmatprep.subr.mxu0 0.0
    %1077 = vmatpush1.msra.mxu0 0.0
    %1078 = vmatprep.subr.mxu0 0.0
    %1079 = vmatpush1.msra.mxu0 0.0
    %1080 = vmatprep.subr.mxu0 0.0
    %1081 = vmatpush1.msra.mxu0 0.0
    %1082 = vmatprep.subr.mxu0 0.0
    %1083 = vmatpush1.msra.mxu0 0.0
    %1084 = vmatprep.subr.mxu0 0.0
    %1085 = vmatpush1.msra.mxu0 0.0
    %1086 = vmatprep.mubr.f32.mxu0 0.0
    %1087 = vmatmul.mubr.f32.gmra.mrb[0].mxu0 %v1013
    %v1088 = vpop.f32.mrb[0].mxu0
    %v1089 = vadd.f32 0.0, %v1088
    %v1090 = vpop.f32.mrb[0].mxu0
    %1091 = vmatprep.mubr.f32.mxu0 0.0
    %1092 = vmatmul.mubr.f32.gmra.mrb[0].mxu0 %v1015
    %v1093 = vpop.f32.mrb[0].mxu0
    %v1094 = vadd.f32 0.0, %v1093
    %v1095 = vpop.f32.mrb[0].mxu0
    %1096 = vmatprep.mubr.f32.mxu0 0.0
    %1097 = vmatmul.mubr.f32.gmra.mrb[0].mxu0 %v1017
    %v1098 = vpop.f32.mrb[0].mxu0
    %v1099 = vadd.f32 0.0, %v1098
    %v1100 = vpop.f32.mrb[0].mxu0
    %1101 = vdwg.mxu0
    %v1102 = vadd.f32 %v994, %v1089
    %v1103 = vadd.f32 %v995, %v1094
    %v1104 = vadd.f32 %v996, %v1099
    %s1105 = scalar_lea.vmem [#allocation4], 720
    %v1106 = vld [vmem:[%s1105] sm:$0xff]
    %v1107 = vld [vmem:[%s1105 + $0x8] sm:$0xff]
    %v1108 = vld [vmem:[%s1105 + $0x10] sm:$0xff]
    %v1109 = vld [vmem:[%s1105 + $0x18] sm:$0xff]
    %v1110 = vld [vmem:[%s1105 + $0x20] sm:$0xff]
    %v1111 = vld [vmem:[%s1105 + $0x28] sm:$0xff]
    %v1112 = vld [vmem:[%s1105 + $0x30] sm:$0xff]
    %v1113 = vld [vmem:[%s1105 + $0x38] sm:$0xff]
    %v1114 = vld [vmem:[%s1105 + $0x40] sm:$0xff]
    %v1115 = vld [vmem:[%s1105 + $0x48] sm:$0x3f]
    %v1116 = vrot.slane %v883, 4
    %v1117 = vrot.slane %v884, 4
    %v1118 = vsel %vm553, %v1116, %v1117
    %v1119 = vrot.slane %v885, 4
    %v1120 = vsel %vm553, %v1117, %v1119
    %v1121 = vsel %vm55, %v1118, 0
    %v1123 = vsel %vm55, %v1120, 0
    %v1125 = vsel %vm55, %v1119, 0
    %v1128 = vsel %vm152, %v1115, 0
    %1130 = vmatprep.subr.mxu0 0.0
    %1131 = vmatpush1.msra.mxu0 %v1106
    %1132 = vmatprep.subr.mxu0 0.0
    %1133 = vmatpush1.msra.mxu0 %v1107
    %1134 = vmatprep.subr.mxu0 0.0
    %1135 = vmatpush1.msra.mxu0 %v1108
    %1136 = vmatprep.subr.mxu0 0.0
    %1137 = vmatpush1.msra.mxu0 %v1109
    %1138 = vmatprep.subr.mxu0 0.0
    %1139 = vmatpush1.msra.mxu0 %v1110
    %1140 = vmatprep.subr.mxu0 0.0
    %1141 = vmatpush1.msra.mxu0 %v1111
    %1142 = vmatprep.subr.mxu0 0.0
    %1143 = vmatpush1.msra.mxu0 %v1112
    %1144 = vmatprep.subr.mxu0 0.0
    %1145 = vmatpush1.msra.mxu0 %v1113
    %1146 = vmatprep.subr.mxu0 0.0
    %1147 = vmatpush1.msra.mxu0 %v1114
    %1148 = vmatprep.subr.mxu0 0.0
    %1149 = vmatpush1.msra.mxu0 %v1128
    %1150 = vmatprep.subr.mxu0 0.0
    %1151 = vmatpush1.msra.mxu0 0.0
    %1152 = vmatprep.subr.mxu0 0.0
    %1153 = vmatpush1.msra.mxu0 0.0
    %1154 = vmatprep.subr.mxu0 0.0
    %1155 = vmatpush1.msra.mxu0 0.0
    %1156 = vmatprep.subr.mxu0 0.0
    %1157 = vmatpush1.msra.mxu0 0.0
    %1158 = vmatprep.subr.mxu0 0.0
    %1159 = vmatpush1.msra.mxu0 0.0
    %1160 = vmatprep.subr.mxu0 0.0
    %1161 = vmatpush1.msra.mxu0 0.0
    %1162 = vmatprep.subr.mxu0 0.0
    %1163 = vmatpush1.msra.mxu0 0.0
    %1164 = vmatprep.subr.mxu0 0.0
    %1165 = vmatpush1.msra.mxu0 0.0
    %1166 = vmatprep.subr.mxu0 0.0
    %1167 = vmatpush1.msra.mxu0 0.0
    %1168 = vmatprep.subr.mxu0 0.0
    %1169 = vmatpush1.msra.mxu0 0.0
    %1170 = vmatprep.subr.mxu0 0.0
    %1171 = vmatpush1.msra.mxu0 0.0
    %1172 = vmatprep.subr.mxu0 0.0
    %1173 = vmatpush1.msra.mxu0 0.0
    %1174 = vmatprep.subr.mxu0 0.0
    %1175 = vmatpush1.msra.mxu0 0.0
    %1176 = vmatprep.subr.mxu0 0.0
    %1177 = vmatpush1.msra.mxu0 0.0
    %1178 = vmatprep.subr.mxu0 0.0
    %1179 = vmatpush1.msra.mxu0 0.0
    %1180 = vmatprep.subr.mxu0 0.0
    %1181 = vmatpush1.msra.mxu0 0.0
    %1182 = vmatprep.subr.mxu0 0.0
    %1183 = vmatpush1.msra.mxu0 0.0
    %1184 = vmatprep.subr.mxu0 0.0
    %1185 = vmatpush1.msra.mxu0 0.0
    %1186 = vmatprep.subr.mxu0 0.0
    %1187 = vmatpush1.msra.mxu0 0.0
    %1188 = vmatprep.subr.mxu0 0.0
    %1189 = vmatpush1.msra.mxu0 0.0
    %1190 = vmatprep.subr.mxu0 0.0
    %1191 = vmatpush1.msra.mxu0 0.0
    %1192 = vmatprep.subr.mxu0 0.0
    %1193 = vmatpush1.msra.mxu0 0.0
    %1194 = vmatprep.mubr.f32.mxu0 0.0
    %1195 = vmatmul.mubr.f32.gmra.mrb[0].mxu0 %v1121
    %v1196 = vpop.f32.mrb[0].mxu0
    %v1197 = vadd.f32 0.0, %v1196
    %v1198 = vpop.f32.mrb[0].mxu0
    %1199 = vmatprep.mubr.f32.mxu0 0.0
    %1200 = vmatmul.mubr.f32.gmra.mrb[0].mxu0 %v1123
    %v1201 = vpop.f32.mrb[0].mxu0
    %v1202 = vadd.f32 0.0, %v1201
    %v1203 = vpop.f32.mrb[0].mxu0
    %1204 = vmatprep.mubr.f32.mxu0 0.0
    %1205 = vmatmul.mubr.f32.gmra.mrb[0].mxu0 %v1125
    %v1206 = vpop.f32.mrb[0].mxu0
    %v1207 = vadd.f32 0.0, %v1206
    %v1208 = vpop.f32.mrb[0].mxu0
    %1209 = vdwg.mxu0
    %v1210 = vadd.f32 %v1102, %v1197
    %v1211 = vadd.f32 %v1103, %v1202
    %v1212 = vadd.f32 %v1104, %v1207
    %vm1213 = vcmp.eq.s32.totalorder %v113, 3
    %vm1214 = vcmp.eq.s32.totalorder %v114, 3
    %vm1215 = vcmp.eq.s32.totalorder %v115, 3
    %vm1216 = vcmp.eq.s32.totalorder %v113, 22
    %vm1217 = vcmp.eq.s32.totalorder %v114, 22
    %vm1218 = vcmp.eq.s32.totalorder %v115, 22
    %vm1219 = vmor %vm1213, %vm1216
    %vm1220 = vmor %vm1214, %vm1217
    %vm1221 = vmor %vm1215, %vm1218
    %v1222 = vsel %vm1219, 0.0, %v108
    %v1223 = vsel %vm1220, 0.0, %v109
    %v1224 = vsel %vm1221, 0.0, %v110
    %s1225 = scalar_lea.vmem [#allocation4], 800
    %v1226 = vld [vmem:[%s1225] sm:$0xff]
    %v1227 = vld [vmem:[%s1225 + $0x8] sm:$0xff]
    %v1228 = vld [vmem:[%s1225 + $0x10] sm:$0xff]
    %v1229 = vld [vmem:[%s1225 + $0x18] sm:$0xff]
    %v1230 = vld [vmem:[%s1225 + $0x20] sm:$0xff]
    %v1231 = vld [vmem:[%s1225 + $0x28] sm:$0xff]
    %v1232 = vld [vmem:[%s1225 + $0x30] sm:$0xff]
    %v1233 = vld [vmem:[%s1225 + $0x38] sm:$0xff]
    %v1234 = vld [vmem:[%s1225 + $0x40] sm:$0xff]
    %v1235 = vld [vmem:[%s1225 + $0x48] sm:$0x3f]
    %v1239 = vrot.slane %v1222, 3
    %v1240 = vrot.slane %v1223, 3
    %v1241 = vsel %vm444, %v1239, %v1240
    %v1242 = vrot.slane %v1224, 3
    %v1243 = vsel %vm444, %v1240, %v1242
    %v1244 = vsel %vm55, %v1241, 0
    %v1246 = vsel %vm55, %v1243, 0
    %v1248 = vsel %vm55, %v1242, 0
    %v1251 = vsel %vm152, %v1235, 0
    %1253 = vmatprep.subr.mxu0 0.0
    %1254 = vmatpush1.msra.mxu0 %v1226
    %1255 = vmatprep.subr.mxu0 0.0
    %1256 = vmatpush1.msra.mxu0 %v1227
    %1257 = vmatprep.subr.mxu0 0.0
    %1258 = vmatpush1.msra.mxu0 %v1228
    %1259 = vmatprep.subr.mxu0 0.0
    %1260 = vmatpush1.msra.mxu0 %v1229
    %1261 = vmatprep.subr.mxu0 0.0
    %1262 = vmatpush1.msra.mxu0 %v1230
    %1263 = vmatprep.subr.mxu0 0.0
    %1264 = vmatpush1.msra.mxu0 %v1231
    %1265 = vmatprep.subr.mxu0 0.0
    %1266 = vmatpush1.msra.mxu0 %v1232
    %1267 = vmatprep.subr.mxu0 0.0
    %1268 = vmatpush1.msra.mxu0 %v1233
    %1269 = vmatprep.subr.mxu0 0.0
    %1270 = vmatpush1.msra.mxu0 %v1234
    %1271 = vmatprep.subr.mxu0 0.0
    %1272 = vmatpush1.msra.mxu0 %v1251
    %1273 = vmatprep.subr.mxu0 0.0
    %1274 = vmatpush1.msra.mxu0 0.0
    %1275 = vmatprep.subr.mxu0 0.0
    %1276 = vmatpush1.msra.mxu0 0.0
    %1277 = vmatprep.subr.mxu0 0.0
    %1278 = vmatpush1.msra.mxu0 0.0
    %1279 = vmatprep.subr.mxu0 0.0
    %1280 = vmatpush1.msra.mxu0 0.0
    %1281 = vmatprep.subr.mxu0 0.0
    %1282 = vmatpush1.msra.mxu0 0.0
    %1283 = vmatprep.subr.mxu0 0.0
    %1284 = vmatpush1.msra.mxu0 0.0
    %1285 = vmatprep.subr.mxu0 0.0
    %1286 = vmatpush1.msra.mxu0 0.0
    %1287 = vmatprep.subr.mxu0 0.0
    %1288 = vmatpush1.msra.mxu0 0.0
    %1289 = vmatprep.subr.mxu0 0.0
    %1290 = vmatpush1.msra.mxu0 0.0
    %1291 = vmatprep.subr.mxu0 0.0
    %1292 = vmatpush1.msra.mxu0 0.0
    %1293 = vmatprep.subr.mxu0 0.0
    %1294 = vmatpush1.msra.mxu0 0.0
    %1295 = vmatprep.subr.mxu0 0.0
    %1296 = vmatpush1.msra.mxu0 0.0
    %1297 = vmatprep.subr.mxu0 0.0
    %1298 = vmatpush1.msra.mxu0 0.0
    %1299 = vmatprep.subr.mxu0 0.0
    %1300 = vmatpush1.msra.mxu0 0.0
    %1301 = vmatprep.subr.mxu0 0.0
    %1302 = vmatpush1.msra.mxu0 0.0
    %1303 = vmatprep.subr.mxu0 0.0
    %1304 = vmatpush1.msra.mxu0 0.0
    %1305 = vmatprep.subr.mxu0 0.0
    %1306 = vmatpush1.msra.mxu0 0.0
    %1307 = vmatprep.subr.mxu0 0.0
    %1308 = vmatpush1.msra.mxu0 0.0
    %1309 = vmatprep.subr.mxu0 0.0
    %1310 = vmatpush1.msra.mxu0 0.0
    %1311 = vmatprep.subr.mxu0 0.0
    %1312 = vmatpush1.msra.mxu0 0.0
    %1313 = vmatprep.subr.mxu0 0.0
    %1314 = vmatpush1.msra.mxu0 0.0
    %1315 = vmatprep.subr.mxu0 0.0
    %1316 = vmatpush1.msra.mxu0 0.0
    %1317 = vmatprep.mubr.f32.mxu0 0.0
    %1318 = vmatmul.mubr.f32.gmra.mrb[0].mxu0 %v1244
    %v1319 = vpop.f32.mrb[0].mxu0
    %v1320 = vadd.f32 0.0, %v1319
    %v1321 = vpop.f32.mrb[0].mxu0
    %1322 = vmatprep.mubr.f32.mxu0 0.0
    %1323 = vmatmul.mubr.f32.gmra.mrb[0].mxu0 %v1246
    %v1324 = vpop.f32.mrb[0].mxu0
    %v1325 = vadd.f32 0.0, %v1324
    %v1326 = vpop.f32.mrb[0].mxu0
    %1327 = vmatprep.mubr.f32.mxu0 0.0
    %1328 = vmatmul.mubr.f32.gmra.mrb[0].mxu0 %v1248
    %v1329 = vpop.f32.mrb[0].mxu0
    %v1330 = vadd.f32 0.0, %v1329
    %v1331 = vpop.f32.mrb[0].mxu0
    %1332 = vdwg.mxu0
    %v1333 = vadd.f32 %v1210, %v1320
    %v1334 = vadd.f32 %v1211, %v1325
    %v1335 = vadd.f32 %v1212, %v1330
    %v1336 = vld [vmem:[%s2] sm:$0x1]
    %v1338 = vlaneseq
    %v1339 = vshrl.u32 %v1338, 7
    %v1340 = vsub.s32 0, %v1339
    %v1341 = vrot.slane %v1336, %v1340
    %v1343 = vadd.f32 %v1333, %v1341
    %v1344 = vadd.f32 %v1334, %v1341
    %v1345 = vadd.f32 %v1335, %v1341
    %v1346 = vmax.f32 %v1343, 0.0
    %v1347 = vmax.f32 %v1344, 0.0
    %v1348 = vmax.f32 %v1345, 0.0
    %v1350 = vrot.slane %v1346, 1
    %v1352 = vmax.f32 %v1346, %v1350
    %v1354 = vrot.slane %v1347, 1
    %v1356 = vmax.f32 %v1347, %v1354
    %v1358 = vrot.slane %v1348, 1
    %v1360 = vmax.f32 %v1348, %v1358
    %v1362 = vrot.slane %v1352, 1
    %v1364 = vrot.slane %v1352, 2
    %v1366 = vrot.slane %v1352, 3
    %v1369 = vrot.slane %v1356, 4
    %v1371 = vrot.slane %v1356, 5
    %v1373 = vrot.slane %v1356, 6
    %v1375 = vrot.slane %v1356, 7
    %v1378 = vrot.slane %v1360, 1
    %vm1380 = vcmask 1040384
    %v1381 = vsel %vm1380, %v1352, %v1362
    %v1382 = vsel %vm774, %v1381, %v1364
    %v1383 = vsel %vm663, %v1382, %v1366
    %v1384 = vsel %vm553, %v1383, %v1369
    %v1385 = vsel %vm444, %v1384, %v1371
    %v1386 = vsel %vm152, %v1385, %v1373
    %v1387 = vsel %vm140, %v1386, %v1375
    %v1388 = vsel %vm1380, %v1360, %v1378
    %1391 = vrot.lane.b32.xlu0 %v1387, 122
    %v1392 = vpop.permute.xlu0 %1391
    %1393 = vrot.lane.b32.xlu0 %v1388, 122
    %v1394 = vpop.permute.xlu0 %1393
    %v1397 = vmax.f32 %v1387, %v1392
    %v1398 = vmax.f32 %v1388, %v1394
    %1401 = vrot.lane.b32.xlu0 %v1397, 6
    %v1402 = vpop.permute.xlu0 %1401
    %1403 = vrot.lane.b32.xlu0 %v1398, 6
    %v1404 = vpop.permute.xlu0 %1403
    %vm1407 = vcmask 97328
    %1408 = vst.msk [vmem:[#allocation3 + $0x1] sm:$0xff] %vm1407, %v1402
    %vm1409 = vcmask 91184
    %1410 = vst.msk [vmem:[#allocation3 + $0x9] sm:$0x3] %vm1409, %v1404
    %vm1411 = vcmask 146528
    %1412 = vst.msk [vmem:[#allocation3 + $0x1] sm:$0xff] %vm1411, %v1397
    %vm1413 = vcmask 140384
    %1414 = vst.msk [vmem:[#allocation3 + $0x9] sm:$0x3] %vm1413, %v1398
    %1415 = vrot.lane.b32.xlu0 %v1397, 122
    %v1416 = vpop.permute.xlu0 %1415
    %1417 = vrot.lane.b32.xlu0 %v1398, 122
    %v1418 = vpop.permute.xlu0 %1417
    %vm1421 = vcmask 195728
    %1422 = vst.msk [vmem:[#allocation3 + $0x1] sm:$0xff] %vm1421, %v1416
    %vm1423 = vcmask 189584
    %1424 = vst.msk [vmem:[#allocation3 + $0x9] sm:$0x3] %vm1423, %v1418
    %1425 = vrot.lane.b32.xlu0 %v1397, 116
    %v1426 = vpop.permute.xlu0 %1425
    %1427 = vrot.lane.b32.xlu0 %v1398, 116
    %v1428 = vpop.permute.xlu0 %1427
    %vm1431 = vcmask 244928
    %1432 = vst.msk [vmem:[#allocation3 + $0x1] sm:$0xff] %vm1431, %v1426
    %vm1433 = vcmask 238784
    %1434 = vst.msk [vmem:[#allocation3 + $0x9] sm:$0x3] %vm1433, %v1428
    %1435 = vrot.lane.b32.xlu0 %v1397, 110
    %v1436 = vpop.permute.xlu0 %1435
    %1437 = vrot.lane.b32.xlu0 %v1398, 110
    %v1438 = vpop.permute.xlu0 %1437
    %vm1441 = vcmask 294128
    %1442 = vst.msk [vmem:[#allocation3 + $0x1] sm:$0xff] %vm1441, %v1436
    %vm1443 = vcmask 287984
    %1444 = vst.msk [vmem:[#allocation3 + $0x9] sm:$0x3] %vm1443, %v1438
    %1445 = vrot.lane.b32.xlu0 %v1397, 104
    %v1446 = vpop.permute.xlu0 %1445
    %1447 = vrot.lane.b32.xlu0 %v1398, 104
    %v1448 = vpop.permute.xlu0 %1447
    %vm1451 = vcmask 343328
    %1452 = vst.msk [vmem:[#allocation3 + $0x1] sm:$0xff] %vm1451, %v1446
    %vm1453 = vcmask 337184
    %1454 = vst.msk [vmem:[#allocation3 + $0x9] sm:$0x3] %vm1453, %v1448
    %1455 = vrot.lane.b32.xlu0 %v1397, 98
    %v1456 = vpop.permute.xlu0 %1455
    %1457 = vrot.lane.b32.xlu0 %v1398, 98
    %v1458 = vpop.permute.xlu0 %1457
    %vm1461 = vcmask 392528
    %1462 = vst.msk [vmem:[#allocation3 + $0x1] sm:$0xff] %vm1461, %v1456
    %vm1463 = vcmask 386384
    %1464 = vst.msk [vmem:[#allocation3 + $0x9] sm:$0x3] %vm1463, %v1458
    %1465 = vrot.lane.b32.xlu0 %v1397, 92
    %v1466 = vpop.permute.xlu0 %1465
    %1467 = vrot.lane.b32.xlu0 %v1398, 92
    %v1468 = vpop.permute.xlu0 %1467
    %vm1471 = vcmask 441728
    %1472 = vst.msk [vmem:[#allocation3 + $0x1] sm:$0xff] %vm1471, %v1466
    %vm1473 = vcmask 435584
    %1474 = vst.msk [vmem:[#allocation3 + $0x9] sm:$0x3] %vm1473, %v1468
    %1475 = vrot.lane.b32.xlu0 %v1397, 86
    %v1476 = vpop.permute.xlu0 %1475
    %1477 = vrot.lane.b32.xlu0 %v1398, 86
    %v1478 = vpop.permute.xlu0 %1477
    %vm1481 = vcmask 490928
    %1482 = vst.msk [vmem:[#allocation3 + $0x1] sm:$0xff] %vm1481, %v1476
    %vm1483 = vcmask 484784
    %1484 = vst.msk [vmem:[#allocation3 + $0x9] sm:$0x3] %vm1483, %v1478
    %1485 = vrot.lane.b32.xlu0 %v1397, 80
    %v1486 = vpop.permute.xlu0 %1485
    %1487 = vrot.lane.b32.xlu0 %v1398, 80
    %v1488 = vpop.permute.xlu0 %1487
    %vm1491 = vcmask 540128
    %1492 = vst.msk [vmem:[#allocation3 + $0x1] sm:$0xff] %vm1491, %v1486
    %vm1493 = vcmask 533984
    %1494 = vst.msk [vmem:[#allocation3 + $0x9] sm:$0x3] %vm1493, %v1488
    %v1495 = vld [vmem:[#allocation3] sm:$0xff]
    %v1496 = vld [vmem:[#allocation3 + $0x8] sm:$0xf]
    %v1497 = vld [vmem:[#allocation7] sm:$0xff]
    %v1498 = vld [vmem:[#allocation7 + $0x8] sm:$0xff]
    %v1499 = vld [vmem:[#allocation7 + $0x10] sm:$0xff]
    %v1500 = vld [vmem:[#allocation7 + $0x18] sm:$0xff]
    %v1501 = vld [vmem:[#allocation7 + $0x20] sm:$0xff]
    %v1502 = vld [vmem:[#allocation7 + $0x28] sm:$0xff]
    %v1503 = vld [vmem:[#allocation7 + $0x30] sm:$0xff]
    %v1504 = vld [vmem:[#allocation7 + $0x38] sm:$0xff]
    %v1505 = vld [vmem:[#allocation7 + $0x40] sm:$0xff]
    %s1506 = scalar_lea.vmem [#allocation7], 72
    %v1507 = vld [vmem:[%s1506] sm:$0xff]
    %v1508 = vld [vmem:[%s1506 + $0x8] sm:$0xff]
    %v1509 = vld [vmem:[%s1506 + $0x10] sm:$0xff]
    %v1510 = vld [vmem:[%s1506 + $0x18] sm:$0xff]
    %v1511 = vld [vmem:[%s1506 + $0x20] sm:$0xff]
    %v1512 = vld [vmem:[%s1506 + $0x28] sm:$0xff]
    %v1513 = vld [vmem:[%s1506 + $0x30] sm:$0xff]
    %v1514 = vld [vmem:[%s1506 + $0x38] sm:$0xff]
    %v1515 = vld [vmem:[%s1506 + $0x40] sm:$0xff]
    %v1517 = vrot.slane %v1495, 1
    %v1518 = vsel %vm65, %v1517, 0
    %1520 = vmatprep.subr.mxu0 0.0
    %1521 = vmatpush1.msra.mxu0 %v1507
    %1522 = vmatprep.subr.mxu0 0.0
    %1523 = vmatpush1.msra.mxu0 %v1508
    %1524 = vmatprep.subr.mxu0 0.0
    %1525 = vmatpush1.msra.mxu0 %v1509
    %1526 = vmatprep.subr.mxu0 0.0
    %1527 = vmatpush1.msra.mxu0 %v1510
    %1528 = vmatprep.subr.mxu0 0.0
    %1529 = vmatpush1.msra.mxu0 %v1511
    %1530 = vmatprep.subr.mxu0 0.0
    %1531 = vmatpush1.msra.mxu0 %v1512
    %1532 = vmatprep.subr.mxu0 0.0
    %1533 = vmatpush1.msra.mxu0 %v1513
    %1534 = vmatprep.subr.mxu0 0.0
    %1535 = vmatpush1.msra.mxu0 %v1514
    %1536 = vmatprep.subr.mxu0 0.0
    %1537 = vmatpush1.msra.mxu0 %v1515
    %1538 = vmatprep.subr.mxu0 0.0
    %1539 = vmatpush1.msra.mxu0 0.0
    %1540 = vmatprep.subr.mxu0 0.0
    %1541 = vmatpush1.msra.mxu0 0.0
    %1542 = vmatprep.subr.mxu0 0.0
    %1543 = vmatpush1.msra.mxu0 0.0
    %1544 = vmatprep.subr.mxu0 0.0
    %1545 = vmatpush1.msra.mxu0 0.0
    %1546 = vmatprep.subr.mxu0 0.0
    %1547 = vmatpush1.msra.mxu0 0.0
    %1548 = vmatprep.subr.mxu0 0.0
    %1549 = vmatpush1.msra.mxu0 0.0
    %1550 = vmatprep.subr.mxu0 0.0
    %1551 = vmatpush1.msra.mxu0 0.0
    %1552 = vmatprep.subr.mxu0 0.0
    %1553 = vmatpush1.msra.mxu0 0.0
    %1554 = vmatprep.subr.mxu0 0.0
    %1555 = vmatpush1.msra.mxu0 0.0
    %1556 = vmatprep.subr.mxu0 0.0
    %1557 = vmatpush1.msra.mxu0 0.0
    %1558 = vmatprep.subr.mxu0 0.0
    %1559 = vmatpush1.msra.mxu0 0.0
    %1560 = vmatprep.subr.mxu0 0.0
    %1561 = vmatpush1.msra.mxu0 0.0
    %1562 = vmatprep.subr.mxu0 0.0
    %1563 = vmatpush1.msra.mxu0 0.0
    %1564 = vmatprep.subr.mxu0 0.0
    %1565 = vmatpush1.msra.mxu0 0.0
    %1566 = vmatprep.subr.mxu0 0.0
    %1567 = vmatpush1.msra.mxu0 0.0
    %1568 = vmatprep.subr.mxu0 0.0
    %1569 = vmatpush1.msra.mxu0 0.0
    %1570 = vmatprep.subr.mxu0 0.0
    %1571 = vmatpush1.msra.mxu0 0.0
    %1572 = vmatprep.subr.mxu0 0.0
    %1573 = vmatpush1.msra.mxu0 0.0
    %1574 = vmatprep.subr.mxu0 0.0
    %1575 = vmatpush1.msra.mxu0 0.0
    %1576 = vmatprep.subr.mxu0 0.0
    %1577 = vmatpush1.msra.mxu0 0.0
    %1578 = vmatprep.subr.mxu0 0.0
    %1579 = vmatpush1.msra.mxu0 0.0
    %1580 = vmatprep.subr.mxu0 0.0
    %1581 = vmatpush1.msra.mxu0 0.0
    %1582 = vmatprep.subr.mxu0 0.0
    %1583 = vmatpush1.msra.mxu0 0.0
    %1584 = vmatprep.mubr.f32.mxu0 0.0
    %1585 = vmatmul.mubr.f32.gmra.mrb[0].mxu0 %v1518
    %v1586 = vpop.f32.mrb[0].mxu0
    %v1587 = vadd.f32 0.0, %v1586
    %v1588 = vpop.f32.mrb[0].mxu0
    %1589 = vdwg.mxu0
    %v1590 = vsel %vm65, %v1495, 0
    %1592 = vmatprep.subr.mxu0 0.0
    %1593 = vmatpush1.msra.mxu0 %v1497
    %1594 = vmatprep.subr.mxu0 0.0
    %1595 = vmatpush1.msra.mxu0 %v1498
    %1596 = vmatprep.subr.mxu0 0.0
    %1597 = vmatpush1.msra.mxu0 %v1499
    %1598 = vmatprep.subr.mxu0 0.0
    %1599 = vmatpush1.msra.mxu0 %v1500
    %1600 = vmatprep.subr.mxu0 0.0
    %1601 = vmatpush1.msra.mxu0 %v1501
    %1602 = vmatprep.subr.mxu0 0.0
    %1603 = vmatpush1.msra.mxu0 %v1502
    %1604 = vmatprep.subr.mxu0 0.0
    %1605 = vmatpush1.msra.mxu0 %v1503
    %1606 = vmatprep.subr.mxu0 0.0
    %1607 = vmatpush1.msra.mxu0 %v1504
    %1608 = vmatprep.subr.mxu0 0.0
    %1609 = vmatpush1.msra.mxu0 %v1505
    %1610 = vmatprep.subr.mxu0 0.0
    %1611 = vmatpush1.msra.mxu0 0.0
    %1612 = vmatprep.subr.mxu0 0.0
    %1613 = vmatpush1.msra.mxu0 0.0
    %1614 = vmatprep.subr.mxu0 0.0
    %1615 = vmatpush1.msra.mxu0 0.0
    %1616 = vmatprep.subr.mxu0 0.0
    %1617 = vmatpush1.msra.mxu0 0.0
    %1618 = vmatprep.subr.mxu0 0.0
    %1619 = vmatpush1.msra.mxu0 0.0
    %1620 = vmatprep.subr.mxu0 0.0
    %1621 = vmatpush1.msra.mxu0 0.0
    %1622 = vmatprep.subr.mxu0 0.0
    %1623 = vmatpush1.msra.mxu0 0.0
    %1624 = vmatprep.subr.mxu0 0.0
    %1625 = vmatpush1.msra.mxu0 0.0
    %1626 = vmatprep.subr.mxu0 0.0
    %1627 = vmatpush1.msra.mxu0 0.0
    %1628 = vmatprep.subr.mxu0 0.0
    %1629 = vmatpush1.msra.mxu0 0.0
    %1630 = vmatprep.subr.mxu0 0.0
    %1631 = vmatpush1.msra.mxu0 0.0
    %1632 = vmatprep.subr.mxu0 0.0
    %1633 = vmatpush1.msra.mxu0 0.0
    %1634 = vmatprep.subr.mxu0 0.0
    %1635 = vmatpush1.msra.mxu0 0.0
    %1636 = vmatprep.subr.mxu0 0.0
    %1637 = vmatpush1.msra.mxu0 0.0
    %1638 = vmatprep.subr.mxu0 0.0
    %1639 = vmatpush1.msra.mxu0 0.0
    %1640 = vmatprep.subr.mxu0 0.0
    %1641 = vmatpush1.msra.mxu0 0.0
    %1642 = vmatprep.subr.mxu0 0.0
    %1643 = vmatpush1.msra.mxu0 0.0
    %1644 = vmatprep.subr.mxu0 0.0
    %1645 = vmatpush1.msra.mxu0 0.0
    %1646 = vmatprep.subr.mxu0 0.0
    %1647 = vmatpush1.msra.mxu0 0.0
    %1648 = vmatprep.subr.mxu0 0.0
    %1649 = vmatpush1.msra.mxu0 0.0
    %1650 = vmatprep.subr.mxu0 0.0
    %1651 = vmatpush1.msra.mxu0 0.0
    %1652 = vmatprep.subr.mxu0 0.0
    %1653 = vmatpush1.msra.mxu0 0.0
    %1654 = vmatprep.subr.mxu0 0.0
    %1655 = vmatpush1.msra.mxu0 0.0
    %1656 = vmatprep.mubr.f32.mxu0 0.0
    %1657 = vmatmul.mubr.f32.gmra.mrb[0].mxu0 %v1590
    %v1658 = vpop.f32.mrb[0].mxu0
    %v1659 = vadd.f32 %v1587, %v1658
    %v1660 = vpop.f32.mrb[0].mxu0
    %1661 = vdwg.mxu0
    %s1662 = scalar_lea.vmem [#allocation7], 144
    %v1663 = vld [vmem:[%s1662] sm:$0xff]
    %v1664 = vld [vmem:[%s1662 + $0x8] sm:$0xff]
    %v1665 = vld [vmem:[%s1662 + $0x10] sm:$0xff]
    %v1666 = vld [vmem:[%s1662 + $0x18] sm:$0xff]
    %v1667 = vld [vmem:[%s1662 + $0x20] sm:$0xff]
    %v1668 = vld [vmem:[%s1662 + $0x28] sm:$0xff]
    %v1669 = vld [vmem:[%s1662 + $0x30] sm:$0xff]
    %v1670 = vld [vmem:[%s1662 + $0x38] sm:$0xff]
    %v1671 = vld [vmem:[%s1662 + $0x40] sm:$0xff]
    %v1672 = vrot.slane %v1495, 2
    %v1673 = vsel %vm65, %v1672, 0
    %1675 = vmatprep.subr.mxu0 0.0
    %1676 = vmatpush1.msra.mxu0 %v1663
    %1677 = vmatprep.subr.mxu0 0.0
    %1678 = vmatpush1.msra.mxu0 %v1664
    %1679 = vmatprep.subr.mxu0 0.0
    %1680 = vmatpush1.msra.mxu0 %v1665
    %1681 = vmatprep.subr.mxu0 0.0
    %1682 = vmatpush1.msra.mxu0 %v1666
    %1683 = vmatprep.subr.mxu0 0.0
    %1684 = vmatpush1.msra.mxu0 %v1667
    %1685 = vmatprep.subr.mxu0 0.0
    %1686 = vmatpush1.msra.mxu0 %v1668
    %1687 = vmatprep.subr.mxu0 0.0
    %1688 = vmatpush1.msra.mxu0 %v1669
    %1689 = vmatprep.subr.mxu0 0.0
    %1690 = vmatpush1.msra.mxu0 %v1670
    %1691 = vmatprep.subr.mxu0 0.0
    %1692 = vmatpush1.msra.mxu0 %v1671
    %1693 = vmatprep.subr.mxu0 0.0
    %1694 = vmatpush1.msra.mxu0 0.0
    %1695 = vmatprep.subr.mxu0 0.0
    %1696 = vmatpush1.msra.mxu0 0.0
    %1697 = vmatprep.subr.mxu0 0.0
    %1698 = vmatpush1.msra.mxu0 0.0
    %1699 = vmatprep.subr.mxu0 0.0
    %1700 = vmatpush1.msra.mxu0 0.0
    %1701 = vmatprep.subr.mxu0 0.0
    %1702 = vmatpush1.msra.mxu0 0.0
    %1703 = vmatprep.subr.mxu0 0.0
    %1704 = vmatpush1.msra.mxu0 0.0
    %1705 = vmatprep.subr.mxu0 0.0
    %1706 = vmatpush1.msra.mxu0 0.0
    %1707 = vmatprep.subr.mxu0 0.0
    %1708 = vmatpush1.msra.mxu0 0.0
    %1709 = vmatprep.subr.mxu0 0.0
    %1710 = vmatpush1.msra.mxu0 0.0
    %1711 = vmatprep.subr.mxu0 0.0
    %1712 = vmatpush1.msra.mxu0 0.0
    %1713 = vmatprep.subr.mxu0 0.0
    %1714 = vmatpush1.msra.mxu0 0.0
    %1715 = vmatprep.subr.mxu0 0.0
    %1716 = vmatpush1.msra.mxu0 0.0
    %1717 = vmatprep.subr.mxu0 0.0
    %1718 = vmatpush1.msra.mxu0 0.0
    %1719 = vmatprep.subr.mxu0 0.0
    %1720 = vmatpush1.msra.mxu0 0.0
    %1721 = vmatprep.subr.mxu0 0.0
    %1722 = vmatpush1.msra.mxu0 0.0
    %1723 = vmatprep.subr.mxu0 0.0
    %1724 = vmatpush1.msra.mxu0 0.0
    %1725 = vmatprep.subr.mxu0 0.0
    %1726 = vmatpush1.msra.mxu0 0.0
    %1727 = vmatprep.subr.mxu0 0.0
    %1728 = vmatpush1.msra.mxu0 0.0
    %1729 = vmatprep.subr.mxu0 0.0
    %1730 = vmatpush1.msra.mxu0 0.0
    %1731 = vmatprep.subr.mxu0 0.0
    %1732 = vmatpush1.msra.mxu0 0.0
    %1733 = vmatprep.subr.mxu0 0.0
    %1734 = vmatpush1.msra.mxu0 0.0
    %1735 = vmatprep.subr.mxu0 0.0
    %1736 = vmatpush1.msra.mxu0 0.0
    %1737 = vmatprep.subr.mxu0 0.0
    %1738 = vmatpush1.msra.mxu0 0.0
    %1739 = vmatprep.mubr.f32.mxu0 0.0
    %1740 = vmatmul.mubr.f32.gmra.mrb[0].mxu0 %v1673
    %v1741 = vpop.f32.mrb[0].mxu0
    %v1742 = vadd.f32 0.0, %v1741
    %v1743 = vpop.f32.mrb[0].mxu0
    %1744 = vdwg.mxu0
    %v1745 = vadd.f32 %v1659, %v1742
    %s1746 = scalar_lea.vmem [#allocation7], 216
    %v1747 = vld [vmem:[%s1746] sm:$0xff]
    %v1748 = vld [vmem:[%s1746 + $0x8] sm:$0xff]
    %v1749 = vld [vmem:[%s1746 + $0x10] sm:$0xff]
    %v1750 = vld [vmem:[%s1746 + $0x18] sm:$0xff]
    %v1751 = vld [vmem:[%s1746 + $0x20] sm:$0xff]
    %v1752 = vld [vmem:[%s1746 + $0x28] sm:$0xff]
    %v1753 = vld [vmem:[%s1746 + $0x30] sm:$0xff]
    %v1754 = vld [vmem:[%s1746 + $0x38] sm:$0xff]
    %v1755 = vld [vmem:[%s1746 + $0x40] sm:$0xff]
    %v1757 = vrot.slane %v1495, 3
    %v1758 = vrot.slane %v1496, 3
    %v1759 = vsel %vm444, %v1757, %v1758
    %v1760 = vsel %vm65, %v1759, 0
    %1762 = vmatprep.subr.mxu0 0.0
    %1763 = vmatpush1.msra.mxu0 %v1747
    %1764 = vmatprep.subr.mxu0 0.0
    %1765 = vmatpush1.msra.mxu0 %v1748
    %1766 = vmatprep.subr.mxu0 0.0
    %1767 = vmatpush1.msra.mxu0 %v1749
    %1768 = vmatprep.subr.mxu0 0.0
    %1769 = vmatpush1.msra.mxu0 %v1750
    %1770 = vmatprep.subr.mxu0 0.0
    %1771 = vmatpush1.msra.mxu0 %v1751
    %1772 = vmatprep.subr.mxu0 0.0
    %1773 = vmatpush1.msra.mxu0 %v1752
    %1774 = vmatprep.subr.mxu0 0.0
    %1775 = vmatpush1.msra.mxu0 %v1753
    %1776 = vmatprep.subr.mxu0 0.0
    %1777 = vmatpush1.msra.mxu0 %v1754
    %1778 = vmatprep.subr.mxu0 0.0
    %1779 = vmatpush1.msra.mxu0 %v1755
    %1780 = vmatprep.subr.mxu0 0.0
    %1781 = vmatpush1.msra.mxu0 0.0
    %1782 = vmatprep.subr.mxu0 0.0
    %1783 = vmatpush1.msra.mxu0 0.0
    %1784 = vmatprep.subr.mxu0 0.0
    %1785 = vmatpush1.msra.mxu0 0.0
    %1786 = vmatprep.subr.mxu0 0.0
    %1787 = vmatpush1.msra.mxu0 0.0
    %1788 = vmatprep.subr.mxu0 0.0
    %1789 = vmatpush1.msra.mxu0 0.0
    %1790 = vmatprep.subr.mxu0 0.0
    %1791 = vmatpush1.msra.mxu0 0.0
    %1792 = vmatprep.subr.mxu0 0.0
    %1793 = vmatpush1.msra.mxu0 0.0
    %1794 = vmatprep.subr.mxu0 0.0
    %1795 = vmatpush1.msra.mxu0 0.0
    %1796 = vmatprep.subr.mxu0 0.0
    %1797 = vmatpush1.msra.mxu0 0.0
    %1798 = vmatprep.subr.mxu0 0.0
    %1799 = vmatpush1.msra.mxu0 0.0
    %1800 = vmatprep.subr.mxu0 0.0
    %1801 = vmatpush1.msra.mxu0 0.0
    %1802 = vmatprep.subr.mxu0 0.0
    %1803 = vmatpush1.msra.mxu0 0.0
    %1804 = vmatprep.subr.mxu0 0.0
    %1805 = vmatpush1.msra.mxu0 0.0
    %1806 = vmatprep.subr.mxu0 0.0
    %1807 = vmatpush1.msra.mxu0 0.0
    %1808 = vmatprep.subr.mxu0 0.0
    %1809 = vmatpush1.msra.mxu0 0.0
    %1810 = vmatprep.subr.mxu0 0.0
    %1811 = vmatpush1.msra.mxu0 0.0
    %1812 = vmatprep.subr.mxu0 0.0
    %1813 = vmatpush1.msra.mxu0 0.0
    %1814 = vmatprep.subr.mxu0 0.0
    %1815 = vmatpush1.msra.mxu0 0.0
    %1816 = vmatprep.subr.mxu0 0.0
    %1817 = vmatpush1.msra.mxu0 0.0
    %1818 = vmatprep.subr.mxu0 0.0
    %1819 = vmatpush1.msra.mxu0 0.0
    %1820 = vmatprep.subr.mxu0 0.0
    %1821 = vmatpush1.msra.mxu0 0.0
    %1822 = vmatprep.subr.mxu0 0.0
    %1823 = vmatpush1.msra.mxu0 0.0
    %1824 = vmatprep.subr.mxu0 0.0
    %1825 = vmatpush1.msra.mxu0 0.0
    %1826 = vmatprep.mubr.f32.mxu0 0.0
    %1827 = vmatmul.mubr.f32.gmra.mrb[0].mxu0 %v1760
    %v1828 = vpop.f32.mrb[0].mxu0
    %v1829 = vadd.f32 0.0, %v1828
    %v1830 = vpop.f32.mrb[0].mxu0
    %1831 = vdwg.mxu0
    %v1832 = vadd.f32 %v1745, %v1829
    %s1833 = scalar_lea.vmem [#allocation7], 288
    %v1834 = vld [vmem:[%s1833] sm:$0xff]
    %v1835 = vld [vmem:[%s1833 + $0x8] sm:$0xff]
    %v1836 = vld [vmem:[%s1833 + $0x10] sm:$0xff]
    %v1837 = vld [vmem:[%s1833 + $0x18] sm:$0xff]
    %v1838 = vld [vmem:[%s1833 + $0x20] sm:$0xff]
    %v1839 = vld [vmem:[%s1833 + $0x28] sm:$0xff]
    %v1840 = vld [vmem:[%s1833 + $0x30] sm:$0xff]
    %v1841 = vld [vmem:[%s1833 + $0x38] sm:$0xff]
    %v1842 = vld [vmem:[%s1833 + $0x40] sm:$0xff]
    %v1843 = vrot.slane %v1495, 4
    %v1844 = vrot.slane %v1496, 4
    %v1845 = vsel %vm553, %v1843, %v1844
    %v1846 = vsel %vm65, %v1845, 0
    %1848 = vmatprep.subr.mxu0 0.0
    %1849 = vmatpush1.msra.mxu0 %v1834
    %1850 = vmatprep.subr.mxu0 0.0
    %1851 = vmatpush1.msra.mxu0 %v1835
    %1852 = vmatprep.subr.mxu0 0.0
    %1853 = vmatpush1.msra.mxu0 %v1836
    %1854 = vmatprep.subr.mxu0 0.0
    %1855 = vmatpush1.msra.mxu0 %v1837
    %1856 = vmatprep.subr.mxu0 0.0
    %1857 = vmatpush1.msra.mxu0 %v1838
    %1858 = vmatprep.subr.mxu0 0.0
    %1859 = vmatpush1.msra.mxu0 %v1839
    %1860 = vmatprep.subr.mxu0 0.0
    %1861 = vmatpush1.msra.mxu0 %v1840
    %1862 = vmatprep.subr.mxu0 0.0
    %1863 = vmatpush1.msra.mxu0 %v1841
    %1864 = vmatprep.subr.mxu0 0.0
    %1865 = vmatpush1.msra.mxu0 %v1842
    %1866 = vmatprep.subr.mxu0 0.0
    %1867 = vmatpush1.msra.mxu0 0.0
    %1868 = vmatprep.subr.mxu0 0.0
    %1869 = vmatpush1.msra.mxu0 0.0
    %1870 = vmatprep.subr.mxu0 0.0
    %1871 = vmatpush1.msra.mxu0 0.0
    %1872 = vmatprep.subr.mxu0 0.0
    %1873 = vmatpush1.msra.mxu0 0.0
    %1874 = vmatprep.subr.mxu0 0.0
    %1875 = vmatpush1.msra.mxu0 0.0
    %1876 = vmatprep.subr.mxu0 0.0
    %1877 = vmatpush1.msra.mxu0 0.0
    %1878 = vmatprep.subr.mxu0 0.0
    %1879 = vmatpush1.msra.mxu0 0.0
    %1880 = vmatprep.subr.mxu0 0.0
    %1881 = vmatpush1.msra.mxu0 0.0
    %1882 = vmatprep.subr.mxu0 0.0
    %1883 = vmatpush1.msra.mxu0 0.0
    %1884 = vmatprep.subr.mxu0 0.0
    %1885 = vmatpush1.msra.mxu0 0.0
    %1886 = vmatprep.subr.mxu0 0.0
    %1887 = vmatpush1.msra.mxu0 0.0
    %1888 = vmatprep.subr.mxu0 0.0
    %1889 = vmatpush1.msra.mxu0 0.0
    %1890 = vmatprep.subr.mxu0 0.0
    %1891 = vmatpush1.msra.mxu0 0.0
    %1892 = vmatprep.subr.mxu0 0.0
    %1893 = vmatpush1.msra.mxu0 0.0
    %1894 = vmatprep.subr.mxu0 0.0
    %1895 = vmatpush1.msra.mxu0 0.0
    %1896 = vmatprep.subr.mxu0 0.0
    %1897 = vmatpush1.msra.mxu0 0.0
    %1898 = vmatprep.subr.mxu0 0.0
    %1899 = vmatpush1.msra.mxu0 0.0
    %1900 = vmatprep.subr.mxu0 0.0
    %1901 = vmatpush1.msra.mxu0 0.0
    %1902 = vmatprep.subr.mxu0 0.0
    %1903 = vmatpush1.msra.mxu0 0.0
    %1904 = vmatprep.subr.mxu0 0.0
    %1905 = vmatpush1.msra.mxu0 0.0
    %1906 = vmatprep.subr.mxu0 0.0
    %1907 = vmatpush1.msra.mxu0 0.0
    %1908 = vmatprep.subr.mxu0 0.0
    %1909 = vmatpush1.msra.mxu0 0.0
    %1910 = vmatprep.subr.mxu0 0.0
    %1911 = vmatpush1.msra.mxu0 0.0
    %1912 = vmatprep.mubr.f32.mxu0 0.0
    %1913 = vmatmul.mubr.f32.gmra.mrb[0].mxu0 %v1846
    %v1914 = vpop.f32.mrb[0].mxu0
    %v1915 = vadd.f32 0.0, %v1914
    %v1916 = vpop.f32.mrb[0].mxu0
    %1917 = vdwg.mxu0
    %v1918 = vadd.f32 %v1832, %v1915
    %s1919 = scalar_lea.vmem [#allocation7], 360
    %v1920 = vld [vmem:[%s1919] sm:$0xff]
    %v1921 = vld [vmem:[%s1919 + $0x8] sm:$0xff]
    %v1922 = vld [vmem:[%s1919 + $0x10] sm:$0xff]
    %v1923 = vld [vmem:[%s1919 + $0x18] sm:$0xff]
    %v1924 = vld [vmem:[%s1919 + $0x20] sm:$0xff]
    %v1925 = vld [vmem:[%s1919 + $0x28] sm:$0xff]
    %v1926 = vld [vmem:[%s1919 + $0x30] sm:$0xff]
    %v1927 = vld [vmem:[%s1919 + $0x38] sm:$0xff]
    %v1928 = vld [vmem:[%s1919 + $0x40] sm:$0xff]
    %v1929 = vrot.slane %v1495, 5
    %v1930 = vrot.slane %v1496, 5
    %v1931 = vsel %vm663, %v1929, %v1930
    %v1932 = vsel %vm65, %v1931, 0
    %1934 = vmatprep.subr.mxu0 0.0
    %1935 = vmatpush1.msra.mxu0 %v1920
    %1936 = vmatprep.subr.mxu0 0.0
    %1937 = vmatpush1.msra.mxu0 %v1921
    %1938 = vmatprep.subr.mxu0 0.0
    %1939 = vmatpush1.msra.mxu0 %v1922
    %1940 = vmatprep.subr.mxu0 0.0
    %1941 = vmatpush1.msra.mxu0 %v1923
    %1942 = vmatprep.subr.mxu0 0.0
    %1943 = vmatpush1.msra.mxu0 %v1924
    %1944 = vmatprep.subr.mxu0 0.0
    %1945 = vmatpush1.msra.mxu0 %v1925
    %1946 = vmatprep.subr.mxu0 0.0
    %1947 = vmatpush1.msra.mxu0 %v1926
    %1948 = vmatprep.subr.mxu0 0.0
    %1949 = vmatpush1.msra.mxu0 %v1927
    %1950 = vmatprep.subr.mxu0 0.0
    %1951 = vmatpush1.msra.mxu0 %v1928
    %1952 = vmatprep.subr.mxu0 0.0
    %1953 = vmatpush1.msra.mxu0 0.0
    %1954 = vmatprep.subr.mxu0 0.0
    %1955 = vmatpush1.msra.mxu0 0.0
    %1956 = vmatprep.subr.mxu0 0.0
    %1957 = vmatpush1.msra.mxu0 0.0
    %1958 = vmatprep.subr.mxu0 0.0
    %1959 = vmatpush1.msra.mxu0 0.0
    %1960 = vmatprep.subr.mxu0 0.0
    %1961 = vmatpush1.msra.mxu0 0.0
    %1962 = vmatprep.subr.mxu0 0.0
    %1963 = vmatpush1.msra.mxu0 0.0
    %1964 = vmatprep.subr.mxu0 0.0
    %1965 = vmatpush1.msra.mxu0 0.0
    %1966 = vmatprep.subr.mxu0 0.0
    %1967 = vmatpush1.msra.mxu0 0.0
    %1968 = vmatprep.subr.mxu0 0.0
    %1969 = vmatpush1.msra.mxu0 0.0
    %1970 = vmatprep.subr.mxu0 0.0
    %1971 = vmatpush1.msra.mxu0 0.0
    %1972 = vmatprep.subr.mxu0 0.0
    %1973 = vmatpush1.msra.mxu0 0.0
    %1974 = vmatprep.subr.mxu0 0.0
    %1975 = vmatpush1.msra.mxu0 0.0
    %1976 = vmatprep.subr.mxu0 0.0
    %1977 = vmatpush1.msra.mxu0 0.0
    %1978 = vmatprep.subr.mxu0 0.0
    %1979 = vmatpush1.msra.mxu0 0.0
    %1980 = vmatprep.subr.mxu0 0.0
    %1981 = vmatpush1.msra.mxu0 0.0
    %1982 = vmatprep.subr.mxu0 0.0
    %1983 = vmatpush1.msra.mxu0 0.0
    %1984 = vmatprep.subr.mxu0 0.0
    %1985 = vmatpush1.msra.mxu0 0.0
    %1986 = vmatprep.subr.mxu0 0.0
    %1987 = vmatpush1.msra.mxu0 0.0
    %1988 = vmatprep.subr.mxu0 0.0
    %1989 = vmatpush1.msra.mxu0 0.0
    %1990 = vmatprep.subr.mxu0 0.0
    %1991 = vmatpush1.msra.mxu0 0.0
    %1992 = vmatprep.subr.mxu0 0.0
    %1993 = vmatpush1.msra.mxu0 0.0
    %1994 = vmatprep.subr.mxu0 0.0
    %1995 = vmatpush1.msra.mxu0 0.0
    %1996 = vmatprep.subr.mxu0 0.0
    %1997 = vmatpush1.msra.mxu0 0.0
    %1998 = vmatprep.mubr.f32.mxu0 0.0
    %1999 = vmatmul.mubr.f32.gmra.mrb[0].mxu0 %v1932
    %v2000 = vpop.f32.mrb[0].mxu0
    %v2001 = vadd.f32 0.0, %v2000
    %v2002 = vpop.f32.mrb[0].mxu0
    %2003 = vdwg.mxu0
    %v2004 = vadd.f32 %v1918, %v2001
    %s2005 = scalar_lea.vmem [#allocation7], 432
    %v2006 = vld [vmem:[%s2005] sm:$0xff]
    %v2007 = vld [vmem:[%s2005 + $0x8] sm:$0xff]
    %v2008 = vld [vmem:[%s2005 + $0x10] sm:$0xff]
    %v2009 = vld [vmem:[%s2005 + $0x18] sm:$0xff]
    %v2010 = vld [vmem:[%s2005 + $0x20] sm:$0xff]
    %v2011 = vld [vmem:[%s2005 + $0x28] sm:$0xff]
    %v2012 = vld [vmem:[%s2005 + $0x30] sm:$0xff]
    %v2013 = vld [vmem:[%s2005 + $0x38] sm:$0xff]
    %v2014 = vld [vmem:[%s2005 + $0x40] sm:$0xff]
    %v2015 = vrot.slane %v1495, 6
    %v2016 = vrot.slane %v1496, 6
    %v2017 = vsel %vm774, %v2015, %v2016
    %v2018 = vsel %vm65, %v2017, 0
    %2020 = vmatprep.subr.mxu0 0.0
    %2021 = vmatpush1.msra.mxu0 %v2006
    %2022 = vmatprep.subr.mxu0 0.0
    %2023 = vmatpush1.msra.mxu0 %v2007
    %2024 = vmatprep.subr.mxu0 0.0
    %2025 = vmatpush1.msra.mxu0 %v2008
    %2026 = vmatprep.subr.mxu0 0.0
    %2027 = vmatpush1.msra.mxu0 %v2009
    %2028 = vmatprep.subr.mxu0 0.0
    %2029 = vmatpush1.msra.mxu0 %v2010
    %2030 = vmatprep.subr.mxu0 0.0
    %2031 = vmatpush1.msra.mxu0 %v2011
    %2032 = vmatprep.subr.mxu0 0.0
    %2033 = vmatpush1.msra.mxu0 %v2012
    %2034 = vmatprep.subr.mxu0 0.0
    %2035 = vmatpush1.msra.mxu0 %v2013
    %2036 = vmatprep.subr.mxu0 0.0
    %2037 = vmatpush1.msra.mxu0 %v2014
    %2038 = vmatprep.subr.mxu0 0.0
    %2039 = vmatpush1.msra.mxu0 0.0
    %2040 = vmatprep.subr.mxu0 0.0
    %2041 = vmatpush1.msra.mxu0 0.0
    %2042 = vmatprep.subr.mxu0 0.0
    %2043 = vmatpush1.msra.mxu0 0.0
    %2044 = vmatprep.subr.mxu0 0.0
    %2045 = vmatpush1.msra.mxu0 0.0
    %2046 = vmatprep.subr.mxu0 0.0
    %2047 = vmatpush1.msra.mxu0 0.0
    %2048 = vmatprep.subr.mxu0 0.0
    %2049 = vmatpush1.msra.mxu0 0.0
    %2050 = vmatprep.subr.mxu0 0.0
    %2051 = vmatpush1.msra.mxu0 0.0
    %2052 = vmatprep.subr.mxu0 0.0
    %2053 = vmatpush1.msra.mxu0 0.0
    %2054 = vmatprep.subr.mxu0 0.0
    %2055 = vmatpush1.msra.mxu0 0.0
    %2056 = vmatprep.subr.mxu0 0.0
    %2057 = vmatpush1.msra.mxu0 0.0
    %2058 = vmatprep.subr.mxu0 0.0
    %2059 = vmatpush1.msra.mxu0 0.0
    %2060 = vmatprep.subr.mxu0 0.0
    %2061 = vmatpush1.msra.mxu0 0.0
    %2062 = vmatprep.subr.mxu0 0.0
    %2063 = vmatpush1.msra.mxu0 0.0
    %2064 = vmatprep.subr.mxu0 0.0
    %2065 = vmatpush1.msra.mxu0 0.0
    %2066 = vmatprep.subr.mxu0 0.0
    %2067 = vmatpush1.msra.mxu0 0.0
    %2068 = vmatprep.subr.mxu0 0.0
    %2069 = vmatpush1.msra.mxu0 0.0
    %2070 = vmatprep.subr.mxu0 0.0
    %2071 = vmatpush1.msra.mxu0 0.0
    %2072 = vmatprep.subr.mxu0 0.0
    %2073 = vmatpush1.msra.mxu0 0.0
    %2074 = vmatprep.subr.mxu0 0.0
    %2075 = vmatpush1.msra.mxu0 0.0
    %2076 = vmatprep.subr.mxu0 0.0
    %2077 = vmatpush1.msra.mxu0 0.0
    %2078 = vmatprep.subr.mxu0 0.0
    %2079 = vmatpush1.msra.mxu0 0.0
    %2080 = vmatprep.subr.mxu0 0.0
    %2081 = vmatpush1.msra.mxu0 0.0
    %2082 = vmatprep.subr.mxu0 0.0
    %2083 = vmatpush1.msra.mxu0 0.0
    %2084 = vmatprep.mubr.f32.mxu0 0.0
    %2085 = vmatmul.mubr.f32.gmra.mrb[0].mxu0 %v2018
    %v2086 = vpop.f32.mrb[0].mxu0
    %v2087 = vadd.f32 0.0, %v2086
    %v2088 = vpop.f32.mrb[0].mxu0
    %2089 = vdwg.mxu0
    %v2090 = vadd.f32 %v2004, %v2087
    %vm2091 = vcmp.eq.s32.totalorder %v113, 9
    %vm2092 = vcmp.eq.s32.totalorder %v114, 9
    %vm2093 = vmor %vm874, %vm2091
    %vm2094 = vmor %vm875, %vm2092
    %v2095 = vsel %vm2093, 0.0, %v1495
    %v2096 = vsel %vm2094, 0.0, %v1496
    %s2097 = scalar_lea.vmem [#allocation7], 504
    %v2098 = vld [vmem:[%s2097] sm:$0xff]
    %v2099 = vld [vmem:[%s2097 + $0x8] sm:$0xff]
    %v2100 = vld [vmem:[%s2097 + $0x10] sm:$0xff]
    %v2101 = vld [vmem:[%s2097 + $0x18] sm:$0xff]
    %v2102 = vld [vmem:[%s2097 + $0x20] sm:$0xff]
    %v2103 = vld [vmem:[%s2097 + $0x28] sm:$0xff]
    %v2104 = vld [vmem:[%s2097 + $0x30] sm:$0xff]
    %v2105 = vld [vmem:[%s2097 + $0x38] sm:$0xff]
    %v2106 = vld [vmem:[%s2097 + $0x40] sm:$0xff]
    %v2108 = vrot.slane %v2095, 2
    %v2109 = vsel %vm65, %v2108, 0
    %2111 = vmatprep.subr.mxu0 0.0
    %2112 = vmatpush1.msra.mxu0 %v2098
    %2113 = vmatprep.subr.mxu0 0.0
    %2114 = vmatpush1.msra.mxu0 %v2099
    %2115 = vmatprep.subr.mxu0 0.0
    %2116 = vmatpush1.msra.mxu0 %v2100
    %2117 = vmatprep.subr.mxu0 0.0
    %2118 = vmatpush1.msra.mxu0 %v2101
    %2119 = vmatprep.subr.mxu0 0.0
    %2120 = vmatpush1.msra.mxu0 %v2102
    %2121 = vmatprep.subr.mxu0 0.0
    %2122 = vmatpush1.msra.mxu0 %v2103
    %2123 = vmatprep.subr.mxu0 0.0
    %2124 = vmatpush1.msra.mxu0 %v2104
    %2125 = vmatprep.subr.mxu0 0.0
    %2126 = vmatpush1.msra.mxu0 %v2105
    %2127 = vmatprep.subr.mxu0 0.0
    %2128 = vmatpush1.msra.mxu0 %v2106
    %2129 = vmatprep.subr.mxu0 0.0
    %2130 = vmatpush1.msra.mxu0 0.0
    %2131 = vmatprep.subr.mxu0 0.0
    %2132 = vmatpush1.msra.mxu0 0.0
    %2133 = vmatprep.subr.mxu0 0.0
    %2134 = vmatpush1.msra.mxu0 0.0
    %2135 = vmatprep.subr.mxu0 0.0
    %2136 = vmatpush1.msra.mxu0 0.0
    %2137 = vmatprep.subr.mxu0 0.0
    %2138 = vmatpush1.msra.mxu0 0.0
    %2139 = vmatprep.subr.mxu0 0.0
    %2140 = vmatpush1.msra.mxu0 0.0
    %2141 = vmatprep.subr.mxu0 0.0
    %2142 = vmatpush1.msra.mxu0 0.0
    %2143 = vmatprep.subr.mxu0 0.0
    %2144 = vmatpush1.msra.mxu0 0.0
    %2145 = vmatprep.subr.mxu0 0.0
    %2146 = vmatpush1.msra.mxu0 0.0
    %2147 = vmatprep.subr.mxu0 0.0
    %2148 = vmatpush1.msra.mxu0 0.0
    %2149 = vmatprep.subr.mxu0 0.0
    %2150 = vmatpush1.msra.mxu0 0.0
    %2151 = vmatprep.subr.mxu0 0.0
    %2152 = vmatpush1.msra.mxu0 0.0
    %2153 = vmatprep.subr.mxu0 0.0
    %2154 = vmatpush1.msra.mxu0 0.0
    %2155 = vmatprep.subr.mxu0 0.0
    %2156 = vmatpush1.msra.mxu0 0.0
    %2157 = vmatprep.subr.mxu0 0.0
    %2158 = vmatpush1.msra.mxu0 0.0
    %2159 = vmatprep.subr.mxu0 0.0
    %2160 = vmatpush1.msra.mxu0 0.0
    %2161 = vmatprep.subr.mxu0 0.0
    %2162 = vmatpush1.msra.mxu0 0.0
    %2163 = vmatprep.subr.mxu0 0.0
    %2164 = vmatpush1.msra.mxu0 0.0
    %2165 = vmatprep.subr.mxu0 0.0
    %2166 = vmatpush1.msra.mxu0 0.0
    %2167 = vmatprep.subr.mxu0 0.0
    %2168 = vmatpush1.msra.mxu0 0.0
    %2169 = vmatprep.subr.mxu0 0.0
    %2170 = vmatpush1.msra.mxu0 0.0
    %2171 = vmatprep.subr.mxu0 0.0
    %2172 = vmatpush1.msra.mxu0 0.0
    %2173 = vmatprep.subr.mxu0 0.0
    %2174 = vmatpush1.msra.mxu0 0.0
    %2175 = vmatprep.mubr.f32.mxu0 0.0
    %2176 = vmatmul.mubr.f32.gmra.mrb[0].mxu0 %v2109
    %v2177 = vpop.f32.mrb[0].mxu0
    %v2178 = vadd.f32 0.0, %v2177
    %v2179 = vpop.f32.mrb[0].mxu0
    %2180 = vdwg.mxu0
    %v2181 = vadd.f32 %v2090, %v2178
    %s2182 = scalar_lea.vmem [#allocation7], 576
    %v2183 = vld [vmem:[%s2182] sm:$0xff]
    %v2184 = vld [vmem:[%s2182 + $0x8] sm:$0xff]
    %v2185 = vld [vmem:[%s2182 + $0x10] sm:$0xff]
    %v2186 = vld [vmem:[%s2182 + $0x18] sm:$0xff]
    %v2187 = vld [vmem:[%s2182 + $0x20] sm:$0xff]
    %v2188 = vld [vmem:[%s2182 + $0x28] sm:$0xff]
    %v2189 = vld [vmem:[%s2182 + $0x30] sm:$0xff]
    %v2190 = vld [vmem:[%s2182 + $0x38] sm:$0xff]
    %v2191 = vld [vmem:[%s2182 + $0x40] sm:$0xff]
    %v2193 = vrot.slane %v2095, 3
    %v2194 = vrot.slane %v2096, 3
    %v2195 = vsel %vm444, %v2193, %v2194
    %v2196 = vsel %vm65, %v2195, 0
    %2198 = vmatprep.subr.mxu0 0.0
    %2199 = vmatpush1.msra.mxu0 %v2183
    %2200 = vmatprep.subr.mxu0 0.0
    %2201 = vmatpush1.msra.mxu0 %v2184
    %2202 = vmatprep.subr.mxu0 0.0
    %2203 = vmatpush1.msra.mxu0 %v2185
    %2204 = vmatprep.subr.mxu0 0.0
    %2205 = vmatpush1.msra.mxu0 %v2186
    %2206 = vmatprep.subr.mxu0 0.0
    %2207 = vmatpush1.msra.mxu0 %v2187
    %2208 = vmatprep.subr.mxu0 0.0
    %2209 = vmatpush1.msra.mxu0 %v2188
    %2210 = vmatprep.subr.mxu0 0.0
    %2211 = vmatpush1.msra.mxu0 %v2189
    %2212 = vmatprep.subr.mxu0 0.0
    %2213 = vmatpush1.msra.mxu0 %v2190
    %2214 = vmatprep.subr.mxu0 0.0
    %2215 = vmatpush1.msra.mxu0 %v2191
    %2216 = vmatprep.subr.mxu0 0.0
    %2217 = vmatpush1.msra.mxu0 0.0
    %2218 = vmatprep.subr.mxu0 0.0
    %2219 = vmatpush1.msra.mxu0 0.0
    %2220 = vmatprep.subr.mxu0 0.0
    %2221 = vmatpush1.msra.mxu0 0.0
    %2222 = vmatprep.subr.mxu0 0.0
    %2223 = vmatpush1.msra.mxu0 0.0
    %2224 = vmatprep.subr.mxu0 0.0
    %2225 = vmatpush1.msra.mxu0 0.0
    %2226 = vmatprep.subr.mxu0 0.0
    %2227 = vmatpush1.msra.mxu0 0.0
    %2228 = vmatprep.subr.mxu0 0.0
    %2229 = vmatpush1.msra.mxu0 0.0
    %2230 = vmatprep.subr.mxu0 0.0
    %2231 = vmatpush1.msra.mxu0 0.0
    %2232 = vmatprep.subr.mxu0 0.0
    %2233 = vmatpush1.msra.mxu0 0.0
    %2234 = vmatprep.subr.mxu0 0.0
    %2235 = vmatpush1.msra.mxu0 0.0
    %2236 = vmatprep.subr.mxu0 0.0
    %2237 = vmatpush1.msra.mxu0 0.0
    %2238 = vmatprep.subr.mxu0 0.0
    %2239 = vmatpush1.msra.mxu0 0.0
    %2240 = vmatprep.subr.mxu0 0.0
    %2241 = vmatpush1.msra.mxu0 0.0
    %2242 = vmatprep.subr.mxu0 0.0
    %2243 = vmatpush1.msra.mxu0 0.0
    %2244 = vmatprep.subr.mxu0 0.0
    %2245 = vmatpush1.msra.mxu0 0.0
    %2246 = vmatprep.subr.mxu0 0.0
    %2247 = vmatpush1.msra.mxu0 0.0
    %2248 = vmatprep.subr.mxu0 0.0
    %2249 = vmatpush1.msra.mxu0 0.0
    %2250 = vmatprep.subr.mxu0 0.0
    %2251 = vmatpush1.msra.mxu0 0.0
    %2252 = vmatprep.subr.mxu0 0.0
    %2253 = vmatpush1.msra.mxu0 0.0
    %2254 = vmatprep.subr.mxu0 0.0
    %2255 = vmatpush1.msra.mxu0 0.0
    %2256 = vmatprep.subr.mxu0 0.0
    %2257 = vmatpush1.msra.mxu0 0.0
    %2258 = vmatprep.subr.mxu0 0.0
    %2259 = vmatpush1.msra.mxu0 0.0
    %2260 = vmatprep.subr.mxu0 0.0
    %2261 = vmatpush1.msra.mxu0 0.0
    %2262 = vmatprep.mubr.f32.mxu0 0.0
    %2263 = vmatmul.mubr.f32.gmra.mrb[0].mxu0 %v2196
    %v2264 = vpop.f32.mrb[0].mxu0
    %v2265 = vadd.f32 0.0, %v2264
    %v2266 = vpop.f32.mrb[0].mxu0
    %2267 = vdwg.mxu0
    %v2268 = vadd.f32 %v2181, %v2265
    %s2269 = scalar_lea.vmem [#allocation7], 648
    %v2270 = vld [vmem:[%s2269] sm:$0xff]
    %v2271 = vld [vmem:[%s2269 + $0x8] sm:$0xff]
    %v2272 = vld [vmem:[%s2269 + $0x10] sm:$0xff]
    %v2273 = vld [vmem:[%s2269 + $0x18] sm:$0xff]
    %v2274 = vld [vmem:[%s2269 + $0x20] sm:$0xff]
    %v2275 = vld [vmem:[%s2269 + $0x28] sm:$0xff]
    %v2276 = vld [vmem:[%s2269 + $0x30] sm:$0xff]
    %v2277 = vld [vmem:[%s2269 + $0x38] sm:$0xff]
    %v2278 = vld [vmem:[%s2269 + $0x40] sm:$0xff]
    %v2279 = vrot.slane %v2095, 4
    %v2280 = vrot.slane %v2096, 4
    %v2281 = vsel %vm553, %v2279, %v2280
    %v2282 = vsel %vm65, %v2281, 0
    %2284 = vmatprep.subr.mxu0 0.0
    %2285 = vmatpush1.msra.mxu0 %v2270
    %2286 = vmatprep.subr.mxu0 0.0
    %2287 = vmatpush1.msra.mxu0 %v2271
    %2288 = vmatprep.subr.mxu0 0.0
    %2289 = vmatpush1.msra.mxu0 %v2272
    %2290 = vmatprep.subr.mxu0 0.0
    %2291 = vmatpush1.msra.mxu0 %v2273
    %2292 = vmatprep.subr.mxu0 0.0
    %2293 = vmatpush1.msra.mxu0 %v2274
    %2294 = vmatprep.subr.mxu0 0.0
    %2295 = vmatpush1.msra.mxu0 %v2275
    %2296 = vmatprep.subr.mxu0 0.0
    %2297 = vmatpush1.msra.mxu0 %v2276
    %2298 = vmatprep.subr.mxu0 0.0
    %2299 = vmatpush1.msra.mxu0 %v2277
    %2300 = vmatprep.subr.mxu0 0.0
    %2301 = vmatpush1.msra.mxu0 %v2278
    %2302 = vmatprep.subr.mxu0 0.0
    %2303 = vmatpush1.msra.mxu0 0.0
    %2304 = vmatprep.subr.mxu0 0.0
    %2305 = vmatpush1.msra.mxu0 0.0
    %2306 = vmatprep.subr.mxu0 0.0
    %2307 = vmatpush1.msra.mxu0 0.0
    %2308 = vmatprep.subr.mxu0 0.0
    %2309 = vmatpush1.msra.mxu0 0.0
    %2310 = vmatprep.subr.mxu0 0.0
    %2311 = vmatpush1.msra.mxu0 0.0
    %2312 = vmatprep.subr.mxu0 0.0
    %2313 = vmatpush1.msra.mxu0 0.0
    %2314 = vmatprep.subr.mxu0 0.0
    %2315 = vmatpush1.msra.mxu0 0.0
    %2316 = vmatprep.subr.mxu0 0.0
    %2317 = vmatpush1.msra.mxu0 0.0
    %2318 = vmatprep.subr.mxu0 0.0
    %2319 = vmatpush1.msra.mxu0 0.0
    %2320 = vmatprep.subr.mxu0 0.0
    %2321 = vmatpush1.msra.mxu0 0.0
    %2322 = vmatprep.subr.mxu0 0.0
    %2323 = vmatpush1.msra.mxu0 0.0
    %2324 = vmatprep.subr.mxu0 0.0
    %2325 = vmatpush1.msra.mxu0 0.0
    %2326 = vmatprep.subr.mxu0 0.0
    %2327 = vmatpush1.msra.mxu0 0.0
    %2328 = vmatprep.subr.mxu0 0.0
    %2329 = vmatpush1.msra.mxu0 0.0
    %2330 = vmatprep.subr.mxu0 0.0
    %2331 = vmatpush1.msra.mxu0 0.0
    %2332 = vmatprep.subr.mxu0 0.0
    %2333 = vmatpush1.msra.mxu0 0.0
    %2334 = vmatprep.subr.mxu0 0.0
    %2335 = vmatpush1.msra.mxu0 0.0
    %2336 = vmatprep.subr.mxu0 0.0
    %2337 = vmatpush1.msra.mxu0 0.0
    %2338 = vmatprep.subr.mxu0 0.0
    %2339 = vmatpush1.msra.mxu0 0.0
    %2340 = vmatprep.subr.mxu0 0.0
    %2341 = vmatpush1.msra.mxu0 0.0
    %2342 = vmatprep.subr.mxu0 0.0
    %2343 = vmatpush1.msra.mxu0 0.0
    %2344 = vmatprep.subr.mxu0 0.0
    %2345 = vmatpush1.msra.mxu0 0.0
    %2346 = vmatprep.subr.mxu0 0.0
    %2347 = vmatpush1.msra.mxu0 0.0
    %2348 = vmatprep.mubr.f32.mxu0 0.0
    %2349 = vmatmul.mubr.f32.gmra.mrb[0].mxu0 %v2282
    %v2350 = vpop.f32.mrb[0].mxu0
    %v2351 = vadd.f32 0.0, %v2350
    %v2352 = vpop.f32.mrb[0].mxu0
    %2353 = vdwg.mxu0
    %v2354 = vadd.f32 %v2268, %v2351
    %vm2355 = vcmp.eq.s32.totalorder %v113, 8
    %vm2356 = vcmp.eq.s32.totalorder %v114, 8
    %vm2357 = vmor %vm1213, %vm2355
    %vm2358 = vmor %vm1214, %vm2356
    %v2359 = vsel %vm2357, 0.0, %v1495
    %v2360 = vsel %vm2358, 0.0, %v1496
    %s2361 = scalar_lea.vmem [#allocation7], 720
    %v2362 = vld [vmem:[%s2361] sm:$0xff]
    %v2363 = vld [vmem:[%s2361 + $0x8] sm:$0xff]
    %v2364 = vld [vmem:[%s2361 + $0x10] sm:$0xff]
    %v2365 = vld [vmem:[%s2361 + $0x18] sm:$0xff]
    %v2366 = vld [vmem:[%s2361 + $0x20] sm:$0xff]
    %v2367 = vld [vmem:[%s2361 + $0x28] sm:$0xff]
    %v2368 = vld [vmem:[%s2361 + $0x30] sm:$0xff]
    %v2369 = vld [vmem:[%s2361 + $0x38] sm:$0xff]
    %v2370 = vld [vmem:[%s2361 + $0x40] sm:$0xff]
    %v2373 = vrot.slane %v2359, 3
    %v2374 = vrot.slane %v2360, 3
    %v2375 = vsel %vm444, %v2373, %v2374
    %v2376 = vsel %vm65, %v2375, 0
    %2378 = vmatprep.subr.mxu0 0.0
    %2379 = vmatpush1.msra.mxu0 %v2362
    %2380 = vmatprep.subr.mxu0 0.0
    %2381 = vmatpush1.msra.mxu0 %v2363
    %2382 = vmatprep.subr.mxu0 0.0
    %2383 = vmatpush1.msra.mxu0 %v2364
    %2384 = vmatprep.subr.mxu0 0.0
    %2385 = vmatpush1.msra.mxu0 %v2365
    %2386 = vmatprep.subr.mxu0 0.0
    %2387 = vmatpush1.msra.mxu0 %v2366
    %2388 = vmatprep.subr.mxu0 0.0
    %2389 = vmatpush1.msra.mxu0 %v2367
    %2390 = vmatprep.subr.mxu0 0.0
    %2391 = vmatpush1.msra.mxu0 %v2368
    %2392 = vmatprep.subr.mxu0 0.0
    %2393 = vmatpush1.msra.mxu0 %v2369
    %2394 = vmatprep.subr.mxu0 0.0
    %2395 = vmatpush1.msra.mxu0 %v2370
    %2396 = vmatprep.subr.mxu0 0.0
    %2397 = vmatpush1.msra.mxu0 0.0
    %2398 = vmatprep.subr.mxu0 0.0
    %2399 = vmatpush1.msra.mxu0 0.0
    %2400 = vmatprep.subr.mxu0 0.0
    %2401 = vmatpush1.msra.mxu0 0.0
    %2402 = vmatprep.subr.mxu0 0.0
    %2403 = vmatpush1.msra.mxu0 0.0
    %2404 = vmatprep.subr.mxu0 0.0
    %2405 = vmatpush1.msra.mxu0 0.0
    %2406 = vmatprep.subr.mxu0 0.0
    %2407 = vmatpush1.msra.mxu0 0.0
    %2408 = vmatprep.subr.mxu0 0.0
    %2409 = vmatpush1.msra.mxu0 0.0
    %2410 = vmatprep.subr.mxu0 0.0
    %2411 = vmatpush1.msra.mxu0 0.0
    %2412 = vmatprep.subr.mxu0 0.0
    %2413 = vmatpush1.msra.mxu0 0.0
    %2414 = vmatprep.subr.mxu0 0.0
    %2415 = vmatpush1.msra.mxu0 0.0
    %2416 = vmatprep.subr.mxu0 0.0
    %2417 = vmatpush1.msra.mxu0 0.0
    %2418 = vmatprep.subr.mxu0 0.0
    %2419 = vmatpush1.msra.mxu0 0.0
    %2420 = vmatprep.subr.mxu0 0.0
    %2421 = vmatpush1.msra.mxu0 0.0
    %2422 = vmatprep.subr.mxu0 0.0
    %2423 = vmatpush1.msra.mxu0 0.0
    %2424 = vmatprep.subr.mxu0 0.0
    %2425 = vmatpush1.msra.mxu0 0.0
    %2426 = vmatprep.subr.mxu0 0.0
    %2427 = vmatpush1.msra.mxu0 0.0
    %2428 = vmatprep.subr.mxu0 0.0
    %2429 = vmatpush1.msra.mxu0 0.0
    %2430 = vmatprep.subr.mxu0 0.0
    %2431 = vmatpush1.msra.mxu0 0.0
    %2432 = vmatprep.subr.mxu0 0.0
    %2433 = vmatpush1.msra.mxu0 0.0
    %2434 = vmatprep.subr.mxu0 0.0
    %2435 = vmatpush1.msra.mxu0 0.0
    %2436 = vmatprep.subr.mxu0 0.0
    %2437 = vmatpush1.msra.mxu0 0.0
    %2438 = vmatprep.subr.mxu0 0.0
    %2439 = vmatpush1.msra.mxu0 0.0
    %2440 = vmatprep.subr.mxu0 0.0
    %2441 = vmatpush1.msra.mxu0 0.0
    %2442 = vmatprep.mubr.f32.mxu0 0.0
    %2443 = vmatmul.mubr.f32.gmra.mrb[0].mxu0 %v2376
    %v2444 = vpop.f32.mrb[0].mxu0
    %v2445 = vadd.f32 0.0, %v2444
    %v2446 = vpop.f32.mrb[0].mxu0
    %2447 = vdwg.mxu0
    %v2448 = vadd.f32 %v2354, %v2445
    %v2449 = vld [vmem:[%s4] sm:$0x1]
    %v2451 = vlaneseq
    %v2452 = vshrl.u32 %v2451, 7
    %v2453 = vsub.s32 0, %v2452
    %v2454 = vrot.slane %v2449, %v2453
    %v2456 = vadd.f32 %v2448, %v2454
    %v2457 = vmax.f32 %v2456, 0.0
    %v2458 = vld [vmem:[%s6] sm:$0x1]
    %v2460 = vrot.slane %v2457, 1
    %v2462 = vmax.f32 %v2457, %v2460
    %2464 = vrot.lane.b32.xlu0 %v2462, 122
    %v2465 = vpop.permute.xlu0 %2464
    %v2467 = vmax.f32 %v2462, %v2465
    %v2468 = vld [vmem:[%s5] sm:$0x3f]
    %vm2469 = vcmask 48128
    %v2471 = vsel %vm2469, %v2467, 0
    %v2474 = vsel %vm152, %v2468, 0
    %2476 = vmatprep.subr.mxu0 0.0
    %2477 = vmatpush1.msra.mxu0 %v2474
    %2478 = vmatprep.subr.mxu0 0.0
    %2479 = vmatpush1.msra.mxu0 0.0
    %2480 = vmatprep.subr.mxu0 0.0
    %2481 = vmatpush1.msra.mxu0 0.0
    %2482 = vmatprep.subr.mxu0 0.0
    %2483 = vmatpush1.msra.mxu0 0.0
    %2484 = vmatprep.subr.mxu0 0.0
    %2485 = vmatpush1.msra.mxu0 0.0
    %2486 = vmatprep.subr.mxu0 0.0
    %2487 = vmatpush1.msra.mxu0 0.0
    %2488 = vmatprep.subr.mxu0 0.0
    %2489 = vmatpush1.msra.mxu0 0.0
    %2490 = vmatprep.subr.mxu0 0.0
    %2491 = vmatpush1.msra.mxu0 0.0
    %2492 = vmatprep.subr.mxu0 0.0
    %2493 = vmatpush1.msra.mxu0 0.0
    %2494 = vmatprep.subr.mxu0 0.0
    %2495 = vmatpush1.msra.mxu0 0.0
    %2496 = vmatprep.subr.mxu0 0.0
    %2497 = vmatpush1.msra.mxu0 0.0
    %2498 = vmatprep.subr.mxu0 0.0
    %2499 = vmatpush1.msra.mxu0 0.0
    %2500 = vmatprep.subr.mxu0 0.0
    %2501 = vmatpush1.msra.mxu0 0.0
    %2502 = vmatprep.subr.mxu0 0.0
    %2503 = vmatpush1.msra.mxu0 0.0
    %2504 = vmatprep.subr.mxu0 0.0
    %2505 = vmatpush1.msra.mxu0 0.0
    %2506 = vmatprep.subr.mxu0 0.0
    %2507 = vmatpush1.msra.mxu0 0.0
    %2508 = vmatprep.subr.mxu0 0.0
    %2509 = vmatpush1.msra.mxu0 0.0
    %2510 = vmatprep.subr.mxu0 0.0
    %2511 = vmatpush1.msra.mxu0 0.0
    %2512 = vmatprep.subr.mxu0 0.0
    %2513 = vmatpush1.msra.mxu0 0.0
    %2514 = vmatprep.subr.mxu0 0.0
    %2515 = vmatpush1.msra.mxu0 0.0
    %2516 = vmatprep.subr.mxu0 0.0
    %2517 = vmatpush1.msra.mxu0 0.0
    %2518 = vmatprep.subr.mxu0 0.0
    %2519 = vmatpush1.msra.mxu0 0.0
    %2520 = vmatprep.subr.mxu0 0.0
    %2521 = vmatpush1.msra.mxu0 0.0
    %2522 = vmatprep.subr.mxu0 0.0
    %2523 = vmatpush1.msra.mxu0 0.0
    %2524 = vmatprep.subr.mxu0 0.0
    %2525 = vmatpush1.msra.mxu0 0.0
    %2526 = vmatprep.subr.mxu0 0.0
    %2527 = vmatpush1.msra.mxu0 0.0
    %2528 = vmatprep.subr.mxu0 0.0
    %2529 = vmatpush1.msra.mxu0 0.0
    %2530 = vmatprep.subr.mxu0 0.0
    %2531 = vmatpush1.msra.mxu0 0.0
    %2532 = vmatprep.subr.mxu0 0.0
    %2533 = vmatpush1.msra.mxu0 0.0
    %2534 = vmatprep.subr.mxu0 0.0
    %2535 = vmatpush1.msra.mxu0 0.0
    %2536 = vmatprep.subr.mxu0 0.0
    %2537 = vmatpush1.msra.mxu0 0.0
    %2538 = vmatprep.subr.mxu0 0.0
    %2539 = vmatpush1.msra.mxu0 0.0
    %2540 = vmatprep.mubr.f32.mxu0 0.0
    %2541 = vmatmul.mubr.f32.gmra.mrb[0].mxu0 %v2471
    %v2542 = vpop.f32.mrb[0].mxu0
    %v2543 = vadd.f32 0.0, %v2542
    %v2544 = vpop.f32.mrb[0].mxu0
    %2545 = vdwg.mxu0
    %v2546 = vadd.f32 %v2458, %v2543
    %s2547 = scalar_lea.vmem %s5, 8
    %v2548 = vld [vmem:[%s2547] sm:$0x3f]
    %2549 = vrot.lane.b32.xlu0 %v2467, 116
    %v2550 = vpop.permute.xlu0 %2549
    %v2551 = vsel %vm2469, %v2550, 0
    %v2554 = vsel %vm152, %v2548, 0
    %2556 = vmatprep.subr.mxu0 0.0
    %2557 = vmatpush1.msra.mxu0 %v2554
    %2558 = vmatprep.subr.mxu0 0.0
    %2559 = vmatpush1.msra.mxu0 0.0
    %2560 = vmatprep.subr.mxu0 0.0
    %2561 = vmatpush1.msra.mxu0 0.0
    %2562 = vmatprep.subr.mxu0 0.0
    %2563 = vmatpush1.msra.mxu0 0.0
    %2564 = vmatprep.subr.mxu0 0.0
    %2565 = vmatpush1.msra.mxu0 0.0
    %2566 = vmatprep.subr.mxu0 0.0
    %2567 = vmatpush1.msra.mxu0 0.0
    %2568 = vmatprep.subr.mxu0 0.0
    %2569 = vmatpush1.msra.mxu0 0.0
    %2570 = vmatprep.subr.mxu0 0.0
    %2571 = vmatpush1.msra.mxu0 0.0
    %2572 = vmatprep.subr.mxu0 0.0
    %2573 = vmatpush1.msra.mxu0 0.0
    %2574 = vmatprep.subr.mxu0 0.0
    %2575 = vmatpush1.msra.mxu0 0.0
    %2576 = vmatprep.subr.mxu0 0.0
    %2577 = vmatpush1.msra.mxu0 0.0
    %2578 = vmatprep.subr.mxu0 0.0
    %2579 = vmatpush1.msra.mxu0 0.0
    %2580 = vmatprep.subr.mxu0 0.0
    %2581 = vmatpush1.msra.mxu0 0.0
    %2582 = vmatprep.subr.mxu0 0.0
    %2583 = vmatpush1.msra.mxu0 0.0
    %2584 = vmatprep.subr.mxu0 0.0
    %2585 = vmatpush1.msra.mxu0 0.0
    %2586 = vmatprep.subr.mxu0 0.0
    %2587 = vmatpush1.msra.mxu0 0.0
    %2588 = vmatprep.subr.mxu0 0.0
    %2589 = vmatpush1.msra.mxu0 0.0
    %2590 = vmatprep.subr.mxu0 0.0
    %2591 = vmatpush1.msra.mxu0 0.0
    %2592 = vmatprep.subr.mxu0 0.0
    %2593 = vmatpush1.msra.mxu0 0.0
    %2594 = vmatprep.subr.mxu0 0.0
    %2595 = vmatpush1.msra.mxu0 0.0
    %2596 = vmatprep.subr.mxu0 0.0
    %2597 = vmatpush1.msra.mxu0 0.0
    %2598 = vmatprep.subr.mxu0 0.0
    %2599 = vmatpush1.msra.mxu0 0.0
    %2600 = vmatprep.subr.mxu0 0.0
    %2601 = vmatpush1.msra.mxu0 0.0
    %2602 = vmatprep.subr.mxu0 0.0
    %2603 = vmatpush1.msra.mxu0 0.0
    %2604 = vmatprep.subr.mxu0 0.0
    %2605 = vmatpush1.msra.mxu0 0.0
    %2606 = vmatprep.subr.mxu0 0.0
    %2607 = vmatpush1.msra.mxu0 0.0
    %2608 = vmatprep.subr.mxu0 0.0
    %2609 = vmatpush1.msra.mxu0 0.0
    %2610 = vmatprep.subr.mxu0 0.0
    %2611 = vmatpush1.msra.mxu0 0.0
    %2612 = vmatprep.subr.mxu0 0.0
    %2613 = vmatpush1.msra.mxu0 0.0
    %2614 = vmatprep.subr.mxu0 0.0
    %2615 = vmatpush1.msra.mxu0 0.0
    %2616 = vmatprep.subr.mxu0 0.0
    %2617 = vmatpush1.msra.mxu0 0.0
    %2618 = vmatprep.subr.mxu0 0.0
    %2619 = vmatpush1.msra.mxu0 0.0
    %2620 = vmatprep.mubr.f32.mxu0 0.0
    %2621 = vmatmul.mubr.f32.gmra.mrb[0].mxu0 %v2551
    %v2622 = vpop.f32.mrb[0].mxu0
    %v2623 = vadd.f32 0.0, %v2622
    %v2624 = vpop.f32.mrb[0].mxu0
    %2625 = vdwg.mxu0
    %v2626 = vadd.f32 %v2546, %v2623
    %s2627 = scalar_lea.vmem %s5, 16
    %v2628 = vld [vmem:[%s2627] sm:$0x3f]
    %2629 = vrot.lane.b32.xlu0 %v2467, 104
    %v2630 = vpop.permute.xlu0 %2629
    %v2631 = vsel %vm2469, %v2630, 0
    %v2634 = vsel %vm152, %v2628, 0
    %2636 = vmatprep.subr.mxu0 0.0
    %2637 = vmatpush1.msra.mxu0 %v2634
    %2638 = vmatprep.subr.mxu0 0.0
    %2639 = vmatpush1.msra.mxu0 0.0
    %2640 = vmatprep.subr.mxu0 0.0
    %2641 = vmatpush1.msra.mxu0 0.0
    %2642 = vmatprep.subr.mxu0 0.0
    %2643 = vmatpush1.msra.mxu0 0.0
    %2644 = vmatprep.subr.mxu0 0.0
    %2645 = vmatpush1.msra.mxu0 0.0
    %2646 = vmatprep.subr.mxu0 0.0
    %2647 = vmatpush1.msra.mxu0 0.0
    %2648 = vmatprep.subr.mxu0 0.0
    %2649 = vmatpush1.msra.mxu0 0.0
    %2650 = vmatprep.subr.mxu0 0.0
    %2651 = vmatpush1.msra.mxu0 0.0
    %2652 = vmatprep.subr.mxu0 0.0
    %2653 = vmatpush1.msra.mxu0 0.0
    %2654 = vmatprep.subr.mxu0 0.0
    %2655 = vmatpush1.msra.mxu0 0.0
    %2656 = vmatprep.subr.mxu0 0.0
    %2657 = vmatpush1.msra.mxu0 0.0
    %2658 = vmatprep.subr.mxu0 0.0
    %2659 = vmatpush1.msra.mxu0 0.0
    %2660 = vmatprep.subr.mxu0 0.0
    %2661 = vmatpush1.msra.mxu0 0.0
    %2662 = vmatprep.subr.mxu0 0.0
    %2663 = vmatpush1.msra.mxu0 0.0
    %2664 = vmatprep.subr.mxu0 0.0
    %2665 = vmatpush1.msra.mxu0 0.0
    %2666 = vmatprep.subr.mxu0 0.0
    %2667 = vmatpush1.msra.mxu0 0.0
    %2668 = vmatprep.subr.mxu0 0.0
    %2669 = vmatpush1.msra.mxu0 0.0
    %2670 = vmatprep.subr.mxu0 0.0
    %2671 = vmatpush1.msra.mxu0 0.0
    %2672 = vmatprep.subr.mxu0 0.0
    %2673 = vmatpush1.msra.mxu0 0.0
    %2674 = vmatprep.subr.mxu0 0.0
    %2675 = vmatpush1.msra.mxu0 0.0
    %2676 = vmatprep.subr.mxu0 0.0
    %2677 = vmatpush1.msra.mxu0 0.0
    %2678 = vmatprep.subr.mxu0 0.0
    %2679 = vmatpush1.msra.mxu0 0.0
    %2680 = vmatprep.subr.mxu0 0.0
    %2681 = vmatpush1.msra.mxu0 0.0
    %2682 = vmatprep.subr.mxu0 0.0
    %2683 = vmatpush1.msra.mxu0 0.0
    %2684 = vmatprep.subr.mxu0 0.0
    %2685 = vmatpush1.msra.mxu0 0.0
    %2686 = vmatprep.subr.mxu0 0.0
    %2687 = vmatpush1.msra.mxu0 0.0
    %2688 = vmatprep.subr.mxu0 0.0
    %2689 = vmatpush1.msra.mxu0 0.0
    %2690 = vmatprep.subr.mxu0 0.0
    %2691 = vmatpush1.msra.mxu0 0.0
    %2692 = vmatprep.subr.mxu0 0.0
    %2693 = vmatpush1.msra.mxu0 0.0
    %2694 = vmatprep.subr.mxu0 0.0
    %2695 = vmatpush1.msra.mxu0 0.0
    %2696 = vmatprep.subr.mxu0 0.0
    %2697 = vmatpush1.msra.mxu0 0.0
    %2698 = vmatprep.subr.mxu0 0.0
    %2699 = vmatpush1.msra.mxu0 0.0
    %2700 = vmatprep.mubr.f32.mxu0 0.0
    %2701 = vmatmul.mubr.f32.gmra.mrb[0].mxu0 %v2631
    %v2702 = vpop.f32.mrb[0].mxu0
    %v2703 = vadd.f32 0.0, %v2702
    %v2704 = vpop.f32.mrb[0].mxu0
    %2705 = vdwg.mxu0
    %v2706 = vadd.f32 %v2626, %v2703
    %s2707 = scalar_lea.vmem %s5, 24
    %v2708 = vld [vmem:[%s2707] sm:$0x3f]
    %v2709 = vrot.slane %v2467, 2
    %v2710 = vsel %vm2469, %v2709, 0
    %v2713 = vsel %vm152, %v2708, 0
    %2715 = vmatprep.subr.mxu0 0.0
    %2716 = vmatpush1.msra.mxu0 %v2713
    %2717 = vmatprep.subr.mxu0 0.0
    %2718 = vmatpush1.msra.mxu0 0.0
    %2719 = vmatprep.subr.mxu0 0.0
    %2720 = vmatpush1.msra.mxu0 0.0
    %2721 = vmatprep.subr.mxu0 0.0
    %2722 = vmatpush1.msra.mxu0 0.0
    %2723 = vmatprep.subr.mxu0 0.0
    %2724 = vmatpush1.msra.mxu0 0.0
    %2725 = vmatprep.subr.mxu0 0.0
    %2726 = vmatpush1.msra.mxu0 0.0
    %2727 = vmatprep.subr.mxu0 0.0
    %2728 = vmatpush1.msra.mxu0 0.0
    %2729 = vmatprep.subr.mxu0 0.0
    %2730 = vmatpush1.msra.mxu0 0.0
    %2731 = vmatprep.subr.mxu0 0.0
    %2732 = vmatpush1.msra.mxu0 0.0
    %2733 = vmatprep.subr.mxu0 0.0
    %2734 = vmatpush1.msra.mxu0 0.0
    %2735 = vmatprep.subr.mxu0 0.0
    %2736 = vmatpush1.msra.mxu0 0.0
    %2737 = vmatprep.subr.mxu0 0.0
    %2738 = vmatpush1.msra.mxu0 0.0
    %2739 = vmatprep.subr.mxu0 0.0
    %2740 = vmatpush1.msra.mxu0 0.0
    %2741 = vmatprep.subr.mxu0 0.0
    %2742 = vmatpush1.msra.mxu0 0.0
    %2743 = vmatprep.subr.mxu0 0.0
    %2744 = vmatpush1.msra.mxu0 0.0
    %2745 = vmatprep.subr.mxu0 0.0
    %2746 = vmatpush1.msra.mxu0 0.0
    %2747 = vmatprep.subr.mxu0 0.0
    %2748 = vmatpush1.msra.mxu0 0.0
    %2749 = vmatprep.subr.mxu0 0.0
    %2750 = vmatpush1.msra.mxu0 0.0
    %2751 = vmatprep.subr.mxu0 0.0
    %2752 = vmatpush1.msra.mxu0 0.0
    %2753 = vmatprep.subr.mxu0 0.0
    %2754 = vmatpush1.msra.mxu0 0.0
    %2755 = vmatprep.subr.mxu0 0.0
    %2756 = vmatpush1.msra.mxu0 0.0
    %2757 = vmatprep.subr.mxu0 0.0
    %2758 = vmatpush1.msra.mxu0 0.0
    %2759 = vmatprep.subr.mxu0 0.0
    %2760 = vmatpush1.msra.mxu0 0.0
    %2761 = vmatprep.subr.mxu0 0.0
    %2762 = vmatpush1.msra.mxu0 0.0
    %2763 = vmatprep.subr.mxu0 0.0
    %2764 = vmatpush1.msra.mxu0 0.0
    %2765 = vmatprep.subr.mxu0 0.0
    %2766 = vmatpush1.msra.mxu0 0.0
    %2767 = vmatprep.subr.mxu0 0.0
    %2768 = vmatpush1.msra.mxu0 0.0
    %2769 = vmatprep.subr.mxu0 0.0
    %2770 = vmatpush1.msra.mxu0 0.0
    %2771 = vmatprep.subr.mxu0 0.0
    %2772 = vmatpush1.msra.mxu0 0.0
    %2773 = vmatprep.subr.mxu0 0.0
    %2774 = vmatpush1.msra.mxu0 0.0
    %2775 = vmatprep.subr.mxu0 0.0
    %2776 = vmatpush1.msra.mxu0 0.0
    %2777 = vmatprep.subr.mxu0 0.0
    %2778 = vmatpush1.msra.mxu0 0.0
    %2779 = vmatprep.mubr.f32.mxu0 0.0
    %2780 = vmatmul.mubr.f32.gmra.mrb[0].mxu0 %v2710
    %v2781 = vpop.f32.mrb[0].mxu0
    %v2782 = vadd.f32 0.0, %v2781
    %v2783 = vpop.f32.mrb[0].mxu0
    %2784 = vdwg.mxu0
    %v2785 = vadd.f32 %v2706, %v2782
    %s2786 = scalar_lea.vmem %s5, 32
    %v2787 = vld [vmem:[%s2786] sm:$0x3f]
    %2788 = vrot.lane.b32.xlu0 %v2709, 116
    %v2789 = vpop.permute.xlu0 %2788
    %v2790 = vsel %vm2469, %v2789, 0
    %v2793 = vsel %vm152, %v2787, 0
    %2795 = vmatprep.subr.mxu0 0.0
    %2796 = vmatpush1.msra.mxu0 %v2793
    %2797 = vmatprep.subr.mxu0 0.0
    %2798 = vmatpush1.msra.mxu0 0.0
    %2799 = vmatprep.subr.mxu0 0.0
    %2800 = vmatpush1.msra.mxu0 0.0
    %2801 = vmatprep.subr.mxu0 0.0
    %2802 = vmatpush1.msra.mxu0 0.0
    %2803 = vmatprep.subr.mxu0 0.0
    %2804 = vmatpush1.msra.mxu0 0.0
    %2805 = vmatprep.subr.mxu0 0.0
    %2806 = vmatpush1.msra.mxu0 0.0
    %2807 = vmatprep.subr.mxu0 0.0
    %2808 = vmatpush1.msra.mxu0 0.0
    %2809 = vmatprep.subr.mxu0 0.0
    %2810 = vmatpush1.msra.mxu0 0.0
    %2811 = vmatprep.subr.mxu0 0.0
    %2812 = vmatpush1.msra.mxu0 0.0
    %2813 = vmatprep.subr.mxu0 0.0
    %2814 = vmatpush1.msra.mxu0 0.0
    %2815 = vmatprep.subr.mxu0 0.0
    %2816 = vmatpush1.msra.mxu0 0.0
    %2817 = vmatprep.subr.mxu0 0.0
    %2818 = vmatpush1.msra.mxu0 0.0
    %2819 = vmatprep.subr.mxu0 0.0
    %2820 = vmatpush1.msra.mxu0 0.0
    %2821 = vmatprep.subr.mxu0 0.0
    %2822 = vmatpush1.msra.mxu0 0.0
    %2823 = vmatprep.subr.mxu0 0.0
    %2824 = vmatpush1.msra.mxu0 0.0
    %2825 = vmatprep.subr.mxu0 0.0
    %2826 = vmatpush1.msra.mxu0 0.0
    %2827 = vmatprep.subr.mxu0 0.0
    %2828 = vmatpush1.msra.mxu0 0.0
    %2829 = vmatprep.subr.mxu0 0.0
    %2830 = vmatpush1.msra.mxu0 0.0
    %2831 = vmatprep.subr.mxu0 0.0
    %2832 = vmatpush1.msra.mxu0 0.0
    %2833 = vmatprep.subr.mxu0 0.0
    %2834 = vmatpush1.msra.mxu0 0.0
    %2835 = vmatprep.subr.mxu0 0.0
    %2836 = vmatpush1.msra.mxu0 0.0
    %2837 = vmatprep.subr.mxu0 0.0
    %2838 = vmatpush1.msra.mxu0 0.0
    %2839 = vmatprep.subr.mxu0 0.0
    %2840 = vmatpush1.msra.mxu0 0.0
    %2841 = vmatprep.subr.mxu0 0.0
    %2842 = vmatpush1.msra.mxu0 0.0
    %2843 = vmatprep.subr.mxu0 0.0
    %2844 = vmatpush1.msra.mxu0 0.0
    %2845 = vmatprep.subr.mxu0 0.0
    %2846 = vmatpush1.msra.mxu0 0.0
    %2847 = vmatprep.subr.mxu0 0.0
    %2848 = vmatpush1.msra.mxu0 0.0
    %2849 = vmatprep.subr.mxu0 0.0
    %2850 = vmatpush1.msra.mxu0 0.0
    %2851 = vmatprep.subr.mxu0 0.0
    %2852 = vmatpush1.msra.mxu0 0.0
    %2853 = vmatprep.subr.mxu0 0.0
    %2854 = vmatpush1.msra.mxu0 0.0
    %2855 = vmatprep.subr.mxu0 0.0
    %2856 = vmatpush1.msra.mxu0 0.0
    %2857 = vmatprep.subr.mxu0 0.0
    %2858 = vmatpush1.msra.mxu0 0.0
    %2859 = vmatprep.mubr.f32.mxu0 0.0
    %2860 = vmatmul.mubr.f32.gmra.mrb[0].mxu0 %v2790
    %v2861 = vpop.f32.mrb[0].mxu0
    %v2862 = vadd.f32 0.0, %v2861
    %v2863 = vpop.f32.mrb[0].mxu0
    %2864 = vdwg.mxu0
    %v2865 = vadd.f32 %v2785, %v2862
    %s2866 = scalar_lea.vmem %s5, 40
    %v2867 = vld [vmem:[%s2866] sm:$0x3f]
    %2868 = vrot.lane.b32.xlu0 %v2709, 104
    %v2869 = vpop.permute.xlu0 %2868
    %v2870 = vsel %vm2469, %v2869, 0
    %v2873 = vsel %vm152, %v2867, 0
    %2875 = vmatprep.subr.mxu0 0.0
    %2876 = vmatpush1.msra.mxu0 %v2873
    %2877 = vmatprep.subr.mxu0 0.0
    %2878 = vmatpush1.msra.mxu0 0.0
    %2879 = vmatprep.subr.mxu0 0.0
    %2880 = vmatpush1.msra.mxu0 0.0
    %2881 = vmatprep.subr.mxu0 0.0
    %2882 = vmatpush1.msra.mxu0 0.0
    %2883 = vmatprep.subr.mxu0 0.0
    %2884 = vmatpush1.msra.mxu0 0.0
    %2885 = vmatprep.subr.mxu0 0.0
    %2886 = vmatpush1.msra.mxu0 0.0
    %2887 = vmatprep.subr.mxu0 0.0
    %2888 = vmatpush1.msra.mxu0 0.0
    %2889 = vmatprep.subr.mxu0 0.0
    %2890 = vmatpush1.msra.mxu0 0.0
    %2891 = vmatprep.subr.mxu0 0.0
    %2892 = vmatpush1.msra.mxu0 0.0
    %2893 = vmatprep.subr.mxu0 0.0
    %2894 = vmatpush1.msra.mxu0 0.0
    %2895 = vmatprep.subr.mxu0 0.0
    %2896 = vmatpush1.msra.mxu0 0.0
    %2897 = vmatprep.subr.mxu0 0.0
    %2898 = vmatpush1.msra.mxu0 0.0
    %2899 = vmatprep.subr.mxu0 0.0
    %2900 = vmatpush1.msra.mxu0 0.0
    %2901 = vmatprep.subr.mxu0 0.0
    %2902 = vmatpush1.msra.mxu0 0.0
    %2903 = vmatprep.subr.mxu0 0.0
    %2904 = vmatpush1.msra.mxu0 0.0
    %2905 = vmatprep.subr.mxu0 0.0
    %2906 = vmatpush1.msra.mxu0 0.0
    %2907 = vmatprep.subr.mxu0 0.0
    %2908 = vmatpush1.msra.mxu0 0.0
    %2909 = vmatprep.subr.mxu0 0.0
    %2910 = vmatpush1.msra.mxu0 0.0
    %2911 = vmatprep.subr.mxu0 0.0
    %2912 = vmatpush1.msra.mxu0 0.0
    %2913 = vmatprep.subr.mxu0 0.0
    %2914 = vmatpush1.msra.mxu0 0.0
    %2915 = vmatprep.subr.mxu0 0.0
    %2916 = vmatpush1.msra.mxu0 0.0
    %2917 = vmatprep.subr.mxu0 0.0
    %2918 = vmatpush1.msra.mxu0 0.0
    %2919 = vmatprep.subr.mxu0 0.0
    %2920 = vmatpush1.msra.mxu0 0.0
    %2921 = vmatprep.subr.mxu0 0.0
    %2922 = vmatpush1.msra.mxu0 0.0
    %2923 = vmatprep.subr.mxu0 0.0
    %2924 = vmatpush1.msra.mxu0 0.0
    %2925 = vmatprep.subr.mxu0 0.0
    %2926 = vmatpush1.msra.mxu0 0.0
    %2927 = vmatprep.subr.mxu0 0.0
    %2928 = vmatpush1.msra.mxu0 0.0
    %2929 = vmatprep.subr.mxu0 0.0
    %2930 = vmatpush1.msra.mxu0 0.0
    %2931 = vmatprep.subr.mxu0 0.0
    %2932 = vmatpush1.msra.mxu0 0.0
    %2933 = vmatprep.subr.mxu0 0.0
    %2934 = vmatpush1.msra.mxu0 0.0
    %2935 = vmatprep.subr.mxu0 0.0
    %2936 = vmatpush1.msra.mxu0 0.0
    %2937 = vmatprep.subr.mxu0 0.0
    %2938 = vmatpush1.msra.mxu0 0.0
    %2939 = vmatprep.mubr.f32.mxu0 0.0
    %2940 = vmatmul.mubr.f32.gmra.mrb[0].mxu0 %v2870
    %v2941 = vpop.f32.mrb[0].mxu0
    %v2942 = vadd.f32 0.0, %v2941
    %v2943 = vpop.f32.mrb[0].mxu0
    %2944 = vdwg.mxu0
    %v2945 = vadd.f32 %v2865, %v2942
    %s2946 = scalar_lea.vmem %s5, 48
    %v2947 = vld [vmem:[%s2946] sm:$0x3f]
    %v2948 = vrot.slane %v2467, 4
    %v2949 = vsel %vm2469, %v2948, 0
    %v2952 = vsel %vm152, %v2947, 0
    %2954 = vmatprep.subr.mxu0 0.0
    %2955 = vmatpush1.msra.mxu0 %v2952
    %2956 = vmatprep.subr.mxu0 0.0
    %2957 = vmatpush1.msra.mxu0 0.0
    %2958 = vmatprep.subr.mxu0 0.0
    %2959 = vmatpush1.msra.mxu0 0.0
    %2960 = vmatprep.subr.mxu0 0.0
    %2961 = vmatpush1.msra.mxu0 0.0
    %2962 = vmatprep.subr.mxu0 0.0
    %2963 = vmatpush1.msra.mxu0 0.0
    %2964 = vmatprep.subr.mxu0 0.0
    %2965 = vmatpush1.msra.mxu0 0.0
    %2966 = vmatprep.subr.mxu0 0.0
    %2967 = vmatpush1.msra.mxu0 0.0
    %2968 = vmatprep.subr.mxu0 0.0
    %2969 = vmatpush1.msra.mxu0 0.0
    %2970 = vmatprep.subr.mxu0 0.0
    %2971 = vmatpush1.msra.mxu0 0.0
    %2972 = vmatprep.subr.mxu0 0.0
    %2973 = vmatpush1.msra.mxu0 0.0
    %2974 = vmatprep.subr.mxu0 0.0
    %2975 = vmatpush1.msra.mxu0 0.0
    %2976 = vmatprep.subr.mxu0 0.0
    %2977 = vmatpush1.msra.mxu0 0.0
    %2978 = vmatprep.subr.mxu0 0.0
    %2979 = vmatpush1.msra.mxu0 0.0
    %2980 = vmatprep.subr.mxu0 0.0
    %2981 = vmatpush1.msra.mxu0 0.0
    %2982 = vmatprep.subr.mxu0 0.0
    %2983 = vmatpush1.msra.mxu0 0.0
    %2984 = vmatprep.subr.mxu0 0.0
    %2985 = vmatpush1.msra.mxu0 0.0
    %2986 = vmatprep.subr.mxu0 0.0
    %2987 = vmatpush1.msra.mxu0 0.0
    %2988 = vmatprep.subr.mxu0 0.0
    %2989 = vmatpush1.msra.mxu0 0.0
    %2990 = vmatprep.subr.mxu0 0.0
    %2991 = vmatpush1.msra.mxu0 0.0
    %2992 = vmatprep.subr.mxu0 0.0
    %2993 = vmatpush1.msra.mxu0 0.0
    %2994 = vmatprep.subr.mxu0 0.0
    %2995 = vmatpush1.msra.mxu0 0.0
    %2996 = vmatprep.subr.mxu0 0.0
    %2997 = vmatpush1.msra.mxu0 0.0
    %2998 = vmatprep.subr.mxu0 0.0
    %2999 = vmatpush1.msra.mxu0 0.0
    %3000 = vmatprep.subr.mxu0 0.0
    %3001 = vmatpush1.msra.mxu0 0.0
    %3002 = vmatprep.subr.mxu0 0.0
    %3003 = vmatpush1.msra.mxu0 0.0
    %3004 = vmatprep.subr.mxu0 0.0
    %3005 = vmatpush1.msra.mxu0 0.0
    %3006 = vmatprep.subr.mxu0 0.0
    %3007 = vmatpush1.msra.mxu0 0.0
    %3008 = vmatprep.subr.mxu0 0.0
    %3009 = vmatpush1.msra.mxu0 0.0
    %3010 = vmatprep.subr.mxu0 0.0
    %3011 = vmatpush1.msra.mxu0 0.0
    %3012 = vmatprep.subr.mxu0 0.0
    %3013 = vmatpush1.msra.mxu0 0.0
    %3014 = vmatprep.subr.mxu0 0.0
    %3015 = vmatpush1.msra.mxu0 0.0
    %3016 = vmatprep.subr.mxu0 0.0
    %3017 = vmatpush1.msra.mxu0 0.0
    %3018 = vmatprep.mubr.f32.mxu0 0.0
    %3019 = vmatmul.mubr.f32.gmra.mrb[0].mxu0 %v2949
    %v3020 = vpop.f32.mrb[0].mxu0
    %v3021 = vadd.f32 0.0, %v3020
    %v3022 = vpop.f32.mrb[0].mxu0
    %3023 = vdwg.mxu0
    %v3024 = vadd.f32 %v2945, %v3021
    %s3025 = scalar_lea.vmem %s5, 56
    %v3026 = vld [vmem:[%s3025] sm:$0x3f]
    %3027 = vrot.lane.b32.xlu0 %v2948, 116
    %v3028 = vpop.permute.xlu0 %3027
    %v3029 = vsel %vm2469, %v3028, 0
    %v3032 = vsel %vm152, %v3026, 0
    %3034 = vmatprep.subr.mxu0 0.0
    %3035 = vmatpush1.msra.mxu0 %v3032
    %3036 = vmatprep.subr.mxu0 0.0
    %3037 = vmatpush1.msra.mxu0 0.0
    %3038 = vmatprep.subr.mxu0 0.0
    %3039 = vmatpush1.msra.mxu0 0.0
    %3040 = vmatprep.subr.mxu0 0.0
    %3041 = vmatpush1.msra.mxu0 0.0
    %3042 = vmatprep.subr.mxu0 0.0
    %3043 = vmatpush1.msra.mxu0 0.0
    %3044 = vmatprep.subr.mxu0 0.0
    %3045 = vmatpush1.msra.mxu0 0.0
    %3046 = vmatprep.subr.mxu0 0.0
    %3047 = vmatpush1.msra.mxu0 0.0
    %3048 = vmatprep.subr.mxu0 0.0
    %3049 = vmatpush1.msra.mxu0 0.0
    %3050 = vmatprep.subr.mxu0 0.0
    %3051 = vmatpush1.msra.mxu0 0.0
    %3052 = vmatprep.subr.mxu0 0.0
    %3053 = vmatpush1.msra.mxu0 0.0
    %3054 = vmatprep.subr.mxu0 0.0
    %3055 = vmatpush1.msra.mxu0 0.0
    %3056 = vmatprep.subr.mxu0 0.0
    %3057 = vmatpush1.msra.mxu0 0.0
    %3058 = vmatprep.subr.mxu0 0.0
    %3059 = vmatpush1.msra.mxu0 0.0
    %3060 = vmatprep.subr.mxu0 0.0
    %3061 = vmatpush1.msra.mxu0 0.0
    %3062 = vmatprep.subr.mxu0 0.0
    %3063 = vmatpush1.msra.mxu0 0.0
    %3064 = vmatprep.subr.mxu0 0.0
    %3065 = vmatpush1.msra.mxu0 0.0
    %3066 = vmatprep.subr.mxu0 0.0
    %3067 = vmatpush1.msra.mxu0 0.0
    %3068 = vmatprep.subr.mxu0 0.0
    %3069 = vmatpush1.msra.mxu0 0.0
    %3070 = vmatprep.subr.mxu0 0.0
    %3071 = vmatpush1.msra.mxu0 0.0
    %3072 = vmatprep.subr.mxu0 0.0
    %3073 = vmatpush1.msra.mxu0 0.0
    %3074 = vmatprep.subr.mxu0 0.0
    %3075 = vmatpush1.msra.mxu0 0.0
    %3076 = vmatprep.subr.mxu0 0.0
    %3077 = vmatpush1.msra.mxu0 0.0
    %3078 = vmatprep.subr.mxu0 0.0
    %3079 = vmatpush1.msra.mxu0 0.0
    %3080 = vmatprep.subr.mxu0 0.0
    %3081 = vmatpush1.msra.mxu0 0.0
    %3082 = vmatprep.subr.mxu0 0.0
    %3083 = vmatpush1.msra.mxu0 0.0
    %3084 = vmatprep.subr.mxu0 0.0
    %3085 = vmatpush1.msra.mxu0 0.0
    %3086 = vmatprep.subr.mxu0 0.0
    %3087 = vmatpush1.msra.mxu0 0.0
    %3088 = vmatprep.subr.mxu0 0.0
    %3089 = vmatpush1.msra.mxu0 0.0
    %3090 = vmatprep.subr.mxu0 0.0
    %3091 = vmatpush1.msra.mxu0 0.0
    %3092 = vmatprep.subr.mxu0 0.0
    %3093 = vmatpush1.msra.mxu0 0.0
    %3094 = vmatprep.subr.mxu0 0.0
    %3095 = vmatpush1.msra.mxu0 0.0
    %3096 = vmatprep.subr.mxu0 0.0
    %3097 = vmatpush1.msra.mxu0 0.0
    %3098 = vmatprep.mubr.f32.mxu0 0.0
    %3099 = vmatmul.mubr.f32.gmra.mrb[0].mxu0 %v3029
    %v3100 = vpop.f32.mrb[0].mxu0
    %v3101 = vadd.f32 0.0, %v3100
    %v3102 = vpop.f32.mrb[0].mxu0
    %3103 = vdwg.mxu0
    %v3104 = vadd.f32 %v3024, %v3101
    %s3105 = scalar_lea.vmem %s5, 64
    %v3106 = vld [vmem:[%s3105] sm:$0x3f]
    %3107 = vrot.lane.b32.xlu0 %v2948, 104
    %v3108 = vpop.permute.xlu0 %3107
    %v3109 = vsel %vm2469, %v3108, 0
    %v3112 = vsel %vm152, %v3106, 0
    %3114 = vmatprep.subr.mxu0 0.0
    %3115 = vmatpush1.msra.mxu0 %v3112
    %3116 = vmatprep.subr.mxu0 0.0
    %3117 = vmatpush1.msra.mxu0 0.0
    %3118 = vmatprep.subr.mxu0 0.0
    %3119 = vmatpush1.msra.mxu0 0.0
    %3120 = vmatprep.subr.mxu0 0.0
    %3121 = vmatpush1.msra.mxu0 0.0
    %3122 = vmatprep.subr.mxu0 0.0
    %3123 = vmatpush1.msra.mxu0 0.0
    %3124 = vmatprep.subr.mxu0 0.0
    %3125 = vmatpush1.msra.mxu0 0.0
    %3126 = vmatprep.subr.mxu0 0.0
    %3127 = vmatpush1.msra.mxu0 0.0
    %3128 = vmatprep.subr.mxu0 0.0
    %3129 = vmatpush1.msra.mxu0 0.0
    %3130 = vmatprep.subr.mxu0 0.0
    %3131 = vmatpush1.msra.mxu0 0.0
    %3132 = vmatprep.subr.mxu0 0.0
    %3133 = vmatpush1.msra.mxu0 0.0
    %3134 = vmatprep.subr.mxu0 0.0
    %3135 = vmatpush1.msra.mxu0 0.0
    %3136 = vmatprep.subr.mxu0 0.0
    %3137 = vmatpush1.msra.mxu0 0.0
    %3138 = vmatprep.subr.mxu0 0.0
    %3139 = vmatpush1.msra.mxu0 0.0
    %3140 = vmatprep.subr.mxu0 0.0
    %3141 = vmatpush1.msra.mxu0 0.0
    %3142 = vmatprep.subr.mxu0 0.0
    %3143 = vmatpush1.msra.mxu0 0.0
    %3144 = vmatprep.subr.mxu0 0.0
    %3145 = vmatpush1.msra.mxu0 0.0
    %3146 = vmatprep.subr.mxu0 0.0
    %3147 = vmatpush1.msra.mxu0 0.0
    %3148 = vmatprep.subr.mxu0 0.0
    %3149 = vmatpush1.msra.mxu0 0.0
    %3150 = vmatprep.subr.mxu0 0.0
    %3151 = vmatpush1.msra.mxu0 0.0
    %3152 = vmatprep.subr.mxu0 0.0
    %3153 = vmatpush1.msra.mxu0 0.0
    %3154 = vmatprep.subr.mxu0 0.0
    %3155 = vmatpush1.msra.mxu0 0.0
    %3156 = vmatprep.subr.mxu0 0.0
    %3157 = vmatpush1.msra.mxu0 0.0
    %3158 = vmatprep.subr.mxu0 0.0
    %3159 = vmatpush1.msra.mxu0 0.0
    %3160 = vmatprep.subr.mxu0 0.0
    %3161 = vmatpush1.msra.mxu0 0.0
    %3162 = vmatprep.subr.mxu0 0.0
    %3163 = vmatpush1.msra.mxu0 0.0
    %3164 = vmatprep.subr.mxu0 0.0
    %3165 = vmatpush1.msra.mxu0 0.0
    %3166 = vmatprep.subr.mxu0 0.0
    %3167 = vmatpush1.msra.mxu0 0.0
    %3168 = vmatprep.subr.mxu0 0.0
    %3169 = vmatpush1.msra.mxu0 0.0
    %3170 = vmatprep.subr.mxu0 0.0
    %3171 = vmatpush1.msra.mxu0 0.0
    %3172 = vmatprep.subr.mxu0 0.0
    %3173 = vmatpush1.msra.mxu0 0.0
    %3174 = vmatprep.subr.mxu0 0.0
    %3175 = vmatpush1.msra.mxu0 0.0
    %3176 = vmatprep.subr.mxu0 0.0
    %3177 = vmatpush1.msra.mxu0 0.0
    %3178 = vmatprep.mubr.f32.mxu0 0.0
    %3179 = vmatmul.mubr.f32.gmra.mrb[0].mxu0 %v3109
    %v3180 = vpop.f32.mrb[0].mxu0
    %v3181 = vadd.f32 0.0, %v3180
    %v3182 = vpop.f32.mrb[0].mxu0
    %3183 = vdwg.mxu0
    %v3184 = vadd.f32 %v3104, %v3181
    %vm3185 = vcmask 90112
    %3186 = vst.msk [vmem:[#allocation9] sm:$0x1] %vm3185, %v3184
    %s3187 = scalar_lea.vmem [#allocation2], 32
    %v3188 = vld [vmem:[%s3187] sm:$0xff]
    %v3189 = vld [vmem:[%s3187 + $0x8] sm:$0xff]
    %v3190 = vld [vmem:[%s3187 + $0x10] sm:$0xff]
    %v3191 = vld [vmem:[%s3187 + $0x18] sm:$0x3]
    %v3192 = vld [vmem:[#allocation4] sm:$0xff]
    %v3193 = vld [vmem:[#allocation4 + $0x8] sm:$0xff]
    %v3194 = vld [vmem:[#allocation4 + $0x10] sm:$0xff]
    %v3195 = vld [vmem:[#allocation4 + $0x18] sm:$0xff]
    %v3196 = vld [vmem:[#allocation4 + $0x20] sm:$0xff]
    %v3197 = vld [vmem:[#allocation4 + $0x28] sm:$0xff]
    %v3198 = vld [vmem:[#allocation4 + $0x30] sm:$0xff]
    %v3199 = vld [vmem:[#allocation4 + $0x38] sm:$0xff]
    %v3200 = vld [vmem:[#allocation4 + $0x40] sm:$0xff]
    %v3201 = vld [vmem:[#allocation4 + $0x48] sm:$0x3f]
    %v3202 = vld [vmem:[%s126] sm:$0xff]
    %v3203 = vld [vmem:[%s126 + $0x8] sm:$0xff]
    %v3204 = vld [vmem:[%s126 + $0x10] sm:$0xff]
    %v3205 = vld [vmem:[%s126 + $0x18] sm:$0xff]
    %v3206 = vld [vmem:[%s126 + $0x20] sm:$0xff]
    %v3207 = vld [vmem:[%s126 + $0x28] sm:$0xff]
    %v3208 = vld [vmem:[%s126 + $0x30] sm:$0xff]
    %v3209 = vld [vmem:[%s126 + $0x38] sm:$0xff]
    %v3210 = vld [vmem:[%s126 + $0x40] sm:$0xff]
    %v3211 = vld [vmem:[%s126 + $0x48] sm:$0x3f]
    %v3215 = vrot.slane %v3188, 1
    %v3216 = vrot.slane %v3189, 1
    %v3217 = vsel %vm140, %v3215, %v3216
    %v3218 = vrot.slane %v3190, 1
    %v3219 = vsel %vm140, %v3216, %v3218
    %v3220 = vsel %vm55, %v3217, 0
    %v3222 = vsel %vm55, %v3219, 0
    %v3224 = vsel %vm55, %v3218, 0
    %v3227 = vsel %vm152, %v3211, 0
    %3229 = vmatprep.subr.mxu0 0.0
    %3230 = vmatpush1.msra.mxu0 %v3202
    %3231 = vmatprep.subr.mxu0 0.0
    %3232 = vmatpush1.msra.mxu0 %v3203
    %3233 = vmatprep.subr.mxu0 0.0
    %3234 = vmatpush1.msra.mxu0 %v3204
    %3235 = vmatprep.subr.mxu0 0.0
    %3236 = vmatpush1.msra.mxu0 %v3205
    %3237 = vmatprep.subr.mxu0 0.0
    %3238 = vmatpush1.msra.mxu0 %v3206
    %3239 = vmatprep.subr.mxu0 0.0
    %3240 = vmatpush1.msra.mxu0 %v3207
    %3241 = vmatprep.subr.mxu0 0.0
    %3242 = vmatpush1.msra.mxu0 %v3208
    %3243 = vmatprep.subr.mxu0 0.0
    %3244 = vmatpush1.msra.mxu0 %v3209
    %3245 = vmatprep.subr.mxu0 0.0
    %3246 = vmatpush1.msra.mxu0 %v3210
    %3247 = vmatprep.subr.mxu0 0.0
    %3248 = vmatpush1.msra.mxu0 %v3227
    %3249 = vmatprep.subr.mxu0 0.0
    %3250 = vmatpush1.msra.mxu0 0.0
    %3251 = vmatprep.subr.mxu0 0.0
    %3252 = vmatpush1.msra.mxu0 0.0
    %3253 = vmatprep.subr.mxu0 0.0
    %3254 = vmatpush1.msra.mxu0 0.0
    %3255 = vmatprep.subr.mxu0 0.0
    %3256 = vmatpush1.msra.mxu0 0.0
    %3257 = vmatprep.subr.mxu0 0.0
    %3258 = vmatpush1.msra.mxu0 0.0
    %3259 = vmatprep.subr.mxu0 0.0
    %3260 = vmatpush1.msra.mxu0 0.0
    %3261 = vmatprep.subr.mxu0 0.0
    %3262 = vmatpush1.msra.mxu0 0.0
    %3263 = vmatprep.subr.mxu0 0.0
    %3264 = vmatpush1.msra.mxu0 0.0
    %3265 = vmatprep.subr.mxu0 0.0
    %3266 = vmatpush1.msra.mxu0 0.0
    %3267 = vmatprep.subr.mxu0 0.0
    %3268 = vmatpush1.msra.mxu0 0.0
    %3269 = vmatprep.subr.mxu0 0.0
    %3270 = vmatpush1.msra.mxu0 0.0
    %3271 = vmatprep.subr.mxu0 0.0
    %3272 = vmatpush1.msra.mxu0 0.0
    %3273 = vmatprep.subr.mxu0 0.0
    %3274 = vmatpush1.msra.mxu0 0.0
    %3275 = vmatprep.subr.mxu0 0.0
    %3276 = vmatpush1.msra.mxu0 0.0
    %3277 = vmatprep.subr.mxu0 0.0
    %3278 = vmatpush1.msra.mxu0 0.0
    %3279 = vmatprep.subr.mxu0 0.0
    %3280 = vmatpush1.msra.mxu0 0.0
    %3281 = vmatprep.subr.mxu0 0.0
    %3282 = vmatpush1.msra.mxu0 0.0
    %3283 = vmatprep.subr.mxu0 0.0
    %3284 = vmatpush1.msra.mxu0 0.0
    %3285 = vmatprep.subr.mxu0 0.0
    %3286 = vmatpush1.msra.mxu0 0.0
    %3287 = vmatprep.subr.mxu0 0.0
    %3288 = vmatpush1.msra.mxu0 0.0
    %3289 = vmatprep.subr.mxu0 0.0
    %3290 = vmatpush1.msra.mxu0 0.0
    %3291 = vmatprep.subr.mxu0 0.0
    %3292 = vmatpush1.msra.mxu0 0.0
    %3293 = vmatprep.mubr.f32.mxu0 0.0
    %3294 = vmatmul.mubr.f32.gmra.mrb[0].mxu0 %v3220
    %v3295 = vpop.f32.mrb[0].mxu0
    %v3296 = vadd.f32 0.0, %v3295
    %v3297 = vpop.f32.mrb[0].mxu0
    %3298 = vmatprep.mubr.f32.mxu0 0.0
    %3299 = vmatmul.mubr.f32.gmra.mrb[0].mxu0 %v3222
    %v3300 = vpop.f32.mrb[0].mxu0
    %v3301 = vadd.f32 0.0, %v3300
    %v3302 = vpop.f32.mrb[0].mxu0
    %3303 = vmatprep.mubr.f32.mxu0 0.0
    %3304 = vmatmul.mubr.f32.gmra.mrb[0].mxu0 %v3224
    %v3305 = vpop.f32.mrb[0].mxu0
    %v3306 = vadd.f32 0.0, %v3305
    %v3307 = vpop.f32.mrb[0].mxu0
    %3308 = vdwg.mxu0
    %v3309 = vsel %vm55, %v3188, 0
    %v3311 = vsel %vm55, %v3189, 0
    %v3313 = vsel %vm55, %v3190, 0
    %v3316 = vsel %vm152, %v3201, 0
    %3318 = vmatprep.subr.mxu0 0.0
    %3319 = vmatpush1.msra.mxu0 %v3192
    %3320 = vmatprep.subr.mxu0 0.0
    %3321 = vmatpush1.msra.mxu0 %v3193
    %3322 = vmatprep.subr.mxu0 0.0
    %3323 = vmatpush1.msra.mxu0 %v3194
    %3324 = vmatprep.subr.mxu0 0.0
    %3325 = vmatpush1.msra.mxu0 %v3195
    %3326 = vmatprep.subr.mxu0 0.0
    %3327 = vmatpush1.msra.mxu0 %v3196
    %3328 = vmatprep.subr.mxu0 0.0
    %3329 = vmatpush1.msra.mxu0 %v3197
    %3330 = vmatprep.subr.mxu0 0.0
    %3331 = vmatpush1.msra.mxu0 %v3198
    %3332 = vmatprep.subr.mxu0 0.0
    %3333 = vmatpush1.msra.mxu0 %v3199
    %3334 = vmatprep.subr.mxu0 0.0
    %3335 = vmatpush1.msra.mxu0 %v3200
    %3336 = vmatprep.subr.mxu0 0.0
    %3337 = vmatpush1.msra.mxu0 %v3316
    %3338 = vmatprep.subr.mxu0 0.0
    %3339 = vmatpush1.msra.mxu0 0.0
    %3340 = vmatprep.subr.mxu0 0.0
    %3341 = vmatpush1.msra.mxu0 0.0
    %3342 = vmatprep.subr.mxu0 0.0
    %3343 = vmatpush1.msra.mxu0 0.0
    %3344 = vmatprep.subr.mxu0 0.0
    %3345 = vmatpush1.msra.mxu0 0.0
    %3346 = vmatprep.subr.mxu0 0.0
    %3347 = vmatpush1.msra.mxu0 0.0
    %3348 = vmatprep.subr.mxu0 0.0
    %3349 = vmatpush1.msra.mxu0 0.0
    %3350 = vmatprep.subr.mxu0 0.0
    %3351 = vmatpush1.msra.mxu0 0.0
    %3352 = vmatprep.subr.mxu0 0.0
    %3353 = vmatpush1.msra.mxu0 0.0
    %3354 = vmatprep.subr.mxu0 0.0
    %3355 = vmatpush1.msra.mxu0 0.0
    %3356 = vmatprep.subr.mxu0 0.0
    %3357 = vmatpush1.msra.mxu0 0.0
    %3358 = vmatprep.subr.mxu0 0.0
    %3359 = vmatpush1.msra.mxu0 0.0
    %3360 = vmatprep.subr.mxu0 0.0
    %3361 = vmatpush1.msra.mxu0 0.0
    %3362 = vmatprep.subr.mxu0 0.0
    %3363 = vmatpush1.msra.mxu0 0.0
    %3364 = vmatprep.subr.mxu0 0.0
    %3365 = vmatpush1.msra.mxu0 0.0
    %3366 = vmatprep.subr.mxu0 0.0
    %3367 = vmatpush1.msra.mxu0 0.0
    %3368 = vmatprep.subr.mxu0 0.0
    %3369 = vmatpush1.msra.mxu0 0.0
    %3370 = vmatprep.subr.mxu0 0.0
    %3371 = vmatpush1.msra.mxu0 0.0
    %3372 = vmatprep.subr.mxu0 0.0
    %3373 = vmatpush1.msra.mxu0 0.0
    %3374 = vmatprep.subr.mxu0 0.0
    %3375 = vmatpush1.msra.mxu0 0.0
    %3376 = vmatprep.subr.mxu0 0.0
    %3377 = vmatpush1.msra.mxu0 0.0
    %3378 = vmatprep.subr.mxu0 0.0
    %3379 = vmatpush1.msra.mxu0 0.0
    %3380 = vmatprep.subr.mxu0 0.0
    %3381 = vmatpush1.msra.mxu0 0.0
    %3382 = vmatprep.mubr.f32.mxu0 0.0
    %3383 = vmatmul.mubr.f32.gmra.mrb[0].mxu0 %v3309
    %v3384 = vpop.f32.mrb[0].mxu0
    %v3385 = vadd.f32 %v3296, %v3384
    %v3386 = vpop.f32.mrb[0].mxu0
    %3387 = vmatprep.mubr.f32.mxu0 0.0
    %3388 = vmatmul.mubr.f32.gmra.mrb[0].mxu0 %v3311
    %v3389 = vpop.f32.mrb[0].mxu0
    %v3390 = vadd.f32 %v3301, %v3389
    %v3391 = vpop.f32.mrb[0].mxu0
    %3392 = vmatprep.mubr.f32.mxu0 0.0
    %3393 = vmatmul.mubr.f32.gmra.mrb[0].mxu0 %v3313
    %v3394 = vpop.f32.mrb[0].mxu0
    %v3395 = vadd.f32 %v3306, %v3394
    %v3396 = vpop.f32.mrb[0].mxu0
    %3397 = vdwg.mxu0
    %v3398 = vld [vmem:[%s325] sm:$0xff]
    %v3399 = vld [vmem:[%s325 + $0x8] sm:$0xff]
    %v3400 = vld [vmem:[%s325 + $0x10] sm:$0xff]
    %v3401 = vld [vmem:[%s325 + $0x18] sm:$0xff]
    %v3402 = vld [vmem:[%s325 + $0x20] sm:$0xff]
    %v3403 = vld [vmem:[%s325 + $0x28] sm:$0xff]
    %v3404 = vld [vmem:[%s325 + $0x30] sm:$0xff]
    %v3405 = vld [vmem:[%s325 + $0x38] sm:$0xff]
    %v3406 = vld [vmem:[%s325 + $0x40] sm:$0xff]
    %v3407 = vld [vmem:[%s325 + $0x48] sm:$0x3f]
    %v3408 = vrot.slane %v3188, 2
    %v3409 = vrot.slane %v3189, 2
    %v3410 = vsel %vm152, %v3408, %v3409
    %v3411 = vrot.slane %v3190, 2
    %v3412 = vsel %vm152, %v3409, %v3411
    %v3413 = vsel %vm55, %v3410, 0
    %v3415 = vsel %vm55, %v3412, 0
    %v3417 = vsel %vm55, %v3411, 0
    %v3420 = vsel %vm152, %v3407, 0
    %3422 = vmatprep.subr.mxu0 0.0
    %3423 = vmatpush1.msra.mxu0 %v3398
    %3424 = vmatprep.subr.mxu0 0.0
    %3425 = vmatpush1.msra.mxu0 %v3399
    %3426 = vmatprep.subr.mxu0 0.0
    %3427 = vmatpush1.msra.mxu0 %v3400
    %3428 = vmatprep.subr.mxu0 0.0
    %3429 = vmatpush1.msra.mxu0 %v3401
    %3430 = vmatprep.subr.mxu0 0.0
    %3431 = vmatpush1.msra.mxu0 %v3402
    %3432 = vmatprep.subr.mxu0 0.0
    %3433 = vmatpush1.msra.mxu0 %v3403
    %3434 = vmatprep.subr.mxu0 0.0
    %3435 = vmatpush1.msra.mxu0 %v3404
    %3436 = vmatprep.subr.mxu0 0.0
    %3437 = vmatpush1.msra.mxu0 %v3405
    %3438 = vmatprep.subr.mxu0 0.0
    %3439 = vmatpush1.msra.mxu0 %v3406
    %3440 = vmatprep.subr.mxu0 0.0
    %3441 = vmatpush1.msra.mxu0 %v3420
    %3442 = vmatprep.subr.mxu0 0.0
    %3443 = vmatpush1.msra.mxu0 0.0
    %3444 = vmatprep.subr.mxu0 0.0
    %3445 = vmatpush1.msra.mxu0 0.0
    %3446 = vmatprep.subr.mxu0 0.0
    %3447 = vmatpush1.msra.mxu0 0.0
    %3448 = vmatprep.subr.mxu0 0.0
    %3449 = vmatpush1.msra.mxu0 0.0
    %3450 = vmatprep.subr.mxu0 0.0
    %3451 = vmatpush1.msra.mxu0 0.0
    %3452 = vmatprep.subr.mxu0 0.0
    %3453 = vmatpush1.msra.mxu0 0.0
    %3454 = vmatprep.subr.mxu0 0.0
    %3455 = vmatpush1.msra.mxu0 0.0
    %3456 = vmatprep.subr.mxu0 0.0
    %3457 = vmatpush1.msra.mxu0 0.0
    %3458 = vmatprep.subr.mxu0 0.0
    %3459 = vmatpush1.msra.mxu0 0.0
    %3460 = vmatprep.subr.mxu0 0.0
    %3461 = vmatpush1.msra.mxu0 0.0
    %3462 = vmatprep.subr.mxu0 0.0
    %3463 = vmatpush1.msra.mxu0 0.0
    %3464 = vmatprep.subr.mxu0 0.0
    %3465 = vmatpush1.msra.mxu0 0.0
    %3466 = vmatprep.subr.mxu0 0.0
    %3467 = vmatpush1.msra.mxu0 0.0
    %3468 = vmatprep.subr.mxu0 0.0
    %3469 = vmatpush1.msra.mxu0 0.0
    %3470 = vmatprep.subr.mxu0 0.0
    %3471 = vmatpush1.msra.mxu0 0.0
    %3472 = vmatprep.subr.mxu0 0.0
    %3473 = vmatpush1.msra.mxu0 0.0
    %3474 = vmatprep.subr.mxu0 0.0
    %3475 = vmatpush1.msra.mxu0 0.0
    %3476 = vmatprep.subr.mxu0 0.0
    %3477 = vmatpush1.msra.mxu0 0.0
    %3478 = vmatprep.subr.mxu0 0.0
    %3479 = vmatpush1.msra.mxu0 0.0
    %3480 = vmatprep.subr.mxu0 0.0
    %3481 = vmatpush1.msra.mxu0 0.0
    %3482 = vmatprep.subr.mxu0 0.0
    %3483 = vmatpush1.msra.mxu0 0.0
    %3484 = vmatprep.subr.mxu0 0.0
    %3485 = vmatpush1.msra.mxu0 0.0
    %3486 = vmatprep.mubr.f32.mxu0 0.0
    %3487 = vmatmul.mubr.f32.gmra.mrb[0].mxu0 %v3413
    %v3488 = vpop.f32.mrb[0].mxu0
    %v3489 = vadd.f32 0.0, %v3488
    %v3490 = vpop.f32.mrb[0].mxu0
    %3491 = vmatprep.mubr.f32.mxu0 0.0
    %3492 = vmatmul.mubr.f32.gmra.mrb[0].mxu0 %v3415
    %v3493 = vpop.f32.mrb[0].mxu0
    %v3494 = vadd.f32 0.0, %v3493
    %v3495 = vpop.f32.mrb[0].mxu0
    %3496 = vmatprep.mubr.f32.mxu0 0.0
    %3497 = vmatmul.mubr.f32.gmra.mrb[0].mxu0 %v3417
    %v3498 = vpop.f32.mrb[0].mxu0
    %v3499 = vadd.f32 0.0, %v3498
    %v3500 = vpop.f32.mrb[0].mxu0
    %3501 = vdwg.mxu0
    %v3502 = vadd.f32 %v3385, %v3489
    %v3503 = vadd.f32 %v3390, %v3494
    %v3504 = vadd.f32 %v3395, %v3499
    %v3505 = vld [vmem:[%s433] sm:$0xff]
    %v3506 = vld [vmem:[%s433 + $0x8] sm:$0xff]
    %v3507 = vld [vmem:[%s433 + $0x10] sm:$0xff]
    %v3508 = vld [vmem:[%s433 + $0x18] sm:$0xff]
    %v3509 = vld [vmem:[%s433 + $0x20] sm:$0xff]
    %v3510 = vld [vmem:[%s433 + $0x28] sm:$0xff]
    %v3511 = vld [vmem:[%s433 + $0x30] sm:$0xff]
    %v3512 = vld [vmem:[%s433 + $0x38] sm:$0xff]
    %v3513 = vld [vmem:[%s433 + $0x40] sm:$0xff]
    %v3514 = vld [vmem:[%s433 + $0x48] sm:$0x3f]
    %v3515 = vrot.slane %v3188, 3
    %v3516 = vrot.slane %v3189, 3
    %v3517 = vsel %vm444, %v3515, %v3516
    %v3518 = vrot.slane %v3190, 3
    %v3519 = vsel %vm444, %v3516, %v3518
    %v3520 = vsel %vm55, %v3517, 0
    %v3522 = vsel %vm55, %v3519, 0
    %v3524 = vsel %vm55, %v3518, 0
    %v3527 = vsel %vm152, %v3514, 0
    %3529 = vmatprep.subr.mxu0 0.0
    %3530 = vmatpush1.msra.mxu0 %v3505
    %3531 = vmatprep.subr.mxu0 0.0
    %3532 = vmatpush1.msra.mxu0 %v3506
    %3533 = vmatprep.subr.mxu0 0.0
    %3534 = vmatpush1.msra.mxu0 %v3507
    %3535 = vmatprep.subr.mxu0 0.0
    %3536 = vmatpush1.msra.mxu0 %v3508
    %3537 = vmatprep.subr.mxu0 0.0
    %3538 = vmatpush1.msra.mxu0 %v3509
    %3539 = vmatprep.subr.mxu0 0.0
    %3540 = vmatpush1.msra.mxu0 %v3510
    %3541 = vmatprep.subr.mxu0 0.0
    %3542 = vmatpush1.msra.mxu0 %v3511
    %3543 = vmatprep.subr.mxu0 0.0
    %3544 = vmatpush1.msra.mxu0 %v3512
    %3545 = vmatprep.subr.mxu0 0.0
    %3546 = vmatpush1.msra.mxu0 %v3513
    %3547 = vmatprep.subr.mxu0 0.0
    %3548 = vmatpush1.msra.mxu0 %v3527
    %3549 = vmatprep.subr.mxu0 0.0
    %3550 = vmatpush1.msra.mxu0 0.0
    %3551 = vmatprep.subr.mxu0 0.0
    %3552 = vmatpush1.msra.mxu0 0.0
    %3553 = vmatprep.subr.mxu0 0.0
    %3554 = vmatpush1.msra.mxu0 0.0
    %3555 = vmatprep.subr.mxu0 0.0
    %3556 = vmatpush1.msra.mxu0 0.0
    %3557 = vmatprep.subr.mxu0 0.0
    %3558 = vmatpush1.msra.mxu0 0.0
    %3559 = vmatprep.subr.mxu0 0.0
    %3560 = vmatpush1.msra.mxu0 0.0
    %3561 = vmatprep.subr.mxu0 0.0
    %3562 = vmatpush1.msra.mxu0 0.0
    %3563 = vmatprep.subr.mxu0 0.0
    %3564 = vmatpush1.msra.mxu0 0.0
    %3565 = vmatprep.subr.mxu0 0.0
    %3566 = vmatpush1.msra.mxu0 0.0
    %3567 = vmatprep.subr.mxu0 0.0
    %3568 = vmatpush1.msra.mxu0 0.0
    %3569 = vmatprep.subr.mxu0 0.0
    %3570 = vmatpush1.msra.mxu0 0.0
    %3571 = vmatprep.subr.mxu0 0.0
    %3572 = vmatpush1.msra.mxu0 0.0
    %3573 = vmatprep.subr.mxu0 0.0
    %3574 = vmatpush1.msra.mxu0 0.0
    %3575 = vmatprep.subr.mxu0 0.0
    %3576 = vmatpush1.msra.mxu0 0.0
    %3577 = vmatprep.subr.mxu0 0.0
    %3578 = vmatpush1.msra.mxu0 0.0
    %3579 = vmatprep.subr.mxu0 0.0
    %3580 = vmatpush1.msra.mxu0 0.0
    %3581 = vmatprep.subr.mxu0 0.0
    %3582 = vmatpush1.msra.mxu0 0.0
    %3583 = vmatprep.subr.mxu0 0.0
    %3584 = vmatpush1.msra.mxu0 0.0
    %3585 = vmatprep.subr.mxu0 0.0
    %3586 = vmatpush1.msra.mxu0 0.0
    %3587 = vmatprep.subr.mxu0 0.0
    %3588 = vmatpush1.msra.mxu0 0.0
    %3589 = vmatprep.subr.mxu0 0.0
    %3590 = vmatpush1.msra.mxu0 0.0
    %3591 = vmatprep.subr.mxu0 0.0
    %3592 = vmatpush1.msra.mxu0 0.0
    %3593 = vmatprep.mubr.f32.mxu0 0.0
    %3594 = vmatmul.mubr.f32.gmra.mrb[0].mxu0 %v3520
    %v3595 = vpop.f32.mrb[0].mxu0
    %v3596 = vadd.f32 0.0, %v3595
    %v3597 = vpop.f32.mrb[0].mxu0
    %3598 = vmatprep.mubr.f32.mxu0 0.0
    %3599 = vmatmul.mubr.f32.gmra.mrb[0].mxu0 %v3522
    %v3600 = vpop.f32.mrb[0].mxu0
    %v3601 = vadd.f32 0.0, %v3600
    %v3602 = vpop.f32.mrb[0].mxu0
    %3603 = vmatprep.mubr.f32.mxu0 0.0
    %3604 = vmatmul.mubr.f32.gmra.mrb[0].mxu0 %v3524
    %v3605 = vpop.f32.mrb[0].mxu0
    %v3606 = vadd.f32 0.0, %v3605
    %v3607 = vpop.f32.mrb[0].mxu0
    %3608 = vdwg.mxu0
    %v3609 = vadd.f32 %v3502, %v3596
    %v3610 = vadd.f32 %v3503, %v3601
    %v3611 = vadd.f32 %v3504, %v3606
    %v3612 = vld [vmem:[%s542] sm:$0xff]
    %v3613 = vld [vmem:[%s542 + $0x8] sm:$0xff]
    %v3614 = vld [vmem:[%s542 + $0x10] sm:$0xff]
    %v3615 = vld [vmem:[%s542 + $0x18] sm:$0xff]
    %v3616 = vld [vmem:[%s542 + $0x20] sm:$0xff]
    %v3617 = vld [vmem:[%s542 + $0x28] sm:$0xff]
    %v3618 = vld [vmem:[%s542 + $0x30] sm:$0xff]
    %v3619 = vld [vmem:[%s542 + $0x38] sm:$0xff]
    %v3620 = vld [vmem:[%s542 + $0x40] sm:$0xff]
    %v3621 = vld [vmem:[%s542 + $0x48] sm:$0x3f]
    %v3622 = vrot.slane %v3188, 4
    %v3623 = vrot.slane %v3189, 4
    %v3624 = vsel %vm553, %v3622, %v3623
    %v3625 = vrot.slane %v3190, 4
    %v3626 = vsel %vm553, %v3623, %v3625
    %v3627 = vsel %vm55, %v3624, 0
    %v3629 = vsel %vm55, %v3626, 0
    %v3631 = vsel %vm55, %v3625, 0
    %v3634 = vsel %vm152, %v3621, 0
    %3636 = vmatprep.subr.mxu0 0.0
    %3637 = vmatpush1.msra.mxu0 %v3612
    %3638 = vmatprep.subr.mxu0 0.0
    %3639 = vmatpush1.msra.mxu0 %v3613
    %3640 = vmatprep.subr.mxu0 0.0
    %3641 = vmatpush1.msra.mxu0 %v3614
    %3642 = vmatprep.subr.mxu0 0.0
    %3643 = vmatpush1.msra.mxu0 %v3615
    %3644 = vmatprep.subr.mxu0 0.0
    %3645 = vmatpush1.msra.mxu0 %v3616
    %3646 = vmatprep.subr.mxu0 0.0
    %3647 = vmatpush1.msra.mxu0 %v3617
    %3648 = vmatprep.subr.mxu0 0.0
    %3649 = vmatpush1.msra.mxu0 %v3618
    %3650 = vmatprep.subr.mxu0 0.0
    %3651 = vmatpush1.msra.mxu0 %v3619
    %3652 = vmatprep.subr.mxu0 0.0
    %3653 = vmatpush1.msra.mxu0 %v3620
    %3654 = vmatprep.subr.mxu0 0.0
    %3655 = vmatpush1.msra.mxu0 %v3634
    %3656 = vmatprep.subr.mxu0 0.0
    %3657 = vmatpush1.msra.mxu0 0.0
    %3658 = vmatprep.subr.mxu0 0.0
    %3659 = vmatpush1.msra.mxu0 0.0
    %3660 = vmatprep.subr.mxu0 0.0
    %3661 = vmatpush1.msra.mxu0 0.0
    %3662 = vmatprep.subr.mxu0 0.0
    %3663 = vmatpush1.msra.mxu0 0.0
    %3664 = vmatprep.subr.mxu0 0.0
    %3665 = vmatpush1.msra.mxu0 0.0
    %3666 = vmatprep.subr.mxu0 0.0
    %3667 = vmatpush1.msra.mxu0 0.0
    %3668 = vmatprep.subr.mxu0 0.0
    %3669 = vmatpush1.msra.mxu0 0.0
    %3670 = vmatprep.subr.mxu0 0.0
    %3671 = vmatpush1.msra.mxu0 0.0
    %3672 = vmatprep.subr.mxu0 0.0
    %3673 = vmatpush1.msra.mxu0 0.0
    %3674 = vmatprep.subr.mxu0 0.0
    %3675 = vmatpush1.msra.mxu0 0.0
    %3676 = vmatprep.subr.mxu0 0.0
    %3677 = vmatpush1.msra.mxu0 0.0
    %3678 = vmatprep.subr.mxu0 0.0
    %3679 = vmatpush1.msra.mxu0 0.0
    %3680 = vmatprep.subr.mxu0 0.0
    %3681 = vmatpush1.msra.mxu0 0.0
    %3682 = vmatprep.subr.mxu0 0.0
    %3683 = vmatpush1.msra.mxu0 0.0
    %3684 = vmatprep.subr.mxu0 0.0
    %3685 = vmatpush1.msra.mxu0 0.0
    %3686 = vmatprep.subr.mxu0 0.0
    %3687 = vmatpush1.msra.mxu0 0.0
    %3688 = vmatprep.subr.mxu0 0.0
    %3689 = vmatpush1.msra.mxu0 0.0
    %3690 = vmatprep.subr.mxu0 0.0
    %3691 = vmatpush1.msra.mxu0 0.0
    %3692 = vmatprep.subr.mxu0 0.0
    %3693 = vmatpush1.msra.mxu0 0.0
    %3694 = vmatprep.subr.mxu0 0.0
    %3695 = vmatpush1.msra.mxu0 0.0
    %3696 = vmatprep.subr.mxu0 0.0
    %3697 = vmatpush1.msra.mxu0 0.0
    %3698 = vmatprep.subr.mxu0 0.0
    %3699 = vmatpush1.msra.mxu0 0.0
    %3700 = vmatprep.mubr.f32.mxu0 0.0
    %3701 = vmatmul.mubr.f32.gmra.mrb[0].mxu0 %v3627
    %v3702 = vpop.f32.mrb[0].mxu0
    %v3703 = vadd.f32 0.0, %v3702
    %v3704 = vpop.f32.mrb[0].mxu0
    %3705 = vmatprep.mubr.f32.mxu0 0.0
    %3706 = vmatmul.mubr.f32.gmra.mrb[0].mxu0 %v3629
    %v3707 = vpop.f32.mrb[0].mxu0
    %v3708 = vadd.f32 0.0, %v3707
    %v3709 = vpop.f32.mrb[0].mxu0
    %3710 = vmatprep.mubr.f32.mxu0 0.0
    %3711 = vmatmul.mubr.f32.gmra.mrb[0].mxu0 %v3631
    %v3712 = vpop.f32.mrb[0].mxu0
    %v3713 = vadd.f32 0.0, %v3712
    %v3714 = vpop.f32.mrb[0].mxu0
    %3715 = vdwg.mxu0
    %v3716 = vadd.f32 %v3609, %v3703
    %v3717 = vadd.f32 %v3610, %v3708
    %v3718 = vadd.f32 %v3611, %v3713
    %v3719 = vld [vmem:[%s651] sm:$0xff]
    %v3720 = vld [vmem:[%s651 + $0x8] sm:$0xff]
    %v3721 = vld [vmem:[%s651 + $0x10] sm:$0xff]
    %v3722 = vld [vmem:[%s651 + $0x18] sm:$0xff]
    %v3723 = vld [vmem:[%s651 + $0x20] sm:$0xff]
    %v3724 = vld [vmem:[%s651 + $0x28] sm:$0xff]
    %v3725 = vld [vmem:[%s651 + $0x30] sm:$0xff]
    %v3726 = vld [vmem:[%s651 + $0x38] sm:$0xff]
    %v3727 = vld [vmem:[%s651 + $0x40] sm:$0xff]
    %v3728 = vld [vmem:[%s651 + $0x48] sm:$0x3f]
    %v3730 = vrot.slane %v3188, 5
    %v3731 = vrot.slane %v3189, 5
    %v3732 = vsel %vm663, %v3730, %v3731
    %v3733 = vrot.slane %v3190, 5
    %v3734 = vsel %vm663, %v3731, %v3733
    %v3735 = vrot.slane %v3191, 5
    %v3736 = vsel %vm663, %v3733, %v3735
    %v3737 = vsel %vm55, %v3732, 0
    %v3739 = vsel %vm55, %v3734, 0
    %v3741 = vsel %vm55, %v3736, 0
    %v3744 = vsel %vm152, %v3728, 0
    %3746 = vmatprep.subr.mxu0 0.0
    %3747 = vmatpush1.msra.mxu0 %v3719
    %3748 = vmatprep.subr.mxu0 0.0
    %3749 = vmatpush1.msra.mxu0 %v3720
    %3750 = vmatprep.subr.mxu0 0.0
    %3751 = vmatpush1.msra.mxu0 %v3721
    %3752 = vmatprep.subr.mxu0 0.0
    %3753 = vmatpush1.msra.mxu0 %v3722
    %3754 = vmatprep.subr.mxu0 0.0
    %3755 = vmatpush1.msra.mxu0 %v3723
    %3756 = vmatprep.subr.mxu0 0.0
    %3757 = vmatpush1.msra.mxu0 %v3724
    %3758 = vmatprep.subr.mxu0 0.0
    %3759 = vmatpush1.msra.mxu0 %v3725
    %3760 = vmatprep.subr.mxu0 0.0
    %3761 = vmatpush1.msra.mxu0 %v3726
    %3762 = vmatprep.subr.mxu0 0.0
    %3763 = vmatpush1.msra.mxu0 %v3727
    %3764 = vmatprep.subr.mxu0 0.0
    %3765 = vmatpush1.msra.mxu0 %v3744
    %3766 = vmatprep.subr.mxu0 0.0
    %3767 = vmatpush1.msra.mxu0 0.0
    %3768 = vmatprep.subr.mxu0 0.0
    %3769 = vmatpush1.msra.mxu0 0.0
    %3770 = vmatprep.subr.mxu0 0.0
    %3771 = vmatpush1.msra.mxu0 0.0
    %3772 = vmatprep.subr.mxu0 0.0
    %3773 = vmatpush1.msra.mxu0 0.0
    %3774 = vmatprep.subr.mxu0 0.0
    %3775 = vmatpush1.msra.mxu0 0.0
    %3776 = vmatprep.subr.mxu0 0.0
    %3777 = vmatpush1.msra.mxu0 0.0
    %3778 = vmatprep.subr.mxu0 0.0
    %3779 = vmatpush1.msra.mxu0 0.0
    %3780 = vmatprep.subr.mxu0 0.0
    %3781 = vmatpush1.msra.mxu0 0.0
    %3782 = vmatprep.subr.mxu0 0.0
    %3783 = vmatpush1.msra.mxu0 0.0
    %3784 = vmatprep.subr.mxu0 0.0
    %3785 = vmatpush1.msra.mxu0 0.0
    %3786 = vmatprep.subr.mxu0 0.0
    %3787 = vmatpush1.msra.mxu0 0.0
    %3788 = vmatprep.subr.mxu0 0.0
    %3789 = vmatpush1.msra.mxu0 0.0
    %3790 = vmatprep.subr.mxu0 0.0
    %3791 = vmatpush1.msra.mxu0 0.0
    %3792 = vmatprep.subr.mxu0 0.0
    %3793 = vmatpush1.msra.mxu0 0.0
    %3794 = vmatprep.subr.mxu0 0.0
    %3795 = vmatpush1.msra.mxu0 0.0
    %3796 = vmatprep.subr.mxu0 0.0
    %3797 = vmatpush1.msra.mxu0 0.0
    %3798 = vmatprep.subr.mxu0 0.0
    %3799 = vmatpush1.msra.mxu0 0.0
    %3800 = vmatprep.subr.mxu0 0.0
    %3801 = vmatpush1.msra.mxu0 0.0
    %3802 = vmatprep.subr.mxu0 0.0
    %3803 = vmatpush1.msra.mxu0 0.0
    %3804 = vmatprep.subr.mxu0 0.0
    %3805 = vmatpush1.msra.mxu0 0.0
    %3806 = vmatprep.subr.mxu0 0.0
    %3807 = vmatpush1.msra.mxu0 0.0
    %3808 = vmatprep.subr.mxu0 0.0
    %3809 = vmatpush1.msra.mxu0 0.0
    %3810 = vmatprep.mubr.f32.mxu0 0.0
    %3811 = vmatmul.mubr.f32.gmra.mrb[0].mxu0 %v3737
    %v3812 = vpop.f32.mrb[0].mxu0
    %v3813 = vadd.f32 0.0, %v3812
    %v3814 = vpop.f32.mrb[0].mxu0
    %3815 = vmatprep.mubr.f32.mxu0 0.0
    %3816 = vmatmul.mubr.f32.gmra.mrb[0].mxu0 %v3739
    %v3817 = vpop.f32.mrb[0].mxu0
    %v3818 = vadd.f32 0.0, %v3817
    %v3819 = vpop.f32.mrb[0].mxu0
    %3820 = vmatprep.mubr.f32.mxu0 0.0
    %3821 = vmatmul.mubr.f32.gmra.mrb[0].mxu0 %v3741
    %v3822 = vpop.f32.mrb[0].mxu0
    %v3823 = vadd.f32 0.0, %v3822
    %v3824 = vpop.f32.mrb[0].mxu0
    %3825 = vdwg.mxu0
    %v3826 = vadd.f32 %v3716, %v3813
    %v3827 = vadd.f32 %v3717, %v3818
    %v3828 = vadd.f32 %v3718, %v3823
    %v3829 = vld [vmem:[%s763] sm:$0xff]
    %v3830 = vld [vmem:[%s763 + $0x8] sm:$0xff]
    %v3831 = vld [vmem:[%s763 + $0x10] sm:$0xff]
    %v3832 = vld [vmem:[%s763 + $0x18] sm:$0xff]
    %v3833 = vld [vmem:[%s763 + $0x20] sm:$0xff]
    %v3834 = vld [vmem:[%s763 + $0x28] sm:$0xff]
    %v3835 = vld [vmem:[%s763 + $0x30] sm:$0xff]
    %v3836 = vld [vmem:[%s763 + $0x38] sm:$0xff]
    %v3837 = vld [vmem:[%s763 + $0x40] sm:$0xff]
    %v3838 = vld [vmem:[%s763 + $0x48] sm:$0x3f]
    %v3839 = vrot.slane %v3188, 6
    %v3840 = vrot.slane %v3189, 6
    %v3841 = vsel %vm774, %v3839, %v3840
    %v3842 = vrot.slane %v3190, 6
    %v3843 = vsel %vm774, %v3840, %v3842
    %v3844 = vrot.slane %v3191, 6
    %v3845 = vsel %vm774, %v3842, %v3844
    %v3846 = vsel %vm55, %v3841, 0
    %v3848 = vsel %vm55, %v3843, 0
    %v3850 = vsel %vm55, %v3845, 0
    %v3853 = vsel %vm152, %v3838, 0
    %3855 = vmatprep.subr.mxu0 0.0
    %3856 = vmatpush1.msra.mxu0 %v3829
    %3857 = vmatprep.subr.mxu0 0.0
    %3858 = vmatpush1.msra.mxu0 %v3830
    %3859 = vmatprep.subr.mxu0 0.0
    %3860 = vmatpush1.msra.mxu0 %v3831
    %3861 = vmatprep.subr.mxu0 0.0
    %3862 = vmatpush1.msra.mxu0 %v3832
    %3863 = vmatprep.subr.mxu0 0.0
    %3864 = vmatpush1.msra.mxu0 %v3833
    %3865 = vmatprep.subr.mxu0 0.0
    %3866 = vmatpush1.msra.mxu0 %v3834
    %3867 = vmatprep.subr.mxu0 0.0
    %3868 = vmatpush1.msra.mxu0 %v3835
    %3869 = vmatprep.subr.mxu0 0.0
    %3870 = vmatpush1.msra.mxu0 %v3836
    %3871 = vmatprep.subr.mxu0 0.0
    %3872 = vmatpush1.msra.mxu0 %v3837
    %3873 = vmatprep.subr.mxu0 0.0
    %3874 = vmatpush1.msra.mxu0 %v3853
    %3875 = vmatprep.subr.mxu0 0.0
    %3876 = vmatpush1.msra.mxu0 0.0
    %3877 = vmatprep.subr.mxu0 0.0
    %3878 = vmatpush1.msra.mxu0 0.0
    %3879 = vmatprep.subr.mxu0 0.0
    %3880 = vmatpush1.msra.mxu0 0.0
    %3881 = vmatprep.subr.mxu0 0.0
    %3882 = vmatpush1.msra.mxu0 0.0
    %3883 = vmatprep.subr.mxu0 0.0
    %3884 = vmatpush1.msra.mxu0 0.0
    %3885 = vmatprep.subr.mxu0 0.0
    %3886 = vmatpush1.msra.mxu0 0.0
    %3887 = vmatprep.subr.mxu0 0.0
    %3888 = vmatpush1.msra.mxu0 0.0
    %3889 = vmatprep.subr.mxu0 0.0
    %3890 = vmatpush1.msra.mxu0 0.0
    %3891 = vmatprep.subr.mxu0 0.0
    %3892 = vmatpush1.msra.mxu0 0.0
    %3893 = vmatprep.subr.mxu0 0.0
    %3894 = vmatpush1.msra.mxu0 0.0
    %3895 = vmatprep.subr.mxu0 0.0
    %3896 = vmatpush1.msra.mxu0 0.0
    %3897 = vmatprep.subr.mxu0 0.0
    %3898 = vmatpush1.msra.mxu0 0.0
    %3899 = vmatprep.subr.mxu0 0.0
    %3900 = vmatpush1.msra.mxu0 0.0
    %3901 = vmatprep.subr.mxu0 0.0
    %3902 = vmatpush1.msra.mxu0 0.0
    %3903 = vmatprep.subr.mxu0 0.0
    %3904 = vmatpush1.msra.mxu0 0.0
    %3905 = vmatprep.subr.mxu0 0.0
    %3906 = vmatpush1.msra.mxu0 0.0
    %3907 = vmatprep.subr.mxu0 0.0
    %3908 = vmatpush1.msra.mxu0 0.0
    %3909 = vmatprep.subr.mxu0 0.0
    %3910 = vmatpush1.msra.mxu0 0.0
    %3911 = vmatprep.subr.mxu0 0.0
    %3912 = vmatpush1.msra.mxu0 0.0
    %3913 = vmatprep.subr.mxu0 0.0
    %3914 = vmatpush1.msra.mxu0 0.0
    %3915 = vmatprep.subr.mxu0 0.0
    %3916 = vmatpush1.msra.mxu0 0.0
    %3917 = vmatprep.subr.mxu0 0.0
    %3918 = vmatpush1.msra.mxu0 0.0
    %3919 = vmatprep.mubr.f32.mxu0 0.0
    %3920 = vmatmul.mubr.f32.gmra.mrb[0].mxu0 %v3846
    %v3921 = vpop.f32.mrb[0].mxu0
    %v3922 = vadd.f32 0.0, %v3921
    %v3923 = vpop.f32.mrb[0].mxu0
    %3924 = vmatprep.mubr.f32.mxu0 0.0
    %3925 = vmatmul.mubr.f32.gmra.mrb[0].mxu0 %v3848
    %v3926 = vpop.f32.mrb[0].mxu0
    %v3927 = vadd.f32 0.0, %v3926
    %v3928 = vpop.f32.mrb[0].mxu0
    %3929 = vmatprep.mubr.f32.mxu0 0.0
    %3930 = vmatmul.mubr.f32.gmra.mrb[0].mxu0 %v3850
    %v3931 = vpop.f32.mrb[0].mxu0
    %v3932 = vadd.f32 0.0, %v3931
    %v3933 = vpop.f32.mrb[0].mxu0
    %3934 = vdwg.mxu0
    %v3935 = vadd.f32 %v3826, %v3922
    %v3936 = vadd.f32 %v3827, %v3927
    %v3937 = vadd.f32 %v3828, %v3932
    %v3938 = vsel %vm880, 0.0, %v3188
    %v3939 = vsel %vm881, 0.0, %v3189
    %v3940 = vsel %vm882, 0.0, %v3190
    %v3941 = vld [vmem:[%s886] sm:$0xff]
    %v3942 = vld [vmem:[%s886 + $0x8] sm:$0xff]
    %v3943 = vld [vmem:[%s886 + $0x10] sm:$0xff]
    %v3944 = vld [vmem:[%s886 + $0x18] sm:$0xff]
    %v3945 = vld [vmem:[%s886 + $0x20] sm:$0xff]
    %v3946 = vld [vmem:[%s886 + $0x28] sm:$0xff]
    %v3947 = vld [vmem:[%s886 + $0x30] sm:$0xff]
    %v3948 = vld [vmem:[%s886 + $0x38] sm:$0xff]
    %v3949 = vld [vmem:[%s886 + $0x40] sm:$0xff]
    %v3950 = vld [vmem:[%s886 + $0x48] sm:$0x3f]
    %v3954 = vrot.slane %v3938, 2
    %v3955 = vrot.slane %v3939, 2
    %v3956 = vsel %vm152, %v3954, %v3955
    %v3957 = vrot.slane %v3940, 2
    %v3958 = vsel %vm152, %v3955, %v3957
    %v3959 = vsel %vm55, %v3956, 0
    %v3961 = vsel %vm55, %v3958, 0
    %v3963 = vsel %vm55, %v3957, 0
    %v3966 = vsel %vm152, %v3950, 0
    %3968 = vmatprep.subr.mxu0 0.0
    %3969 = vmatpush1.msra.mxu0 %v3941
    %3970 = vmatprep.subr.mxu0 0.0
    %3971 = vmatpush1.msra.mxu0 %v3942
    %3972 = vmatprep.subr.mxu0 0.0
    %3973 = vmatpush1.msra.mxu0 %v3943
    %3974 = vmatprep.subr.mxu0 0.0
    %3975 = vmatpush1.msra.mxu0 %v3944
    %3976 = vmatprep.subr.mxu0 0.0
    %3977 = vmatpush1.msra.mxu0 %v3945
    %3978 = vmatprep.subr.mxu0 0.0
    %3979 = vmatpush1.msra.mxu0 %v3946
    %3980 = vmatprep.subr.mxu0 0.0
    %3981 = vmatpush1.msra.mxu0 %v3947
    %3982 = vmatprep.subr.mxu0 0.0
    %3983 = vmatpush1.msra.mxu0 %v3948
    %3984 = vmatprep.subr.mxu0 0.0
    %3985 = vmatpush1.msra.mxu0 %v3949
    %3986 = vmatprep.subr.mxu0 0.0
    %3987 = vmatpush1.msra.mxu0 %v3966
    %3988 = vmatprep.subr.mxu0 0.0
    %3989 = vmatpush1.msra.mxu0 0.0
    %3990 = vmatprep.subr.mxu0 0.0
    %3991 = vmatpush1.msra.mxu0 0.0
    %3992 = vmatprep.subr.mxu0 0.0
    %3993 = vmatpush1.msra.mxu0 0.0
    %3994 = vmatprep.subr.mxu0 0.0
    %3995 = vmatpush1.msra.mxu0 0.0
    %3996 = vmatprep.subr.mxu0 0.0
    %3997 = vmatpush1.msra.mxu0 0.0
    %3998 = vmatprep.subr.mxu0 0.0
    %3999 = vmatpush1.msra.mxu0 0.0
    %4000 = vmatprep.subr.mxu0 0.0
    %4001 = vmatpush1.msra.mxu0 0.0
    %4002 = vmatprep.subr.mxu0 0.0
    %4003 = vmatpush1.msra.mxu0 0.0
    %4004 = vmatprep.subr.mxu0 0.0
    %4005 = vmatpush1.msra.mxu0 0.0
    %4006 = vmatprep.subr.mxu0 0.0
    %4007 = vmatpush1.msra.mxu0 0.0
    %4008 = vmatprep.subr.mxu0 0.0
    %4009 = vmatpush1.msra.mxu0 0.0
    %4010 = vmatprep.subr.mxu0 0.0
    %4011 = vmatpush1.msra.mxu0 0.0
    %4012 = vmatprep.subr.mxu0 0.0
    %4013 = vmatpush1.msra.mxu0 0.0
    %4014 = vmatprep.subr.mxu0 0.0
    %4015 = vmatpush1.msra.mxu0 0.0
    %4016 = vmatprep.subr.mxu0 0.0
    %4017 = vmatpush1.msra.mxu0 0.0
    %4018 = vmatprep.subr.mxu0 0.0
    %4019 = vmatpush1.msra.mxu0 0.0
    %4020 = vmatprep.subr.mxu0 0.0
    %4021 = vmatpush1.msra.mxu0 0.0
    %4022 = vmatprep.subr.mxu0 0.0
    %4023 = vmatpush1.msra.mxu0 0.0
    %4024 = vmatprep.subr.mxu0 0.0
    %4025 = vmatpush1.msra.mxu0 0.0
    %4026 = vmatprep.subr.mxu0 0.0
    %4027 = vmatpush1.msra.mxu0 0.0
    %4028 = vmatprep.subr.mxu0 0.0
    %4029 = vmatpush1.msra.mxu0 0.0
    %4030 = vmatprep.subr.mxu0 0.0
    %4031 = vmatpush1.msra.mxu0 0.0
    %4032 = vmatprep.mubr.f32.mxu0 0.0
    %4033 = vmatmul.mubr.f32.gmra.mrb[0].mxu0 %v3959
    %v4034 = vpop.f32.mrb[0].mxu0
    %v4035 = vadd.f32 0.0, %v4034
    %v4036 = vpop.f32.mrb[0].mxu0
    %4037 = vmatprep.mubr.f32.mxu0 0.0
    %4038 = vmatmul.mubr.f32.gmra.mrb[0].mxu0 %v3961
    %v4039 = vpop.f32.mrb[0].mxu0
    %v4040 = vadd.f32 0.0, %v4039
    %v4041 = vpop.f32.mrb[0].mxu0
    %4042 = vmatprep.mubr.f32.mxu0 0.0
    %4043 = vmatmul.mubr.f32.gmra.mrb[0].mxu0 %v3963
    %v4044 = vpop.f32.mrb[0].mxu0
    %v4045 = vadd.f32 0.0, %v4044
    %v4046 = vpop.f32.mrb[0].mxu0
    %4047 = vdwg.mxu0
    %v4048 = vadd.f32 %v3935, %v4035
    %v4049 = vadd.f32 %v3936, %v4040
    %v4050 = vadd.f32 %v3937, %v4045
    %v4051 = vld [vmem:[%s997] sm:$0xff]
    %v4052 = vld [vmem:[%s997 + $0x8] sm:$0xff]
    %v4053 = vld [vmem:[%s997 + $0x10] sm:$0xff]
    %v4054 = vld [vmem:[%s997 + $0x18] sm:$0xff]
    %v4055 = vld [vmem:[%s997 + $0x20] sm:$0xff]
    %v4056 = vld [vmem:[%s997 + $0x28] sm:$0xff]
    %v4057 = vld [vmem:[%s997 + $0x30] sm:$0xff]
    %v4058 = vld [vmem:[%s997 + $0x38] sm:$0xff]
    %v4059 = vld [vmem:[%s997 + $0x40] sm:$0xff]
    %v4060 = vld [vmem:[%s997 + $0x48] sm:$0x3f]
    %v4061 = vrot.slane %v3938, 3
    %v4062 = vrot.slane %v3939, 3
    %v4063 = vsel %vm444, %v4061, %v4062
    %v4064 = vrot.slane %v3940, 3
    %v4065 = vsel %vm444, %v4062, %v4064
    %v4066 = vsel %vm55, %v4063, 0
    %v4068 = vsel %vm55, %v4065, 0
    %v4070 = vsel %vm55, %v4064, 0
    %v4073 = vsel %vm152, %v4060, 0
    %4075 = vmatprep.subr.mxu0 0.0
    %4076 = vmatpush1.msra.mxu0 %v4051
    %4077 = vmatprep.subr.mxu0 0.0
    %4078 = vmatpush1.msra.mxu0 %v4052
    %4079 = vmatprep.subr.mxu0 0.0
    %4080 = vmatpush1.msra.mxu0 %v4053
    %4081 = vmatprep.subr.mxu0 0.0
    %4082 = vmatpush1.msra.mxu0 %v4054
    %4083 = vmatprep.subr.mxu0 0.0
    %4084 = vmatpush1.msra.mxu0 %v4055
    %4085 = vmatprep.subr.mxu0 0.0
    %4086 = vmatpush1.msra.mxu0 %v4056
    %4087 = vmatprep.subr.mxu0 0.0
    %4088 = vmatpush1.msra.mxu0 %v4057
    %4089 = vmatprep.subr.mxu0 0.0
    %4090 = vmatpush1.msra.mxu0 %v4058
    %4091 = vmatprep.subr.mxu0 0.0
    %4092 = vmatpush1.msra.mxu0 %v4059
    %4093 = vmatprep.subr.mxu0 0.0
    %4094 = vmatpush1.msra.mxu0 %v4073
    %4095 = vmatprep.subr.mxu0 0.0
    %4096 = vmatpush1.msra.mxu0 0.0
    %4097 = vmatprep.subr.mxu0 0.0
    %4098 = vmatpush1.msra.mxu0 0.0
    %4099 = vmatprep.subr.mxu0 0.0
    %4100 = vmatpush1.msra.mxu0 0.0
    %4101 = vmatprep.subr.mxu0 0.0
    %4102 = vmatpush1.msra.mxu0 0.0
    %4103 = vmatprep.subr.mxu0 0.0
    %4104 = vmatpush1.msra.mxu0 0.0
    %4105 = vmatprep.subr.mxu0 0.0
    %4106 = vmatpush1.msra.mxu0 0.0
    %4107 = vmatprep.subr.mxu0 0.0
    %4108 = vmatpush1.msra.mxu0 0.0
    %4109 = vmatprep.subr.mxu0 0.0
    %4110 = vmatpush1.msra.mxu0 0.0
    %4111 = vmatprep.subr.mxu0 0.0
    %4112 = vmatpush1.msra.mxu0 0.0
    %4113 = vmatprep.subr.mxu0 0.0
    %4114 = vmatpush1.msra.mxu0 0.0
    %4115 = vmatprep.subr.mxu0 0.0
    %4116 = vmatpush1.msra.mxu0 0.0
    %4117 = vmatprep.subr.mxu0 0.0
    %4118 = vmatpush1.msra.mxu0 0.0
    %4119 = vmatprep.subr.mxu0 0.0
    %4120 = vmatpush1.msra.mxu0 0.0
    %4121 = vmatprep.subr.mxu0 0.0
    %4122 = vmatpush1.msra.mxu0 0.0
    %4123 = vmatprep.subr.mxu0 0.0
    %4124 = vmatpush1.msra.mxu0 0.0
    %4125 = vmatprep.subr.mxu0 0.0
    %4126 = vmatpush1.msra.mxu0 0.0
    %4127 = vmatprep.subr.mxu0 0.0
    %4128 = vmatpush1.msra.mxu0 0.0
    %4129 = vmatprep.subr.mxu0 0.0
    %4130 = vmatpush1.msra.mxu0 0.0
    %4131 = vmatprep.subr.mxu0 0.0
    %4132 = vmatpush1.msra.mxu0 0.0
    %4133 = vmatprep.subr.mxu0 0.0
    %4134 = vmatpush1.msra.mxu0 0.0
    %4135 = vmatprep.subr.mxu0 0.0
    %4136 = vmatpush1.msra.mxu0 0.0
    %4137 = vmatprep.subr.mxu0 0.0
    %4138 = vmatpush1.msra.mxu0 0.0
    %4139 = vmatprep.mubr.f32.mxu0 0.0
    %4140 = vmatmul.mubr.f32.gmra.mrb[0].mxu0 %v4066
    %v4141 = vpop.f32.mrb[0].mxu0
    %v4142 = vadd.f32 0.0, %v4141
    %v4143 = vpop.f32.mrb[0].mxu0
    %4144 = vmatprep.mubr.f32.mxu0 0.0
    %4145 = vmatmul.mubr.f32.gmra.mrb[0].mxu0 %v4068
    %v4146 = vpop.f32.mrb[0].mxu0
    %v4147 = vadd.f32 0.0, %v4146
    %v4148 = vpop.f32.mrb[0].mxu0
    %4149 = vmatprep.mubr.f32.mxu0 0.0
    %4150 = vmatmul.mubr.f32.gmra.mrb[0].mxu0 %v4070
    %v4151 = vpop.f32.mrb[0].mxu0
    %v4152 = vadd.f32 0.0, %v4151
    %v4153 = vpop.f32.mrb[0].mxu0
    %4154 = vdwg.mxu0
    %v4155 = vadd.f32 %v4048, %v4142
    %v4156 = vadd.f32 %v4049, %v4147
    %v4157 = vadd.f32 %v4050, %v4152
    %v4158 = vld [vmem:[%s1105] sm:$0xff]
    %v4159 = vld [vmem:[%s1105 + $0x8] sm:$0xff]
    %v4160 = vld [vmem:[%s1105 + $0x10] sm:$0xff]
    %v4161 = vld [vmem:[%s1105 + $0x18] sm:$0xff]
    %v4162 = vld [vmem:[%s1105 + $0x20] sm:$0xff]
    %v4163 = vld [vmem:[%s1105 + $0x28] sm:$0xff]
    %v4164 = vld [vmem:[%s1105 + $0x30] sm:$0xff]
    %v4165 = vld [vmem:[%s1105 + $0x38] sm:$0xff]
    %v4166 = vld [vmem:[%s1105 + $0x40] sm:$0xff]
    %v4167 = vld [vmem:[%s1105 + $0x48] sm:$0x3f]
    %v4168 = vrot.slane %v3938, 4
    %v4169 = vrot.slane %v3939, 4
    %v4170 = vsel %vm553, %v4168, %v4169
    %v4171 = vrot.slane %v3940, 4
    %v4172 = vsel %vm553, %v4169, %v4171
    %v4173 = vsel %vm55, %v4170, 0
    %v4175 = vsel %vm55, %v4172, 0
    %v4177 = vsel %vm55, %v4171, 0
    %v4180 = vsel %vm152, %v4167, 0
    %4182 = vmatprep.subr.mxu0 0.0
    %4183 = vmatpush1.msra.mxu0 %v4158
    %4184 = vmatprep.subr.mxu0 0.0
    %4185 = vmatpush1.msra.mxu0 %v4159
    %4186 = vmatprep.subr.mxu0 0.0
    %4187 = vmatpush1.msra.mxu0 %v4160
    %4188 = vmatprep.subr.mxu0 0.0
    %4189 = vmatpush1.msra.mxu0 %v4161
    %4190 = vmatprep.subr.mxu0 0.0
    %4191 = vmatpush1.msra.mxu0 %v4162
    %4192 = vmatprep.subr.mxu0 0.0
    %4193 = vmatpush1.msra.mxu0 %v4163
    %4194 = vmatprep.subr.mxu0 0.0
    %4195 = vmatpush1.msra.mxu0 %v4164
    %4196 = vmatprep.subr.mxu0 0.0
    %4197 = vmatpush1.msra.mxu0 %v4165
    %4198 = vmatprep.subr.mxu0 0.0
    %4199 = vmatpush1.msra.mxu0 %v4166
    %4200 = vmatprep.subr.mxu0 0.0
    %4201 = vmatpush1.msra.mxu0 %v4180
    %4202 = vmatprep.subr.mxu0 0.0
    %4203 = vmatpush1.msra.mxu0 0.0
    %4204 = vmatprep.subr.mxu0 0.0
    %4205 = vmatpush1.msra.mxu0 0.0
    %4206 = vmatprep.subr.mxu0 0.0
    %4207 = vmatpush1.msra.mxu0 0.0
    %4208 = vmatprep.subr.mxu0 0.0
    %4209 = vmatpush1.msra.mxu0 0.0
    %4210 = vmatprep.subr.mxu0 0.0
    %4211 = vmatpush1.msra.mxu0 0.0
    %4212 = vmatprep.subr.mxu0 0.0
    %4213 = vmatpush1.msra.mxu0 0.0
    %4214 = vmatprep.subr.mxu0 0.0
    %4215 = vmatpush1.msra.mxu0 0.0
    %4216 = vmatprep.subr.mxu0 0.0
    %4217 = vmatpush1.msra.mxu0 0.0
    %4218 = vmatprep.subr.mxu0 0.0
    %4219 = vmatpush1.msra.mxu0 0.0
    %4220 = vmatprep.subr.mxu0 0.0
    %4221 = vmatpush1.msra.mxu0 0.0
    %4222 = vmatprep.subr.mxu0 0.0
    %4223 = vmatpush1.msra.mxu0 0.0
    %4224 = vmatprep.subr.mxu0 0.0
    %4225 = vmatpush1.msra.mxu0 0.0
    %4226 = vmatprep.subr.mxu0 0.0
    %4227 = vmatpush1.msra.mxu0 0.0
    %4228 = vmatprep.subr.mxu0 0.0
    %4229 = vmatpush1.msra.mxu0 0.0
    %4230 = vmatprep.subr.mxu0 0.0
    %4231 = vmatpush1.msra.mxu0 0.0
    %4232 = vmatprep.subr.mxu0 0.0
    %4233 = vmatpush1.msra.mxu0 0.0
    %4234 = vmatprep.subr.mxu0 0.0
    %4235 = vmatpush1.msra.mxu0 0.0
    %4236 = vmatprep.subr.mxu0 0.0
    %4237 = vmatpush1.msra.mxu0 0.0
    %4238 = vmatprep.subr.mxu0 0.0
    %4239 = vmatpush1.msra.mxu0 0.0
    %4240 = vmatprep.subr.mxu0 0.0
    %4241 = vmatpush1.msra.mxu0 0.0
    %4242 = vmatprep.subr.mxu0 0.0
    %4243 = vmatpush1.msra.mxu0 0.0
    %4244 = vmatprep.subr.mxu0 0.0
    %4245 = vmatpush1.msra.mxu0 0.0
    %4246 = vmatprep.mubr.f32.mxu0 0.0
    %4247 = vmatmul.mubr.f32.gmra.mrb[0].mxu0 %v4173
    %v4248 = vpop.f32.mrb[0].mxu0
    %v4249 = vadd.f32 0.0, %v4248
    %v4250 = vpop.f32.mrb[0].mxu0
    %4251 = vmatprep.mubr.f32.mxu0 0.0
    %4252 = vmatmul.mubr.f32.gmra.mrb[0].mxu0 %v4175
    %v4253 = vpop.f32.mrb[0].mxu0
    %v4254 = vadd.f32 0.0, %v4253
    %v4255 = vpop.f32.mrb[0].mxu0
    %4256 = vmatprep.mubr.f32.mxu0 0.0
    %4257 = vmatmul.mubr.f32.gmra.mrb[0].mxu0 %v4177
    %v4258 = vpop.f32.mrb[0].mxu0
    %v4259 = vadd.f32 0.0, %v4258
    %v4260 = vpop.f32.mrb[0].mxu0
    %4261 = vdwg.mxu0
    %v4262 = vadd.f32 %v4155, %v4249
    %v4263 = vadd.f32 %v4156, %v4254
    %v4264 = vadd.f32 %v4157, %v4259
    %v4265 = vsel %vm1219, 0.0, %v3188
    %v4266 = vsel %vm1220, 0.0, %v3189
    %v4267 = vsel %vm1221, 0.0, %v3190
    %v4268 = vld [vmem:[%s1225] sm:$0xff]
    %v4269 = vld [vmem:[%s1225 + $0x8] sm:$0xff]
    %v4270 = vld [vmem:[%s1225 + $0x10] sm:$0xff]
    %v4271 = vld [vmem:[%s1225 + $0x18] sm:$0xff]
    %v4272 = vld [vmem:[%s1225 + $0x20] sm:$0xff]
    %v4273 = vld [vmem:[%s1225 + $0x28] sm:$0xff]
    %v4274 = vld [vmem:[%s1225 + $0x30] sm:$0xff]
    %v4275 = vld [vmem:[%s1225 + $0x38] sm:$0xff]
    %v4276 = vld [vmem:[%s1225 + $0x40] sm:$0xff]
    %v4277 = vld [vmem:[%s1225 + $0x48] sm:$0x3f]
    %v4281 = vrot.slane %v4265, 3
    %v4282 = vrot.slane %v4266, 3
    %v4283 = vsel %vm444, %v4281, %v4282
    %v4284 = vrot.slane %v4267, 3
    %v4285 = vsel %vm444, %v4282, %v4284
    %v4286 = vsel %vm55, %v4283, 0
    %v4288 = vsel %vm55, %v4285, 0
    %v4290 = vsel %vm55, %v4284, 0
    %v4293 = vsel %vm152, %v4277, 0
    %4295 = vmatprep.subr.mxu0 0.0
    %4296 = vmatpush1.msra.mxu0 %v4268
    %4297 = vmatprep.subr.mxu0 0.0
    %4298 = vmatpush1.msra.mxu0 %v4269
    %4299 = vmatprep.subr.mxu0 0.0
    %4300 = vmatpush1.msra.mxu0 %v4270
    %4301 = vmatprep.subr.mxu0 0.0
    %4302 = vmatpush1.msra.mxu0 %v4271
    %4303 = vmatprep.subr.mxu0 0.0
    %4304 = vmatpush1.msra.mxu0 %v4272
    %4305 = vmatprep.subr.mxu0 0.0
    %4306 = vmatpush1.msra.mxu0 %v4273
    %4307 = vmatprep.subr.mxu0 0.0
    %4308 = vmatpush1.msra.mxu0 %v4274
    %4309 = vmatprep.subr.mxu0 0.0
    %4310 = vmatpush1.msra.mxu0 %v4275
    %4311 = vmatprep.subr.mxu0 0.0
    %4312 = vmatpush1.msra.mxu0 %v4276
    %4313 = vmatprep.subr.mxu0 0.0
    %4314 = vmatpush1.msra.mxu0 %v4293
    %4315 = vmatprep.subr.mxu0 0.0
    %4316 = vmatpush1.msra.mxu0 0.0
    %4317 = vmatprep.subr.mxu0 0.0
    %4318 = vmatpush1.msra.mxu0 0.0
    %4319 = vmatprep.subr.mxu0 0.0
    %4320 = vmatpush1.msra.mxu0 0.0
    %4321 = vmatprep.subr.mxu0 0.0
    %4322 = vmatpush1.msra.mxu0 0.0
    %4323 = vmatprep.subr.mxu0 0.0
    %4324 = vmatpush1.msra.mxu0 0.0
    %4325 = vmatprep.subr.mxu0 0.0
    %4326 = vmatpush1.msra.mxu0 0.0
    %4327 = vmatprep.subr.mxu0 0.0
    %4328 = vmatpush1.msra.mxu0 0.0
    %4329 = vmatprep.subr.mxu0 0.0
    %4330 = vmatpush1.msra.mxu0 0.0
    %4331 = vmatprep.subr.mxu0 0.0
    %4332 = vmatpush1.msra.mxu0 0.0
    %4333 = vmatprep.subr.mxu0 0.0
    %4334 = vmatpush1.msra.mxu0 0.0
    %4335 = vmatprep.subr.mxu0 0.0
    %4336 = vmatpush1.msra.mxu0 0.0
    %4337 = vmatprep.subr.mxu0 0.0
    %4338 = vmatpush1.msra.mxu0 0.0
    %4339 = vmatprep.subr.mxu0 0.0
    %4340 = vmatpush1.msra.mxu0 0.0
    %4341 = vmatprep.subr.mxu0 0.0
    %4342 = vmatpush1.msra.mxu0 0.0
    %4343 = vmatprep.subr.mxu0 0.0
    %4344 = vmatpush1.msra.mxu0 0.0
    %4345 = vmatprep.subr.mxu0 0.0
    %4346 = vmatpush1.msra.mxu0 0.0
    %4347 = vmatprep.subr.mxu0 0.0
    %4348 = vmatpush1.msra.mxu0 0.0
    %4349 = vmatprep.subr.mxu0 0.0
    %4350 = vmatpush1.msra.mxu0 0.0
    %4351 = vmatprep.subr.mxu0 0.0
    %4352 = vmatpush1.msra.mxu0 0.0
    %4353 = vmatprep.subr.mxu0 0.0
    %4354 = vmatpush1.msra.mxu0 0.0
    %4355 = vmatprep.subr.mxu0 0.0
    %4356 = vmatpush1.msra.mxu0 0.0
    %4357 = vmatprep.subr.mxu0 0.0
    %4358 = vmatpush1.msra.mxu0 0.0
    %4359 = vmatprep.mubr.f32.mxu0 0.0
    %4360 = vmatmul.mubr.f32.gmra.mrb[0].mxu0 %v4286
    %v4361 = vpop.f32.mrb[0].mxu0
    %v4362 = vadd.f32 0.0, %v4361
    %v4363 = vpop.f32.mrb[0].mxu0
    %4364 = vmatprep.mubr.f32.mxu0 0.0
    %4365 = vmatmul.mubr.f32.gmra.mrb[0].mxu0 %v4288
    %v4366 = vpop.f32.mrb[0].mxu0
    %v4367 = vadd.f32 0.0, %v4366
    %v4368 = vpop.f32.mrb[0].mxu0
    %4369 = vmatprep.mubr.f32.mxu0 0.0
    %4370 = vmatmul.mubr.f32.gmra.mrb[0].mxu0 %v4290
    %v4371 = vpop.f32.mrb[0].mxu0
    %v4372 = vadd.f32 0.0, %v4371
    %v4373 = vpop.f32.mrb[0].mxu0
    %4374 = vdwg.mxu0
    %v4375 = vadd.f32 %v4262, %v4362
    %v4376 = vadd.f32 %v4263, %v4367
    %v4377 = vadd.f32 %v4264, %v4372
    %v4378 = vld [vmem:[%s2] sm:$0x1]
    %v4380 = vlaneseq
    %v4381 = vshrl.u32 %v4380, 7
    %v4382 = vsub.s32 0, %v4381
    %v4383 = vrot.slane %v4378, %v4382
    %v4385 = vadd.f32 %v4375, %v4383
    %v4386 = vadd.f32 %v4376, %v4383
    %v4387 = vadd.f32 %v4377, %v4383
    %v4388 = vmax.f32 %v4385, 0.0
    %v4389 = vmax.f32 %v4386, 0.0
    %v4390 = vmax.f32 %v4387, 0.0
    %v4392 = vrot.slane %v4388, 1
    %v4394 = vmax.f32 %v4388, %v4392
    %v4396 = vrot.slane %v4389, 1
    %v4398 = vmax.f32 %v4389, %v4396
    %v4400 = vrot.slane %v4390, 1
    %v4402 = vmax.f32 %v4390, %v4400
    %v4404 = vrot.slane %v4394, 1
    %v4406 = vrot.slane %v4394, 2
    %v4408 = vrot.slane %v4394, 3
    %v4411 = vrot.slane %v4398, 4
    %v4413 = vrot.slane %v4398, 5
    %v4415 = vrot.slane %v4398, 6
    %v4417 = vrot.slane %v4398, 7
    %v4420 = vrot.slane %v4402, 1
    %v4422 = vsel %vm1380, %v4394, %v4404
    %v4423 = vsel %vm774, %v4422, %v4406
    %v4424 = vsel %vm663, %v4423, %v4408
    %v4425 = vsel %vm553, %v4424, %v4411
    %v4426 = vsel %vm444, %v4425, %v4413
    %v4427 = vsel %vm152, %v4426, %v4415
    %v4428 = vsel %vm140, %v4427, %v4417
    %v4429 = vsel %vm1380, %v4402, %v4420
    %4432 = vrot.lane.b32.xlu0 %v4428, 122
    %v4433 = vpop.permute.xlu0 %4432
    %4434 = vrot.lane.b32.xlu0 %v4429, 122
    %v4435 = vpop.permute.xlu0 %4434
    %v4438 = vmax.f32 %v4428, %v4433
    %v4439 = vmax.f32 %v4429, %v4435
    %4442 = vrot.lane.b32.xlu0 %v4438, 6
    %v4443 = vpop.permute.xlu0 %4442
    %4444 = vrot.lane.b32.xlu0 %v4439, 6
    %v4445 = vpop.permute.xlu0 %4444
    %s4448 = scalar_lea.vmem [#allocation3], 16
    %4449 = vst.msk [vmem:[%s4448 + $0x1] sm:$0xff] %vm1407, %v4443
    %4450 = vst.msk [vmem:[%s4448 + $0x9] sm:$0x3] %vm1409, %v4445
    %4451 = vst.msk [vmem:[%s4448 + $0x1] sm:$0xff] %vm1411, %v4438
    %4452 = vst.msk [vmem:[%s4448 + $0x9] sm:$0x3] %vm1413, %v4439
    %4453 = vrot.lane.b32.xlu0 %v4438, 122
    %v4454 = vpop.permute.xlu0 %4453
    %4455 = vrot.lane.b32.xlu0 %v4439, 122
    %v4456 = vpop.permute.xlu0 %4455
    %4459 = vst.msk [vmem:[%s4448 + $0x1] sm:$0xff] %vm1421, %v4454
    %4460 = vst.msk [vmem:[%s4448 + $0x9] sm:$0x3] %vm1423, %v4456
    %4461 = vrot.lane.b32.xlu0 %v4438, 116
    %v4462 = vpop.permute.xlu0 %4461
    %4463 = vrot.lane.b32.xlu0 %v4439, 116
    %v4464 = vpop.permute.xlu0 %4463
    %4467 = vst.msk [vmem:[%s4448 + $0x1] sm:$0xff] %vm1431, %v4462
    %4468 = vst.msk [vmem:[%s4448 + $0x9] sm:$0x3] %vm1433, %v4464
    %4469 = vrot.lane.b32.xlu0 %v4438, 110
    %v4470 = vpop.permute.xlu0 %4469
    %4471 = vrot.lane.b32.xlu0 %v4439, 110
    %v4472 = vpop.permute.xlu0 %4471
    %4475 = vst.msk [vmem:[%s4448 + $0x1] sm:$0xff] %vm1441, %v4470
    %4476 = vst.msk [vmem:[%s4448 + $0x9] sm:$0x3] %vm1443, %v4472
    %4477 = vrot.lane.b32.xlu0 %v4438, 104
    %v4478 = vpop.permute.xlu0 %4477
    %4479 = vrot.lane.b32.xlu0 %v4439, 104
    %v4480 = vpop.permute.xlu0 %4479
    %4483 = vst.msk [vmem:[%s4448 + $0x1] sm:$0xff] %vm1451, %v4478
    %4484 = vst.msk [vmem:[%s4448 + $0x9] sm:$0x3] %vm1453, %v4480
    %4485 = vrot.lane.b32.xlu0 %v4438, 98
    %v4486 = vpop.permute.xlu0 %4485
    %4487 = vrot.lane.b32.xlu0 %v4439, 98
    %v4488 = vpop.permute.xlu0 %4487
    %4491 = vst.msk [vmem:[%s4448 + $0x1] sm:$0xff] %vm1461, %v4486
    %4492 = vst.msk [vmem:[%s4448 + $0x9] sm:$0x3] %vm1463, %v4488
    %4493 = vrot.lane.b32.xlu0 %v4438, 92
    %v4494 = vpop.permute.xlu0 %4493
    %4495 = vrot.lane.b32.xlu0 %v4439, 92
    %v4496 = vpop.permute.xlu0 %4495
    %4499 = vst.msk [vmem:[%s4448 + $0x1] sm:$0xff] %vm1471, %v4494
    %4500 = vst.msk [vmem:[%s4448 + $0x9] sm:$0x3] %vm1473, %v4496
    %4501 = vrot.lane.b32.xlu0 %v4438, 86
    %v4502 = vpop.permute.xlu0 %4501
    %4503 = vrot.lane.b32.xlu0 %v4439, 86
    %v4504 = vpop.permute.xlu0 %4503
    %4507 = vst.msk [vmem:[%s4448 + $0x1] sm:$0xff] %vm1481, %v4502
    %4508 = vst.msk [vmem:[%s4448 + $0x9] sm:$0x3] %vm1483, %v4504
    %4509 = vrot.lane.b32.xlu0 %v4438, 80
    %v4510 = vpop.permute.xlu0 %4509
    %4511 = vrot.lane.b32.xlu0 %v4439, 80
    %v4512 = vpop.permute.xlu0 %4511
    %4515 = vst.msk [vmem:[%s4448 + $0x1] sm:$0xff] %vm1491, %v4510
    %4516 = vst.msk [vmem:[%s4448 + $0x9] sm:$0x3] %vm1493, %v4512
    %v4517 = vld [vmem:[%s4448] sm:$0xff]
    %v4518 = vld [vmem:[%s4448 + $0x8] sm:$0xf]
    %v4519 = vld [vmem:[#allocation7] sm:$0xff]
    %v4520 = vld [vmem:[#allocation7 + $0x8] sm:$0xff]
    %v4521 = vld [vmem:[#allocation7 + $0x10] sm:$0xff]
    %v4522 = vld [vmem:[#allocation7 + $0x18] sm:$0xff]
    %v4523 = vld [vmem:[#allocation7 + $0x20] sm:$0xff]
    %v4524 = vld [vmem:[#allocation7 + $0x28] sm:$0xff]
    %v4525 = vld [vmem:[#allocation7 + $0x30] sm:$0xff]
    %v4526 = vld [vmem:[#allocation7 + $0x38] sm:$0xff]
    %v4527 = vld [vmem:[#allocation7 + $0x40] sm:$0xff]
    %v4528 = vld [vmem:[%s1506] sm:$0xff]
    %v4529 = vld [vmem:[%s1506 + $0x8] sm:$0xff]
    %v4530 = vld [vmem:[%s1506 + $0x10] sm:$0xff]
    %v4531 = vld [vmem:[%s1506 + $0x18] sm:$0xff]
    %v4532 = vld [vmem:[%s1506 + $0x20] sm:$0xff]
    %v4533 = vld [vmem:[%s1506 + $0x28] sm:$0xff]
    %v4534 = vld [vmem:[%s1506 + $0x30] sm:$0xff]
    %v4535 = vld [vmem:[%s1506 + $0x38] sm:$0xff]
    %v4536 = vld [vmem:[%s1506 + $0x40] sm:$0xff]
    %v4538 = vrot.slane %v4517, 1
    %v4539 = vsel %vm65, %v4538, 0
    %4541 = vmatprep.subr.mxu0 0.0
    %4542 = vmatpush1.msra.mxu0 %v4528
    %4543 = vmatprep.subr.mxu0 0.0
    %4544 = vmatpush1.msra.mxu0 %v4529
    %4545 = vmatprep.subr.mxu0 0.0
    %4546 = vmatpush1.msra.mxu0 %v4530
    %4547 = vmatprep.subr.mxu0 0.0
    %4548 = vmatpush1.msra.mxu0 %v4531
    %4549 = vmatprep.subr.mxu0 0.0
    %4550 = vmatpush1.msra.mxu0 %v4532
    %4551 = vmatprep.subr.mxu0 0.0
    %4552 = vmatpush1.msra.mxu0 %v4533
    %4553 = vmatprep.subr.mxu0 0.0
    %4554 = vmatpush1.msra.mxu0 %v4534
    %4555 = vmatprep.subr.mxu0 0.0
    %4556 = vmatpush1.msra.mxu0 %v4535
    %4557 = vmatprep.subr.mxu0 0.0
    %4558 = vmatpush1.msra.mxu0 %v4536
    %4559 = vmatprep.subr.mxu0 0.0
    %4560 = vmatpush1.msra.mxu0 0.0
    %4561 = vmatprep.subr.mxu0 0.0
    %4562 = vmatpush1.msra.mxu0 0.0
    %4563 = vmatprep.subr.mxu0 0.0
    %4564 = vmatpush1.msra.mxu0 0.0
    %4565 = vmatprep.subr.mxu0 0.0
    %4566 = vmatpush1.msra.mxu0 0.0
    %4567 = vmatprep.subr.mxu0 0.0
    %4568 = vmatpush1.msra.mxu0 0.0
    %4569 = vmatprep.subr.mxu0 0.0
    %4570 = vmatpush1.msra.mxu0 0.0
    %4571 = vmatprep.subr.mxu0 0.0
    %4572 = vmatpush1.msra.mxu0 0.0
    %4573 = vmatprep.subr.mxu0 0.0
    %4574 = vmatpush1.msra.mxu0 0.0
    %4575 = vmatprep.subr.mxu0 0.0
    %4576 = vmatpush1.msra.mxu0 0.0
    %4577 = vmatprep.subr.mxu0 0.0
    %4578 = vmatpush1.msra.mxu0 0.0
    %4579 = vmatprep.subr.mxu0 0.0
    %4580 = vmatpush1.msra.mxu0 0.0
    %4581 = vmatprep.subr.mxu0 0.0
    %4582 = vmatpush1.msra.mxu0 0.0
    %4583 = vmatprep.subr.mxu0 0.0
    %4584 = vmatpush1.msra.mxu0 0.0
    %4585 = vmatprep.subr.mxu0 0.0
    %4586 = vmatpush1.msra.mxu0 0.0
    %4587 = vmatprep.subr.mxu0 0.0
    %4588 = vmatpush1.msra.mxu0 0.0
    %4589 = vmatprep.subr.mxu0 0.0
    %4590 = vmatpush1.msra.mxu0 0.0
    %4591 = vmatprep.subr.mxu0 0.0
    %4592 = vmatpush1.msra.mxu0 0.0
    %4593 = vmatprep.subr.mxu0 0.0
    %4594 = vmatpush1.msra.mxu0 0.0
    %4595 = vmatprep.subr.mxu0 0.0
    %4596 = vmatpush1.msra.mxu0 0.0
    %4597 = vmatprep.subr.mxu0 0.0
    %4598 = vmatpush1.msra.mxu0 0.0
    %4599 = vmatprep.subr.mxu0 0.0
    %4600 = vmatpush1.msra.mxu0 0.0
    %4601 = vmatprep.subr.mxu0 0.0
    %4602 = vmatpush1.msra.mxu0 0.0
    %4603 = vmatprep.subr.mxu0 0.0
    %4604 = vmatpush1.msra.mxu0 0.0
    %4605 = vmatprep.mubr.f32.mxu0 0.0
    %4606 = vmatmul.mubr.f32.gmra.mrb[0].mxu0 %v4539
    %v4607 = vpop.f32.mrb[0].mxu0
    %v4608 = vadd.f32 0.0, %v4607
    %v4609 = vpop.f32.mrb[0].mxu0
    %4610 = vdwg.mxu0
    %v4611 = vsel %vm65, %v4517, 0
    %4613 = vmatprep.subr.mxu0 0.0
    %4614 = vmatpush1.msra.mxu0 %v4519
    %4615 = vmatprep.subr.mxu0 0.0
    %4616 = vmatpush1.msra.mxu0 %v4520
    %4617 = vmatprep.subr.mxu0 0.0
    %4618 = vmatpush1.msra.mxu0 %v4521
    %4619 = vmatprep.subr.mxu0 0.0
    %4620 = vmatpush1.msra.mxu0 %v4522
    %4621 = vmatprep.subr.mxu0 0.0
    %4622 = vmatpush1.msra.mxu0 %v4523
    %4623 = vmatprep.subr.mxu0 0.0
    %4624 = vmatpush1.msra.mxu0 %v4524
    %4625 = vmatprep.subr.mxu0 0.0
    %4626 = vmatpush1.msra.mxu0 %v4525
    %4627 = vmatprep.subr.mxu0 0.0
    %4628 = vmatpush1.msra.mxu0 %v4526
    %4629 = vmatprep.subr.mxu0 0.0
    %4630 = vmatpush1.msra.mxu0 %v4527
    %4631 = vmatprep.subr.mxu0 0.0
    %4632 = vmatpush1.msra.mxu0 0.0
    %4633 = vmatprep.subr.mxu0 0.0
    %4634 = vmatpush1.msra.mxu0 0.0
    %4635 = vmatprep.subr.mxu0 0.0
    %4636 = vmatpush1.msra.mxu0 0.0
    %4637 = vmatprep.subr.mxu0 0.0
    %4638 = vmatpush1.msra.mxu0 0.0
    %4639 = vmatprep.subr.mxu0 0.0
    %4640 = vmatpush1.msra.mxu0 0.0
    %4641 = vmatprep.subr.mxu0 0.0
    %4642 = vmatpush1.msra.mxu0 0.0
    %4643 = vmatprep.subr.mxu0 0.0
    %4644 = vmatpush1.msra.mxu0 0.0
    %4645 = vmatprep.subr.mxu0 0.0
    %4646 = vmatpush1.msra.mxu0 0.0
    %4647 = vmatprep.subr.mxu0 0.0
    %4648 = vmatpush1.msra.mxu0 0.0
    %4649 = vmatprep.subr.mxu0 0.0
    %4650 = vmatpush1.msra.mxu0 0.0
    %4651 = vmatprep.subr.mxu0 0.0
    %4652 = vmatpush1.msra.mxu0 0.0
    %4653 = vmatprep.subr.mxu0 0.0
    %4654 = vmatpush1.msra.mxu0 0.0
    %4655 = vmatprep.subr.mxu0 0.0
    %4656 = vmatpush1.msra.mxu0 0.0
    %4657 = vmatprep.subr.mxu0 0.0
    %4658 = vmatpush1.msra.mxu0 0.0
    %4659 = vmatprep.subr.mxu0 0.0
    %4660 = vmatpush1.msra.mxu0 0.0
    %4661 = vmatprep.subr.mxu0 0.0
    %4662 = vmatpush1.msra.mxu0 0.0
    %4663 = vmatprep.subr.mxu0 0.0
    %4664 = vmatpush1.msra.mxu0 0.0
    %4665 = vmatprep.subr.mxu0 0.0
    %4666 = vmatpush1.msra.mxu0 0.0
    %4667 = vmatprep.subr.mxu0 0.0
    %4668 = vmatpush1.msra.mxu0 0.0
    %4669 = vmatprep.subr.mxu0 0.0
    %4670 = vmatpush1.msra.mxu0 0.0
    %4671 = vmatprep.subr.mxu0 0.0
    %4672 = vmatpush1.msra.mxu0 0.0
    %4673 = vmatprep.subr.mxu0 0.0
    %4674 = vmatpush1.msra.mxu0 0.0
    %4675 = vmatprep.subr.mxu0 0.0
    %4676 = vmatpush1.msra.mxu0 0.0
    %4677 = vmatprep.mubr.f32.mxu0 0.0
    %4678 = vmatmul.mubr.f32.gmra.mrb[0].mxu0 %v4611
    %v4679 = vpop.f32.mrb[0].mxu0
    %v4680 = vadd.f32 %v4608, %v4679
    %v4681 = vpop.f32.mrb[0].mxu0
    %4682 = vdwg.mxu0
    %v4683 = vld [vmem:[%s1662] sm:$0xff]
    %v4684 = vld [vmem:[%s1662 + $0x8] sm:$0xff]
    %v4685 = vld [vmem:[%s1662 + $0x10] sm:$0xff]
    %v4686 = vld [vmem:[%s1662 + $0x18] sm:$0xff]
    %v4687 = vld [vmem:[%s1662 + $0x20] sm:$0xff]
    %v4688 = vld [vmem:[%s1662 + $0x28] sm:$0xff]
    %v4689 = vld [vmem:[%s1662 + $0x30] sm:$0xff]
    %v4690 = vld [vmem:[%s1662 + $0x38] sm:$0xff]
    %v4691 = vld [vmem:[%s1662 + $0x40] sm:$0xff]
    %v4692 = vrot.slane %v4517, 2
    %v4693 = vsel %vm65, %v4692, 0
    %4695 = vmatprep.subr.mxu0 0.0
    %4696 = vmatpush1.msra.mxu0 %v4683
    %4697 = vmatprep.subr.mxu0 0.0
    %4698 = vmatpush1.msra.mxu0 %v4684
    %4699 = vmatprep.subr.mxu0 0.0
    %4700 = vmatpush1.msra.mxu0 %v4685
    %4701 = vmatprep.subr.mxu0 0.0
    %4702 = vmatpush1.msra.mxu0 %v4686
    %4703 = vmatprep.subr.mxu0 0.0
    %4704 = vmatpush1.msra.mxu0 %v4687
    %4705 = vmatprep.subr.mxu0 0.0
    %4706 = vmatpush1.msra.mxu0 %v4688
    %4707 = vmatprep.subr.mxu0 0.0
    %4708 = vmatpush1.msra.mxu0 %v4689
    %4709 = vmatprep.subr.mxu0 0.0
    %4710 = vmatpush1.msra.mxu0 %v4690
    %4711 = vmatprep.subr.mxu0 0.0
    %4712 = vmatpush1.msra.mxu0 %v4691
    %4713 = vmatprep.subr.mxu0 0.0
    %4714 = vmatpush1.msra.mxu0 0.0
    %4715 = vmatprep.subr.mxu0 0.0
    %4716 = vmatpush1.msra.mxu0 0.0
    %4717 = vmatprep.subr.mxu0 0.0
    %4718 = vmatpush1.msra.mxu0 0.0
    %4719 = vmatprep.subr.mxu0 0.0
    %4720 = vmatpush1.msra.mxu0 0.0
    %4721 = vmatprep.subr.mxu0 0.0
    %4722 = vmatpush1.msra.mxu0 0.0
    %4723 = vmatprep.subr.mxu0 0.0
    %4724 = vmatpush1.msra.mxu0 0.0
    %4725 = vmatprep.subr.mxu0 0.0
    %4726 = vmatpush1.msra.mxu0 0.0
    %4727 = vmatprep.subr.mxu0 0.0
    %4728 = vmatpush1.msra.mxu0 0.0
    %4729 = vmatprep.subr.mxu0 0.0
    %4730 = vmatpush1.msra.mxu0 0.0
    %4731 = vmatprep.subr.mxu0 0.0
    %4732 = vmatpush1.msra.mxu0 0.0
    %4733 = vmatprep.subr.mxu0 0.0
    %4734 = vmatpush1.msra.mxu0 0.0
    %4735 = vmatprep.subr.mxu0 0.0
    %4736 = vmatpush1.msra.mxu0 0.0
    %4737 = vmatprep.subr.mxu0 0.0
    %4738 = vmatpush1.msra.mxu0 0.0
    %4739 = vmatprep.subr.mxu0 0.0
    %4740 = vmatpush1.msra.mxu0 0.0
    %4741 = vmatprep.subr.mxu0 0.0
    %4742 = vmatpush1.msra.mxu0 0.0
    %4743 = vmatprep.subr.mxu0 0.0
    %4744 = vmatpush1.msra.mxu0 0.0
    %4745 = vmatprep.subr.mxu0 0.0
    %4746 = vmatpush1.msra.mxu0 0.0
    %4747 = vmatprep.subr.mxu0 0.0
    %4748 = vmatpush1.msra.mxu0 0.0
    %4749 = vmatprep.subr.mxu0 0.0
    %4750 = vmatpush1.msra.mxu0 0.0
    %4751 = vmatprep.subr.mxu0 0.0
    %4752 = vmatpush1.msra.mxu0 0.0
    %4753 = vmatprep.subr.mxu0 0.0
    %4754 = vmatpush1.msra.mxu0 0.0
    %4755 = vmatprep.subr.mxu0 0.0
    %4756 = vmatpush1.msra.mxu0 0.0
    %4757 = vmatprep.subr.mxu0 0.0
    %4758 = vmatpush1.msra.mxu0 0.0
    %4759 = vmatprep.mubr.f32.mxu0 0.0
    %4760 = vmatmul.mubr.f32.gmra.mrb[0].mxu0 %v4693
    %v4761 = vpop.f32.mrb[0].mxu0
    %v4762 = vadd.f32 0.0, %v4761
    %v4763 = vpop.f32.mrb[0].mxu0
    %4764 = vdwg.mxu0
    %v4765 = vadd.f32 %v4680, %v4762
    %v4766 = vld [vmem:[%s1746] sm:$0xff]
    %v4767 = vld [vmem:[%s1746 + $0x8] sm:$0xff]
    %v4768 = vld [vmem:[%s1746 + $0x10] sm:$0xff]
    %v4769 = vld [vmem:[%s1746 + $0x18] sm:$0xff]
    %v4770 = vld [vmem:[%s1746 + $0x20] sm:$0xff]
    %v4771 = vld [vmem:[%s1746 + $0x28] sm:$0xff]
    %v4772 = vld [vmem:[%s1746 + $0x30] sm:$0xff]
    %v4773 = vld [vmem:[%s1746 + $0x38] sm:$0xff]
    %v4774 = vld [vmem:[%s1746 + $0x40] sm:$0xff]
    %v4776 = vrot.slane %v4517, 3
    %v4777 = vrot.slane %v4518, 3
    %v4778 = vsel %vm444, %v4776, %v4777
    %v4779 = vsel %vm65, %v4778, 0
    %4781 = vmatprep.subr.mxu0 0.0
    %4782 = vmatpush1.msra.mxu0 %v4766
    %4783 = vmatprep.subr.mxu0 0.0
    %4784 = vmatpush1.msra.mxu0 %v4767
    %4785 = vmatprep.subr.mxu0 0.0
    %4786 = vmatpush1.msra.mxu0 %v4768
    %4787 = vmatprep.subr.mxu0 0.0
    %4788 = vmatpush1.msra.mxu0 %v4769
    %4789 = vmatprep.subr.mxu0 0.0
    %4790 = vmatpush1.msra.mxu0 %v4770
    %4791 = vmatprep.subr.mxu0 0.0
    %4792 = vmatpush1.msra.mxu0 %v4771
    %4793 = vmatprep.subr.mxu0 0.0
    %4794 = vmatpush1.msra.mxu0 %v4772
    %4795 = vmatprep.subr.mxu0 0.0
    %4796 = vmatpush1.msra.mxu0 %v4773
    %4797 = vmatprep.subr.mxu0 0.0
    %4798 = vmatpush1.msra.mxu0 %v4774
    %4799 = vmatprep.subr.mxu0 0.0
    %4800 = vmatpush1.msra.mxu0 0.0
    %4801 = vmatprep.subr.mxu0 0.0
    %4802 = vmatpush1.msra.mxu0 0.0
    %4803 = vmatprep.subr.mxu0 0.0
    %4804 = vmatpush1.msra.mxu0 0.0
    %4805 = vmatprep.subr.mxu0 0.0
    %4806 = vmatpush1.msra.mxu0 0.0
    %4807 = vmatprep.subr.mxu0 0.0
    %4808 = vmatpush1.msra.mxu0 0.0
    %4809 = vmatprep.subr.mxu0 0.0
    %4810 = vmatpush1.msra.mxu0 0.0
    %4811 = vmatprep.subr.mxu0 0.0
    %4812 = vmatpush1.msra.mxu0 0.0
    %4813 = vmatprep.subr.mxu0 0.0
    %4814 = vmatpush1.msra.mxu0 0.0
    %4815 = vmatprep.subr.mxu0 0.0
    %4816 = vmatpush1.msra.mxu0 0.0
    %4817 = vmatprep.subr.mxu0 0.0
    %4818 = vmatpush1.msra.mxu0 0.0
    %4819 = vmatprep.subr.mxu0 0.0
    %4820 = vmatpush1.msra.mxu0 0.0
    %4821 = vmatprep.subr.mxu0 0.0
    %4822 = vmatpush1.msra.mxu0 0.0
    %4823 = vmatprep.subr.mxu0 0.0
    %4824 = vmatpush1.msra.mxu0 0.0
    %4825 = vmatprep.subr.mxu0 0.0
    %4826 = vmatpush1.msra.mxu0 0.0
    %4827 = vmatprep.subr.mxu0 0.0
    %4828 = vmatpush1.msra.mxu0 0.0
    %4829 = vmatprep.subr.mxu0 0.0
    %4830 = vmatpush1.msra.mxu0 0.0
    %4831 = vmatprep.subr.mxu0 0.0
    %4832 = vmatpush1.msra.mxu0 0.0
    %4833 = vmatprep.subr.mxu0 0.0
    %4834 = vmatpush1.msra.mxu0 0.0
    %4835 = vmatprep.subr.mxu0 0.0
    %4836 = vmatpush1.msra.mxu0 0.0
    %4837 = vmatprep.subr.mxu0 0.0
    %4838 = vmatpush1.msra.mxu0 0.0
    %4839 = vmatprep.subr.mxu0 0.0
    %4840 = vmatpush1.msra.mxu0 0.0
    %4841 = vmatprep.subr.mxu0 0.0
    %4842 = vmatpush1.msra.mxu0 0.0
    %4843 = vmatprep.subr.mxu0 0.0
    %4844 = vmatpush1.msra.mxu0 0.0
    %4845 = vmatprep.mubr.f32.mxu0 0.0
    %4846 = vmatmul.mubr.f32.gmra.mrb[0].mxu0 %v4779
    %v4847 = vpop.f32.mrb[0].mxu0
    %v4848 = vadd.f32 0.0, %v4847
    %v4849 = vpop.f32.mrb[0].mxu0
    %4850 = vdwg.mxu0
    %v4851 = vadd.f32 %v4765, %v4848
    %v4852 = vld [vmem:[%s1833] sm:$0xff]
    %v4853 = vld [vmem:[%s1833 + $0x8] sm:$0xff]
    %v4854 = vld [vmem:[%s1833 + $0x10] sm:$0xff]
    %v4855 = vld [vmem:[%s1833 + $0x18] sm:$0xff]
    %v4856 = vld [vmem:[%s1833 + $0x20] sm:$0xff]
    %v4857 = vld [vmem:[%s1833 + $0x28] sm:$0xff]
    %v4858 = vld [vmem:[%s1833 + $0x30] sm:$0xff]
    %v4859 = vld [vmem:[%s1833 + $0x38] sm:$0xff]
    %v4860 = vld [vmem:[%s1833 + $0x40] sm:$0xff]
    %v4861 = vrot.slane %v4517, 4
    %v4862 = vrot.slane %v4518, 4
    %v4863 = vsel %vm553, %v4861, %v4862
    %v4864 = vsel %vm65, %v4863, 0
    %4866 = vmatprep.subr.mxu0 0.0
    %4867 = vmatpush1.msra.mxu0 %v4852
    %4868 = vmatprep.subr.mxu0 0.0
    %4869 = vmatpush1.msra.mxu0 %v4853
    %4870 = vmatprep.subr.mxu0 0.0
    %4871 = vmatpush1.msra.mxu0 %v4854
    %4872 = vmatprep.subr.mxu0 0.0
    %4873 = vmatpush1.msra.mxu0 %v4855
    %4874 = vmatprep.subr.mxu0 0.0
    %4875 = vmatpush1.msra.mxu0 %v4856
    %4876 = vmatprep.subr.mxu0 0.0
    %4877 = vmatpush1.msra.mxu0 %v4857
    %4878 = vmatprep.subr.mxu0 0.0
    %4879 = vmatpush1.msra.mxu0 %v4858
    %4880 = vmatprep.subr.mxu0 0.0
    %4881 = vmatpush1.msra.mxu0 %v4859
    %4882 = vmatprep.subr.mxu0 0.0
    %4883 = vmatpush1.msra.mxu0 %v4860
    %4884 = vmatprep.subr.mxu0 0.0
    %4885 = vmatpush1.msra.mxu0 0.0
    %4886 = vmatprep.subr.mxu0 0.0
    %4887 = vmatpush1.msra.mxu0 0.0
    %4888 = vmatprep.subr.mxu0 0.0
    %4889 = vmatpush1.msra.mxu0 0.0
    %4890 = vmatprep.subr.mxu0 0.0
    %4891 = vmatpush1.msra.mxu0 0.0
    %4892 = vmatprep.subr.mxu0 0.0
    %4893 = vmatpush1.msra.mxu0 0.0
    %4894 = vmatprep.subr.mxu0 0.0
    %4895 = vmatpush1.msra.mxu0 0.0
    %4896 = vmatprep.subr.mxu0 0.0
    %4897 = vmatpush1.msra.mxu0 0.0
    %4898 = vmatprep.subr.mxu0 0.0
    %4899 = vmatpush1.msra.mxu0 0.0
    %4900 = vmatprep.subr.mxu0 0.0
    %4901 = vmatpush1.msra.mxu0 0.0
    %4902 = vmatprep.subr.mxu0 0.0
    %4903 = vmatpush1.msra.mxu0 0.0
    %4904 = vmatprep.subr.mxu0 0.0
    %4905 = vmatpush1.msra.mxu0 0.0
    %4906 = vmatprep.subr.mxu0 0.0
    %4907 = vmatpush1.msra.mxu0 0.0
    %4908 = vmatprep.subr.mxu0 0.0
    %4909 = vmatpush1.msra.mxu0 0.0
    %4910 = vmatprep.subr.mxu0 0.0
    %4911 = vmatpush1.msra.mxu0 0.0
    %4912 = vmatprep.subr.mxu0 0.0
    %4913 = vmatpush1.msra.mxu0 0.0
    %4914 = vmatprep.subr.mxu0 0.0
    %4915 = vmatpush1.msra.mxu0 0.0
    %4916 = vmatprep.subr.mxu0 0.0
    %4917 = vmatpush1.msra.mxu0 0.0
    %4918 = vmatprep.subr.mxu0 0.0
    %4919 = vmatpush1.msra.mxu0 0.0
    %4920 = vmatprep.subr.mxu0 0.0
    %4921 = vmatpush1.msra.mxu0 0.0
    %4922 = vmatprep.subr.mxu0 0.0
    %4923 = vmatpush1.msra.mxu0 0.0
    %4924 = vmatprep.subr.mxu0 0.0
    %4925 = vmatpush1.msra.mxu0 0.0
    %4926 = vmatprep.subr.mxu0 0.0
    %4927 = vmatpush1.msra.mxu0 0.0
    %4928 = vmatprep.subr.mxu0 0.0
    %4929 = vmatpush1.msra.mxu0 0.0
    %4930 = vmatprep.mubr.f32.mxu0 0.0
    %4931 = vmatmul.mubr.f32.gmra.mrb[0].mxu0 %v4864
    %v4932 = vpop.f32.mrb[0].mxu0
    %v4933 = vadd.f32 0.0, %v4932
    %v4934 = vpop.f32.mrb[0].mxu0
    %4935 = vdwg.mxu0
    %v4936 = vadd.f32 %v4851, %v4933
    %v4937 = vld [vmem:[%s1919] sm:$0xff]
    %v4938 = vld [vmem:[%s1919 + $0x8] sm:$0xff]
    %v4939 = vld [vmem:[%s1919 + $0x10] sm:$0xff]
    %v4940 = vld [vmem:[%s1919 + $0x18] sm:$0xff]
    %v4941 = vld [vmem:[%s1919 + $0x20] sm:$0xff]
    %v4942 = vld [vmem:[%s1919 + $0x28] sm:$0xff]
    %v4943 = vld [vmem:[%s1919 + $0x30] sm:$0xff]
    %v4944 = vld [vmem:[%s1919 + $0x38] sm:$0xff]
    %v4945 = vld [vmem:[%s1919 + $0x40] sm:$0xff]
    %v4946 = vrot.slane %v4517, 5
    %v4947 = vrot.slane %v4518, 5
    %v4948 = vsel %vm663, %v4946, %v4947
    %v4949 = vsel %vm65, %v4948, 0
    %4951 = vmatprep.subr.mxu0 0.0
    %4952 = vmatpush1.msra.mxu0 %v4937
    %4953 = vmatprep.subr.mxu0 0.0
    %4954 = vmatpush1.msra.mxu0 %v4938
    %4955 = vmatprep.subr.mxu0 0.0
    %4956 = vmatpush1.msra.mxu0 %v4939
    %4957 = vmatprep.subr.mxu0 0.0
    %4958 = vmatpush1.msra.mxu0 %v4940
    %4959 = vmatprep.subr.mxu0 0.0
    %4960 = vmatpush1.msra.mxu0 %v4941
    %4961 = vmatprep.subr.mxu0 0.0
    %4962 = vmatpush1.msra.mxu0 %v4942
    %4963 = vmatprep.subr.mxu0 0.0
    %4964 = vmatpush1.msra.mxu0 %v4943
    %4965 = vmatprep.subr.mxu0 0.0
    %4966 = vmatpush1.msra.mxu0 %v4944
    %4967 = vmatprep.subr.mxu0 0.0
    %4968 = vmatpush1.msra.mxu0 %v4945
    %4969 = vmatprep.subr.mxu0 0.0
    %4970 = vmatpush1.msra.mxu0 0.0
    %4971 = vmatprep.subr.mxu0 0.0
    %4972 = vmatpush1.msra.mxu0 0.0
    %4973 = vmatprep.subr.mxu0 0.0
    %4974 = vmatpush1.msra.mxu0 0.0
    %4975 = vmatprep.subr.mxu0 0.0
    %4976 = vmatpush1.msra.mxu0 0.0
    %4977 = vmatprep.subr.mxu0 0.0
    %4978 = vmatpush1.msra.mxu0 0.0
    %4979 = vmatprep.subr.mxu0 0.0
    %4980 = vmatpush1.msra.mxu0 0.0
    %4981 = vmatprep.subr.mxu0 0.0
    %4982 = vmatpush1.msra.mxu0 0.0
    %4983 = vmatprep.subr.mxu0 0.0
    %4984 = vmatpush1.msra.mxu0 0.0
    %4985 = vmatprep.subr.mxu0 0.0
    %4986 = vmatpush1.msra.mxu0 0.0
    %4987 = vmatprep.subr.mxu0 0.0
    %4988 = vmatpush1.msra.mxu0 0.0
    %4989 = vmatprep.subr.mxu0 0.0
    %4990 = vmatpush1.msra.mxu0 0.0
    %4991 = vmatprep.subr.mxu0 0.0
    %4992 = vmatpush1.msra.mxu0 0.0
    %4993 = vmatprep.subr.mxu0 0.0
    %4994 = vmatpush1.msra.mxu0 0.0
    %4995 = vmatprep.subr.mxu0 0.0
    %4996 = vmatpush1.msra.mxu0 0.0
    %4997 = vmatprep.subr.mxu0 0.0
    %4998 = vmatpush1.msra.mxu0 0.0
    %4999 = vmatprep.subr.mxu0 0.0
    %5000 = vmatpush1.msra.mxu0 0.0
    %5001 = vmatprep.subr.mxu0 0.0
    %5002 = vmatpush1.msra.mxu0 0.0
    %5003 = vmatprep.subr.mxu0 0.0
    %5004 = vmatpush1.msra.mxu0 0.0
    %5005 = vmatprep.subr.mxu0 0.0
    %5006 = vmatpush1.msra.mxu0 0.0
    %5007 = vmatprep.subr.mxu0 0.0
    %5008 = vmatpush1.msra.mxu0 0.0
    %5009 = vmatprep.subr.mxu0 0.0
    %5010 = vmatpush1.msra.mxu0 0.0
    %5011 = vmatprep.subr.mxu0 0.0
    %5012 = vmatpush1.msra.mxu0 0.0
    %5013 = vmatprep.subr.mxu0 0.0
    %5014 = vmatpush1.msra.mxu0 0.0
    %5015 = vmatprep.mubr.f32.mxu0 0.0
    %5016 = vmatmul.mubr.f32.gmra.mrb[0].mxu0 %v4949
    %v5017 = vpop.f32.mrb[0].mxu0
    %v5018 = vadd.f32 0.0, %v5017
    %v5019 = vpop.f32.mrb[0].mxu0
    %5020 = vdwg.mxu0
    %v5021 = vadd.f32 %v4936, %v5018
    %v5022 = vld [vmem:[%s2005] sm:$0xff]
    %v5023 = vld [vmem:[%s2005 + $0x8] sm:$0xff]
    %v5024 = vld [vmem:[%s2005 + $0x10] sm:$0xff]
    %v5025 = vld [vmem:[%s2005 + $0x18] sm:$0xff]
    %v5026 = vld [vmem:[%s2005 + $0x20] sm:$0xff]
    %v5027 = vld [vmem:[%s2005 + $0x28] sm:$0xff]
    %v5028 = vld [vmem:[%s2005 + $0x30] sm:$0xff]
    %v5029 = vld [vmem:[%s2005 + $0x38] sm:$0xff]
    %v5030 = vld [vmem:[%s2005 + $0x40] sm:$0xff]
    %v5031 = vrot.slane %v4517, 6
    %v5032 = vrot.slane %v4518, 6
    %v5033 = vsel %vm774, %v5031, %v5032
    %v5034 = vsel %vm65, %v5033, 0
    %5036 = vmatprep.subr.mxu0 0.0
    %5037 = vmatpush1.msra.mxu0 %v5022
    %5038 = vmatprep.subr.mxu0 0.0
    %5039 = vmatpush1.msra.mxu0 %v5023
    %5040 = vmatprep.subr.mxu0 0.0
    %5041 = vmatpush1.msra.mxu0 %v5024
    %5042 = vmatprep.subr.mxu0 0.0
    %5043 = vmatpush1.msra.mxu0 %v5025
    %5044 = vmatprep.subr.mxu0 0.0
    %5045 = vmatpush1.msra.mxu0 %v5026
    %5046 = vmatprep.subr.mxu0 0.0
    %5047 = vmatpush1.msra.mxu0 %v5027
    %5048 = vmatprep.subr.mxu0 0.0
    %5049 = vmatpush1.msra.mxu0 %v5028
    %5050 = vmatprep.subr.mxu0 0.0
    %5051 = vmatpush1.msra.mxu0 %v5029
    %5052 = vmatprep.subr.mxu0 0.0
    %5053 = vmatpush1.msra.mxu0 %v5030
    %5054 = vmatprep.subr.mxu0 0.0
    %5055 = vmatpush1.msra.mxu0 0.0
    %5056 = vmatprep.subr.mxu0 0.0
    %5057 = vmatpush1.msra.mxu0 0.0
    %5058 = vmatprep.subr.mxu0 0.0
    %5059 = vmatpush1.msra.mxu0 0.0
    %5060 = vmatprep.subr.mxu0 0.0
    %5061 = vmatpush1.msra.mxu0 0.0
    %5062 = vmatprep.subr.mxu0 0.0
    %5063 = vmatpush1.msra.mxu0 0.0
    %5064 = vmatprep.subr.mxu0 0.0
    %5065 = vmatpush1.msra.mxu0 0.0
    %5066 = vmatprep.subr.mxu0 0.0
    %5067 = vmatpush1.msra.mxu0 0.0
    %5068 = vmatprep.subr.mxu0 0.0
    %5069 = vmatpush1.msra.mxu0 0.0
    %5070 = vmatprep.subr.mxu0 0.0
    %5071 = vmatpush1.msra.mxu0 0.0
    %5072 = vmatprep.subr.mxu0 0.0
    %5073 = vmatpush1.msra.mxu0 0.0
    %5074 = vmatprep.subr.mxu0 0.0
    %5075 = vmatpush1.msra.mxu0 0.0
    %5076 = vmatprep.subr.mxu0 0.0
    %5077 = vmatpush1.msra.mxu0 0.0
    %5078 = vmatprep.subr.mxu0 0.0
    %5079 = vmatpush1.msra.mxu0 0.0
    %5080 = vmatprep.subr.mxu0 0.0
    %5081 = vmatpush1.msra.mxu0 0.0
    %5082 = vmatprep.subr.mxu0 0.0
    %5083 = vmatpush1.msra.mxu0 0.0
    %5084 = vmatprep.subr.mxu0 0.0
    %5085 = vmatpush1.msra.mxu0 0.0
    %5086 = vmatprep.subr.mxu0 0.0
    %5087 = vmatpush1.msra.mxu0 0.0
    %5088 = vmatprep.subr.mxu0 0.0
    %5089 = vmatpush1.msra.mxu0 0.0
    %5090 = vmatprep.subr.mxu0 0.0
    %5091 = vmatpush1.msra.mxu0 0.0
    %5092 = vmatprep.subr.mxu0 0.0
    %5093 = vmatpush1.msra.mxu0 0.0
    %5094 = vmatprep.subr.mxu0 0.0
    %5095 = vmatpush1.msra.mxu0 0.0
    %5096 = vmatprep.subr.mxu0 0.0
    %5097 = vmatpush1.msra.mxu0 0.0
    %5098 = vmatprep.subr.mxu0 0.0
    %5099 = vmatpush1.msra.mxu0 0.0
    %5100 = vmatprep.mubr.f32.mxu0 0.0
    %5101 = vmatmul.mubr.f32.gmra.mrb[0].mxu0 %v5034
    %v5102 = vpop.f32.mrb[0].mxu0
    %v5103 = vadd.f32 0.0, %v5102
    %v5104 = vpop.f32.mrb[0].mxu0
    %5105 = vdwg.mxu0
    %v5106 = vadd.f32 %v5021, %v5103
    %v5107 = vsel %vm2093, 0.0, %v4517
    %v5108 = vsel %vm2094, 0.0, %v4518
    %v5109 = vld [vmem:[%s2097] sm:$0xff]
    %v5110 = vld [vmem:[%s2097 + $0x8] sm:$0xff]
    %v5111 = vld [vmem:[%s2097 + $0x10] sm:$0xff]
    %v5112 = vld [vmem:[%s2097 + $0x18] sm:$0xff]
    %v5113 = vld [vmem:[%s2097 + $0x20] sm:$0xff]
    %v5114 = vld [vmem:[%s2097 + $0x28] sm:$0xff]
    %v5115 = vld [vmem:[%s2097 + $0x30] sm:$0xff]
    %v5116 = vld [vmem:[%s2097 + $0x38] sm:$0xff]
    %v5117 = vld [vmem:[%s2097 + $0x40] sm:$0xff]
    %v5119 = vrot.slane %v5107, 2
    %v5120 = vsel %vm65, %v5119, 0
    %5122 = vmatprep.subr.mxu0 0.0
    %5123 = vmatpush1.msra.mxu0 %v5109
    %5124 = vmatprep.subr.mxu0 0.0
    %5125 = vmatpush1.msra.mxu0 %v5110
    %5126 = vmatprep.subr.mxu0 0.0
    %5127 = vmatpush1.msra.mxu0 %v5111
    %5128 = vmatprep.subr.mxu0 0.0
    %5129 = vmatpush1.msra.mxu0 %v5112
    %5130 = vmatprep.subr.mxu0 0.0
    %5131 = vmatpush1.msra.mxu0 %v5113
    %5132 = vmatprep.subr.mxu0 0.0
    %5133 = vmatpush1.msra.mxu0 %v5114
    %5134 = vmatprep.subr.mxu0 0.0
    %5135 = vmatpush1.msra.mxu0 %v5115
    %5136 = vmatprep.subr.mxu0 0.0
    %5137 = vmatpush1.msra.mxu0 %v5116
    %5138 = vmatprep.subr.mxu0 0.0
    %5139 = vmatpush1.msra.mxu0 %v5117
    %5140 = vmatprep.subr.mxu0 0.0
    %5141 = vmatpush1.msra.mxu0 0.0
    %5142 = vmatprep.subr.mxu0 0.0
    %5143 = vmatpush1.msra.mxu0 0.0
    %5144 = vmatprep.subr.mxu0 0.0
    %5145 = vmatpush1.msra.mxu0 0.0
    %5146 = vmatprep.subr.mxu0 0.0
    %5147 = vmatpush1.msra.mxu0 0.0
    %5148 = vmatprep.subr.mxu0 0.0
    %5149 = vmatpush1.msra.mxu0 0.0
    %5150 = vmatprep.subr.mxu0 0.0
    %5151 = vmatpush1.msra.mxu0 0.0
    %5152 = vmatprep.subr.mxu0 0.0
    %5153 = vmatpush1.msra.mxu0 0.0
    %5154 = vmatprep.subr.mxu0 0.0
    %5155 = vmatpush1.msra.mxu0 0.0
    %5156 = vmatprep.subr.mxu0 0.0
    %5157 = vmatpush1.msra.mxu0 0.0
    %5158 = vmatprep.subr.mxu0 0.0
    %5159 = vmatpush1.msra.mxu0 0.0
    %5160 = vmatprep.subr.mxu0 0.0
    %5161 = vmatpush1.msra.mxu0 0.0
    %5162 = vmatprep.subr.mxu0 0.0
    %5163 = vmatpush1.msra.mxu0 0.0
    %5164 = vmatprep.subr.mxu0 0.0
    %5165 = vmatpush1.msra.mxu0 0.0
    %5166 = vmatprep.subr.mxu0 0.0
    %5167 = vmatpush1.msra.mxu0 0.0
    %5168 = vmatprep.subr.mxu0 0.0
    %5169 = vmatpush1.msra.mxu0 0.0
    %5170 = vmatprep.subr.mxu0 0.0
    %5171 = vmatpush1.msra.mxu0 0.0
    %5172 = vmatprep.subr.mxu0 0.0
    %5173 = vmatpush1.msra.mxu0 0.0
    %5174 = vmatprep.subr.mxu0 0.0
    %5175 = vmatpush1.msra.mxu0 0.0
    %5176 = vmatprep.subr.mxu0 0.0
    %5177 = vmatpush1.msra.mxu0 0.0
    %5178 = vmatprep.subr.mxu0 0.0
    %5179 = vmatpush1.msra.mxu0 0.0
    %5180 = vmatprep.subr.mxu0 0.0
    %5181 = vmatpush1.msra.mxu0 0.0
    %5182 = vmatprep.subr.mxu0 0.0
    %5183 = vmatpush1.msra.mxu0 0.0
    %5184 = vmatprep.subr.mxu0 0.0
    %5185 = vmatpush1.msra.mxu0 0.0
    %5186 = vmatprep.mubr.f32.mxu0 0.0
    %5187 = vmatmul.mubr.f32.gmra.mrb[0].mxu0 %v5120
    %v5188 = vpop.f32.mrb[0].mxu0
    %v5189 = vadd.f32 0.0, %v5188
    %v5190 = vpop.f32.mrb[0].mxu0
    %5191 = vdwg.mxu0
    %v5192 = vadd.f32 %v5106, %v5189
    %v5193 = vld [vmem:[%s2182] sm:$0xff]
    %v5194 = vld [vmem:[%s2182 + $0x8] sm:$0xff]
    %v5195 = vld [vmem:[%s2182 + $0x10] sm:$0xff]
    %v5196 = vld [vmem:[%s2182 + $0x18] sm:$0xff]
    %v5197 = vld [vmem:[%s2182 + $0x20] sm:$0xff]
    %v5198 = vld [vmem:[%s2182 + $0x28] sm:$0xff]
    %v5199 = vld [vmem:[%s2182 + $0x30] sm:$0xff]
    %v5200 = vld [vmem:[%s2182 + $0x38] sm:$0xff]
    %v5201 = vld [vmem:[%s2182 + $0x40] sm:$0xff]
    %v5203 = vrot.slane %v5107, 3
    %v5204 = vrot.slane %v5108, 3
    %v5205 = vsel %vm444, %v5203, %v5204
    %v5206 = vsel %vm65, %v5205, 0
    %5208 = vmatprep.subr.mxu0 0.0
    %5209 = vmatpush1.msra.mxu0 %v5193
    %5210 = vmatprep.subr.mxu0 0.0
    %5211 = vmatpush1.msra.mxu0 %v5194
    %5212 = vmatprep.subr.mxu0 0.0
    %5213 = vmatpush1.msra.mxu0 %v5195
    %5214 = vmatprep.subr.mxu0 0.0
    %5215 = vmatpush1.msra.mxu0 %v5196
    %5216 = vmatprep.subr.mxu0 0.0
    %5217 = vmatpush1.msra.mxu0 %v5197
    %5218 = vmatprep.subr.mxu0 0.0
    %5219 = vmatpush1.msra.mxu0 %v5198
    %5220 = vmatprep.subr.mxu0 0.0
    %5221 = vmatpush1.msra.mxu0 %v5199
    %5222 = vmatprep.subr.mxu0 0.0
    %5223 = vmatpush1.msra.mxu0 %v5200
    %5224 = vmatprep.subr.mxu0 0.0
    %5225 = vmatpush1.msra.mxu0 %v5201
    %5226 = vmatprep.subr.mxu0 0.0
    %5227 = vmatpush1.msra.mxu0 0.0
    %5228 = vmatprep.subr.mxu0 0.0
    %5229 = vmatpush1.msra.mxu0 0.0
    %5230 = vmatprep.subr.mxu0 0.0
    %5231 = vmatpush1.msra.mxu0 0.0
    %5232 = vmatprep.subr.mxu0 0.0
    %5233 = vmatpush1.msra.mxu0 0.0
    %5234 = vmatprep.subr.mxu0 0.0
    %5235 = vmatpush1.msra.mxu0 0.0
    %5236 = vmatprep.subr.mxu0 0.0
    %5237 = vmatpush1.msra.mxu0 0.0
    %5238 = vmatprep.subr.mxu0 0.0
    %5239 = vmatpush1.msra.mxu0 0.0
    %5240 = vmatprep.subr.mxu0 0.0
    %5241 = vmatpush1.msra.mxu0 0.0
    %5242 = vmatprep.subr.mxu0 0.0
    %5243 = vmatpush1.msra.mxu0 0.0
    %5244 = vmatprep.subr.mxu0 0.0
    %5245 = vmatpush1.msra.mxu0 0.0
    %5246 = vmatprep.subr.mxu0 0.0
    %5247 = vmatpush1.msra.mxu0 0.0
    %5248 = vmatprep.subr.mxu0 0.0
    %5249 = vmatpush1.msra.mxu0 0.0
    %5250 = vmatprep.subr.mxu0 0.0
    %5251 = vmatpush1.msra.mxu0 0.0
    %5252 = vmatprep.subr.mxu0 0.0
    %5253 = vmatpush1.msra.mxu0 0.0
    %5254 = vmatprep.subr.mxu0 0.0
    %5255 = vmatpush1.msra.mxu0 0.0
    %5256 = vmatprep.subr.mxu0 0.0
    %5257 = vmatpush1.msra.mxu0 0.0
    %5258 = vmatprep.subr.mxu0 0.0
    %5259 = vmatpush1.msra.mxu0 0.0
    %5260 = vmatprep.subr.mxu0 0.0
    %5261 = vmatpush1.msra.mxu0 0.0
    %5262 = vmatprep.subr.mxu0 0.0
    %5263 = vmatpush1.msra.mxu0 0.0
    %5264 = vmatprep.subr.mxu0 0.0
    %5265 = vmatpush1.msra.mxu0 0.0
    %5266 = vmatprep.subr.mxu0 0.0
    %5267 = vmatpush1.msra.mxu0 0.0
    %5268 = vmatprep.subr.mxu0 0.0
    %5269 = vmatpush1.msra.mxu0 0.0
    %5270 = vmatprep.subr.mxu0 0.0
    %5271 = vmatpush1.msra.mxu0 0.0
    %5272 = vmatprep.mubr.f32.mxu0 0.0
    %5273 = vmatmul.mubr.f32.gmra.mrb[0].mxu0 %v5206
    %v5274 = vpop.f32.mrb[0].mxu0
    %v5275 = vadd.f32 0.0, %v5274
    %v5276 = vpop.f32.mrb[0].mxu0
    %5277 = vdwg.mxu0
    %v5278 = vadd.f32 %v5192, %v5275
    %v5279 = vld [vmem:[%s2269] sm:$0xff]
    %v5280 = vld [vmem:[%s2269 + $0x8] sm:$0xff]
    %v5281 = vld [vmem:[%s2269 + $0x10] sm:$0xff]
    %v5282 = vld [vmem:[%s2269 + $0x18] sm:$0xff]
    %v5283 = vld [vmem:[%s2269 + $0x20] sm:$0xff]
    %v5284 = vld [vmem:[%s2269 + $0x28] sm:$0xff]
    %v5285 = vld [vmem:[%s2269 + $0x30] sm:$0xff]
    %v5286 = vld [vmem:[%s2269 + $0x38] sm:$0xff]
    %v5287 = vld [vmem:[%s2269 + $0x40] sm:$0xff]
    %v5288 = vrot.slane %v5107, 4
    %v5289 = vrot.slane %v5108, 4
    %v5290 = vsel %vm553, %v5288, %v5289
    %v5291 = vsel %vm65, %v5290, 0
    %5293 = vmatprep.subr.mxu0 0.0
    %5294 = vmatpush1.msra.mxu0 %v5279
    %5295 = vmatprep.subr.mxu0 0.0
    %5296 = vmatpush1.msra.mxu0 %v5280
    %5297 = vmatprep.subr.mxu0 0.0
    %5298 = vmatpush1.msra.mxu0 %v5281
    %5299 = vmatprep.subr.mxu0 0.0
    %5300 = vmatpush1.msra.mxu0 %v5282
    %5301 = vmatprep.subr.mxu0 0.0
    %5302 = vmatpush1.msra.mxu0 %v5283
    %5303 = vmatprep.subr.mxu0 0.0
    %5304 = vmatpush1.msra.mxu0 %v5284
    %5305 = vmatprep.subr.mxu0 0.0
    %5306 = vmatpush1.msra.mxu0 %v5285
    %5307 = vmatprep.subr.mxu0 0.0
    %5308 = vmatpush1.msra.mxu0 %v5286
    %5309 = vmatprep.subr.mxu0 0.0
    %5310 = vmatpush1.msra.mxu0 %v5287
    %5311 = vmatprep.subr.mxu0 0.0
    %5312 = vmatpush1.msra.mxu0 0.0
    %5313 = vmatprep.subr.mxu0 0.0
    %5314 = vmatpush1.msra.mxu0 0.0
    %5315 = vmatprep.subr.mxu0 0.0
    %5316 = vmatpush1.msra.mxu0 0.0
    %5317 = vmatprep.subr.mxu0 0.0
    %5318 = vmatpush1.msra.mxu0 0.0
    %5319 = vmatprep.subr.mxu0 0.0
    %5320 = vmatpush1.msra.mxu0 0.0
    %5321 = vmatprep.subr.mxu0 0.0
    %5322 = vmatpush1.msra.mxu0 0.0
    %5323 = vmatprep.subr.mxu0 0.0
    %5324 = vmatpush1.msra.mxu0 0.0
    %5325 = vmatprep.subr.mxu0 0.0
    %5326 = vmatpush1.msra.mxu0 0.0
    %5327 = vmatprep.subr.mxu0 0.0
    %5328 = vmatpush1.msra.mxu0 0.0
    %5329 = vmatprep.subr.mxu0 0.0
    %5330 = vmatpush1.msra.mxu0 0.0
    %5331 = vmatprep.subr.mxu0 0.0
    %5332 = vmatpush1.msra.mxu0 0.0
    %5333 = vmatprep.subr.mxu0 0.0
    %5334 = vmatpush1.msra.mxu0 0.0
    %5335 = vmatprep.subr.mxu0 0.0
    %5336 = vmatpush1.msra.mxu0 0.0
    %5337 = vmatprep.subr.mxu0 0.0
    %5338 = vmatpush1.msra.mxu0 0.0
    %5339 = vmatprep.subr.mxu0 0.0
    %5340 = vmatpush1.msra.mxu0 0.0
    %5341 = vmatprep.subr.mxu0 0.0
    %5342 = vmatpush1.msra.mxu0 0.0
    %5343 = vmatprep.subr.mxu0 0.0
    %5344 = vmatpush1.msra.mxu0 0.0
    %5345 = vmatprep.subr.mxu0 0.0
    %5346 = vmatpush1.msra.mxu0 0.0
    %5347 = vmatprep.subr.mxu0 0.0
    %5348 = vmatpush1.msra.mxu0 0.0
    %5349 = vmatprep.subr.mxu0 0.0
    %5350 = vmatpush1.msra.mxu0 0.0
    %5351 = vmatprep.subr.mxu0 0.0
    %5352 = vmatpush1.msra.mxu0 0.0
    %5353 = vmatprep.subr.mxu0 0.0
    %5354 = vmatpush1.msra.mxu0 0.0
    %5355 = vmatprep.subr.mxu0 0.0
    %5356 = vmatpush1.msra.mxu0 0.0
    %5357 = vmatprep.mubr.f32.mxu0 0.0
    %5358 = vmatmul.mubr.f32.gmra.mrb[0].mxu0 %v5291
    %v5359 = vpop.f32.mrb[0].mxu0
    %v5360 = vadd.f32 0.0, %v5359
    %v5361 = vpop.f32.mrb[0].mxu0
    %5362 = vdwg.mxu0
    %v5363 = vadd.f32 %v5278, %v5360
    %v5364 = vsel %vm2357, 0.0, %v4517
    %v5365 = vsel %vm2358, 0.0, %v4518
    %v5366 = vld [vmem:[%s2361] sm:$0xff]
    %v5367 = vld [vmem:[%s2361 + $0x8] sm:$0xff]
    %v5368 = vld [vmem:[%s2361 + $0x10] sm:$0xff]
    %v5369 = vld [vmem:[%s2361 + $0x18] sm:$0xff]
    %v5370 = vld [vmem:[%s2361 + $0x20] sm:$0xff]
    %v5371 = vld [vmem:[%s2361 + $0x28] sm:$0xff]
    %v5372 = vld [vmem:[%s2361 + $0x30] sm:$0xff]
    %v5373 = vld [vmem:[%s2361 + $0x38] sm:$0xff]
    %v5374 = vld [vmem:[%s2361 + $0x40] sm:$0xff]
    %v5377 = vrot.slane %v5364, 3
    %v5378 = vrot.slane %v5365, 3
    %v5379 = vsel %vm444, %v5377, %v5378
    %v5380 = vsel %vm65, %v5379, 0
    %5382 = vmatprep.subr.mxu0 0.0
    %5383 = vmatpush1.msra.mxu0 %v5366
    %5384 = vmatprep.subr.mxu0 0.0
    %5385 = vmatpush1.msra.mxu0 %v5367
    %5386 = vmatprep.subr.mxu0 0.0
    %5387 = vmatpush1.msra.mxu0 %v5368
    %5388 = vmatprep.subr.mxu0 0.0
    %5389 = vmatpush1.msra.mxu0 %v5369
    %5390 = vmatprep.subr.mxu0 0.0
    %5391 = vmatpush1.msra.mxu0 %v5370
    %5392 = vmatprep.subr.mxu0 0.0
    %5393 = vmatpush1.msra.mxu0 %v5371
    %5394 = vmatprep.subr.mxu0 0.0
    %5395 = vmatpush1.msra.mxu0 %v5372
    %5396 = vmatprep.subr.mxu0 0.0
    %5397 = vmatpush1.msra.mxu0 %v5373
    %5398 = vmatprep.subr.mxu0 0.0
    %5399 = vmatpush1.msra.mxu0 %v5374
    %5400 = vmatprep.subr.mxu0 0.0
    %5401 = vmatpush1.msra.mxu0 0.0
    %5402 = vmatprep.subr.mxu0 0.0
    %5403 = vmatpush1.msra.mxu0 0.0
    %5404 = vmatprep.subr.mxu0 0.0
    %5405 = vmatpush1.msra.mxu0 0.0
    %5406 = vmatprep.subr.mxu0 0.0
    %5407 = vmatpush1.msra.mxu0 0.0
    %5408 = vmatprep.subr.mxu0 0.0
    %5409 = vmatpush1.msra.mxu0 0.0
    %5410 = vmatprep.subr.mxu0 0.0
    %5411 = vmatpush1.msra.mxu0 0.0
    %5412 = vmatprep.subr.mxu0 0.0
    %5413 = vmatpush1.msra.mxu0 0.0
    %5414 = vmatprep.subr.mxu0 0.0
    %5415 = vmatpush1.msra.mxu0 0.0
    %5416 = vmatprep.subr.mxu0 0.0
    %5417 = vmatpush1.msra.mxu0 0.0
    %5418 = vmatprep.subr.mxu0 0.0
    %5419 = vmatpush1.msra.mxu0 0.0
    %5420 = vmatprep.subr.mxu0 0.0
    %5421 = vmatpush1.msra.mxu0 0.0
    %5422 = vmatprep.subr.mxu0 0.0
    %5423 = vmatpush1.msra.mxu0 0.0
    %5424 = vmatprep.subr.mxu0 0.0
    %5425 = vmatpush1.msra.mxu0 0.0
    %5426 = vmatprep.subr.mxu0 0.0
    %5427 = vmatpush1.msra.mxu0 0.0
    %5428 = vmatprep.subr.mxu0 0.0
    %5429 = vmatpush1.msra.mxu0 0.0
    %5430 = vmatprep.subr.mxu0 0.0
    %5431 = vmatpush1.msra.mxu0 0.0
    %5432 = vmatprep.subr.mxu0 0.0
    %5433 = vmatpush1.msra.mxu0 0.0
    %5434 = vmatprep.subr.mxu0 0.0
    %5435 = vmatpush1.msra.mxu0 0.0
    %5436 = vmatprep.subr.mxu0 0.0
    %5437 = vmatpush1.msra.mxu0 0.0
    %5438 = vmatprep.subr.mxu0 0.0
    %5439 = vmatpush1.msra.mxu0 0.0
    %5440 = vmatprep.subr.mxu0 0.0
    %5441 = vmatpush1.msra.mxu0 0.0
    %5442 = vmatprep.subr.mxu0 0.0
    %5443 = vmatpush1.msra.mxu0 0.0
    %5444 = vmatprep.subr.mxu0 0.0
    %5445 = vmatpush1.msra.mxu0 0.0
    %5446 = vmatprep.mubr.f32.mxu0 0.0
    %5447 = vmatmul.mubr.f32.gmra.mrb[0].mxu0 %v5380
    %v5448 = vpop.f32.mrb[0].mxu0
    %v5449 = vadd.f32 0.0, %v5448
    %v5450 = vpop.f32.mrb[0].mxu0
    %5451 = vdwg.mxu0
    %v5452 = vadd.f32 %v5363, %v5449
    %v5453 = vld [vmem:[%s4] sm:$0x1]
    %v5455 = vlaneseq
    %v5456 = vshrl.u32 %v5455, 7
    %v5457 = vsub.s32 0, %v5456
    %v5458 = vrot.slane %v5453, %v5457
    %v5460 = vadd.f32 %v5452, %v5458
    %v5461 = vmax.f32 %v5460, 0.0
    %v5462 = vld [vmem:[%s6] sm:$0x1]
    %v5464 = vrot.slane %v5461, 1
    %v5466 = vmax.f32 %v5461, %v5464
    %5468 = vrot.lane.b32.xlu0 %v5466, 122
    %v5469 = vpop.permute.xlu0 %5468
    %v5471 = vmax.f32 %v5466, %v5469
    %v5472 = vld [vmem:[%s5] sm:$0x3f]
    %v5474 = vsel %vm2469, %v5471, 0
    %v5477 = vsel %vm152, %v5472, 0
    %5479 = vmatprep.subr.mxu0 0.0
    %5480 = vmatpush1.msra.mxu0 %v5477
    %5481 = vmatprep.subr.mxu0 0.0
    %5482 = vmatpush1.msra.mxu0 0.0
    %5483 = vmatprep.subr.mxu0 0.0
    %5484 = vmatpush1.msra.mxu0 0.0
    %5485 = vmatprep.subr.mxu0 0.0
    %5486 = vmatpush1.msra.mxu0 0.0
    %5487 = vmatprep.subr.mxu0 0.0
    %5488 = vmatpush1.msra.mxu0 0.0
    %5489 = vmatprep.subr.mxu0 0.0
    %5490 = vmatpush1.msra.mxu0 0.0
    %5491 = vmatprep.subr.mxu0 0.0
    %5492 = vmatpush1.msra.mxu0 0.0
    %5493 = vmatprep.subr.mxu0 0.0
    %5494 = vmatpush1.msra.mxu0 0.0
    %5495 = vmatprep.subr.mxu0 0.0
    %5496 = vmatpush1.msra.mxu0 0.0
    %5497 = vmatprep.subr.mxu0 0.0
    %5498 = vmatpush1.msra.mxu0 0.0
    %5499 = vmatprep.subr.mxu0 0.0
    %5500 = vmatpush1.msra.mxu0 0.0
    %5501 = vmatprep.subr.mxu0 0.0
    %5502 = vmatpush1.msra.mxu0 0.0
    %5503 = vmatprep.subr.mxu0 0.0
    %5504 = vmatpush1.msra.mxu0 0.0
    %5505 = vmatprep.subr.mxu0 0.0
    %5506 = vmatpush1.msra.mxu0 0.0
    %5507 = vmatprep.subr.mxu0 0.0
    %5508 = vmatpush1.msra.mxu0 0.0
    %5509 = vmatprep.subr.mxu0 0.0
    %5510 = vmatpush1.msra.mxu0 0.0
    %5511 = vmatprep.subr.mxu0 0.0
    %5512 = vmatpush1.msra.mxu0 0.0
    %5513 = vmatprep.subr.mxu0 0.0
    %5514 = vmatpush1.msra.mxu0 0.0
    %5515 = vmatprep.subr.mxu0 0.0
    %5516 = vmatpush1.msra.mxu0 0.0
    %5517 = vmatprep.subr.mxu0 0.0
    %5518 = vmatpush1.msra.mxu0 0.0
    %5519 = vmatprep.subr.mxu0 0.0
    %5520 = vmatpush1.msra.mxu0 0.0
    %5521 = vmatprep.subr.mxu0 0.0
    %5522 = vmatpush1.msra.mxu0 0.0
    %5523 = vmatprep.subr.mxu0 0.0
    %5524 = vmatpush1.msra.mxu0 0.0
    %5525 = vmatprep.subr.mxu0 0.0
    %5526 = vmatpush1.msra.mxu0 0.0
    %5527 = vmatprep.subr.mxu0 0.0
    %5528 = vmatpush1.msra.mxu0 0.0
    %5529 = vmatprep.subr.mxu0 0.0
    %5530 = vmatpush1.msra.mxu0 0.0
    %5531 = vmatprep.subr.mxu0 0.0
    %5532 = vmatpush1.msra.mxu0 0.0
    %5533 = vmatprep.subr.mxu0 0.0
    %5534 = vmatpush1.msra.mxu0 0.0
    %5535 = vmatprep.subr.mxu0 0.0
    %5536 = vmatpush1.msra.mxu0 0.0
    %5537 = vmatprep.subr.mxu0 0.0
    %5538 = vmatpush1.msra.mxu0 0.0
    %5539 = vmatprep.subr.mxu0 0.0
    %5540 = vmatpush1.msra.mxu0 0.0
    %5541 = vmatprep.subr.mxu0 0.0
    %5542 = vmatpush1.msra.mxu0 0.0
    %5543 = vmatprep.mubr.f32.mxu0 0.0
    %5544 = vmatmul.mubr.f32.gmra.mrb[0].mxu0 %v5474
    %v5545 = vpop.f32.mrb[0].mxu0
    %v5546 = vadd.f32 0.0, %v5545
    %v5547 = vpop.f32.mrb[0].mxu0
    %5548 = vdwg.mxu0
    %v5549 = vadd.f32 %v5462, %v5546
    %v5550 = vld [vmem:[%s2547] sm:$0x3f]
    %5551 = vrot.lane.b32.xlu0 %v5471, 116
    %v5552 = vpop.permute.xlu0 %5551
    %v5553 = vsel %vm2469, %v5552, 0
    %v5556 = vsel %vm152, %v5550, 0
    %5558 = vmatprep.subr.mxu0 0.0
    %5559 = vmatpush1.msra.mxu0 %v5556
    %5560 = vmatprep.subr.mxu0 0.0
    %5561 = vmatpush1.msra.mxu0 0.0
    %5562 = vmatprep.subr.mxu0 0.0
    %5563 = vmatpush1.msra.mxu0 0.0
    %5564 = vmatprep.subr.mxu0 0.0
    %5565 = vmatpush1.msra.mxu0 0.0
    %5566 = vmatprep.subr.mxu0 0.0
    %5567 = vmatpush1.msra.mxu0 0.0
    %5568 = vmatprep.subr.mxu0 0.0
    %5569 = vmatpush1.msra.mxu0 0.0
    %5570 = vmatprep.subr.mxu0 0.0
    %5571 = vmatpush1.msra.mxu0 0.0
    %5572 = vmatprep.subr.mxu0 0.0
    %5573 = vmatpush1.msra.mxu0 0.0
    %5574 = vmatprep.subr.mxu0 0.0
    %5575 = vmatpush1.msra.mxu0 0.0
    %5576 = vmatprep.subr.mxu0 0.0
    %5577 = vmatpush1.msra.mxu0 0.0
    %5578 = vmatprep.subr.mxu0 0.0
    %5579 = vmatpush1.msra.mxu0 0.0
    %5580 = vmatprep.subr.mxu0 0.0
    %5581 = vmatpush1.msra.mxu0 0.0
    %5582 = vmatprep.subr.mxu0 0.0
    %5583 = vmatpush1.msra.mxu0 0.0
    %5584 = vmatprep.subr.mxu0 0.0
    %5585 = vmatpush1.msra.mxu0 0.0
    %5586 = vmatprep.subr.mxu0 0.0
    %5587 = vmatpush1.msra.mxu0 0.0
    %5588 = vmatprep.subr.mxu0 0.0
    %5589 = vmatpush1.msra.mxu0 0.0
    %5590 = vmatprep.subr.mxu0 0.0
    %5591 = vmatpush1.msra.mxu0 0.0
    %5592 = vmatprep.subr.mxu0 0.0
    %5593 = vmatpush1.msra.mxu0 0.0
    %5594 = vmatprep.subr.mxu0 0.0
    %5595 = vmatpush1.msra.mxu0 0.0
    %5596 = vmatprep.subr.mxu0 0.0
    %5597 = vmatpush1.msra.mxu0 0.0
    %5598 = vmatprep.subr.mxu0 0.0
    %5599 = vmatpush1.msra.mxu0 0.0
    %5600 = vmatprep.subr.mxu0 0.0
    %5601 = vmatpush1.msra.mxu0 0.0
    %5602 = vmatprep.subr.mxu0 0.0
    %5603 = vmatpush1.msra.mxu0 0.0
    %5604 = vmatprep.subr.mxu0 0.0
    %5605 = vmatpush1.msra.mxu0 0.0
    %5606 = vmatprep.subr.mxu0 0.0
    %5607 = vmatpush1.msra.mxu0 0.0
    %5608 = vmatprep.subr.mxu0 0.0
    %5609 = vmatpush1.msra.mxu0 0.0
    %5610 = vmatprep.subr.mxu0 0.0
    %5611 = vmatpush1.msra.mxu0 0.0
    %5612 = vmatprep.subr.mxu0 0.0
    %5613 = vmatpush1.msra.mxu0 0.0
    %5614 = vmatprep.subr.mxu0 0.0
    %5615 = vmatpush1.msra.mxu0 0.0
    %5616 = vmatprep.subr.mxu0 0.0
    %5617 = vmatpush1.msra.mxu0 0.0
    %5618 = vmatprep.subr.mxu0 0.0
    %5619 = vmatpush1.msra.mxu0 0.0
    %5620 = vmatprep.subr.mxu0 0.0
    %5621 = vmatpush1.msra.mxu0 0.0
    %5622 = vmatprep.mubr.f32.mxu0 0.0
    %5623 = vmatmul.mubr.f32.gmra.mrb[0].mxu0 %v5553
    %v5624 = vpop.f32.mrb[0].mxu0
    %v5625 = vadd.f32 0.0, %v5624
    %v5626 = vpop.f32.mrb[0].mxu0
    %5627 = vdwg.mxu0
    %v5628 = vadd.f32 %v5549, %v5625
    %v5629 = vld [vmem:[%s2627] sm:$0x3f]
    %5630 = vrot.lane.b32.xlu0 %v5471, 104
    %v5631 = vpop.permute.xlu0 %5630
    %v5632 = vsel %vm2469, %v5631, 0
    %v5635 = vsel %vm152, %v5629, 0
    %5637 = vmatprep.subr.mxu0 0.0
    %5638 = vmatpush1.msra.mxu0 %v5635
    %5639 = vmatprep.subr.mxu0 0.0
    %5640 = vmatpush1.msra.mxu0 0.0
    %5641 = vmatprep.subr.mxu0 0.0
    %5642 = vmatpush1.msra.mxu0 0.0
    %5643 = vmatprep.subr.mxu0 0.0
    %5644 = vmatpush1.msra.mxu0 0.0
    %5645 = vmatprep.subr.mxu0 0.0
    %5646 = vmatpush1.msra.mxu0 0.0
    %5647 = vmatprep.subr.mxu0 0.0
    %5648 = vmatpush1.msra.mxu0 0.0
    %5649 = vmatprep.subr.mxu0 0.0
    %5650 = vmatpush1.msra.mxu0 0.0
    %5651 = vmatprep.subr.mxu0 0.0
    %5652 = vmatpush1.msra.mxu0 0.0
    %5653 = vmatprep.subr.mxu0 0.0
    %5654 = vmatpush1.msra.mxu0 0.0
    %5655 = vmatprep.subr.mxu0 0.0
    %5656 = vmatpush1.msra.mxu0 0.0
    %5657 = vmatprep.subr.mxu0 0.0
    %5658 = vmatpush1.msra.mxu0 0.0
    %5659 = vmatprep.subr.mxu0 0.0
    %5660 = vmatpush1.msra.mxu0 0.0
    %5661 = vmatprep.subr.mxu0 0.0
    %5662 = vmatpush1.msra.mxu0 0.0
    %5663 = vmatprep.subr.mxu0 0.0
    %5664 = vmatpush1.msra.mxu0 0.0
    %5665 = vmatprep.subr.mxu0 0.0
    %5666 = vmatpush1.msra.mxu0 0.0
    %5667 = vmatprep.subr.mxu0 0.0
    %5668 = vmatpush1.msra.mxu0 0.0
    %5669 = vmatprep.subr.mxu0 0.0
    %5670 = vmatpush1.msra.mxu0 0.0
    %5671 = vmatprep.subr.mxu0 0.0
    %5672 = vmatpush1.msra.mxu0 0.0
    %5673 = vmatprep.subr.mxu0 0.0
    %5674 = vmatpush1.msra.mxu0 0.0
    %5675 = vmatprep.subr.mxu0 0.0
    %5676 = vmatpush1.msra.mxu0 0.0
    %5677 = vmatprep.subr.mxu0 0.0
    %5678 = vmatpush1.msra.mxu0 0.0
    %5679 = vmatprep.subr.mxu0 0.0
    %5680 = vmatpush1.msra.mxu0 0.0
    %5681 = vmatprep.subr.mxu0 0.0
    %5682 = vmatpush1.msra.mxu0 0.0
    %5683 = vmatprep.subr.mxu0 0.0
    %5684 = vmatpush1.msra.mxu0 0.0
    %5685 = vmatprep.subr.mxu0 0.0
    %5686 = vmatpush1.msra.mxu0 0.0
    %5687 = vmatprep.subr.mxu0 0.0
    %5688 = vmatpush1.msra.mxu0 0.0
    %5689 = vmatprep.subr.mxu0 0.0
    %5690 = vmatpush1.msra.mxu0 0.0
    %5691 = vmatprep.subr.mxu0 0.0
    %5692 = vmatpush1.msra.mxu0 0.0
    %5693 = vmatprep.subr.mxu0 0.0
    %5694 = vmatpush1.msra.mxu0 0.0
    %5695 = vmatprep.subr.mxu0 0.0
    %5696 = vmatpush1.msra.mxu0 0.0
    %5697 = vmatprep.subr.mxu0 0.0
    %5698 = vmatpush1.msra.mxu0 0.0
    %5699 = vmatprep.subr.mxu0 0.0
    %5700 = vmatpush1.msra.mxu0 0.0
    %5701 = vmatprep.mubr.f32.mxu0 0.0
    %5702 = vmatmul.mubr.f32.gmra.mrb[0].mxu0 %v5632
    %v5703 = vpop.f32.mrb[0].mxu0
    %v5704 = vadd.f32 0.0, %v5703
    %v5705 = vpop.f32.mrb[0].mxu0
    %5706 = vdwg.mxu0
    %v5707 = vadd.f32 %v5628, %v5704
    %v5708 = vld [vmem:[%s2707] sm:$0x3f]
    %v5709 = vrot.slane %v5471, 2
    %v5710 = vsel %vm2469, %v5709, 0
    %v5713 = vsel %vm152, %v5708, 0
    %5715 = vmatprep.subr.mxu0 0.0
    %5716 = vmatpush1.msra.mxu0 %v5713
    %5717 = vmatprep.subr.mxu0 0.0
    %5718 = vmatpush1.msra.mxu0 0.0
    %5719 = vmatprep.subr.mxu0 0.0
    %5720 = vmatpush1.msra.mxu0 0.0
    %5721 = vmatprep.subr.mxu0 0.0
    %5722 = vmatpush1.msra.mxu0 0.0
    %5723 = vmatprep.subr.mxu0 0.0
    %5724 = vmatpush1.msra.mxu0 0.0
    %5725 = vmatprep.subr.mxu0 0.0
    %5726 = vmatpush1.msra.mxu0 0.0
    %5727 = vmatprep.subr.mxu0 0.0
    %5728 = vmatpush1.msra.mxu0 0.0
    %5729 = vmatprep.subr.mxu0 0.0
    %5730 = vmatpush1.msra.mxu0 0.0
    %5731 = vmatprep.subr.mxu0 0.0
    %5732 = vmatpush1.msra.mxu0 0.0
    %5733 = vmatprep.subr.mxu0 0.0
    %5734 = vmatpush1.msra.mxu0 0.0
    %5735 = vmatprep.subr.mxu0 0.0
    %5736 = vmatpush1.msra.mxu0 0.0
    %5737 = vmatprep.subr.mxu0 0.0
    %5738 = vmatpush1.msra.mxu0 0.0
    %5739 = vmatprep.subr.mxu0 0.0
    %5740 = vmatpush1.msra.mxu0 0.0
    %5741 = vmatprep.subr.mxu0 0.0
    %5742 = vmatpush1.msra.mxu0 0.0
    %5743 = vmatprep.subr.mxu0 0.0
    %5744 = vmatpush1.msra.mxu0 0.0
    %5745 = vmatprep.subr.mxu0 0.0
    %5746 = vmatpush1.msra.mxu0 0.0
    %5747 = vmatprep.subr.mxu0 0.0
    %5748 = vmatpush1.msra.mxu0 0.0
    %5749 = vmatprep.subr.mxu0 0.0
    %5750 = vmatpush1.msra.mxu0 0.0
    %5751 = vmatprep.subr.mxu0 0.0
    %5752 = vmatpush1.msra.mxu0 0.0
    %5753 = vmatprep.subr.mxu0 0.0
    %5754 = vmatpush1.msra.mxu0 0.0
    %5755 = vmatprep.subr.mxu0 0.0
    %5756 = vmatpush1.msra.mxu0 0.0
    %5757 = vmatprep.subr.mxu0 0.0
    %5758 = vmatpush1.msra.mxu0 0.0
    %5759 = vmatprep.subr.mxu0 0.0
    %5760 = vmatpush1.msra.mxu0 0.0
    %5761 = vmatprep.subr.mxu0 0.0
    %5762 = vmatpush1.msra.mxu0 0.0
    %5763 = vmatprep.subr.mxu0 0.0
    %5764 = vmatpush1.msra.mxu0 0.0
    %5765 = vmatprep.subr.mxu0 0.0
    %5766 = vmatpush1.msra.mxu0 0.0
    %5767 = vmatprep.subr.mxu0 0.0
    %5768 = vmatpush1.msra.mxu0 0.0
    %5769 = vmatprep.subr.mxu0 0.0
    %5770 = vmatpush1.msra.mxu0 0.0
    %5771 = vmatprep.subr.mxu0 0.0
    %5772 = vmatpush1.msra.mxu0 0.0
    %5773 = vmatprep.subr.mxu0 0.0
    %5774 = vmatpush1.msra.mxu0 0.0
    %5775 = vmatprep.subr.mxu0 0.0
    %5776 = vmatpush1.msra.mxu0 0.0
    %5777 = vmatprep.subr.mxu0 0.0
    %5778 = vmatpush1.msra.mxu0 0.0
    %5779 = vmatprep.mubr.f32.mxu0 0.0
    %5780 = vmatmul.mubr.f32.gmra.mrb[0].mxu0 %v5710
    %v5781 = vpop.f32.mrb[0].mxu0
    %v5782 = vadd.f32 0.0, %v5781
    %v5783 = vpop.f32.mrb[0].mxu0
    %5784 = vdwg.mxu0
    %v5785 = vadd.f32 %v5707, %v5782
    %v5786 = vld [vmem:[%s2786] sm:$0x3f]
    %5787 = vrot.lane.b32.xlu0 %v5709, 116
    %v5788 = vpop.permute.xlu0 %5787
    %v5789 = vsel %vm2469, %v5788, 0
    %v5792 = vsel %vm152, %v5786, 0
    %5794 = vmatprep.subr.mxu0 0.0
    %5795 = vmatpush1.msra.mxu0 %v5792
    %5796 = vmatprep.subr.mxu0 0.0
    %5797 = vmatpush1.msra.mxu0 0.0
    %5798 = vmatprep.subr.mxu0 0.0
    %5799 = vmatpush1.msra.mxu0 0.0
    %5800 = vmatprep.subr.mxu0 0.0
    %5801 = vmatpush1.msra.mxu0 0.0
    %5802 = vmatprep.subr.mxu0 0.0
    %5803 = vmatpush1.msra.mxu0 0.0
    %5804 = vmatprep.subr.mxu0 0.0
    %5805 = vmatpush1.msra.mxu0 0.0
    %5806 = vmatprep.subr.mxu0 0.0
    %5807 = vmatpush1.msra.mxu0 0.0
    %5808 = vmatprep.subr.mxu0 0.0
    %5809 = vmatpush1.msra.mxu0 0.0
    %5810 = vmatprep.subr.mxu0 0.0
    %5811 = vmatpush1.msra.mxu0 0.0
    %5812 = vmatprep.subr.mxu0 0.0
    %5813 = vmatpush1.msra.mxu0 0.0
    %5814 = vmatprep.subr.mxu0 0.0
    %5815 = vmatpush1.msra.mxu0 0.0
    %5816 = vmatprep.subr.mxu0 0.0
    %5817 = vmatpush1.msra.mxu0 0.0
    %5818 = vmatprep.subr.mxu0 0.0
    %5819 = vmatpush1.msra.mxu0 0.0
    %5820 = vmatprep.subr.mxu0 0.0
    %5821 = vmatpush1.msra.mxu0 0.0
    %5822 = vmatprep.subr.mxu0 0.0
    %5823 = vmatpush1.msra.mxu0 0.0
    %5824 = vmatprep.subr.mxu0 0.0
    %5825 = vmatpush1.msra.mxu0 0.0
    %5826 = vmatprep.subr.mxu0 0.0
    %5827 = vmatpush1.msra.mxu0 0.0
    %5828 = vmatprep.subr.mxu0 0.0
    %5829 = vmatpush1.msra.mxu0 0.0
    %5830 = vmatprep.subr.mxu0 0.0
    %5831 = vmatpush1.msra.mxu0 0.0
    %5832 = vmatprep.subr.mxu0 0.0
    %5833 = vmatpush1.msra.mxu0 0.0
    %5834 = vmatprep.subr.mxu0 0.0
    %5835 = vmatpush1.msra.mxu0 0.0
    %5836 = vmatprep.subr.mxu0 0.0
    %5837 = vmatpush1.msra.mxu0 0.0
    %5838 = vmatprep.subr.mxu0 0.0
    %5839 = vmatpush1.msra.mxu0 0.0
    %5840 = vmatprep.subr.mxu0 0.0
    %5841 = vmatpush1.msra.mxu0 0.0
    %5842 = vmatprep.subr.mxu0 0.0
    %5843 = vmatpush1.msra.mxu0 0.0
    %5844 = vmatprep.subr.mxu0 0.0
    %5845 = vmatpush1.msra.mxu0 0.0
    %5846 = vmatprep.subr.mxu0 0.0
    %5847 = vmatpush1.msra.mxu0 0.0
    %5848 = vmatprep.subr.mxu0 0.0
    %5849 = vmatpush1.msra.mxu0 0.0
    %5850 = vmatprep.subr.mxu0 0.0
    %5851 = vmatpush1.msra.mxu0 0.0
    %5852 = vmatprep.subr.mxu0 0.0
    %5853 = vmatpush1.msra.mxu0 0.0
    %5854 = vmatprep.subr.mxu0 0.0
    %5855 = vmatpush1.msra.mxu0 0.0
    %5856 = vmatprep.subr.mxu0 0.0
    %5857 = vmatpush1.msra.mxu0 0.0
    %5858 = vmatprep.mubr.f32.mxu0 0.0
    %5859 = vmatmul.mubr.f32.gmra.mrb[0].mxu0 %v5789
    %v5860 = vpop.f32.mrb[0].mxu0
    %v5861 = vadd.f32 0.0, %v5860
    %v5862 = vpop.f32.mrb[0].mxu0
    %5863 = vdwg.mxu0
    %v5864 = vadd.f32 %v5785, %v5861
    %v5865 = vld [vmem:[%s2866] sm:$0x3f]
    %5866 = vrot.lane.b32.xlu0 %v5709, 104
    %v5867 = vpop.permute.xlu0 %5866
    %v5868 = vsel %vm2469, %v5867, 0
    %v5871 = vsel %vm152, %v5865, 0
    %5873 = vmatprep.subr.mxu0 0.0
    %5874 = vmatpush1.msra.mxu0 %v5871
    %5875 = vmatprep.subr.mxu0 0.0
    %5876 = vmatpush1.msra.mxu0 0.0
    %5877 = vmatprep.subr.mxu0 0.0
    %5878 = vmatpush1.msra.mxu0 0.0
    %5879 = vmatprep.subr.mxu0 0.0
    %5880 = vmatpush1.msra.mxu0 0.0
    %5881 = vmatprep.subr.mxu0 0.0
    %5882 = vmatpush1.msra.mxu0 0.0
    %5883 = vmatprep.subr.mxu0 0.0
    %5884 = vmatpush1.msra.mxu0 0.0
    %5885 = vmatprep.subr.mxu0 0.0
    %5886 = vmatpush1.msra.mxu0 0.0
    %5887 = vmatprep.subr.mxu0 0.0
    %5888 = vmatpush1.msra.mxu0 0.0
    %5889 = vmatprep.subr.mxu0 0.0
    %5890 = vmatpush1.msra.mxu0 0.0
    %5891 = vmatprep.subr.mxu0 0.0
    %5892 = vmatpush1.msra.mxu0 0.0
    %5893 = vmatprep.subr.mxu0 0.0
    %5894 = vmatpush1.msra.mxu0 0.0
    %5895 = vmatprep.subr.mxu0 0.0
    %5896 = vmatpush1.msra.mxu0 0.0
    %5897 = vmatprep.subr.mxu0 0.0
    %5898 = vmatpush1.msra.mxu0 0.0
    %5899 = vmatprep.subr.mxu0 0.0
    %5900 = vmatpush1.msra.mxu0 0.0
    %5901 = vmatprep.subr.mxu0 0.0
    %5902 = vmatpush1.msra.mxu0 0.0
    %5903 = vmatprep.subr.mxu0 0.0
    %5904 = vmatpush1.msra.mxu0 0.0
    %5905 = vmatprep.subr.mxu0 0.0
    %5906 = vmatpush1.msra.mxu0 0.0
    %5907 = vmatprep.subr.mxu0 0.0
    %5908 = vmatpush1.msra.mxu0 0.0
    %5909 = vmatprep.subr.mxu0 0.0
    %5910 = vmatpush1.msra.mxu0 0.0
    %5911 = vmatprep.subr.mxu0 0.0
    %5912 = vmatpush1.msra.mxu0 0.0
    %5913 = vmatprep.subr.mxu0 0.0
    %5914 = vmatpush1.msra.mxu0 0.0
    %5915 = vmatprep.subr.mxu0 0.0
    %5916 = vmatpush1.msra.mxu0 0.0
    %5917 = vmatprep.subr.mxu0 0.0
    %5918 = vmatpush1.msra.mxu0 0.0
    %5919 = vmatprep.subr.mxu0 0.0
    %5920 = vmatpush1.msra.mxu0 0.0
    %5921 = vmatprep.subr.mxu0 0.0
    %5922 = vmatpush1.msra.mxu0 0.0
    %5923 = vmatprep.subr.mxu0 0.0
    %5924 = vmatpush1.msra.mxu0 0.0
    %5925 = vmatprep.subr.mxu0 0.0
    %5926 = vmatpush1.msra.mxu0 0.0
    %5927 = vmatprep.subr.mxu0 0.0
    %5928 = vmatpush1.msra.mxu0 0.0
    %5929 = vmatprep.subr.mxu0 0.0
    %5930 = vmatpush1.msra.mxu0 0.0
    %5931 = vmatprep.subr.mxu0 0.0
    %5932 = vmatpush1.msra.mxu0 0.0
    %5933 = vmatprep.subr.mxu0 0.0
    %5934 = vmatpush1.msra.mxu0 0.0
    %5935 = vmatprep.subr.mxu0 0.0
    %5936 = vmatpush1.msra.mxu0 0.0
    %5937 = vmatprep.mubr.f32.mxu0 0.0
    %5938 = vmatmul.mubr.f32.gmra.mrb[0].mxu0 %v5868
    %v5939 = vpop.f32.mrb[0].mxu0
    %v5940 = vadd.f32 0.0, %v5939
    %v5941 = vpop.f32.mrb[0].mxu0
    %5942 = vdwg.mxu0
    %v5943 = vadd.f32 %v5864, %v5940
    %v5944 = vld [vmem:[%s2946] sm:$0x3f]
    %v5945 = vrot.slane %v5471, 4
    %v5946 = vsel %vm2469, %v5945, 0
    %v5949 = vsel %vm152, %v5944, 0
    %5951 = vmatprep.subr.mxu0 0.0
    %5952 = vmatpush1.msra.mxu0 %v5949
    %5953 = vmatprep.subr.mxu0 0.0
    %5954 = vmatpush1.msra.mxu0 0.0
    %5955 = vmatprep.subr.mxu0 0.0
    %5956 = vmatpush1.msra.mxu0 0.0
    %5957 = vmatprep.subr.mxu0 0.0
    %5958 = vmatpush1.msra.mxu0 0.0
    %5959 = vmatprep.subr.mxu0 0.0
    %5960 = vmatpush1.msra.mxu0 0.0
    %5961 = vmatprep.subr.mxu0 0.0
    %5962 = vmatpush1.msra.mxu0 0.0
    %5963 = vmatprep.subr.mxu0 0.0
    %5964 = vmatpush1.msra.mxu0 0.0
    %5965 = vmatprep.subr.mxu0 0.0
    %5966 = vmatpush1.msra.mxu0 0.0
    %5967 = vmatprep.subr.mxu0 0.0
    %5968 = vmatpush1.msra.mxu0 0.0
    %5969 = vmatprep.subr.mxu0 0.0
    %5970 = vmatpush1.msra.mxu0 0.0
    %5971 = vmatprep.subr.mxu0 0.0
    %5972 = vmatpush1.msra.mxu0 0.0
    %5973 = vmatprep.subr.mxu0 0.0
    %5974 = vmatpush1.msra.mxu0 0.0
    %5975 = vmatprep.subr.mxu0 0.0
    %5976 = vmatpush1.msra.mxu0 0.0
    %5977 = vmatprep.subr.mxu0 0.0
    %5978 = vmatpush1.msra.mxu0 0.0
    %5979 = vmatprep.subr.mxu0 0.0
    %5980 = vmatpush1.msra.mxu0 0.0
    %5981 = vmatprep.subr.mxu0 0.0
    %5982 = vmatpush1.msra.mxu0 0.0
    %5983 = vmatprep.subr.mxu0 0.0
    %5984 = vmatpush1.msra.mxu0 0.0
    %5985 = vmatprep.subr.mxu0 0.0
    %5986 = vmatpush1.msra.mxu0 0.0
    %5987 = vmatprep.subr.mxu0 0.0
    %5988 = vmatpush1.msra.mxu0 0.0
    %5989 = vmatprep.subr.mxu0 0.0
    %5990 = vmatpush1.msra.mxu0 0.0
    %5991 = vmatprep.subr.mxu0 0.0
    %5992 = vmatpush1.msra.mxu0 0.0
    %5993 = vmatprep.subr.mxu0 0.0
    %5994 = vmatpush1.msra.mxu0 0.0
    %5995 = vmatprep.subr.mxu0 0.0
    %5996 = vmatpush1.msra.mxu0 0.0
    %5997 = vmatprep.subr.mxu0 0.0
    %5998 = vmatpush1.msra.mxu0 0.0
    %5999 = vmatprep.subr.mxu0 0.0
    %6000 = vmatpush1.msra.mxu0 0.0
    %6001 = vmatprep.subr.mxu0 0.0
    %6002 = vmatpush1.msra.mxu0 0.0
    %6003 = vmatprep.subr.mxu0 0.0
    %6004 = vmatpush1.msra.mxu0 0.0
    %6005 = vmatprep.subr.mxu0 0.0
    %6006 = vmatpush1.msra.mxu0 0.0
    %6007 = vmatprep.subr.mxu0 0.0
    %6008 = vmatpush1.msra.mxu0 0.0
    %6009 = vmatprep.subr.mxu0 0.0
    %6010 = vmatpush1.msra.mxu0 0.0
    %6011 = vmatprep.subr.mxu0 0.0
    %6012 = vmatpush1.msra.mxu0 0.0
    %6013 = vmatprep.subr.mxu0 0.0
    %6014 = vmatpush1.msra.mxu0 0.0
    %6015 = vmatprep.mubr.f32.mxu0 0.0
    %6016 = vmatmul.mubr.f32.gmra.mrb[0].mxu0 %v5946
    %v6017 = vpop.f32.mrb[0].mxu0
    %v6018 = vadd.f32 0.0, %v6017
    %v6019 = vpop.f32.mrb[0].mxu0
    %6020 = vdwg.mxu0
    %v6021 = vadd.f32 %v5943, %v6018
    %v6022 = vld [vmem:[%s3025] sm:$0x3f]
    %6023 = vrot.lane.b32.xlu0 %v5945, 116
    %v6024 = vpop.permute.xlu0 %6023
    %v6025 = vsel %vm2469, %v6024, 0
    %v6028 = vsel %vm152, %v6022, 0
    %6030 = vmatprep.subr.mxu0 0.0
    %6031 = vmatpush1.msra.mxu0 %v6028
    %6032 = vmatprep.subr.mxu0 0.0
    %6033 = vmatpush1.msra.mxu0 0.0
    %6034 = vmatprep.subr.mxu0 0.0
    %6035 = vmatpush1.msra.mxu0 0.0
    %6036 = vmatprep.subr.mxu0 0.0
    %6037 = vmatpush1.msra.mxu0 0.0
    %6038 = vmatprep.subr.mxu0 0.0
    %6039 = vmatpush1.msra.mxu0 0.0
    %6040 = vmatprep.subr.mxu0 0.0
    %6041 = vmatpush1.msra.mxu0 0.0
    %6042 = vmatprep.subr.mxu0 0.0
    %6043 = vmatpush1.msra.mxu0 0.0
    %6044 = vmatprep.subr.mxu0 0.0
    %6045 = vmatpush1.msra.mxu0 0.0
    %6046 = vmatprep.subr.mxu0 0.0
    %6047 = vmatpush1.msra.mxu0 0.0
    %6048 = vmatprep.subr.mxu0 0.0
    %6049 = vmatpush1.msra.mxu0 0.0
    %6050 = vmatprep.subr.mxu0 0.0
    %6051 = vmatpush1.msra.mxu0 0.0
    %6052 = vmatprep.subr.mxu0 0.0
    %6053 = vmatpush1.msra.mxu0 0.0
    %6054 = vmatprep.subr.mxu0 0.0
    %6055 = vmatpush1.msra.mxu0 0.0
    %6056 = vmatprep.subr.mxu0 0.0
    %6057 = vmatpush1.msra.mxu0 0.0
    %6058 = vmatprep.subr.mxu0 0.0
    %6059 = vmatpush1.msra.mxu0 0.0
    %6060 = vmatprep.subr.mxu0 0.0
    %6061 = vmatpush1.msra.mxu0 0.0
    %6062 = vmatprep.subr.mxu0 0.0
    %6063 = vmatpush1.msra.mxu0 0.0
    %6064 = vmatprep.subr.mxu0 0.0
    %6065 = vmatpush1.msra.mxu0 0.0
    %6066 = vmatprep.subr.mxu0 0.0
    %6067 = vmatpush1.msra.mxu0 0.0
    %6068 = vmatprep.subr.mxu0 0.0
    %6069 = vmatpush1.msra.mxu0 0.0
    %6070 = vmatprep.subr.mxu0 0.0
    %6071 = vmatpush1.msra.mxu0 0.0
    %6072 = vmatprep.subr.mxu0 0.0
    %6073 = vmatpush1.msra.mxu0 0.0
    %6074 = vmatprep.subr.mxu0 0.0
    %6075 = vmatpush1.msra.mxu0 0.0
    %6076 = vmatprep.subr.mxu0 0.0
    %6077 = vmatpush1.msra.mxu0 0.0
    %6078 = vmatprep.subr.mxu0 0.0
    %6079 = vmatpush1.msra.mxu0 0.0
    %6080 = vmatprep.subr.mxu0 0.0
    %6081 = vmatpush1.msra.mxu0 0.0
    %6082 = vmatprep.subr.mxu0 0.0
    %6083 = vmatpush1.msra.mxu0 0.0
    %6084 = vmatprep.subr.mxu0 0.0
    %6085 = vmatpush1.msra.mxu0 0.0
    %6086 = vmatprep.subr.mxu0 0.0
    %6087 = vmatpush1.msra.mxu0 0.0
    %6088 = vmatprep.subr.mxu0 0.0
    %6089 = vmatpush1.msra.mxu0 0.0
    %6090 = vmatprep.subr.mxu0 0.0
    %6091 = vmatpush1.msra.mxu0 0.0
    %6092 = vmatprep.subr.mxu0 0.0
    %6093 = vmatpush1.msra.mxu0 0.0
    %6094 = vmatprep.mubr.f32.mxu0 0.0
    %6095 = vmatmul.mubr.f32.gmra.mrb[0].mxu0 %v6025
    %v6096 = vpop.f32.mrb[0].mxu0
    %v6097 = vadd.f32 0.0, %v6096
    %v6098 = vpop.f32.mrb[0].mxu0
    %6099 = vdwg.mxu0
    %v6100 = vadd.f32 %v6021, %v6097
    %v6101 = vld [vmem:[%s3105] sm:$0x3f]
    %6102 = vrot.lane.b32.xlu0 %v5945, 104
    %v6103 = vpop.permute.xlu0 %6102
    %v6104 = vsel %vm2469, %v6103, 0
    %v6107 = vsel %vm152, %v6101, 0
    %6109 = vmatprep.subr.mxu0 0.0
    %6110 = vmatpush1.msra.mxu0 %v6107
    %6111 = vmatprep.subr.mxu0 0.0
    %6112 = vmatpush1.msra.mxu0 0.0
    %6113 = vmatprep.subr.mxu0 0.0
    %6114 = vmatpush1.msra.mxu0 0.0
    %6115 = vmatprep.subr.mxu0 0.0
    %6116 = vmatpush1.msra.mxu0 0.0
    %6117 = vmatprep.subr.mxu0 0.0
    %6118 = vmatpush1.msra.mxu0 0.0
    %6119 = vmatprep.subr.mxu0 0.0
    %6120 = vmatpush1.msra.mxu0 0.0
    %6121 = vmatprep.subr.mxu0 0.0
    %6122 = vmatpush1.msra.mxu0 0.0
    %6123 = vmatprep.subr.mxu0 0.0
    %6124 = vmatpush1.msra.mxu0 0.0
    %6125 = vmatprep.subr.mxu0 0.0
    %6126 = vmatpush1.msra.mxu0 0.0
    %6127 = vmatprep.subr.mxu0 0.0
    %6128 = vmatpush1.msra.mxu0 0.0
    %6129 = vmatprep.subr.mxu0 0.0
    %6130 = vmatpush1.msra.mxu0 0.0
    %6131 = vmatprep.subr.mxu0 0.0
    %6132 = vmatpush1.msra.mxu0 0.0
    %6133 = vmatprep.subr.mxu0 0.0
    %6134 = vmatpush1.msra.mxu0 0.0
    %6135 = vmatprep.subr.mxu0 0.0
    %6136 = vmatpush1.msra.mxu0 0.0
    %6137 = vmatprep.subr.mxu0 0.0
    %6138 = vmatpush1.msra.mxu0 0.0
    %6139 = vmatprep.subr.mxu0 0.0
    %6140 = vmatpush1.msra.mxu0 0.0
    %6141 = vmatprep.subr.mxu0 0.0
    %6142 = vmatpush1.msra.mxu0 0.0
    %6143 = vmatprep.subr.mxu0 0.0
    %6144 = vmatpush1.msra.mxu0 0.0
    %6145 = vmatprep.subr.mxu0 0.0
    %6146 = vmatpush1.msra.mxu0 0.0
    %6147 = vmatprep.subr.mxu0 0.0
    %6148 = vmatpush1.msra.mxu0 0.0
    %6149 = vmatprep.subr.mxu0 0.0
    %6150 = vmatpush1.msra.mxu0 0.0
    %6151 = vmatprep.subr.mxu0 0.0
    %6152 = vmatpush1.msra.mxu0 0.0
    %6153 = vmatprep.subr.mxu0 0.0
    %6154 = vmatpush1.msra.mxu0 0.0
    %6155 = vmatprep.subr.mxu0 0.0
    %6156 = vmatpush1.msra.mxu0 0.0
    %6157 = vmatprep.subr.mxu0 0.0
    %6158 = vmatpush1.msra.mxu0 0.0
    %6159 = vmatprep.subr.mxu0 0.0
    %6160 = vmatpush1.msra.mxu0 0.0
    %6161 = vmatprep.subr.mxu0 0.0
    %6162 = vmatpush1.msra.mxu0 0.0
    %6163 = vmatprep.subr.mxu0 0.0
    %6164 = vmatpush1.msra.mxu0 0.0
    %6165 = vmatprep.subr.mxu0 0.0
    %6166 = vmatpush1.msra.mxu0 0.0
    %6167 = vmatprep.subr.mxu0 0.0
    %6168 = vmatpush1.msra.mxu0 0.0
    %6169 = vmatprep.subr.mxu0 0.0
    %6170 = vmatpush1.msra.mxu0 0.0
    %6171 = vmatprep.subr.mxu0 0.0
    %6172 = vmatpush1.msra.mxu0 0.0
    %6173 = vmatprep.mubr.f32.mxu0 0.0
    %6174 = vmatmul.mubr.f32.gmra.mrb[0].mxu0 %v6104
    %v6175 = vpop.f32.mrb[0].mxu0
    %v6176 = vadd.f32 0.0, %v6175
    %v6177 = vpop.f32.mrb[0].mxu0
    %6178 = vdwg.mxu0
    %v6179 = vadd.f32 %v6100, %v6176
    %6180 = vst.msk [vmem:[#allocation9 + $0x1] sm:$0x1] %vm3185, %v6179
    // Predicated region
    $region38: #{forward.1} parent=1 // pred_check
      _
    $region39: #{forward.1} parent=1 // pred_check_branch
      %6182 = sbr.rel (0) target = $region41
    $region40: #{forward.1} parent=1 // pred_region
      %s6184 = ssub.s32 32, 32
      %6185 = vsyncadd [#allocation6], %s6184
      %s6187 = sshll.u32 [#allocation9], 4
      %s6188 = int_to_ptr.vmem [resolvable:$true] %s6187
      %6190 = dma.vmem_to_hbm [thread:$0]  %s6188, 32, %s7, [#allocation6]
    $region41: #{forward.1} parent=1 // pred_fallthru
      _
    // Predicated region
    $region42: #{forward.1} parent=1 // pred_check
      _
    $region43: #{forward.1} parent=1 // pred_check_branch
      %6192 = sbr.rel (0) target = $region45
    $region44: #{forward.1} parent=1 // pred_region
      %6193 = dma.done [#allocation6], 32
    $region45: #{forward.1} parent=1 // pred_fallthru
      _
    %6194 = vsyncpa [#allocation5], 1
    %6195 = vsyncpa [#allocation8], 1
    %6196 = vsyncpa [#allocation6], 1

</llo_original>
